<compile_context>
chip_gen: v7x
topology: tpu7x:2x2x1
jax: 0.10.0
libtpu: 0.0.40
codegen_flags: <defaults>
</compile_context>

<pallas_src>
import numpy as np

import jax
import jax.numpy as jnp
from jax import lax
from jax.experimental import pallas as pl
from jax.experimental.pallas import tpu as pltpu


_TAPS = tuple((dy, dx) for dy in range(3) for dx in range(3))


# ---------------------------------------------------------------------------
# Small layout / budgeting helpers
# ---------------------------------------------------------------------------
def _round_up(n, m):
    return ((n + m - 1) // m) * m


def _pad_lanes(a, npad):
    n = a.shape[-1]
    if n == npad:
        return a
    return jnp.pad(a, [(0, 0)] * (a.ndim - 1) + [(0, npad - n)])


def _choose_spatial_tile(npad, batch, cap=8192):
    """Largest lane-dense (multiple-of-128) divisor of npad under `cap`, then
    shrunk while possible until the grid has >= 4 parallel steps (v7x has two
    TensorCores; a 1-step grid leaves one idle)."""
    tn = min(cap, npad)
    while npad % tn != 0 or tn % 128 != 0:
        tn -= 128
    while (batch * (npad // tn) < 4 and tn >= 256
           and (tn // 2) % 128 == 0 and npad % (tn // 2) == 0):
        tn //= 2
    return tn


def _vmem_limit(block_elems_f32):
    """VMEM limit derived from double-buffered f32 block elements (+ slack),
    kept under v7x's 64 MiB physical VMEM."""
    need = 8 * block_elems_f32 + (4 << 20)
    return int(min(48 << 20, max(8 << 20, need)))


# ---------------------------------------------------------------------------
# Kernel 1: pointwise 1x1 conv = (M, K) @ (K, TN) + bias   (used for conv1)
# ---------------------------------------------------------------------------
def _pointwise_conv_kernel(x_ref, w_ref, b_ref, o_ref):
    # x: (1, K, TN)   w: (M, K)   b: (M, 1)   o: (1, M, TN)
    o_ref[0] = (jnp.dot(w_ref[...], x_ref[0], preferred_element_type=jnp.float32)
                + b_ref[...]).astype(o_ref.dtype)


def pointwise_conv(x_flat, w, b):
    """x_flat: (B, K, N) -> (B, M, N)  with  out = w @ x + b per pixel."""
    B, K, N = x_flat.shape
    M = w.shape[0]
    npad = _round_up(N, 128)
    xp = _pad_lanes(x_flat.astype(jnp.float32), npad)
    tn = _choose_spatial_tile(npad, B)
    nt = npad // tn
    blk = K * tn + M * K + M + M * tn
    out = pl.pallas_call(
        _pointwise_conv_kernel,
        out_shape=jax.ShapeDtypeStruct((B, M, npad), jnp.float32),
        grid_spec=pltpu.PrefetchScalarGridSpec(
            num_scalar_prefetch=0,
            grid=(nt, B),
            in_specs=[
                pl.BlockSpec((1, K, tn), lambda t, b: (b, 0, t)),
                pl.BlockSpec((M, K), lambda t, b: (0, 0)),
                pl.BlockSpec((M, 1), lambda t, b: (0, 0)),
            ],
            out_specs=pl.BlockSpec((1, M, tn), lambda t, b: (b, 0, t)),
        ),
        compiler_params=pltpu.CompilerParams(
            dimension_semantics=("parallel", "parallel"),
            vmem_limit_bytes=_vmem_limit(blk)),
    )(xp, jnp.asarray(w, jnp.float32), jnp.asarray(b, jnp.float32).reshape(M, 1))
    return out[..., :N] if npad != N else out


# ---------------------------------------------------------------------------
# Kernel 2: conv2 = 3x3 / stride 2 / pad 1, computed in-kernel from 4 parity
# planes of the zero-padded input (no 9x im2col materialized in HBM).
# ---------------------------------------------------------------------------
def _conv2_stride2_kernel(pee_ref, peo_ref, poe_ref, poo_ref, w_ref, b_ref, o_ref):
    # p??: (1, f, Hp, Wp) parity planes; w: SMEM (9*f*f,) [dy,dx,co,ci];
    # b: SMEM (f,); o: (1, f, H2, W2)
    f, h2, w2 = o_ref.shape[1], o_ref.shape[2], o_ref.shape[3]
    planes = {(0, 0): pee_ref[0], (0, 1): peo_ref[0],
              (1, 0): poe_ref[0], (1, 1): poo_ref[0]}
    taps = []
    for dy, dx in _TAPS:
        p = planes[(dy & 1, dx & 1)]
        r0, s0 = dy >> 1, dx >> 1
        taps.append(p[:, r0:r0 + h2, s0:s0 + w2])      # (f, H2, W2)
    for co in range(f):
        acc = jnp.zeros((h2, w2), jnp.float32) + b_ref[co]
        for k in range(9):
            tap = taps[k]
            for ci in range(f):
                acc = acc + w_ref[k * f * f + co * f + ci] * tap[ci]
        o_ref[0, co] = acc.astype(o_ref.dtype)


def conv2_stride2(x_img, w, b):
    """(B, f, H, W) -> (B, f, H2, W2), 3x3 conv, stride 2, padding 1."""
    B, f, H, W = x_img.shape
    H2 = (H - 1) // 2 + 1
    W2 = (W - 1) // 2 + 1
    Hp, Wp = H2 + 1, W2 + 1
    xp = jnp.pad(x_img.astype(jnp.float32),
                 ((0, 0), (0, 0), (1, 2 * Hp - 1 - H), (1, 2 * Wp - 1 - W)))
    planes = [xp[:, :, r::2, s::2] for r in (0, 1) for s in (0, 1)]  # (B,f,Hp,Wp)
    w_flat = jnp.transpose(jnp.asarray(w, jnp.float32), (2, 3, 0, 1)).reshape(-1)
    b_vec = jnp.asarray(b, jnp.float32).reshape(-1)
    plane_spec = pl.BlockSpec((1, f, Hp, Wp), lambda bi: (bi, 0, 0, 0))
    smem_spec = pl.BlockSpec(memory_space=pltpu.MemorySpace.SMEM)
    blk = 4 * f * Hp * Wp + f * H2 * W2 + 9 * f * f + f
    return pl.pallas_call(
        _conv2_stride2_kernel,
        out_shape=jax.ShapeDtypeStruct((B, f, H2, W2), jnp.float32),
        grid_spec=pltpu.PrefetchScalarGridSpec(
            num_scalar_prefetch=0,
            grid=(B,),
            in_specs=[plane_spec, plane_spec, plane_spec, plane_spec,
                      smem_spec, smem_spec],
            out_specs=pl.BlockSpec((1, f, H2, W2), lambda bi: (bi, 0, 0, 0)),
        ),
        compiler_params=pltpu.CompilerParams(
            dimension_semantics=("parallel",),
            vmem_limit_bytes=_vmem_limit(blk)),
    )(planes[0], planes[1], planes[2], planes[3], w_flat, b_vec)


# ---------------------------------------------------------------------------
# Kernel 3: fused low-resolution branch on the pooled map
#   conv_max(3x3)+relu -> conv3(3x3)+relu -> conv3_(3x3), all VMEM-resident.
# Each 3x3 conv = sum_k  W_k @ (X @ S_k)  with constant 0/1 shift matrices S_k.
# ---------------------------------------------------------------------------
def _lowres_branch_kernel(v_ref, s_ref, w_ref, b_ref, o_ref):
    # v: (1, f, HW)  s: (9, HW, HW)  w: (3, 9, f, f)  b: (3, f, 1)  o: (1, f, HW)
    f, hw = v_ref.shape[1], v_ref.shape[2]

    def conv3x3(x, layer):
        acc = jnp.zeros((f, hw), jnp.float32) + b_ref[layer]
        for k in range(9):
            shifted = jnp.dot(x, s_ref[k], preferred_element_type=jnp.float32)
            acc = acc + jnp.dot(w_ref[layer, k], shifted,
                                preferred_element_type=jnp.float32)
        return acc

    v = jnp.maximum(conv3x3(v_ref[0], 0), 0.0)    # conv_max + relu
    v = jnp.maximum(conv3x3(v, 1), 0.0)           # conv3 + relu
    o_ref[0] = conv3x3(v, 2).astype(o_ref.dtype)  # conv3_


def _shift_matrices(hm, wm):
    """0/1 matrices S_k (HW, HW) s.t. (x @ S_k)[c, p] = x at tap k of pixel p."""
    hw = hm * wm
    s = np.zeros((9, hw, hw), np.float32)
    for k, (dy, dx) in enumerate(_TAPS):
        for i in range(hm):
            si = i + dy - 1
            if si < 0 or si >= hm:
                continue
            for j in range(wm):
                sj = j + dx - 1
                if 0 <= sj < wm:
                    s[k, si * wm + sj, i * wm + j] = 1.0
    return jnp.asarray(s)


def lowres_branch(v_flat, hm, wm, w_max, b_max, w3, b3, w3_, b3_):
    B, f, hw = v_flat.shape

    def stack_w(w):
        return jnp.transpose(jnp.asarray(w, jnp.float32), (2, 3, 0, 1)).reshape(9, f, f)

    w_all = jnp.stack([stack_w(w_max), stack_w(w3), stack_w(w3_)])       # (3,9,f,f)
    b_all = jnp.stack([jnp.asarray(bb, jnp.float32).reshape(f, 1)
                       for bb in (b_max, b3, b3_)])                      # (3,f,1)
    s_all = _shift_matrices(hm, wm)                                      # (9,hw,hw)
    blk = 2 * f * hw + 9 * hw * hw + 27 * f * f + 3 * f
    return pl.pallas_call(
        _lowres_branch_kernel,
        out_shape=jax.ShapeDtypeStruct((B, f, hw), jnp.float32),
        grid_spec=pltpu.PrefetchScalarGridSpec(
            num_scalar_prefetch=0,
            grid=(B,),
            in_specs=[
                pl.BlockSpec((1, f, hw), lambda bi: (bi, 0, 0)),
                pl.BlockSpec((9, hw, hw), lambda bi: (0, 0, 0)),
                pl.BlockSpec((3, 9, f, f), lambda bi: (0, 0, 0, 0)),
                pl.BlockSpec((3, f, 1), lambda bi: (0, 0, 0)),
            ],
            out_specs=pl.BlockSpec((1, f, hw), lambda bi: (bi, 0, 0)),
        ),
        compiler_params=pltpu.CompilerParams(
            dimension_semantics=("parallel",),
            vmem_limit_bytes=_vmem_limit(blk)),
    )(v_flat.astype(jnp.float32), s_all, w_all, b_all)


# ---------------------------------------------------------------------------
# Kernel 4: fused full-resolution tail
#   c1 = W1 @ x + b1 ; cf = Wf @ c1 + bf ; c3_up = c3 @ M_tile
#   c4 = W4 @ (cf + c3_up) + b4 ; out = x * sigmoid(c4)
# x is read exactly once, nothing full-resolution besides x/out touches HBM.
# ---------------------------------------------------------------------------
def _esa_tail_kernel(x_ref, c3_ref, m_ref, w1_ref, b1_ref, wf_ref, bf_ref,
                     w4_ref, b4_ref, o_ref):
    # x: (1, C, TN)  c3: (1, f, Khw)  m: (Khw, TN)
    x = x_ref[0]
    c1 = jnp.dot(w1_ref[...], x, preferred_element_type=jnp.float32) + b1_ref[...]
    cf = jnp.dot(wf_ref[...], c1, preferred_element_type=jnp.float32) + bf_ref[...]
    c3u = jnp.dot(c3_ref[0], m_ref[...], preferred_element_type=jnp.float32)
    c4 = jnp.dot(w4_ref[...], cf + c3u,
                 preferred_element_type=jnp.float32) + b4_ref[...]
    o_ref[0] = (x * jax.nn.sigmoid(c4)).astype(o_ref.dtype)


def esa_tail(x_flat, c3_flat, m_t, w1, b1, wf, bf, w4, b4):
    B, C, N = x_flat.shape
    f, khw = c3_flat.shape[1], c3_flat.shape[2]
    npad = _round_up(N, 128)
    xp = _pad_lanes(x_flat, npad)
    mp = _pad_lanes(m_t.astype(jnp.float32), npad)
    tn = _choose_spatial_tile(npad, B)
    nt = npad // tn
    blk = (2 * C * tn + khw * tn + f * khw + f * C + f * f + C * f + 2 * f + C)
    out = pl.pallas_call(
        _esa_tail_kernel,
        out_shape=jax.ShapeDtypeStruct((B, C, npad), x_flat.dtype),
        grid_spec=pltpu.PrefetchScalarGridSpec(
            num_scalar_prefetch=0,
            grid=(nt, B),  # tile axis outermost so the M block is reused across B
            in_specs=[
                pl.BlockSpec((1, C, tn), lambda t, b: (b, 0, t)),
                pl.BlockSpec((1, f, khw), lambda t, b: (b, 0, 0)),
                pl.BlockSpec((khw, tn), lambda t, b: (0, t)),
                pl.BlockSpec((f, C), lambda t, b: (0, 0)),
                pl.BlockSpec((f, 1), lambda t, b: (0, 0)),
                pl.BlockSpec((f, f), lambda t, b: (0, 0)),
                pl.BlockSpec((f, 1), lambda t, b: (0, 0)),
                pl.BlockSpec((C, f), lambda t, b: (0, 0)),
                pl.BlockSpec((C, 1), lambda t, b: (0, 0)),
            ],
            out_specs=pl.BlockSpec((1, C, tn), lambda t, b: (b, 0, t)),
        ),
        compiler_params=pltpu.CompilerParams(
            dimension_semantics=("parallel", "parallel"),
            vmem_limit_bytes=_vmem_limit(blk)),
    )(xp, c3_flat, mp,
      jnp.asarray(w1, jnp.float32), jnp.asarray(b1, jnp.float32).reshape(f, 1),
      jnp.asarray(wf, jnp.float32), jnp.asarray(bf, jnp.float32).reshape(f, 1),
      jnp.asarray(w4, jnp.float32), jnp.asarray(b4, jnp.float32).reshape(C, 1))
    return out[..., :N] if npad != N else out


# ---------------------------------------------------------------------------
# Constant bilinear interpolation matrices (align_corners=False, edge clamp)
# ---------------------------------------------------------------------------
def _bilinear_matrix(out_size, in_size):
    scale = in_size / out_size
    dst = jnp.arange(out_size, dtype=jnp.float32)
    src = jnp.clip((dst + 0.5) * scale - 0.5, 0.0, float(in_size - 1))
    i0 = jnp.clip(jnp.floor(src).astype(jnp.int32), 0, in_size - 1)
    i1 = jnp.minimum(i0 + 1, in_size - 1)
    w1 = src - i0.astype(jnp.float32)
    w0 = 1.0 - w1
    m = jnp.zeros((out_size, in_size), jnp.float32)
    rows = jnp.arange(out_size)
    m = m.at[rows, i0].add(w0)
    m = m.at[rows, i1].add(w1)
    return m


# ---------------------------------------------------------------------------
# ESA forward (Pallas path)
# ---------------------------------------------------------------------------
def esa_forward(x, params):
    B, C, H, W = x.shape
    N = H * W
    f = params["w1"].shape[0]
    x_flat = x.reshape(B, C, N)

    # conv1: 1x1, n_feats -> f (only needed by the conv2 path; the tail recomputes it)
    c1_flat = pointwise_conv(x_flat, params["w1"][:, :, 0, 0], params["b1"])

    # conv2: 3x3 stride 2 (pad 1) computed in-kernel (no HBM im2col)
    c1 = conv2_stride2(c1_flat.reshape(B, f, H, W), params["w2"], params["b2"])
    H2, W2 = c1.shape[2], c1.shape[3]
    assert H2 >= 7 and W2 >= 7, "max_pool2d(kernel=7, stride=3) needs a >= 7x7 map"

    # max_pool2d(kernel=7, stride=3)
    # TODO(synk): max-pool stays in XLA (lax.reduce_window); tiny tensor, no clean Pallas win.
    v_max = lax.reduce_window(c1, -jnp.inf, lax.max,
                              (1, 1, 7, 7), (1, 1, 3, 3), "VALID")
    Hm, Wm = v_max.shape[2], v_max.shape[3]

    # conv_max(+relu) -> conv3(+relu) -> conv3_ : one fused Pallas launch
    c3_flat = lowres_branch(v_max.reshape(B, f, Hm * Wm), Hm, Wm,
                            params["w_max"], params["b_max"],
                            params["w3"], params["b3"],
                            params["w3_"], params["b3_"])

    # constant bilinear upsample operator (Hm*Wm, H*W); applied inside the tail kernel
    m_t = jnp.kron(_bilinear_matrix(H, Hm).T, _bilinear_matrix(W, Wm).T)

    # fused tail: c1_ recompute + conv_f + upsample + conv4 + sigmoid + x*m
    out_flat = esa_tail(x_flat, c3_flat, m_t,
                        params["w1"][:, :, 0, 0], params["b1"],
                        params["wf"][:, :, 0, 0], params["bf"],
                        params["w4"][:, :, 0, 0], params["b4"])
    return out_flat.reshape(B, C, H, W)


# ---------------------------------------------------------------------------
# Pure-JAX reference (lax.conv / reduce_window) for verification
# ---------------------------------------------------------------------------
def _conv2d_ref(x, w, b, stride, padding):
    out = lax.conv_general_dilated(
        x, w, window_strides=(stride, stride),
        padding=[(padding, padding), (padding, padding)],
        dimension_numbers=("NCHW", "OIHW", "NCHW"),
        precision=lax.Precision.HIGHEST)
    return out + b.reshape(1, -1, 1, 1)


def esa_reference(x, p):
    H, W = x.shape[2], x.shape[3]
    c1_ = _conv2d_ref(x, p["w1"], p["b1"], 1, 0)
    c1 = _conv2d_ref(c1_, p["w2"], p["b2"], 2, 1)
    v_max = lax.reduce_window(c1, -jnp.inf, lax.max,
                              (1, 1, 7, 7), (1, 1, 3, 3), "VALID")
    v_range = jax.nn.relu(_conv2d_ref(v_max, p["w_max"], p["b_max"], 1, 1))
    c3 = jax.nn.relu(_conv2d_ref(v_range, p["w3"], p["b3"], 1, 1))
    c3 = _conv2d_ref(c3, p["w3_"], p["b3_"], 1, 1)
    Ah = _bilinear_matrix(H, c3.shape[2])
    Aw = _bilinear_matrix(W, c3.shape[3])
    c3 = jnp.einsum("Hh,bchw->bcHw", Ah, c3, precision=lax.Precision.HIGHEST)
    c3 = jnp.einsum("bchw,Ww->bchW", c3, Aw, precision=lax.Precision.HIGHEST)
    cf = _conv2d_ref(c1_, p["wf"], p["bf"], 1, 0)
    c4 = _conv2d_ref(c3 + cf, p["w4"], p["b4"], 1, 0)
    return x * jax.nn.sigmoid(c4)


if __name__ == "__main__":
    B, n_feats, H, W = 2, 16, 32, 32
    ratio = 0.25
    f = int(n_feats * ratio)  # 4

    key = jax.random.PRNGKey(0)
    ks = jax.random.split(key, 16)

    def init(k, shape, s=0.1):
        return jax.random.normal(k, shape, dtype=jnp.float32) * s

    x = jax.random.normal(ks[0], (B, n_feats, H, W), dtype=jnp.float32)
    params = {
        "w1":    init(ks[1],  (f, n_feats, 1, 1)), "b1":    init(ks[2],  (f,)),
        "wf":    init(ks[3],  (f, f, 1, 1)),       "bf":    init(ks[4],  (f,)),
        "w_max": init(ks[5],  (f, f, 3, 3)),       "b_max": init(ks[6],  (f,)),
        "w2":    init(ks[7],  (f, f, 3, 3)),       "b2":    init(ks[8],  (f,)),
        "w3":    init(ks[9],  (f, f, 3, 3)),       "b3":    init(ks[10], (f,)),
        "w3_":   init(ks[11], (f, f, 3, 3)),       "b3_":   init(ks[12], (f,)),
        "w4":    init(ks[13], (n_feats, f, 1, 1)), "b4":    init(ks[14], (n_feats,)),
    }

    out = jax.jit(esa_forward)(x, params)
    out = jax.block_until_ready(out)

    ref = esa_reference(x, params)
    assert out.shape == x.shape
    assert jnp.allclose(out, ref, atol=2e-3, rtol=2e-3), "mismatch vs reference"

    print("KERNEL_OK")
</pallas_src>

<mosaic_0001>
module attributes {stable_mosaic.version = 11 : i64} {
  func.func private @main(%arg0: i32) attributes {dimension_semantics = [#tpu.dimension_semantics<core_parallel>], iteration_bounds = array<i64: 2>, tpu.core_type = #tpu.core_type<sc_scalar_subcore>, window_params = []} {
    return
  }
}

module attributes {stable_mosaic.version = 11 : i64} {
  func.func private @main(%arg0: i32) attributes {dimension_semantics = [#tpu.dimension_semantics<core_parallel>], iteration_bounds = array<i64: 2>, tpu.core_type = #tpu.core_type<sc_scalar_subcore>, window_params = []} {
    return
  }
}

module attributes {stable_mosaic.version = 11 : i64} {
  func.func @_pointwise_conv_kernel(%arg0: i32, %arg1: i32, %arg2: memref<1x16x512xf32, #tpu.memory_space<vmem>>, %arg3: memref<4x16xf32, #tpu.memory_space<vmem>>, %arg4: memref<4x1xf32, #tpu.memory_space<vmem>>, %arg5: memref<1x4x512xf32, #tpu.memory_space<vmem>>) attributes {dimension_semantics = [#tpu.dimension_semantics<parallel>, #tpu.dimension_semantics<parallel>], iteration_bounds = array<i64: 2, 2>, scalar_prefetch = 0 : i64, scratch_operands = 0 : i64, tpu.core_type = #tpu.core_type<tc>, window_params = [{transform_indices = @transform_0, window_bounds = array<i64: 1, 16, 512>}, {pipeline_mode = #tpu.pipeline_mode<synchronous>, transform_indices = @transform_1, window_bounds = array<i64: 4, 16>}, {pipeline_mode = #tpu.pipeline_mode<synchronous>, transform_indices = @transform_2, window_bounds = array<i64: 4, 1>}, {transform_indices = @transform_3, window_bounds = array<i64: 1, 4, 512>}]} {
    %c0 = arith.constant 0 : index
    %c0_0 = arith.constant 0 : index
    %0 = vector.load %arg3[%c0, %c0_0] : memref<4x16xf32, #tpu.memory_space<vmem>>, vector<4x16xf32>
    %c0_1 = arith.constant 0 : index
    %c0_2 = arith.constant 0 : index
    %c0_3 = arith.constant 0 : index
    %1 = vector.load %arg2[%c0_1, %c0_2, %c0_3] : memref<1x16x512xf32, #tpu.memory_space<vmem>>, vector<1x16x512xf32>
    %2 = vector.shape_cast %1 : vector<1x16x512xf32> to vector<16x512xf32>
    %cst = arith.constant dense<0.000000e+00> : vector<4x512xf32>
    %3 = tpu.matmul %0, %2, %cst {dimension_numbers = #tpu.dot_dimension_numbers<[1], [0], [0], [1], [0, 0, 1, 1], [], []>} : vector<4x16xf32>, vector<16x512xf32>, vector<4x512xf32> -> vector<4x512xf32>
    %c0_4 = arith.constant 0 : index
    %c0_5 = arith.constant 0 : index
    %4 = vector.load %arg4[%c0_4, %c0_5] : memref<4x1xf32, #tpu.memory_space<vmem>>, vector<4x1xf32>
    %5 = vector.broadcast %4 : vector<4x1xf32> to vector<4x512xf32>
    %6 = arith.addf %3, %5 : vector<4x512xf32>
    %c0_6 = arith.constant 0 : index
    %c0_7 = arith.constant 0 : index
    %c0_8 = arith.constant 0 : index
    %7 = vector.load %arg5[%c0_6, %c0_7, %c0_8] : memref<1x4x512xf32, #tpu.memory_space<vmem>>, vector<1x4x512xf32>
    %8 = vector.shape_cast %7 : vector<1x4x512xf32> to vector<4x512xf32>
    %9 = vector.shape_cast %6 : vector<4x512xf32> to vector<1x4x512xf32>
    tpu.vector_store %arg5[%c0_6, %c0_7, %c0_8], %9 {strides = array<i32>} : memref<1x4x512xf32, #tpu.memory_space<vmem>>, vector<1x4x512xf32>,
    return
  }
  func.func @transform_0(%arg0: i32, %arg1: i32) -> (i32, i32, i32) {
    %c0_i32 = arith.constant 0 : i32
    %c0_i32_0 = arith.constant 0 : i32
    return %arg1, %c0_i32, %arg0 : i32, i32, i32
  }
  func.func @transform_1(%arg0: i32, %arg1: i32) -> (i32, i32) {
    %c0_i32 = arith.constant 0 : i32
    %c0_i32_0 = arith.constant 0 : i32
    %c0_i32_1 = arith.constant 0 : i32
    return %c0_i32, %c0_i32_0 : i32, i32
  }
  func.func @transform_2(%arg0: i32, %arg1: i32) -> (i32, i32) {
    %c0_i32 = arith.constant 0 : i32
    %c0_i32_0 = arith.constant 0 : i32
    %c0_i32_1 = arith.constant 0 : i32
    return %c0_i32, %c0_i32_0 : i32, i32
  }
  func.func @transform_3(%arg0: i32, %arg1: i32) -> (i32, i32, i32) {
    %c0_i32 = arith.constant 0 : i32
    %c0_i32_0 = arith.constant 0 : i32
    return %arg1, %c0_i32, %arg0 : i32, i32, i32
  }
}

module attributes {stable_mosaic.version = 11 : i64} {
  func.func @_conv2_stride2_kernel(%arg0: i32, %arg1: memref<1x4x17x17xf32, #tpu.memory_space<vmem>>, %arg2: memref<1x4x17x17xf32, #tpu.memory_space<vmem>>, %arg3: memref<1x4x17x17xf32, #tpu.memory_space<vmem>>, %arg4: memref<1x4x17x17xf32, #tpu.memory_space<vmem>>, %arg5: memref<144xf32, #tpu.memory_space<smem>>, %arg6: memref<4xf32, #tpu.memory_space<smem>>, %arg7: memref<1x4x16x16xf32, #tpu.memory_space<vmem>>) attributes {dimension_semantics = [#tpu.dimension_semantics<parallel>], iteration_bounds = array<i64: 2>, scalar_prefetch = 0 : i64, scratch_operands = 0 : i64, tpu.core_type = #tpu.core_type<tc>, window_params = [{transform_indices = @transform_0, window_bounds = array<i64: 1, 4, 17, 17>}, {transform_indices = @transform_1, window_bounds = array<i64: 1, 4, 17, 17>}, {transform_indices = @transform_2, window_bounds = array<i64: 1, 4, 17, 17>}, {transform_indices = @transform_3, window_bounds = array<i64: 1, 4, 17, 17>}, {transform_indices = @transform_4, window_bounds = array<i64: 144>}, {transform_indices = @transform_5, window_bounds = array<i64: 4>}, {transform_indices = @transform_6, window_bounds = array<i64: 1, 4, 16, 16>}]} {
    %c0 = arith.constant 0 : index
    %c0_0 = arith.constant 0 : index
    %c0_1 = arith.constant 0 : index
    %c0_2 = arith.constant 0 : index
    %0 = vector.load %arg1[%c0, %c0_0, %c0_1, %c0_2] : memref<1x4x17x17xf32, #tpu.memory_space<vmem>>, vector<1x4x17x17xf32>
    %1 = vector.shape_cast %0 : vector<1x4x17x17xf32> to vector<4x17x17xf32>
    %c0_3 = arith.constant 0 : index
    %c0_4 = arith.constant 0 : index
    %c0_5 = arith.constant 0 : index
    %c0_6 = arith.constant 0 : index
    %2 = vector.load %arg2[%c0_3, %c0_4, %c0_5, %c0_6] : memref<1x4x17x17xf32, #tpu.memory_space<vmem>>, vector<1x4x17x17xf32>
    %3 = vector.shape_cast %2 : vector<1x4x17x17xf32> to vector<4x17x17xf32>
    %c0_7 = arith.constant 0 : index
    %c0_8 = arith.constant 0 : index
    %c0_9 = arith.constant 0 : index
    %c0_10 = arith.constant 0 : index
    %4 = vector.load %arg3[%c0_7, %c0_8, %c0_9, %c0_10] : memref<1x4x17x17xf32, #tpu.memory_space<vmem>>, vector<1x4x17x17xf32>
    %5 = vector.shape_cast %4 : vector<1x4x17x17xf32> to vector<4x17x17xf32>
    %c0_11 = arith.constant 0 : index
    %c0_12 = arith.constant 0 : index
    %c0_13 = arith.constant 0 : index
    %c0_14 = arith.constant 0 : index
    %6 = vector.load %arg4[%c0_11, %c0_12, %c0_13, %c0_14] : memref<1x4x17x17xf32, #tpu.memory_space<vmem>>, vector<1x4x17x17xf32>
    %7 = vector.shape_cast %6 : vector<1x4x17x17xf32> to vector<4x17x17xf32>
    %8 = vector.extract_strided_slice %1 {offsets = [0, 0, 0], sizes = [4, 16, 16], strides = [1, 1, 1]} : vector<4x17x17xf32> to vector<4x16x16xf32>
    %9 = vector.extract_strided_slice %3 {offsets = [0, 0, 0], sizes = [4, 16, 16], strides = [1, 1, 1]} : vector<4x17x17xf32> to vector<4x16x16xf32>
    %10 = vector.extract_strided_slice %1 {offsets = [0, 0, 1], sizes = [4, 16, 16], strides = [1, 1, 1]} : vector<4x17x17xf32> to vector<4x16x16xf32>
    %11 = vector.extract_strided_slice %5 {offsets = [0, 0, 0], sizes = [4, 16, 16], strides = [1, 1, 1]} : vector<4x17x17xf32> to vector<4x16x16xf32>
    %12 = vector.extract_strided_slice %7 {offsets = [0, 0, 0], sizes = [4, 16, 16], strides = [1, 1, 1]} : vector<4x17x17xf32> to vector<4x16x16xf32>
    %13 = vector.extract_strided_slice %5 {offsets = [0, 0, 1], sizes = [4, 16, 16], strides = [1, 1, 1]} : vector<4x17x17xf32> to vector<4x16x16xf32>
    %14 = vector.extract_strided_slice %1 {offsets = [0, 1, 0], sizes = [4, 16, 16], strides = [1, 1, 1]} : vector<4x17x17xf32> to vector<4x16x16xf32>
    %15 = vector.extract_strided_slice %3 {offsets = [0, 1, 0], sizes = [4, 16, 16], strides = [1, 1, 1]} : vector<4x17x17xf32> to vector<4x16x16xf32>
    %16 = vector.extract_strided_slice %1 {offsets = [0, 1, 1], sizes = [4, 16, 16], strides = [1, 1, 1]} : vector<4x17x17xf32> to vector<4x16x16xf32>
    %cst = arith.constant 0.000000e+00 : f32
    %17 = vector.broadcast %cst : f32 to vector<16x16xf32>
    %c0_15 = arith.constant 0 : index
    %18 = memref.load %arg6[%c0_15] : memref<4xf32, #tpu.memory_space<smem>>
    %19 = vector.broadcast %18 : f32 to vector<16x16xf32>
    %20 = arith.addf %17, %19 : vector<16x16xf32>
    %c0_16 = arith.constant 0 : index
    %21 = memref.load %arg5[%c0_16] : memref<144xf32, #tpu.memory_space<smem>>
    %22 = vector.extract_strided_slice %8 {offsets = [0, 0, 0], sizes = [1, 16, 16], strides = [1, 1, 1]} : vector<4x16x16xf32> to vector<1x16x16xf32>
    %23 = vector.shape_cast %22 : vector<1x16x16xf32> to vector<16x16xf32>
    %24 = vector.broadcast %21 : f32 to vector<16x16xf32>
    %25 = arith.mulf %24, %23 : vector<16x16xf32>
    %26 = arith.addf %20, %25 : vector<16x16xf32>
    %c1 = arith.constant 1 : index
    %27 = memref.load %arg5[%c1] : memref<144xf32, #tpu.memory_space<smem>>
    %28 = vector.extract_strided_slice %8 {offsets = [1, 0, 0], sizes = [1, 16, 16], strides = [1, 1, 1]} : vector<4x16x16xf32> to vector<1x16x16xf32>
    %29 = vector.shape_cast %28 : vector<1x16x16xf32> to vector<16x16xf32>
    %30 = vector.broadcast %27 : f32 to vector<16x16xf32>
    %31 = arith.mulf %30, %29 : vector<16x16xf32>
    %32 = arith.addf %26, %31 : vector<16x16xf32>
    %c2 = arith.constant 2 : index
    %33 = memref.load %arg5[%c2] : memref<144xf32, #tpu.memory_space<smem>>
    %34 = vector.extract_strided_slice %8 {offsets = [2, 0, 0], sizes = [1, 16, 16], strides = [1, 1, 1]} : vector<4x16x16xf32> to vector<1x16x16xf32>
    %35 = vector.shape_cast %34 : vector<1x16x16xf32> to vector<16x16xf32>
    %36 = vector.broadcast %33 : f32 to vector<16x16xf32>
    %37 = arith.mulf %36, %35 : vector<16x16xf32>
    %38 = arith.addf %32, %37 : vector<16x16xf32>
    %c3 = arith.constant 3 : index
    %39 = memref.load %arg5[%c3] : memref<144xf32, #tpu.memory_space<smem>>
    %40 = vector.extract_strided_slice %8 {offsets = [3, 0, 0], sizes = [1, 16, 16], strides = [1, 1, 1]} : vector<4x16x16xf32> to vector<1x16x16xf32>
    %41 = vector.shape_cast %40 : vector<1x16x16xf32> to vector<16x16xf32>
    %42 = vector.broadcast %39 : f32 to vector<16x16xf32>
    %43 = arith.mulf %42, %41 : vector<16x16xf32>
    %44 = arith.addf %38, %43 : vector<16x16xf32>
    %c16 = arith.constant 16 : index
    %45 = memref.load %arg5[%c16] : memref<144xf32, #tpu.memory_space<smem>>
    %46 = vector.extract_strided_slice %9 {offsets = [0, 0, 0], sizes = [1, 16, 16], strides = [1, 1, 1]} : vector<4x16x16xf32> to vector<1x16x16xf32>
    %47 = vector.shape_cast %46 : vector<1x16x16xf32> to vector<16x16xf32>
    %48 = vector.broadcast %45 : f32 to vector<16x16xf32>
    %49 = arith.mulf %48, %47 : vector<16x16xf32>
    %50 = arith.addf %44, %49 : vector<16x16xf32>
    %c17 = arith.constant 17 : index
    %51 = memref.load %arg5[%c17] : memref<144xf32, #tpu.memory_space<smem>>
    %52 = vector.extract_strided_slice %9 {offsets = [1, 0, 0], sizes = [1, 16, 16], strides = [1, 1, 1]} : vector<4x16x16xf32> to vector<1x16x16xf32>
    %53 = vector.shape_cast %52 : vector<1x16x16xf32> to vector<16x16xf32>
    %54 = vector.broadcast %51 : f32 to vector<16x16xf32>
    %55 = arith.mulf %54, %53 : vector<16x16xf32>
    %56 = arith.addf %50, %55 : vector<16x16xf32>
    %c18 = arith.constant 18 : index
    %57 = memref.load %arg5[%c18] : memref<144xf32, #tpu.memory_space<smem>>
    %58 = vector.extract_strided_slice %9 {offsets = [2, 0, 0], sizes = [1, 16, 16], strides = [1, 1, 1]} : vector<4x16x16xf32> to vector<1x16x16xf32>
    %59 = vector.shape_cast %58 : vector<1x16x16xf32> to vector<16x16xf32>
    %60 = vector.broadcast %57 : f32 to vector<16x16xf32>
    %61 = arith.mulf %60, %59 : vector<16x16xf32>
    %62 = arith.addf %56, %61 : vector<16x16xf32>
    %c19 = arith.constant 19 : index
    %63 = memref.load %arg5[%c19] : memref<144xf32, #tpu.memory_space<smem>>
    %64 = vector.extract_strided_slice %9 {offsets = [3, 0, 0], sizes = [1, 16, 16], strides = [1, 1, 1]} : vector<4x16x16xf32> to vector<1x16x16xf32>
    %65 = vector.shape_cast %64 : vector<1x16x16xf32> to vector<16x16xf32>
    %66 = vector.broadcast %63 : f32 to vector<16x16xf32>
    %67 = arith.mulf %66, %65 : vector<16x16xf32>
    %68 = arith.addf %62, %67 : vector<16x16xf32>
    %c32 = arith.constant 32 : index
    %69 = memref.load %arg5[%c32] : memref<144xf32, #tpu.memory_space<smem>>
    %70 = vector.extract_strided_slice %10 {offsets = [0, 0, 0], sizes = [1, 16, 16], strides = [1, 1, 1]} : vector<4x16x16xf32> to vector<1x16x16xf32>
    %71 = vector.shape_cast %70 : vector<1x16x16xf32> to vector<16x16xf32>
    %72 = vector.broadcast %69 : f32 to vector<16x16xf32>
    %73 = arith.mulf %72, %71 : vector<16x16xf32>
    %74 = arith.addf %68, %73 : vector<16x16xf32>
    %c33 = arith.constant 33 : index
    %75 = memref.load %arg5[%c33] : memref<144xf32, #tpu.memory_space<smem>>
    %76 = vector.extract_strided_slice %10 {offsets = [1, 0, 0], sizes = [1, 16, 16], strides = [1, 1, 1]} : vector<4x16x16xf32> to vector<1x16x16xf32>
    %77 = vector.shape_cast %76 : vector<1x16x16xf32> to vector<16x16xf32>
    %78 = vector.broadcast %75 : f32 to vector<16x16xf32>
    %79 = arith.mulf %78, %77 : vector<16x16xf32>
    %80 = arith.addf %74, %79 : vector<16x16xf32>
    %c34 = arith.constant 34 : index
    %81 = memref.load %arg5[%c34] : memref<144xf32, #tpu.memory_space<smem>>
    %82 = vector.extract_strided_slice %10 {offsets = [2, 0, 0], sizes = [1, 16, 16], strides = [1, 1, 1]} : vector<4x16x16xf32> to vector<1x16x16xf32>
    %83 = vector.shape_cast %82 : vector<1x16x16xf32> to vector<16x16xf32>
    %84 = vector.broadcast %81 : f32 to vector<16x16xf32>
    %85 = arith.mulf %84, %83 : vector<16x16xf32>
    %86 = arith.addf %80, %85 : vector<16x16xf32>
    %c35 = arith.constant 35 : index
    %87 = memref.load %arg5[%c35] : memref<144xf32, #tpu.memory_space<smem>>
    %88 = vector.extract_strided_slice %10 {offsets = [3, 0, 0], sizes = [1, 16, 16], strides = [1, 1, 1]} : vector<4x16x16xf32> to vector<1x16x16xf32>
    %89 = vector.shape_cast %88 : vector<1x16x16xf32> to vector<16x16xf32>
    %90 = vector.broadcast %87 : f32 to vector<16x16xf32>
    %91 = arith.mulf %90, %89 : vector<16x16xf32>
    %92 = arith.addf %86, %91 : vector<16x16xf32>
    %c48 = arith.constant 48 : index
    %93 = memref.load %arg5[%c48] : memref<144xf32, #tpu.memory_space<smem>>
    %94 = vector.extract_strided_slice %11 {offsets = [0, 0, 0], sizes = [1, 16, 16], strides = [1, 1, 1]} : vector<4x16x16xf32> to vector<1x16x16xf32>
    %95 = vector.shape_cast %94 : vector<1x16x16xf32> to vector<16x16xf32>
    %96 = vector.broadcast %93 : f32 to vector<16x16xf32>
    %97 = arith.mulf %96, %95 : vector<16x16xf32>
    %98 = arith.addf %92, %97 : vector<16x16xf32>
    %c49 = arith.constant 49 : index
    %99 = memref.load %arg5[%c49] : memref<144xf32, #tpu.memory_space<smem>>
    %100 = vector.extract_strided_slice %11 {offsets = [1, 0, 0], sizes = [1, 16, 16], strides = [1, 1, 1]} : vector<4x16x16xf32> to vector<1x16x16xf32>
    %101 = vector.shape_cast %100 : vector<1x16x16xf32> to vector<16x16xf32>
    %102 = vector.broadcast %99 : f32 to vector<16x16xf32>
    %103 = arith.mulf %102, %101 : vector<16x16xf32>
    %104 = arith.addf %98, %103 : vector<16x16xf32>
    %c50 = arith.constant 50 : index
    %105 = memref.load %arg5[%c50] : memref<144xf32, #tpu.memory_space<smem>>
    %106 = vector.extract_strided_slice %11 {offsets = [2, 0, 0], sizes = [1, 16, 16], strides = [1, 1, 1]} : vector<4x16x16xf32> to vector<1x16x16xf32>
    %107 = vector.shape_cast %106 : vector<1x16x16xf32> to vector<16x16xf32>
    %108 = vector.broadcast %105 : f32 to vector<16x16xf32>
    %109 = arith.mulf %108, %107 : vector<16x16xf32>
    %110 = arith.addf %104, %109 : vector<16x16xf32>
    %c51 = arith.constant 51 : index
    %111 = memref.load %arg5[%c51] : memref<144xf32, #tpu.memory_space<smem>>
    %112 = vector.extract_strided_slice %11 {offsets = [3, 0, 0], sizes = [1, 16, 16], strides = [1, 1, 1]} : vector<4x16x16xf32> to vector<1x16x16xf32>
    %113 = vector.shape_cast %112 : vector<1x16x16xf32> to vector<16x16xf32>
    %114 = vector.broadcast %111 : f32 to vector<16x16xf32>
    %115 = arith.mulf %114, %113 : vector<16x16xf32>
    %116 = arith.addf %110, %115 : vector<16x16xf32>
    %c64 = arith.constant 64 : index
    %117 = memref.load %arg5[%c64] : memref<144xf32, #tpu.memory_space<smem>>
    %118 = vector.extract_strided_slice %12 {offsets = [0, 0, 0], sizes = [1, 16, 16], strides = [1, 1, 1]} : vector<4x16x16xf32> to vector<1x16x16xf32>
    %119 = vector.shape_cast %118 : vector<1x16x16xf32> to vector<16x16xf32>
    %120 = vector.broadcast %117 : f32 to vector<16x16xf32>
    %121 = arith.mulf %120, %119 : vector<16x16xf32>
    %122 = arith.addf %116, %121 : vector<16x16xf32>
    %c65 = arith.constant 65 : index
    %123 = memref.load %arg5[%c65] : memref<144xf32, #tpu.memory_space<smem>>
    %124 = vector.extract_strided_slice %12 {offsets = [1, 0, 0], sizes = [1, 16, 16], strides = [1, 1, 1]} : vector<4x16x16xf32> to vector<1x16x16xf32>
    %125 = vector.shape_cast %124 : vector<1x16x16xf32> to vector<16x16xf32>
    %126 = vector.broadcast %123 : f32 to vector<16x16xf32>
    %127 = arith.mulf %126, %125 : vector<16x16xf32>
    %128 = arith.addf %122, %127 : vector<16x16xf32>
    %c66 = arith.constant 66 : index
    %129 = memref.load %arg5[%c66] : memref<144xf32, #tpu.memory_space<smem>>
    %130 = vector.extract_strided_slice %12 {offsets = [2, 0, 0], sizes = [1, 16, 16], strides = [1, 1, 1]} : vector<4x16x16xf32> to vector<1x16x16xf32>
    %131 = vector.shape_cast %130 : vector<1x16x16xf32> to vector<16x16xf32>
    %132 = vector.broadcast %129 : f32 to vector<16x16xf32>
    %133 = arith.mulf %132, %131 : vector<16x16xf32>
    %134 = arith.addf %128, %133 : vector<16x16xf32>
    %c67 = arith.constant 67 : index
    %135 = memref.load %arg5[%c67] : memref<144xf32, #tpu.memory_space<smem>>
    %136 = vector.extract_strided_slice %12 {offsets = [3, 0, 0], sizes = [1, 16, 16], strides = [1, 1, 1]} : vector<4x16x16xf32> to vector<1x16x16xf32>
    %137 = vector.shape_cast %136 : vector<1x16x16xf32> to vector<16x16xf32>
    %138 = vector.broadcast %135 : f32 to vector<16x16xf32>
    %139 = arith.mulf %138, %137 : vector<16x16xf32>
    %140 = arith.addf %134, %139 : vector<16x16xf32>
    %c80 = arith.constant 80 : index
    %141 = memref.load %arg5[%c80] : memref<144xf32, #tpu.memory_space<smem>>
    %142 = vector.extract_strided_slice %13 {offsets = [0, 0, 0], sizes = [1, 16, 16], strides = [1, 1, 1]} : vector<4x16x16xf32> to vector<1x16x16xf32>
    %143 = vector.shape_cast %142 : vector<1x16x16xf32> to vector<16x16xf32>
    %144 = vector.broadcast %141 : f32 to vector<16x16xf32>
    %145 = arith.mulf %144, %143 : vector<16x16xf32>
    %146 = arith.addf %140, %145 : vector<16x16xf32>
    %c81 = arith.constant 81 : index
    %147 = memref.load %arg5[%c81] : memref<144xf32, #tpu.memory_space<smem>>
    %148 = vector.extract_strided_slice %13 {offsets = [1, 0, 0], sizes = [1, 16, 16], strides = [1, 1, 1]} : vector<4x16x16xf32> to vector<1x16x16xf32>
    %149 = vector.shape_cast %148 : vector<1x16x16xf32> to vector<16x16xf32>
    %150 = vector.broadcast %147 : f32 to vector<16x16xf32>
    %151 = arith.mulf %150, %149 : vector<16x16xf32>
    %152 = arith.addf %146, %151 : vector<16x16xf32>
    %c82 = arith.constant 82 : index
    %153 = memref.load %arg5[%c82] : memref<144xf32, #tpu.memory_space<smem>>
    %154 = vector.extract_strided_slice %13 {offsets = [2, 0, 0], sizes = [1, 16, 16], strides = [1, 1, 1]} : vector<4x16x16xf32> to vector<1x16x16xf32>
    %155 = vector.shape_cast %154 : vector<1x16x16xf32> to vector<16x16xf32>
    %156 = vector.broadcast %153 : f32 to vector<16x16xf32>
    %157 = arith.mulf %156, %155 : vector<16x16xf32>
    %158 = arith.addf %152, %157 : vector<16x16xf32>
    %c83 = arith.constant 83 : index
    %159 = memref.load %arg5[%c83] : memref<144xf32, #tpu.memory_space<smem>>
    %160 = vector.extract_strided_slice %13 {offsets = [3, 0, 0], sizes = [1, 16, 16], strides = [1, 1, 1]} : vector<4x16x16xf32> to vector<1x16x16xf32>
    %161 = vector.shape_cast %160 : vector<1x16x16xf32> to vector<16x16xf32>
    %162 = vector.broadcast %159 : f32 to vector<16x16xf32>
    %163 = arith.mulf %162, %161 : vector<16x16xf32>
    %164 = arith.addf %158, %163 : vector<16x16xf32>
    %c96 = arith.constant 96 : index
    %165 = memref.load %arg5[%c96] : memref<144xf32, #tpu.memory_space<smem>>
    %166 = vector.extract_strided_slice %14 {offsets = [0, 0, 0], sizes = [1, 16, 16], strides = [1, 1, 1]} : vector<4x16x16xf32> to vector<1x16x16xf32>
    %167 = vector.shape_cast %166 : vector<1x16x16xf32> to vector<16x16xf32>
    %168 = vector.broadcast %165 : f32 to vector<16x16xf32>
    %169 = arith.mulf %168, %167 : vector<16x16xf32>
    %170 = arith.addf %164, %169 : vector<16x16xf32>
    %c97 = arith.constant 97 : index
    %171 = memref.load %arg5[%c97] : memref<144xf32, #tpu.memory_space<smem>>
    %172 = vector.extract_strided_slice %14 {offsets = [1, 0, 0], sizes = [1, 16, 16], strides = [1, 1, 1]} : vector<4x16x16xf32> to vector<1x16x16xf32>
    %173 = vector.shape_cast %172 : vector<1x16x16xf32> to vector<16x16xf32>
    %174 = vector.broadcast %171 : f32 to vector<16x16xf32>
    %175 = arith.mulf %174, %173 : vector<16x16xf32>
    %176 = arith.addf %170, %175 : vector<16x16xf32>
    %c98 = arith.constant 98 : index
    %177 = memref.load %arg5[%c98] : memref<144xf32, #tpu.memory_space<smem>>
    %178 = vector.extract_strided_slice %14 {offsets = [2, 0, 0], sizes = [1, 16, 16], strides = [1, 1, 1]} : vector<4x16x16xf32> to vector<1x16x16xf32>
    %179 = vector.shape_cast %178 : vector<1x16x16xf32> to vector<16x16xf32>
    %180 = vector.broadcast %177 : f32 to vector<16x16xf32>
    %181 = arith.mulf %180, %179 : vector<16x16xf32>
    %182 = arith.addf %176, %181 : vector<16x16xf32>
    %c99 = arith.constant 99 : index
    %183 = memref.load %arg5[%c99] : memref<144xf32, #tpu.memory_space<smem>>
    %184 = vector.extract_strided_slice %14 {offsets = [3, 0, 0], sizes = [1, 16, 16], strides = [1, 1, 1]} : vector<4x16x16xf32> to vector<1x16x16xf32>
    %185 = vector.shape_cast %184 : vector<1x16x16xf32> to vector<16x16xf32>
    %186 = vector.broadcast %183 : f32 to vector<16x16xf32>
    %187 = arith.mulf %186, %185 : vector<16x16xf32>
    %188 = arith.addf %182, %187 : vector<16x16xf32>
    %c112 = arith.constant 112 : index
    %189 = memref.load %arg5[%c112] : memref<144xf32, #tpu.memory_space<smem>>
    %190 = vector.extract_strided_slice %15 {offsets = [0, 0, 0], sizes = [1, 16, 16], strides = [1, 1, 1]} : vector<4x16x16xf32> to vector<1x16x16xf32>
    %191 = vector.shape_cast %190 : vector<1x16x16xf32> to vector<16x16xf32>
    %192 = vector.broadcast %189 : f32 to vector<16x16xf32>
    %193 = arith.mulf %192, %191 : vector<16x16xf32>
    %194 = arith.addf %188, %193 : vector<16x16xf32>
    %c113 = arith.constant 113 : index
    %195 = memref.load %arg5[%c113] : memref<144xf32, #tpu.memory_space<smem>>
    %196 = vector.extract_strided_slice %15 {offsets = [1, 0, 0], sizes = [1, 16, 16], strides = [1, 1, 1]} : vector<4x16x16xf32> to vector<1x16x16xf32>
    %197 = vector.shape_cast %196 : vector<1x16x16xf32> to vector<16x16xf32>
    %198 = vector.broadcast %195 : f32 to vector<16x16xf32>
    %199 = arith.mulf %198, %197 : vector<16x16xf32>
    %200 = arith.addf %194, %199 : vector<16x16xf32>
    %c114 = arith.constant 114 : index
    %201 = memref.load %arg5[%c114] : memref<144xf32, #tpu.memory_space<smem>>
    %202 = vector.extract_strided_slice %15 {offsets = [2, 0, 0], sizes = [1, 16, 16], strides = [1, 1, 1]} : vector<4x16x16xf32> to vector<1x16x16xf32>
    %203 = vector.shape_cast %202 : vector<1x16x16xf32> to vector<16x16xf32>
    %204 = vector.broadcast %201 : f32 to vector<16x16xf32>
    %205 = arith.mulf %204, %203 : vector<16x16xf32>
    %206 = arith.addf %200, %205 : vector<16x16xf32>
    %c115 = arith.constant 115 : index
    %207 = memref.load %arg5[%c115] : memref<144xf32, #tpu.memory_space<smem>>
    %208 = vector.extract_strided_slice %15 {offsets = [3, 0, 0], sizes = [1, 16, 16], strides = [1, 1, 1]} : vector<4x16x16xf32> to vector<1x16x16xf32>
    %209 = vector.shape_cast %208 : vector<1x16x16xf32> to vector<16x16xf32>
    %210 = vector.broadcast %207 : f32 to vector<16x16xf32>
    %211 = arith.mulf %210, %209 : vector<16x16xf32>
    %212 = arith.addf %206, %211 : vector<16x16xf32>
    %c128 = arith.constant 128 : index
    %213 = memref.load %arg5[%c128] : memref<144xf32, #tpu.memory_space<smem>>
    %214 = vector.extract_strided_slice %16 {offsets = [0, 0, 0], sizes = [1, 16, 16], strides = [1, 1, 1]} : vector<4x16x16xf32> to vector<1x16x16xf32>
    %215 = vector.shape_cast %214 : vector<1x16x16xf32> to vector<16x16xf32>
    %216 = vector.broadcast %213 : f32 to vector<16x16xf32>
    %217 = arith.mulf %216, %215 : vector<16x16xf32>
    %218 = arith.addf %212, %217 : vector<16x16xf32>
    %c129 = arith.constant 129 : index
    %219 = memref.load %arg5[%c129] : memref<144xf32, #tpu.memory_space<smem>>
    %220 = vector.extract_strided_slice %16 {offsets = [1, 0, 0], sizes = [1, 16, 16], strides = [1, 1, 1]} : vector<4x16x16xf32> to vector<1x16x16xf32>
    %221 = vector.shape_cast %220 : vector<1x16x16xf32> to vector<16x16xf32>
    %222 = vector.broadcast %219 : f32 to vector<16x16xf32>
    %223 = arith.mulf %222, %221 : vector<16x16xf32>
    %224 = arith.addf %218, %223 : vector<16x16xf32>
    %c130 = arith.constant 130 : index
    %225 = memref.load %arg5[%c130] : memref<144xf32, #tpu.memory_space<smem>>
    %226 = vector.extract_strided_slice %16 {offsets = [2, 0, 0], sizes = [1, 16, 16], strides = [1, 1, 1]} : vector<4x16x16xf32> to vector<1x16x16xf32>
    %227 = vector.shape_cast %226 : vector<1x16x16xf32> to vector<16x16xf32>
    %228 = vector.broadcast %225 : f32 to vector<16x16xf32>
    %229 = arith.mulf %228, %227 : vector<16x16xf32>
    %230 = arith.addf %224, %229 : vector<16x16xf32>
    %c131 = arith.constant 131 : index
    %231 = memref.load %arg5[%c131] : memref<144xf32, #tpu.memory_space<smem>>
    %232 = vector.extract_strided_slice %16 {offsets = [3, 0, 0], sizes = [1, 16, 16], strides = [1, 1, 1]} : vector<4x16x16xf32> to vector<1x16x16xf32>
    %233 = vector.shape_cast %232 : vector<1x16x16xf32> to vector<16x16xf32>
    %234 = vector.broadcast %231 : f32 to vector<16x16xf32>
    %235 = arith.mulf %234, %233 : vector<16x16xf32>
    %236 = arith.addf %230, %235 : vector<16x16xf32>
    %c0_17 = arith.constant 0 : index
    %c0_18 = arith.constant 0 : index
    %c0_19 = arith.constant 0 : index
    %c0_20 = arith.constant 0 : index
    %237 = vector.load %arg7[%c0_17, %c0_18, %c0_19, %c0_20] : memref<1x4x16x16xf32, #tpu.memory_space<vmem>>, vector<1x1x16x16xf32>
    %238 = vector.shape_cast %237 : vector<1x1x16x16xf32> to vector<16x16xf32>
    %239 = vector.shape_cast %236 : vector<16x16xf32> to vector<1x1x16x16xf32>
    tpu.vector_store %arg7[%c0_17, %c0_18, %c0_19, %c0_20], %239 {strides = array<i32>} : memref<1x4x16x16xf32, #tpu.memory_space<vmem>>, vector<1x1x16x16xf32>,
    %cst_21 = arith.constant 0.000000e+00 : f32
    %240 = vector.broadcast %cst_21 : f32 to vector<16x16xf32>
    %c1_22 = arith.constant 1 : index
    %241 = memref.load %arg6[%c1_22] : memref<4xf32, #tpu.memory_space<smem>>
    %242 = vector.broadcast %241 : f32 to vector<16x16xf32>
    %243 = arith.addf %240, %242 : vector<16x16xf32>
    %c4 = arith.constant 4 : index
    %244 = memref.load %arg5[%c4] : memref<144xf32, #tpu.memory_space<smem>>
    %245 = vector.extract_strided_slice %8 {offsets = [0, 0, 0], sizes = [1, 16, 16], strides = [1, 1, 1]} : vector<4x16x16xf32> to vector<1x16x16xf32>
    %246 = vector.shape_cast %245 : vector<1x16x16xf32> to vector<16x16xf32>
    %247 = vector.broadcast %244 : f32 to vector<16x16xf32>
    %248 = arith.mulf %247, %246 : vector<16x16xf32>
    %249 = arith.addf %243, %248 : vector<16x16xf32>
    %c5 = arith.constant 5 : index
    %250 = memref.load %arg5[%c5] : memref<144xf32, #tpu.memory_space<smem>>
    %251 = vector.extract_strided_slice %8 {offsets = [1, 0, 0], sizes = [1, 16, 16], strides = [1, 1, 1]} : vector<4x16x16xf32> to vector<1x16x16xf32>
    %252 = vector.shape_cast %251 : vector<1x16x16xf32> to vector<16x16xf32>
    %253 = vector.broadcast %250 : f32 to vector<16x16xf32>
    %254 = arith.mulf %253, %252 : vector<16x16xf32>
    %255 = arith.addf %249, %254 : vector<16x16xf32>
    %c6 = arith.constant 6 : index
    %256 = memref.load %arg5[%c6] : memref<144xf32, #tpu.memory_space<smem>>
    %257 = vector.extract_strided_slice %8 {offsets = [2, 0, 0], sizes = [1, 16, 16], strides = [1, 1, 1]} : vector<4x16x16xf32> to vector<1x16x16xf32>
    %258 = vector.shape_cast %257 : vector<1x16x16xf32> to vector<16x16xf32>
    %259 = vector.broadcast %256 : f32 to vector<16x16xf32>
    %260 = arith.mulf %259, %258 : vector<16x16xf32>
    %261 = arith.addf %255, %260 : vector<16x16xf32>
    %c7 = arith.constant 7 : index
    %262 = memref.load %arg5[%c7] : memref<144xf32, #tpu.memory_space<smem>>
    %263 = vector.extract_strided_slice %8 {offsets = [3, 0, 0], sizes = [1, 16, 16], strides = [1, 1, 1]} : vector<4x16x16xf32> to vector<1x16x16xf32>
    %264 = vector.shape_cast %263 : vector<1x16x16xf32> to vector<16x16xf32>
    %265 = vector.broadcast %262 : f32 to vector<16x16xf32>
    %266 = arith.mulf %265, %264 : vector<16x16xf32>
    %267 = arith.addf %261, %266 : vector<16x16xf32>
    %c20 = arith.constant 20 : index
    %268 = memref.load %arg5[%c20] : memref<144xf32, #tpu.memory_space<smem>>
    %269 = vector.extract_strided_slice %9 {offsets = [0, 0, 0], sizes = [1, 16, 16], strides = [1, 1, 1]} : vector<4x16x16xf32> to vector<1x16x16xf32>
    %270 = vector.shape_cast %269 : vector<1x16x16xf32> to vector<16x16xf32>
    %271 = vector.broadcast %268 : f32 to vector<16x16xf32>
    %272 = arith.mulf %271, %270 : vector<16x16xf32>
    %273 = arith.addf %267, %272 : vector<16x16xf32>
    %c21 = arith.constant 21 : index
    %274 = memref.load %arg5[%c21] : memref<144xf32, #tpu.memory_space<smem>>
    %275 = vector.extract_strided_slice %9 {offsets = [1, 0, 0], sizes = [1, 16, 16], strides = [1, 1, 1]} : vector<4x16x16xf32> to vector<1x16x16xf32>
    %276 = vector.shape_cast %275 : vector<1x16x16xf32> to vector<16x16xf32>
    %277 = vector.broadcast %274 : f32 to vector<16x16xf32>
    %278 = arith.mulf %277, %276 : vector<16x16xf32>
    %279 = arith.addf %273, %278 : vector<16x16xf32>
    %c22 = arith.constant 22 : index
    %280 = memref.load %arg5[%c22] : memref<144xf32, #tpu.memory_space<smem>>
    %281 = vector.extract_strided_slice %9 {offsets = [2, 0, 0], sizes = [1, 16, 16], strides = [1, 1, 1]} : vector<4x16x16xf32> to vector<1x16x16xf32>
    %282 = vector.shape_cast %281 : vector<1x16x16xf32> to vector<16x16xf32>
    %283 = vector.broadcast %280 : f32 to vector<16x16xf32>
    %284 = arith.mulf %283, %282 : vector<16x16xf32>
    %285 = arith.addf %279, %284 : vector<16x16xf32>
    %c23 = arith.constant 23 : index
    %286 = memref.load %arg5[%c23] : memref<144xf32, #tpu.memory_space<smem>>
    %287 = vector.extract_strided_slice %9 {offsets = [3, 0, 0], sizes = [1, 16, 16], strides = [1, 1, 1]} : vector<4x16x16xf32> to vector<1x16x16xf32>
    %288 = vector.shape_cast %287 : vector<1x16x16xf32> to vector<16x16xf32>
    %289 = vector.broadcast %286 : f32 to vector<16x16xf32>
    %290 = arith.mulf %289, %288 : vector<16x16xf32>
    %291 = arith.addf %285, %290 : vector<16x16xf32>
    %c36 = arith.constant 36 : index
    %292 = memref.load %arg5[%c36] : memref<144xf32, #tpu.memory_space<smem>>
    %293 = vector.extract_strided_slice %10 {offsets = [0, 0, 0], sizes = [1, 16, 16], strides = [1, 1, 1]} : vector<4x16x16xf32> to vector<1x16x16xf32>
    %294 = vector.shape_cast %293 : vector<1x16x16xf32> to vector<16x16xf32>
    %295 = vector.broadcast %292 : f32 to vector<16x16xf32>
    %296 = arith.mulf %295, %294 : vector<16x16xf32>
    %297 = arith.addf %291, %296 : vector<16x16xf32>
    %c37 = arith.constant 37 : index
    %298 = memref.load %arg5[%c37] : memref<144xf32, #tpu.memory_space<smem>>
    %299 = vector.extract_strided_slice %10 {offsets = [1, 0, 0], sizes = [1, 16, 16], strides = [1, 1, 1]} : vector<4x16x16xf32> to vector<1x16x16xf32>
    %300 = vector.shape_cast %299 : vector<1x16x16xf32> to vector<16x16xf32>
    %301 = vector.broadcast %298 : f32 to vector<16x16xf32>
    %302 = arith.mulf %301, %300 : vector<16x16xf32>
    %303 = arith.addf %297, %302 : vector<16x16xf32>
    %c38 = arith.constant 38 : index
    %304 = memref.load %arg5[%c38] : memref<144xf32, #tpu.memory_space<smem>>
    %305 = vector.extract_strided_slice %10 {offsets = [2, 0, 0], sizes = [1, 16, 16], strides = [1, 1, 1]} : vector<4x16x16xf32> to vector<1x16x16xf32>
    %306 = vector.shape_cast %305 : vector<1x16x16xf32> to vector<16x16xf32>
    %307 = vector.broadcast %304 : f32 to vector<16x16xf32>
    %308 = arith.mulf %307, %306 : vector<16x16xf32>
    %309 = arith.addf %303, %308 : vector<16x16xf32>
    %c39 = arith.constant 39 : index
    %310 = memref.load %arg5[%c39] : memref<144xf32, #tpu.memory_space<smem>>
    %311 = vector.extract_strided_slice %10 {offsets = [3, 0, 0], sizes = [1, 16, 16], strides = [1, 1, 1]} : vector<4x16x16xf32> to vector<1x16x16xf32>
    %312 = vector.shape_cast %311 : vector<1x16x16xf32> to vector<16x16xf32>
    %313 = vector.broadcast %310 : f32 to vector<16x16xf32>
    %314 = arith.mulf %313, %312 : vector<16x16xf32>
    %315 = arith.addf %309, %314 : vector<16x16xf32>
    %c52 = arith.constant 52 : index
    %316 = memref.load %arg5[%c52] : memref<144xf32, #tpu.memory_space<smem>>
    %317 = vector.extract_strided_slice %11 {offsets = [0, 0, 0], sizes = [1, 16, 16], strides = [1, 1, 1]} : vector<4x16x16xf32> to vector<1x16x16xf32>
    %318 = vector.shape_cast %317 : vector<1x16x16xf32> to vector<16x16xf32>
    %319 = vector.broadcast %316 : f32 to vector<16x16xf32>
    %320 = arith.mulf %319, %318 : vector<16x16xf32>
    %321 = arith.addf %315, %320 : vector<16x16xf32>
    %c53 = arith.constant 53 : index
    %322 = memref.load %arg5[%c53] : memref<144xf32, #tpu.memory_space<smem>>
    %323 = vector.extract_strided_slice %11 {offsets = [1, 0, 0], sizes = [1, 16, 16], strides = [1, 1, 1]} : vector<4x16x16xf32> to vector<1x16x16xf32>
    %324 = vector.shape_cast %323 : vector<1x16x16xf32> to vector<16x16xf32>
    %325 = vector.broadcast %322 : f32 to vector<16x16xf32>
    %326 = arith.mulf %325, %324 : vector<16x16xf32>
    %327 = arith.addf %321, %326 : vector<16x16xf32>
    %c54 = arith.constant 54 : index
    %328 = memref.load %arg5[%c54] : memref<144xf32, #tpu.memory_space<smem>>
    %329 = vector.extract_strided_slice %11 {offsets = [2, 0, 0], sizes = [1, 16, 16], strides = [1, 1, 1]} : vector<4x16x16xf32> to vector<1x16x16xf32>
    %330 = vector.shape_cast %329 : vector<1x16x16xf32> to vector<16x16xf32>
    %331 = vector.broadcast %328 : f32 to vector<16x16xf32>
    %332 = arith.mulf %331, %330 : vector<16x16xf32>
    %333 = arith.addf %327, %332 : vector<16x16xf32>
    %c55 = arith.constant 55 : index
    %334 = memref.load %arg5[%c55] : memref<144xf32, #tpu.memory_space<smem>>
    %335 = vector.extract_strided_slice %11 {offsets = [3, 0, 0], sizes = [1, 16, 16], strides = [1, 1, 1]} : vector<4x16x16xf32> to vector<1x16x16xf32>
    %336 = vector.shape_cast %335 : vector<1x16x16xf32> to vector<16x16xf32>
    %337 = vector.broadcast %334 : f32 to vector<16x16xf32>
    %338 = arith.mulf %337, %336 : vector<16x16xf32>
    %339 = arith.addf %333, %338 : vector<16x16xf32>
    %c68 = arith.constant 68 : index
    %340 = memref.load %arg5[%c68] : memref<144xf32, #tpu.memory_space<smem>>
    %341 = vector.extract_strided_slice %12 {offsets = [0, 0, 0], sizes = [1, 16, 16], strides = [1, 1, 1]} : vector<4x16x16xf32> to vector<1x16x16xf32>
    %342 = vector.shape_cast %341 : vector<1x16x16xf32> to vector<16x16xf32>
    %343 = vector.broadcast %340 : f32 to vector<16x16xf32>
    %344 = arith.mulf %343, %342 : vector<16x16xf32>
    %345 = arith.addf %339, %344 : vector<16x16xf32>
    %c69 = arith.constant 69 : index
    %346 = memref.load %arg5[%c69] : memref<144xf32, #tpu.memory_space<smem>>
    %347 = vector.extract_strided_slice %12 {offsets = [1, 0, 0], sizes = [1, 16, 16], strides = [1, 1, 1]} : vector<4x16x16xf32> to vector<1x16x16xf32>
    %348 = vector.shape_cast %347 : vector<1x16x16xf32> to vector<16x16xf32>
    %349 = vector.broadcast %346 : f32 to vector<16x16xf32>
    %350 = arith.mulf %349, %348 : vector<16x16xf32>
    %351 = arith.addf %345, %350 : vector<16x16xf32>
    %c70 = arith.constant 70 : index
    %352 = memref.load %arg5[%c70] : memref<144xf32, #tpu.memory_space<smem>>
    %353 = vector.extract_strided_slice %12 {offsets = [2, 0, 0], sizes = [1, 16, 16], strides = [1, 1, 1]} : vector<4x16x16xf32> to vector<1x16x16xf32>
    %354 = vector.shape_cast %353 : vector<1x16x16xf32> to vector<16x16xf32>
    %355 = vector.broadcast %352 : f32 to vector<16x16xf32>
    %356 = arith.mulf %355, %354 : vector<16x16xf32>
    %357 = arith.addf %351, %356 : vector<16x16xf32>
    %c71 = arith.constant 71 : index
    %358 = memref.load %arg5[%c71] : memref<144xf32, #tpu.memory_space<smem>>
    %359 = vector.extract_strided_slice %12 {offsets = [3, 0, 0], sizes = [1, 16, 16], strides = [1, 1, 1]} : vector<4x16x16xf32> to vector<1x16x16xf32>
    %360 = vector.shape_cast %359 : vector<1x16x16xf32> to vector<16x16xf32>
    %361 = vector.broadcast %358 : f32 to vector<16x16xf32>
    %362 = arith.mulf %361, %360 : vector<16x16xf32>
    %363 = arith.addf %357, %362 : vector<16x16xf32>
    %c84 = arith.constant 84 : index
    %364 = memref.load %arg5[%c84] : memref<144xf32, #tpu.memory_space<smem>>
    %365 = vector.extract_strided_slice %13 {offsets = [0, 0, 0], sizes = [1, 16, 16], strides = [1, 1, 1]} : vector<4x16x16xf32> to vector<1x16x16xf32>
    %366 = vector.shape_cast %365 : vector<1x16x16xf32> to vector<16x16xf32>
    %367 = vector.broadcast %364 : f32 to vector<16x16xf32>
    %368 = arith.mulf %367, %366 : vector<16x16xf32>
    %369 = arith.addf %363, %368 : vector<16x16xf32>
    %c85 = arith.constant 85 : index
    %370 = memref.load %arg5[%c85] : memref<144xf32, #tpu.memory_space<smem>>
    %371 = vector.extract_strided_slice %13 {offsets = [1, 0, 0], sizes = [1, 16, 16], strides = [1, 1, 1]} : vector<4x16x16xf32> to vector<1x16x16xf32>
    %372 = vector.shape_cast %371 : vector<1x16x16xf32> to vector<16x16xf32>
    %373 = vector.broadcast %370 : f32 to vector<16x16xf32>
    %374 = arith.mulf %373, %372 : vector<16x16xf32>
    %375 = arith.addf %369, %374 : vector<16x16xf32>
    %c86 = arith.constant 86 : index
    %376 = memref.load %arg5[%c86] : memref<144xf32, #tpu.memory_space<smem>>
    %377 = vector.extract_strided_slice %13 {offsets = [2, 0, 0], sizes = [1, 16, 16], strides = [1, 1, 1]} : vector<4x16x16xf32> to vector<1x16x16xf32>
    %378 = vector.shape_cast %377 : vector<1x16x16xf32> to vector<16x16xf32>
    %379 = vector.broadcast %376 : f32 to vector<16x16xf32>
    %380 = arith.mulf %379, %378 : vector<16x16xf32>
    %381 = arith.addf %375, %380 : vector<16x16xf32>
    %c87 = arith.constant 87 : index
    %382 = memref.load %arg5[%c87] : memref<144xf32, #tpu.memory_space<smem>>
    %383 = vector.extract_strided_slice %13 {offsets = [3, 0, 0], sizes = [1, 16, 16], strides = [1, 1, 1]} : vector<4x16x16xf32> to vector<1x16x16xf32>
    %384 = vector.shape_cast %383 : vector<1x16x16xf32> to vector<16x16xf32>
    %385 = vector.broadcast %382 : f32 to vector<16x16xf32>
    %386 = arith.mulf %385, %384 : vector<16x16xf32>
    %387 = arith.addf %381, %386 : vector<16x16xf32>
    %c100 = arith.constant 100 : index
    %388 = memref.load %arg5[%c100] : memref<144xf32, #tpu.memory_space<smem>>
    %389 = vector.extract_strided_slice %14 {offsets = [0, 0, 0], sizes = [1, 16, 16], strides = [1, 1, 1]} : vector<4x16x16xf32> to vector<1x16x16xf32>
    %390 = vector.shape_cast %389 : vector<1x16x16xf32> to vector<16x16xf32>
    %391 = vector.broadcast %388 : f32 to vector<16x16xf32>
    %392 = arith.mulf %391, %390 : vector<16x16xf32>
    %393 = arith.addf %387, %392 : vector<16x16xf32>
    %c101 = arith.constant 101 : index
    %394 = memref.load %arg5[%c101] : memref<144xf32, #tpu.memory_space<smem>>
    %395 = vector.extract_strided_slice %14 {offsets = [1, 0, 0], sizes = [1, 16, 16], strides = [1, 1, 1]} : vector<4x16x16xf32> to vector<1x16x16xf32>
    %396 = vector.shape_cast %395 : vector<1x16x16xf32> to vector<16x16xf32>
    %397 = vector.broadcast %394 : f32 to vector<16x16xf32>
    %398 = arith.mulf %397, %396 : vector<16x16xf32>
    %399 = arith.addf %393, %398 : vector<16x16xf32>
    %c102 = arith.constant 102 : index
    %400 = memref.load %arg5[%c102] : memref<144xf32, #tpu.memory_space<smem>>
    %401 = vector.extract_strided_slice %14 {offsets = [2, 0, 0], sizes = [1, 16, 16], strides = [1, 1, 1]} : vector<4x16x16xf32> to vector<1x16x16xf32>
    %402 = vector.shape_cast %401 : vector<1x16x16xf32> to vector<16x16xf32>
    %403 = vector.broadcast %400 : f32 to vector<16x16xf32>
    %404 = arith.mulf %403, %402 : vector<16x16xf32>
    %405 = arith.addf %399, %404 : vector<16x16xf32>
    %c103 = arith.constant 103 : index
    %406 = memref.load %arg5[%c103] : memref<144xf32, #tpu.memory_space<smem>>
    %407 = vector.extract_strided_slice %14 {offsets = [3, 0, 0], sizes = [1, 16, 16], strides = [1, 1, 1]} : vector<4x16x16xf32> to vector<1x16x16xf32>
    %408 = vector.shape_cast %407 : vector<1x16x16xf32> to vector<16x16xf32>
    %409 = vector.broadcast %406 : f32 to vector<16x16xf32>
    %410 = arith.mulf %409, %408 : vector<16x16xf32>
    %411 = arith.addf %405, %410 : vector<16x16xf32>
    %c116 = arith.constant 116 : index
    %412 = memref.load %arg5[%c116] : memref<144xf32, #tpu.memory_space<smem>>
    %413 = vector.extract_strided_slice %15 {offsets = [0, 0, 0], sizes = [1, 16, 16], strides = [1, 1, 1]} : vector<4x16x16xf32> to vector<1x16x16xf32>
    %414 = vector.shape_cast %413 : vector<1x16x16xf32> to vector<16x16xf32>
    %415 = vector.broadcast %412 : f32 to vector<16x16xf32>
    %416 = arith.mulf %415, %414 : vector<16x16xf32>
    %417 = arith.addf %411, %416 : vector<16x16xf32>
    %c117 = arith.constant 117 : index
    %418 = memref.load %arg5[%c117] : memref<144xf32, #tpu.memory_space<smem>>
    %419 = vector.extract_strided_slice %15 {offsets = [1, 0, 0], sizes = [1, 16, 16], strides = [1, 1, 1]} : vector<4x16x16xf32> to vector<1x16x16xf32>
    %420 = vector.shape_cast %419 : vector<1x16x16xf32> to vector<16x16xf32>
    %421 = vector.broadcast %418 : f32 to vector<16x16xf32>
    %422 = arith.mulf %421, %420 : vector<16x16xf32>
    %423 = arith.addf %417, %422 : vector<16x16xf32>
    %c118 = arith.constant 118 : index
    %424 = memref.load %arg5[%c118] : memref<144xf32, #tpu.memory_space<smem>>
    %425 = vector.extract_strided_slice %15 {offsets = [2, 0, 0], sizes = [1, 16, 16], strides = [1, 1, 1]} : vector<4x16x16xf32> to vector<1x16x16xf32>
    %426 = vector.shape_cast %425 : vector<1x16x16xf32> to vector<16x16xf32>
    %427 = vector.broadcast %424 : f32 to vector<16x16xf32>
    %428 = arith.mulf %427, %426 : vector<16x16xf32>
    %429 = arith.addf %423, %428 : vector<16x16xf32>
    %c119 = arith.constant 119 : index
    %430 = memref.load %arg5[%c119] : memref<144xf32, #tpu.memory_space<smem>>
    %431 = vector.extract_strided_slice %15 {offsets = [3, 0, 0], sizes = [1, 16, 16], strides = [1, 1, 1]} : vector<4x16x16xf32> to vector<1x16x16xf32>
    %432 = vector.shape_cast %431 : vector<1x16x16xf32> to vector<16x16xf32>
    %433 = vector.broadcast %430 : f32 to vector<16x16xf32>
    %434 = arith.mulf %433, %432 : vector<16x16xf32>
    %435 = arith.addf %429, %434 : vector<16x16xf32>
    %c132 = arith.constant 132 : index
    %436 = memref.load %arg5[%c132] : memref<144xf32, #tpu.memory_space<smem>>
    %437 = vector.extract_strided_slice %16 {offsets = [0, 0, 0], sizes = [1, 16, 16], strides = [1, 1, 1]} : vector<4x16x16xf32> to vector<1x16x16xf32>
    %438 = vector.shape_cast %437 : vector<1x16x16xf32> to vector<16x16xf32>
    %439 = vector.broadcast %436 : f32 to vector<16x16xf32>
    %440 = arith.mulf %439, %438 : vector<16x16xf32>
    %441 = arith.addf %435, %440 : vector<16x16xf32>
    %c133 = arith.constant 133 : index
    %442 = memref.load %arg5[%c133] : memref<144xf32, #tpu.memory_space<smem>>
    %443 = vector.extract_strided_slice %16 {offsets = [1, 0, 0], sizes = [1, 16, 16], strides = [1, 1, 1]} : vector<4x16x16xf32> to vector<1x16x16xf32>
    %444 = vector.shape_cast %443 : vector<1x16x16xf32> to vector<16x16xf32>
    %445 = vector.broadcast %442 : f32 to vector<16x16xf32>
    %446 = arith.mulf %445, %444 : vector<16x16xf32>
    %447 = arith.addf %441, %446 : vector<16x16xf32>
    %c134 = arith.constant 134 : index
    %448 = memref.load %arg5[%c134] : memref<144xf32, #tpu.memory_space<smem>>
    %449 = vector.extract_strided_slice %16 {offsets = [2, 0, 0], sizes = [1, 16, 16], strides = [1, 1, 1]} : vector<4x16x16xf32> to vector<1x16x16xf32>
    %450 = vector.shape_cast %449 : vector<1x16x16xf32> to vector<16x16xf32>
    %451 = vector.broadcast %448 : f32 to vector<16x16xf32>
    %452 = arith.mulf %451, %450 : vector<16x16xf32>
    %453 = arith.addf %447, %452 : vector<16x16xf32>
    %c135 = arith.constant 135 : index
    %454 = memref.load %arg5[%c135] : memref<144xf32, #tpu.memory_space<smem>>
    %455 = vector.extract_strided_slice %16 {offsets = [3, 0, 0], sizes = [1, 16, 16], strides = [1, 1, 1]} : vector<4x16x16xf32> to vector<1x16x16xf32>
    %456 = vector.shape_cast %455 : vector<1x16x16xf32> to vector<16x16xf32>
    %457 = vector.broadcast %454 : f32 to vector<16x16xf32>
    %458 = arith.mulf %457, %456 : vector<16x16xf32>
    %459 = arith.addf %453, %458 : vector<16x16xf32>
    %c0_23 = arith.constant 0 : index
    %c1_24 = arith.constant 1 : index
    %c0_25 = arith.constant 0 : index
    %c0_26 = arith.constant 0 : index
    %460 = vector.load %arg7[%c0_23, %c1_24, %c0_25, %c0_26] : memref<1x4x16x16xf32, #tpu.memory_space<vmem>>, vector<1x1x16x16xf32>
    %461 = vector.shape_cast %460 : vector<1x1x16x16xf32> to vector<16x16xf32>
    %462 = vector.shape_cast %459 : vector<16x16xf32> to vector<1x1x16x16xf32>
    tpu.vector_store %arg7[%c0_23, %c1_24, %c0_25, %c0_26], %462 {strides = array<i32>} : memref<1x4x16x16xf32, #tpu.memory_space<vmem>>, vector<1x1x16x16xf32>,
    %cst_27 = arith.constant 0.000000e+00 : f32
    %463 = vector.broadcast %cst_27 : f32 to vector<16x16xf32>
    %c2_28 = arith.constant 2 : index
    %464 = memref.load %arg6[%c2_28] : memref<4xf32, #tpu.memory_space<smem>>
    %465 = vector.broadcast %464 : f32 to vector<16x16xf32>
    %466 = arith.addf %463, %465 : vector<16x16xf32>
    %c8 = arith.constant 8 : index
    %467 = memref.load %arg5[%c8] : memref<144xf32, #tpu.memory_space<smem>>
    %468 = vector.extract_strided_slice %8 {offsets = [0, 0, 0], sizes = [1, 16, 16], strides = [1, 1, 1]} : vector<4x16x16xf32> to vector<1x16x16xf32>
    %469 = vector.shape_cast %468 : vector<1x16x16xf32> to vector<16x16xf32>
    %470 = vector.broadcast %467 : f32 to vector<16x16xf32>
    %471 = arith.mulf %470, %469 : vector<16x16xf32>
    %472 = arith.addf %466, %471 : vector<16x16xf32>
    %c9 = arith.constant 9 : index
    %473 = memref.load %arg5[%c9] : memref<144xf32, #tpu.memory_space<smem>>
    %474 = vector.extract_strided_slice %8 {offsets = [1, 0, 0], sizes = [1, 16, 16], strides = [1, 1, 1]} : vector<4x16x16xf32> to vector<1x16x16xf32>
    %475 = vector.shape_cast %474 : vector<1x16x16xf32> to vector<16x16xf32>
    %476 = vector.broadcast %473 : f32 to vector<16x16xf32>
    %477 = arith.mulf %476, %475 : vector<16x16xf32>
    %478 = arith.addf %472, %477 : vector<16x16xf32>
    %c10 = arith.constant 10 : index
    %479 = memref.load %arg5[%c10] : memref<144xf32, #tpu.memory_space<smem>>
    %480 = vector.extract_strided_slice %8 {offsets = [2, 0, 0], sizes = [1, 16, 16], strides = [1, 1, 1]} : vector<4x16x16xf32> to vector<1x16x16xf32>
    %481 = vector.shape_cast %480 : vector<1x16x16xf32> to vector<16x16xf32>
    %482 = vector.broadcast %479 : f32 to vector<16x16xf32>
    %483 = arith.mulf %482, %481 : vector<16x16xf32>
    %484 = arith.addf %478, %483 : vector<16x16xf32>
    %c11 = arith.constant 11 : index
    %485 = memref.load %arg5[%c11] : memref<144xf32, #tpu.memory_space<smem>>
    %486 = vector.extract_strided_slice %8 {offsets = [3, 0, 0], sizes = [1, 16, 16], strides = [1, 1, 1]} : vector<4x16x16xf32> to vector<1x16x16xf32>
    %487 = vector.shape_cast %486 : vector<1x16x16xf32> to vector<16x16xf32>
    %488 = vector.broadcast %485 : f32 to vector<16x16xf32>
    %489 = arith.mulf %488, %487 : vector<16x16xf32>
    %490 = arith.addf %484, %489 : vector<16x16xf32>
    %c24 = arith.constant 24 : index
    %491 = memref.load %arg5[%c24] : memref<144xf32, #tpu.memory_space<smem>>
    %492 = vector.extract_strided_slice %9 {offsets = [0, 0, 0], sizes = [1, 16, 16], strides = [1, 1, 1]} : vector<4x16x16xf32> to vector<1x16x16xf32>
    %493 = vector.shape_cast %492 : vector<1x16x16xf32> to vector<16x16xf32>
    %494 = vector.broadcast %491 : f32 to vector<16x16xf32>
    %495 = arith.mulf %494, %493 : vector<16x16xf32>
    %496 = arith.addf %490, %495 : vector<16x16xf32>
    %c25 = arith.constant 25 : index
    %497 = memref.load %arg5[%c25] : memref<144xf32, #tpu.memory_space<smem>>
    %498 = vector.extract_strided_slice %9 {offsets = [1, 0, 0], sizes = [1, 16, 16], strides = [1, 1, 1]} : vector<4x16x16xf32> to vector<1x16x16xf32>
    %499 = vector.shape_cast %498 : vector<1x16x16xf32> to vector<16x16xf32>
    %500 = vector.broadcast %497 : f32 to vector<16x16xf32>
    %501 = arith.mulf %500, %499 : vector<16x16xf32>
    %502 = arith.addf %496, %501 : vector<16x16xf32>
    %c26 = arith.constant 26 : index
    %503 = memref.load %arg5[%c26] : memref<144xf32, #tpu.memory_space<smem>>
    %504 = vector.extract_strided_slice %9 {offsets = [2, 0, 0], sizes = [1, 16, 16], strides = [1, 1, 1]} : vector<4x16x16xf32> to vector<1x16x16xf32>
    %505 = vector.shape_cast %504 : vector<1x16x16xf32> to vector<16x16xf32>
    %506 = vector.broadcast %503 : f32 to vector<16x16xf32>
    %507 = arith.mulf %506, %505 : vector<16x16xf32>
    %508 = arith.addf %502, %507 : vector<16x16xf32>
    %c27 = arith.constant 27 : index
    %509 = memref.load %arg5[%c27] : memref<144xf32, #tpu.memory_space<smem>>
    %510 = vector.extract_strided_slice %9 {offsets = [3, 0, 0], sizes = [1, 16, 16], strides = [1, 1, 1]} : vector<4x16x16xf32> to vector<1x16x16xf32>
    %511 = vector.shape_cast %510 : vector<1x16x16xf32> to vector<16x16xf32>
    %512 = vector.broadcast %509 : f32 to vector<16x16xf32>
    %513 = arith.mulf %512, %511 : vector<16x16xf32>
    %514 = arith.addf %508, %513 : vector<16x16xf32>
    %c40 = arith.constant 40 : index
    %515 = memref.load %arg5[%c40] : memref<144xf32, #tpu.memory_space<smem>>
    %516 = vector.extract_strided_slice %10 {offsets = [0, 0, 0], sizes = [1, 16, 16], strides = [1, 1, 1]} : vector<4x16x16xf32> to vector<1x16x16xf32>
    %517 = vector.shape_cast %516 : vector<1x16x16xf32> to vector<16x16xf32>
    %518 = vector.broadcast %515 : f32 to vector<16x16xf32>
    %519 = arith.mulf %518, %517 : vector<16x16xf32>
    %520 = arith.addf %514, %519 : vector<16x16xf32>
    %c41 = arith.constant 41 : index
    %521 = memref.load %arg5[%c41] : memref<144xf32, #tpu.memory_space<smem>>
    %522 = vector.extract_strided_slice %10 {offsets = [1, 0, 0], sizes = [1, 16, 16], strides = [1, 1, 1]} : vector<4x16x16xf32> to vector<1x16x16xf32>
    %523 = vector.shape_cast %522 : vector<1x16x16xf32> to vector<16x16xf32>
    %524 = vector.broadcast %521 : f32 to vector<16x16xf32>
    %525 = arith.mulf %524, %523 : vector<16x16xf32>
    %526 = arith.addf %520, %525 : vector<16x16xf32>
    %c42 = arith.constant 42 : index
    %527 = memref.load %arg5[%c42] : memref<144xf32, #tpu.memory_space<smem>>
    %528 = vector.extract_strided_slice %10 {offsets = [2, 0, 0], sizes = [1, 16, 16], strides = [1, 1, 1]} : vector<4x16x16xf32> to vector<1x16x16xf32>
    %529 = vector.shape_cast %528 : vector<1x16x16xf32> to vector<16x16xf32>
    %530 = vector.broadcast %527 : f32 to vector<16x16xf32>
    %531 = arith.mulf %530, %529 : vector<16x16xf32>
    %532 = arith.addf %526, %531 : vector<16x16xf32>
    %c43 = arith.constant 43 : index
    %533 = memref.load %arg5[%c43] : memref<144xf32, #tpu.memory_space<smem>>
    %534 = vector.extract_strided_slice %10 {offsets = [3, 0, 0], sizes = [1, 16, 16], strides = [1, 1, 1]} : vector<4x16x16xf32> to vector<1x16x16xf32>
    %535 = vector.shape_cast %534 : vector<1x16x16xf32> to vector<16x16xf32>
    %536 = vector.broadcast %533 : f32 to vector<16x16xf32>
    %537 = arith.mulf %536, %535 : vector<16x16xf32>
    %538 = arith.addf %532, %537 : vector<16x16xf32>
    %c56 = arith.constant 56 : index
    %539 = memref.load %arg5[%c56] : memref<144xf32, #tpu.memory_space<smem>>
    %540 = vector.extract_strided_slice %11 {offsets = [0, 0, 0], sizes = [1, 16, 16], strides = [1, 1, 1]} : vector<4x16x16xf32> to vector<1x16x16xf32>
    %541 = vector.shape_cast %540 : vector<1x16x16xf32> to vector<16x16xf32>
    %542 = vector.broadcast %539 : f32 to vector<16x16xf32>
    %543 = arith.mulf %542, %541 : vector<16x16xf32>
    %544 = arith.addf %538, %543 : vector<16x16xf32>
    %c57 = arith.constant 57 : index
    %545 = memref.load %arg5[%c57] : memref<144xf32, #tpu.memory_space<smem>>
    %546 = vector.extract_strided_slice %11 {offsets = [1, 0, 0], sizes = [1, 16, 16], strides = [1, 1, 1]} : vector<4x16x16xf32> to vector<1x16x16xf32>
    %547 = vector.shape_cast %546 : vector<1x16x16xf32> to vector<16x16xf32>
    %548 = vector.broadcast %545 : f32 to vector<16x16xf32>
    %549 = arith.mulf %548, %547 : vector<16x16xf32>
    %550 = arith.addf %544, %549 : vector<16x16xf32>
    %c58 = arith.constant 58 : index
    %551 = memref.load %arg5[%c58] : memref<144xf32, #tpu.memory_space<smem>>
    %552 = vector.extract_strided_slice %11 {offsets = [2, 0, 0], sizes = [1, 16, 16], strides = [1, 1, 1]} : vector<4x16x16xf32> to vector<1x16x16xf32>
    %553 = vector.shape_cast %552 : vector<1x16x16xf32> to vector<16x16xf32>
    %554 = vector.broadcast %551 : f32 to vector<16x16xf32>
    %555 = arith.mulf %554, %553 : vector<16x16xf32>
    %556 = arith.addf %550, %555 : vector<16x16xf32>
    %c59 = arith.constant 59 : index
    %557 = memref.load %arg5[%c59] : memref<144xf32, #tpu.memory_space<smem>>
    %558 = vector.extract_strided_slice %11 {offsets = [3, 0, 0], sizes = [1, 16, 16], strides = [1, 1, 1]} : vector<4x16x16xf32> to vector<1x16x16xf32>
    %559 = vector.shape_cast %558 : vector<1x16x16xf32> to vector<16x16xf32>
    %560 = vector.broadcast %557 : f32 to vector<16x16xf32>
    %561 = arith.mulf %560, %559 : vector<16x16xf32>
    %562 = arith.addf %556, %561 : vector<16x16xf32>
    %c72 = arith.constant 72 : index
    %563 = memref.load %arg5[%c72] : memref<144xf32, #tpu.memory_space<smem>>
    %564 = vector.extract_strided_slice %12 {offsets = [0, 0, 0], sizes = [1, 16, 16], strides = [1, 1, 1]} : vector<4x16x16xf32> to vector<1x16x16xf32>
    %565 = vector.shape_cast %564 : vector<1x16x16xf32> to vector<16x16xf32>
    %566 = vector.broadcast %563 : f32 to vector<16x16xf32>
    %567 = arith.mulf %566, %565 : vector<16x16xf32>
    %568 = arith.addf %562, %567 : vector<16x16xf32>
    %c73 = arith.constant 73 : index
    %569 = memref.load %arg5[%c73] : memref<144xf32, #tpu.memory_space<smem>>
    %570 = vector.extract_strided_slice %12 {offsets = [1, 0, 0], sizes = [1, 16, 16], strides = [1, 1, 1]} : vector<4x16x16xf32> to vector<1x16x16xf32>
    %571 = vector.shape_cast %570 : vector<1x16x16xf32> to vector<16x16xf32>
    %572 = vector.broadcast %569 : f32 to vector<16x16xf32>
    %573 = arith.mulf %572, %571 : vector<16x16xf32>
    %574 = arith.addf %568, %573 : vector<16x16xf32>
    %c74 = arith.constant 74 : index
    %575 = memref.load %arg5[%c74] : memref<144xf32, #tpu.memory_space<smem>>
    %576 = vector.extract_strided_slice %12 {offsets = [2, 0, 0], sizes = [1, 16, 16], strides = [1, 1, 1]} : vector<4x16x16xf32> to vector<1x16x16xf32>
    %577 = vector.shape_cast %576 : vector<1x16x16xf32> to vector<16x16xf32>
    %578 = vector.broadcast %575 : f32 to vector<16x16xf32>
    %579 = arith.mulf %578, %577 : vector<16x16xf32>
    %580 = arith.addf %574, %579 : vector<16x16xf32>
    %c75 = arith.constant 75 : index
    %581 = memref.load %arg5[%c75] : memref<144xf32, #tpu.memory_space<smem>>
    %582 = vector.extract_strided_slice %12 {offsets = [3, 0, 0], sizes = [1, 16, 16], strides = [1, 1, 1]} : vector<4x16x16xf32> to vector<1x16x16xf32>
    %583 = vector.shape_cast %582 : vector<1x16x16xf32> to vector<16x16xf32>
    %584 = vector.broadcast %581 : f32 to vector<16x16xf32>
    %585 = arith.mulf %584, %583 : vector<16x16xf32>
    %586 = arith.addf %580, %585 : vector<16x16xf32>
    %c88 = arith.constant 88 : index
    %587 = memref.load %arg5[%c88] : memref<144xf32, #tpu.memory_space<smem>>
    %588 = vector.extract_strided_slice %13 {offsets = [0, 0, 0], sizes = [1, 16, 16], strides = [1, 1, 1]} : vector<4x16x16xf32> to vector<1x16x16xf32>
    %589 = vector.shape_cast %588 : vector<1x16x16xf32> to vector<16x16xf32>
    %590 = vector.broadcast %587 : f32 to vector<16x16xf32>
    %591 = arith.mulf %590, %589 : vector<16x16xf32>
    %592 = arith.addf %586, %591 : vector<16x16xf32>
    %c89 = arith.constant 89 : index
    %593 = memref.load %arg5[%c89] : memref<144xf32, #tpu.memory_space<smem>>
    %594 = vector.extract_strided_slice %13 {offsets = [1, 0, 0], sizes = [1, 16, 16], strides = [1, 1, 1]} : vector<4x16x16xf32> to vector<1x16x16xf32>
    %595 = vector.shape_cast %594 : vector<1x16x16xf32> to vector<16x16xf32>
    %596 = vector.broadcast %593 : f32 to vector<16x16xf32>
    %597 = arith.mulf %596, %595 : vector<16x16xf32>
    %598 = arith.addf %592, %597 : vector<16x16xf32>
    %c90 = arith.constant 90 : index
    %599 = memref.load %arg5[%c90] : memref<144xf32, #tpu.memory_space<smem>>
    %600 = vector.extract_strided_slice %13 {offsets = [2, 0, 0], sizes = [1, 16, 16], strides = [1, 1, 1]} : vector<4x16x16xf32> to vector<1x16x16xf32>
    %601 = vector.shape_cast %600 : vector<1x16x16xf32> to vector<16x16xf32>
    %602 = vector.broadcast %599 : f32 to vector<16x16xf32>
    %603 = arith.mulf %602, %601 : vector<16x16xf32>
    %604 = arith.addf %598, %603 : vector<16x16xf32>
    %c91 = arith.constant 91 : index
    %605 = memref.load %arg5[%c91] : memref<144xf32, #tpu.memory_space<smem>>
    %606 = vector.extract_strided_slice %13 {offsets = [3, 0, 0], sizes = [1, 16, 16], strides = [1, 1, 1]} : vector<4x16x16xf32> to vector<1x16x16xf32>
    %607 = vector.shape_cast %606 : vector<1x16x16xf32> to vector<16x16xf32>
    %608 = vector.broadcast %605 : f32 to vector<16x16xf32>
    %609 = arith.mulf %608, %607 : vector<16x16xf32>
    %610 = arith.addf %604, %609 : vector<16x16xf32>
    %c104 = arith.constant 104 : index
    %611 = memref.load %arg5[%c104] : memref<144xf32, #tpu.memory_space<smem>>
    %612 = vector.extract_strided_slice %14 {offsets = [0, 0, 0], sizes = [1, 16, 16], strides = [1, 1, 1]} : vector<4x16x16xf32> to vector<1x16x16xf32>
    %613 = vector.shape_cast %612 : vector<1x16x16xf32> to vector<16x16xf32>
    %614 = vector.broadcast %611 : f32 to vector<16x16xf32>
    %615 = arith.mulf %614, %613 : vector<16x16xf32>
    %616 = arith.addf %610, %615 : vector<16x16xf32>
    %c105 = arith.constant 105 : index
    %617 = memref.load %arg5[%c105] : memref<144xf32, #tpu.memory_space<smem>>
    %618 = vector.extract_strided_slice %14 {offsets = [1, 0, 0], sizes = [1, 16, 16], strides = [1, 1, 1]} : vector<4x16x16xf32> to vector<1x16x16xf32>
    %619 = vector.shape_cast %618 : vector<1x16x16xf32> to vector<16x16xf32>
    %620 = vector.broadcast %617 : f32 to vector<16x16xf32>
    %621 = arith.mulf %620, %619 : vector<16x16xf32>
    %622 = arith.addf %616, %621 : vector<16x16xf32>
    %c106 = arith.constant 106 : index
    %623 = memref.load %arg5[%c106] : memref<144xf32, #tpu.memory_space<smem>>
    %624 = vector.extract_strided_slice %14 {offsets = [2, 0, 0], sizes = [1, 16, 16], strides = [1, 1, 1]} : vector<4x16x16xf32> to vector<1x16x16xf32>
    %625 = vector.shape_cast %624 : vector<1x16x16xf32> to vector<16x16xf32>
    %626 = vector.broadcast %623 : f32 to vector<16x16xf32>
    %627 = arith.mulf %626, %625 : vector<16x16xf32>
    %628 = arith.addf %622, %627 : vector<16x16xf32>
    %c107 = arith.constant 107 : index
    %629 = memref.load %arg5[%c107] : memref<144xf32, #tpu.memory_space<smem>>
    %630 = vector.extract_strided_slice %14 {offsets = [3, 0, 0], sizes = [1, 16, 16], strides = [1, 1, 1]} : vector<4x16x16xf32> to vector<1x16x16xf32>
    %631 = vector.shape_cast %630 : vector<1x16x16xf32> to vector<16x16xf32>
    %632 = vector.broadcast %629 : f32 to vector<16x16xf32>
    %633 = arith.mulf %632, %631 : vector<16x16xf32>
    %634 = arith.addf %628, %633 : vector<16x16xf32>
    %c120 = arith.constant 120 : index
    %635 = memref.load %arg5[%c120] : memref<144xf32, #tpu.memory_space<smem>>
    %636 = vector.extract_strided_slice %15 {offsets = [0, 0, 0], sizes = [1, 16, 16], strides = [1, 1, 1]} : vector<4x16x16xf32> to vector<1x16x16xf32>
    %637 = vector.shape_cast %636 : vector<1x16x16xf32> to vector<16x16xf32>
    %638 = vector.broadcast %635 : f32 to vector<16x16xf32>
    %639 = arith.mulf %638, %637 : vector<16x16xf32>
    %640 = arith.addf %634, %639 : vector<16x16xf32>
    %c121 = arith.constant 121 : index
    %641 = memref.load %arg5[%c121] : memref<144xf32, #tpu.memory_space<smem>>
    %642 = vector.extract_strided_slice %15 {offsets = [1, 0, 0], sizes = [1, 16, 16], strides = [1, 1, 1]} : vector<4x16x16xf32> to vector<1x16x16xf32>
    %643 = vector.shape_cast %642 : vector<1x16x16xf32> to vector<16x16xf32>
    %644 = vector.broadcast %641 : f32 to vector<16x16xf32>
    %645 = arith.mulf %644, %643 : vector<16x16xf32>
    %646 = arith.addf %640, %645 : vector<16x16xf32>
    %c122 = arith.constant 122 : index
    %647 = memref.load %arg5[%c122] : memref<144xf32, #tpu.memory_space<smem>>
    %648 = vector.extract_strided_slice %15 {offsets = [2, 0, 0], sizes = [1, 16, 16], strides = [1, 1, 1]} : vector<4x16x16xf32> to vector<1x16x16xf32>
    %649 = vector.shape_cast %648 : vector<1x16x16xf32> to vector<16x16xf32>
    %650 = vector.broadcast %647 : f32 to vector<16x16xf32>
    %651 = arith.mulf %650, %649 : vector<16x16xf32>
    %652 = arith.addf %646, %651 : vector<16x16xf32>
    %c123 = arith.constant 123 : index
    %653 = memref.load %arg5[%c123] : memref<144xf32, #tpu.memory_space<smem>>
    %654 = vector.extract_strided_slice %15 {offsets = [3, 0, 0], sizes = [1, 16, 16], strides = [1, 1, 1]} : vector<4x16x16xf32> to vector<1x16x16xf32>
    %655 = vector.shape_cast %654 : vector<1x16x16xf32> to vector<16x16xf32>
    %656 = vector.broadcast %653 : f32 to vector<16x16xf32>
    %657 = arith.mulf %656, %655 : vector<16x16xf32>
    %658 = arith.addf %652, %657 : vector<16x16xf32>
    %c136 = arith.constant 136 : index
    %659 = memref.load %arg5[%c136] : memref<144xf32, #tpu.memory_space<smem>>
    %660 = vector.extract_strided_slice %16 {offsets = [0, 0, 0], sizes = [1, 16, 16], strides = [1, 1, 1]} : vector<4x16x16xf32> to vector<1x16x16xf32>
    %661 = vector.shape_cast %660 : vector<1x16x16xf32> to vector<16x16xf32>
    %662 = vector.broadcast %659 : f32 to vector<16x16xf32>
    %663 = arith.mulf %662, %661 : vector<16x16xf32>
    %664 = arith.addf %658, %663 : vector<16x16xf32>
    %c137 = arith.constant 137 : index
    %665 = memref.load %arg5[%c137] : memref<144xf32, #tpu.memory_space<smem>>
    %666 = vector.extract_strided_slice %16 {offsets = [1, 0, 0], sizes = [1, 16, 16], strides = [1, 1, 1]} : vector<4x16x16xf32> to vector<1x16x16xf32>
    %667 = vector.shape_cast %666 : vector<1x16x16xf32> to vector<16x16xf32>
    %668 = vector.broadcast %665 : f32 to vector<16x16xf32>
    %669 = arith.mulf %668, %667 : vector<16x16xf32>
    %670 = arith.addf %664, %669 : vector<16x16xf32>
    %c138 = arith.constant 138 : index
    %671 = memref.load %arg5[%c138] : memref<144xf32, #tpu.memory_space<smem>>
    %672 = vector.extract_strided_slice %16 {offsets = [2, 0, 0], sizes = [1, 16, 16], strides = [1, 1, 1]} : vector<4x16x16xf32> to vector<1x16x16xf32>
    %673 = vector.shape_cast %672 : vector<1x16x16xf32> to vector<16x16xf32>
    %674 = vector.broadcast %671 : f32 to vector<16x16xf32>
    %675 = arith.mulf %674, %673 : vector<16x16xf32>
    %676 = arith.addf %670, %675 : vector<16x16xf32>
    %c139 = arith.constant 139 : index
    %677 = memref.load %arg5[%c139] : memref<144xf32, #tpu.memory_space<smem>>
    %678 = vector.extract_strided_slice %16 {offsets = [3, 0, 0], sizes = [1, 16, 16], strides = [1, 1, 1]} : vector<4x16x16xf32> to vector<1x16x16xf32>
    %679 = vector.shape_cast %678 : vector<1x16x16xf32> to vector<16x16xf32>
    %680 = vector.broadcast %677 : f32 to vector<16x16xf32>
    %681 = arith.mulf %680, %679 : vector<16x16xf32>
    %682 = arith.addf %676, %681 : vector<16x16xf32>
    %c0_29 = arith.constant 0 : index
    %c2_30 = arith.constant 2 : index
    %c0_31 = arith.constant 0 : index
    %c0_32 = arith.constant 0 : index
    %683 = vector.load %arg7[%c0_29, %c2_30, %c0_31, %c0_32] : memref<1x4x16x16xf32, #tpu.memory_space<vmem>>, vector<1x1x16x16xf32>
    %684 = vector.shape_cast %683 : vector<1x1x16x16xf32> to vector<16x16xf32>
    %685 = vector.shape_cast %682 : vector<16x16xf32> to vector<1x1x16x16xf32>
    tpu.vector_store %arg7[%c0_29, %c2_30, %c0_31, %c0_32], %685 {strides = array<i32>} : memref<1x4x16x16xf32, #tpu.memory_space<vmem>>, vector<1x1x16x16xf32>,
    %cst_33 = arith.constant 0.000000e+00 : f32
    %686 = vector.broadcast %cst_33 : f32 to vector<16x16xf32>
    %c3_34 = arith.constant 3 : index
    %687 = memref.load %arg6[%c3_34] : memref<4xf32, #tpu.memory_space<smem>>
    %688 = vector.broadcast %687 : f32 to vector<16x16xf32>
    %689 = arith.addf %686, %688 : vector<16x16xf32>
    %c12 = arith.constant 12 : index
    %690 = memref.load %arg5[%c12] : memref<144xf32, #tpu.memory_space<smem>>
    %691 = vector.extract_strided_slice %8 {offsets = [0, 0, 0], sizes = [1, 16, 16], strides = [1, 1, 1]} : vector<4x16x16xf32> to vector<1x16x16xf32>
    %692 = vector.shape_cast %691 : vector<1x16x16xf32> to vector<16x16xf32>
    %693 = vector.broadcast %690 : f32 to vector<16x16xf32>
    %694 = arith.mulf %693, %692 : vector<16x16xf32>
    %695 = arith.addf %689, %694 : vector<16x16xf32>
    %c13 = arith.constant 13 : index
    %696 = memref.load %arg5[%c13] : memref<144xf32, #tpu.memory_space<smem>>
    %697 = vector.extract_strided_slice %8 {offsets = [1, 0, 0], sizes = [1, 16, 16], strides = [1, 1, 1]} : vector<4x16x16xf32> to vector<1x16x16xf32>
    %698 = vector.shape_cast %697 : vector<1x16x16xf32> to vector<16x16xf32>
    %699 = vector.broadcast %696 : f32 to vector<16x16xf32>
    %700 = arith.mulf %699, %698 : vector<16x16xf32>
    %701 = arith.addf %695, %700 : vector<16x16xf32>
    %c14 = arith.constant 14 : index
    %702 = memref.load %arg5[%c14] : memref<144xf32, #tpu.memory_space<smem>>
    %703 = vector.extract_strided_slice %8 {offsets = [2, 0, 0], sizes = [1, 16, 16], strides = [1, 1, 1]} : vector<4x16x16xf32> to vector<1x16x16xf32>
    %704 = vector.shape_cast %703 : vector<1x16x16xf32> to vector<16x16xf32>
    %705 = vector.broadcast %702 : f32 to vector<16x16xf32>
    %706 = arith.mulf %705, %704 : vector<16x16xf32>
    %707 = arith.addf %701, %706 : vector<16x16xf32>
    %c15 = arith.constant 15 : index
    %708 = memref.load %arg5[%c15] : memref<144xf32, #tpu.memory_space<smem>>
    %709 = vector.extract_strided_slice %8 {offsets = [3, 0, 0], sizes = [1, 16, 16], strides = [1, 1, 1]} : vector<4x16x16xf32> to vector<1x16x16xf32>
    %710 = vector.shape_cast %709 : vector<1x16x16xf32> to vector<16x16xf32>
    %711 = vector.broadcast %708 : f32 to vector<16x16xf32>
    %712 = arith.mulf %711, %710 : vector<16x16xf32>
    %713 = arith.addf %707, %712 : vector<16x16xf32>
    %c28 = arith.constant 28 : index
    %714 = memref.load %arg5[%c28] : memref<144xf32, #tpu.memory_space<smem>>
    %715 = vector.extract_strided_slice %9 {offsets = [0, 0, 0], sizes = [1, 16, 16], strides = [1, 1, 1]} : vector<4x16x16xf32> to vector<1x16x16xf32>
    %716 = vector.shape_cast %715 : vector<1x16x16xf32> to vector<16x16xf32>
    %717 = vector.broadcast %714 : f32 to vector<16x16xf32>
    %718 = arith.mulf %717, %716 : vector<16x16xf32>
    %719 = arith.addf %713, %718 : vector<16x16xf32>
    %c29 = arith.constant 29 : index
    %720 = memref.load %arg5[%c29] : memref<144xf32, #tpu.memory_space<smem>>
    %721 = vector.extract_strided_slice %9 {offsets = [1, 0, 0], sizes = [1, 16, 16], strides = [1, 1, 1]} : vector<4x16x16xf32> to vector<1x16x16xf32>
    %722 = vector.shape_cast %721 : vector<1x16x16xf32> to vector<16x16xf32>
    %723 = vector.broadcast %720 : f32 to vector<16x16xf32>
    %724 = arith.mulf %723, %722 : vector<16x16xf32>
    %725 = arith.addf %719, %724 : vector<16x16xf32>
    %c30 = arith.constant 30 : index
    %726 = memref.load %arg5[%c30] : memref<144xf32, #tpu.memory_space<smem>>
    %727 = vector.extract_strided_slice %9 {offsets = [2, 0, 0], sizes = [1, 16, 16], strides = [1, 1, 1]} : vector<4x16x16xf32> to vector<1x16x16xf32>
    %728 = vector.shape_cast %727 : vector<1x16x16xf32> to vector<16x16xf32>
    %729 = vector.broadcast %726 : f32 to vector<16x16xf32>
    %730 = arith.mulf %729, %728 : vector<16x16xf32>
    %731 = arith.addf %725, %730 : vector<16x16xf32>
    %c31 = arith.constant 31 : index
    %732 = memref.load %arg5[%c31] : memref<144xf32, #tpu.memory_space<smem>>
    %733 = vector.extract_strided_slice %9 {offsets = [3, 0, 0], sizes = [1, 16, 16], strides = [1, 1, 1]} : vector<4x16x16xf32> to vector<1x16x16xf32>
    %734 = vector.shape_cast %733 : vector<1x16x16xf32> to vector<16x16xf32>
    %735 = vector.broadcast %732 : f32 to vector<16x16xf32>
    %736 = arith.mulf %735, %734 : vector<16x16xf32>
    %737 = arith.addf %731, %736 : vector<16x16xf32>
    %c44 = arith.constant 44 : index
    %738 = memref.load %arg5[%c44] : memref<144xf32, #tpu.memory_space<smem>>
    %739 = vector.extract_strided_slice %10 {offsets = [0, 0, 0], sizes = [1, 16, 16], strides = [1, 1, 1]} : vector<4x16x16xf32> to vector<1x16x16xf32>
    %740 = vector.shape_cast %739 : vector<1x16x16xf32> to vector<16x16xf32>
    %741 = vector.broadcast %738 : f32 to vector<16x16xf32>
    %742 = arith.mulf %741, %740 : vector<16x16xf32>
    %743 = arith.addf %737, %742 : vector<16x16xf32>
    %c45 = arith.constant 45 : index
    %744 = memref.load %arg5[%c45] : memref<144xf32, #tpu.memory_space<smem>>
    %745 = vector.extract_strided_slice %10 {offsets = [1, 0, 0], sizes = [1, 16, 16], strides = [1, 1, 1]} : vector<4x16x16xf32> to vector<1x16x16xf32>
    %746 = vector.shape_cast %745 : vector<1x16x16xf32> to vector<16x16xf32>
    %747 = vector.broadcast %744 : f32 to vector<16x16xf32>
    %748 = arith.mulf %747, %746 : vector<16x16xf32>
    %749 = arith.addf %743, %748 : vector<16x16xf32>
    %c46 = arith.constant 46 : index
    %750 = memref.load %arg5[%c46] : memref<144xf32, #tpu.memory_space<smem>>
    %751 = vector.extract_strided_slice %10 {offsets = [2, 0, 0], sizes = [1, 16, 16], strides = [1, 1, 1]} : vector<4x16x16xf32> to vector<1x16x16xf32>
    %752 = vector.shape_cast %751 : vector<1x16x16xf32> to vector<16x16xf32>
    %753 = vector.broadcast %750 : f32 to vector<16x16xf32>
    %754 = arith.mulf %753, %752 : vector<16x16xf32>
    %755 = arith.addf %749, %754 : vector<16x16xf32>
    %c47 = arith.constant 47 : index
    %756 = memref.load %arg5[%c47] : memref<144xf32, #tpu.memory_space<smem>>
    %757 = vector.extract_strided_slice %10 {offsets = [3, 0, 0], sizes = [1, 16, 16], strides = [1, 1, 1]} : vector<4x16x16xf32> to vector<1x16x16xf32>
    %758 = vector.shape_cast %757 : vector<1x16x16xf32> to vector<16x16xf32>
    %759 = vector.broadcast %756 : f32 to vector<16x16xf32>
    %760 = arith.mulf %759, %758 : vector<16x16xf32>
    %761 = arith.addf %755, %760 : vector<16x16xf32>
    %c60 = arith.constant 60 : index
    %762 = memref.load %arg5[%c60] : memref<144xf32, #tpu.memory_space<smem>>
    %763 = vector.extract_strided_slice %11 {offsets = [0, 0, 0], sizes = [1, 16, 16], strides = [1, 1, 1]} : vector<4x16x16xf32> to vector<1x16x16xf32>
    %764 = vector.shape_cast %763 : vector<1x16x16xf32> to vector<16x16xf32>
    %765 = vector.broadcast %762 : f32 to vector<16x16xf32>
    %766 = arith.mulf %765, %764 : vector<16x16xf32>
    %767 = arith.addf %761, %766 : vector<16x16xf32>
    %c61 = arith.constant 61 : index
    %768 = memref.load %arg5[%c61] : memref<144xf32, #tpu.memory_space<smem>>
    %769 = vector.extract_strided_slice %11 {offsets = [1, 0, 0], sizes = [1, 16, 16], strides = [1, 1, 1]} : vector<4x16x16xf32> to vector<1x16x16xf32>
    %770 = vector.shape_cast %769 : vector<1x16x16xf32> to vector<16x16xf32>
    %771 = vector.broadcast %768 : f32 to vector<16x16xf32>
    %772 = arith.mulf %771, %770 : vector<16x16xf32>
    %773 = arith.addf %767, %772 : vector<16x16xf32>
    %c62 = arith.constant 62 : index
    %774 = memref.load %arg5[%c62] : memref<144xf32, #tpu.memory_space<smem>>
    %775 = vector.extract_strided_slice %11 {offsets = [2, 0, 0], sizes = [1, 16, 16], strides = [1, 1, 1]} : vector<4x16x16xf32> to vector<1x16x16xf32>
    %776 = vector.shape_cast %775 : vector<1x16x16xf32> to vector<16x16xf32>
    %777 = vector.broadcast %774 : f32 to vector<16x16xf32>
    %778 = arith.mulf %777, %776 : vector<16x16xf32>
    %779 = arith.addf %773, %778 : vector<16x16xf32>
    %c63 = arith.constant 63 : index
    %780 = memref.load %arg5[%c63] : memref<144xf32, #tpu.memory_space<smem>>
    %781 = vector.extract_strided_slice %11 {offsets = [3, 0, 0], sizes = [1, 16, 16], strides = [1, 1, 1]} : vector<4x16x16xf32> to vector<1x16x16xf32>
    %782 = vector.shape_cast %781 : vector<1x16x16xf32> to vector<16x16xf32>
    %783 = vector.broadcast %780 : f32 to vector<16x16xf32>
    %784 = arith.mulf %783, %782 : vector<16x16xf32>
    %785 = arith.addf %779, %784 : vector<16x16xf32>
    %c76 = arith.constant 76 : index
    %786 = memref.load %arg5[%c76] : memref<144xf32, #tpu.memory_space<smem>>
    %787 = vector.extract_strided_slice %12 {offsets = [0, 0, 0], sizes = [1, 16, 16], strides = [1, 1, 1]} : vector<4x16x16xf32> to vector<1x16x16xf32>
    %788 = vector.shape_cast %787 : vector<1x16x16xf32> to vector<16x16xf32>
    %789 = vector.broadcast %786 : f32 to vector<16x16xf32>
    %790 = arith.mulf %789, %788 : vector<16x16xf32>
    %791 = arith.addf %785, %790 : vector<16x16xf32>
    %c77 = arith.constant 77 : index
    %792 = memref.load %arg5[%c77] : memref<144xf32, #tpu.memory_space<smem>>
    %793 = vector.extract_strided_slice %12 {offsets = [1, 0, 0], sizes = [1, 16, 16], strides = [1, 1, 1]} : vector<4x16x16xf32> to vector<1x16x16xf32>
    %794 = vector.shape_cast %793 : vector<1x16x16xf32> to vector<16x16xf32>
    %795 = vector.broadcast %792 : f32 to vector<16x16xf32>
    %796 = arith.mulf %795, %794 : vector<16x16xf32>
    %797 = arith.addf %791, %796 : vector<16x16xf32>
    %c78 = arith.constant 78 : index
    %798 = memref.load %arg5[%c78] : memref<144xf32, #tpu.memory_space<smem>>
    %799 = vector.extract_strided_slice %12 {offsets = [2, 0, 0], sizes = [1, 16, 16], strides = [1, 1, 1]} : vector<4x16x16xf32> to vector<1x16x16xf32>
    %800 = vector.shape_cast %799 : vector<1x16x16xf32> to vector<16x16xf32>
    %801 = vector.broadcast %798 : f32 to vector<16x16xf32>
    %802 = arith.mulf %801, %800 : vector<16x16xf32>
    %803 = arith.addf %797, %802 : vector<16x16xf32>
    %c79 = arith.constant 79 : index
    %804 = memref.load %arg5[%c79] : memref<144xf32, #tpu.memory_space<smem>>
    %805 = vector.extract_strided_slice %12 {offsets = [3, 0, 0], sizes = [1, 16, 16], strides = [1, 1, 1]} : vector<4x16x16xf32> to vector<1x16x16xf32>
    %806 = vector.shape_cast %805 : vector<1x16x16xf32> to vector<16x16xf32>
    %807 = vector.broadcast %804 : f32 to vector<16x16xf32>
    %808 = arith.mulf %807, %806 : vector<16x16xf32>
    %809 = arith.addf %803, %808 : vector<16x16xf32>
    %c92 = arith.constant 92 : index
    %810 = memref.load %arg5[%c92] : memref<144xf32, #tpu.memory_space<smem>>
    %811 = vector.extract_strided_slice %13 {offsets = [0, 0, 0], sizes = [1, 16, 16], strides = [1, 1, 1]} : vector<4x16x16xf32> to vector<1x16x16xf32>
    %812 = vector.shape_cast %811 : vector<1x16x16xf32> to vector<16x16xf32>
    %813 = vector.broadcast %810 : f32 to vector<16x16xf32>
    %814 = arith.mulf %813, %812 : vector<16x16xf32>
    %815 = arith.addf %809, %814 : vector<16x16xf32>
    %c93 = arith.constant 93 : index
    %816 = memref.load %arg5[%c93] : memref<144xf32, #tpu.memory_space<smem>>
    %817 = vector.extract_strided_slice %13 {offsets = [1, 0, 0], sizes = [1, 16, 16], strides = [1, 1, 1]} : vector<4x16x16xf32> to vector<1x16x16xf32>
    %818 = vector.shape_cast %817 : vector<1x16x16xf32> to vector<16x16xf32>
    %819 = vector.broadcast %816 : f32 to vector<16x16xf32>
    %820 = arith.mulf %819, %818 : vector<16x16xf32>
    %821 = arith.addf %815, %820 : vector<16x16xf32>
    %c94 = arith.constant 94 : index
    %822 = memref.load %arg5[%c94] : memref<144xf32, #tpu.memory_space<smem>>
    %823 = vector.extract_strided_slice %13 {offsets = [2, 0, 0], sizes = [1, 16, 16], strides = [1, 1, 1]} : vector<4x16x16xf32> to vector<1x16x16xf32>
    %824 = vector.shape_cast %823 : vector<1x16x16xf32> to vector<16x16xf32>
    %825 = vector.broadcast %822 : f32 to vector<16x16xf32>
    %826 = arith.mulf %825, %824 : vector<16x16xf32>
    %827 = arith.addf %821, %826 : vector<16x16xf32>
    %c95 = arith.constant 95 : index
    %828 = memref.load %arg5[%c95] : memref<144xf32, #tpu.memory_space<smem>>
    %829 = vector.extract_strided_slice %13 {offsets = [3, 0, 0], sizes = [1, 16, 16], strides = [1, 1, 1]} : vector<4x16x16xf32> to vector<1x16x16xf32>
    %830 = vector.shape_cast %829 : vector<1x16x16xf32> to vector<16x16xf32>
    %831 = vector.broadcast %828 : f32 to vector<16x16xf32>
    %832 = arith.mulf %831, %830 : vector<16x16xf32>
    %833 = arith.addf %827, %832 : vector<16x16xf32>
    %c108 = arith.constant 108 : index
    %834 = memref.load %arg5[%c108] : memref<144xf32, #tpu.memory_space<smem>>
    %835 = vector.extract_strided_slice %14 {offsets = [0, 0, 0], sizes = [1, 16, 16], strides = [1, 1, 1]} : vector<4x16x16xf32> to vector<1x16x16xf32>
    %836 = vector.shape_cast %835 : vector<1x16x16xf32> to vector<16x16xf32>
    %837 = vector.broadcast %834 : f32 to vector<16x16xf32>
    %838 = arith.mulf %837, %836 : vector<16x16xf32>
    %839 = arith.addf %833, %838 : vector<16x16xf32>
    %c109 = arith.constant 109 : index
    %840 = memref.load %arg5[%c109] : memref<144xf32, #tpu.memory_space<smem>>
    %841 = vector.extract_strided_slice %14 {offsets = [1, 0, 0], sizes = [1, 16, 16], strides = [1, 1, 1]} : vector<4x16x16xf32> to vector<1x16x16xf32>
    %842 = vector.shape_cast %841 : vector<1x16x16xf32> to vector<16x16xf32>
    %843 = vector.broadcast %840 : f32 to vector<16x16xf32>
    %844 = arith.mulf %843, %842 : vector<16x16xf32>
    %845 = arith.addf %839, %844 : vector<16x16xf32>
    %c110 = arith.constant 110 : index
    %846 = memref.load %arg5[%c110] : memref<144xf32, #tpu.memory_space<smem>>
    %847 = vector.extract_strided_slice %14 {offsets = [2, 0, 0], sizes = [1, 16, 16], strides = [1, 1, 1]} : vector<4x16x16xf32> to vector<1x16x16xf32>
    %848 = vector.shape_cast %847 : vector<1x16x16xf32> to vector<16x16xf32>
    %849 = vector.broadcast %846 : f32 to vector<16x16xf32>
    %850 = arith.mulf %849, %848 : vector<16x16xf32>
    %851 = arith.addf %845, %850 : vector<16x16xf32>
    %c111 = arith.constant 111 : index
    %852 = memref.load %arg5[%c111] : memref<144xf32, #tpu.memory_space<smem>>
    %853 = vector.extract_strided_slice %14 {offsets = [3, 0, 0], sizes = [1, 16, 16], strides = [1, 1, 1]} : vector<4x16x16xf32> to vector<1x16x16xf32>
    %854 = vector.shape_cast %853 : vector<1x16x16xf32> to vector<16x16xf32>
    %855 = vector.broadcast %852 : f32 to vector<16x16xf32>
    %856 = arith.mulf %855, %854 : vector<16x16xf32>
    %857 = arith.addf %851, %856 : vector<16x16xf32>
    %c124 = arith.constant 124 : index
    %858 = memref.load %arg5[%c124] : memref<144xf32, #tpu.memory_space<smem>>
    %859 = vector.extract_strided_slice %15 {offsets = [0, 0, 0], sizes = [1, 16, 16], strides = [1, 1, 1]} : vector<4x16x16xf32> to vector<1x16x16xf32>
    %860 = vector.shape_cast %859 : vector<1x16x16xf32> to vector<16x16xf32>
    %861 = vector.broadcast %858 : f32 to vector<16x16xf32>
    %862 = arith.mulf %861, %860 : vector<16x16xf32>
    %863 = arith.addf %857, %862 : vector<16x16xf32>
    %c125 = arith.constant 125 : index
    %864 = memref.load %arg5[%c125] : memref<144xf32, #tpu.memory_space<smem>>
    %865 = vector.extract_strided_slice %15 {offsets = [1, 0, 0], sizes = [1, 16, 16], strides = [1, 1, 1]} : vector<4x16x16xf32> to vector<1x16x16xf32>
    %866 = vector.shape_cast %865 : vector<1x16x16xf32> to vector<16x16xf32>
    %867 = vector.broadcast %864 : f32 to vector<16x16xf32>
    %868 = arith.mulf %867, %866 : vector<16x16xf32>
    %869 = arith.addf %863, %868 : vector<16x16xf32>
    %c126 = arith.constant 126 : index
    %870 = memref.load %arg5[%c126] : memref<144xf32, #tpu.memory_space<smem>>
    %871 = vector.extract_strided_slice %15 {offsets = [2, 0, 0], sizes = [1, 16, 16], strides = [1, 1, 1]} : vector<4x16x16xf32> to vector<1x16x16xf32>
    %872 = vector.shape_cast %871 : vector<1x16x16xf32> to vector<16x16xf32>
    %873 = vector.broadcast %870 : f32 to vector<16x16xf32>
    %874 = arith.mulf %873, %872 : vector<16x16xf32>
    %875 = arith.addf %869, %874 : vector<16x16xf32>
    %c127 = arith.constant 127 : index
    %876 = memref.load %arg5[%c127] : memref<144xf32, #tpu.memory_space<smem>>
    %877 = vector.extract_strided_slice %15 {offsets = [3, 0, 0], sizes = [1, 16, 16], strides = [1, 1, 1]} : vector<4x16x16xf32> to vector<1x16x16xf32>
    %878 = vector.shape_cast %877 : vector<1x16x16xf32> to vector<16x16xf32>
    %879 = vector.broadcast %876 : f32 to vector<16x16xf32>
    %880 = arith.mulf %879, %878 : vector<16x16xf32>
    %881 = arith.addf %875, %880 : vector<16x16xf32>
    %c140 = arith.constant 140 : index
    %882 = memref.load %arg5[%c140] : memref<144xf32, #tpu.memory_space<smem>>
    %883 = vector.extract_strided_slice %16 {offsets = [0, 0, 0], sizes = [1, 16, 16], strides = [1, 1, 1]} : vector<4x16x16xf32> to vector<1x16x16xf32>
    %884 = vector.shape_cast %883 : vector<1x16x16xf32> to vector<16x16xf32>
    %885 = vector.broadcast %882 : f32 to vector<16x16xf32>
    %886 = arith.mulf %885, %884 : vector<16x16xf32>
    %887 = arith.addf %881, %886 : vector<16x16xf32>
    %c141 = arith.constant 141 : index
    %888 = memref.load %arg5[%c141] : memref<144xf32, #tpu.memory_space<smem>>
    %889 = vector.extract_strided_slice %16 {offsets = [1, 0, 0], sizes = [1, 16, 16], strides = [1, 1, 1]} : vector<4x16x16xf32> to vector<1x16x16xf32>
    %890 = vector.shape_cast %889 : vector<1x16x16xf32> to vector<16x16xf32>
    %891 = vector.broadcast %888 : f32 to vector<16x16xf32>
    %892 = arith.mulf %891, %890 : vector<16x16xf32>
    %893 = arith.addf %887, %892 : vector<16x16xf32>
    %c142 = arith.constant 142 : index
    %894 = memref.load %arg5[%c142] : memref<144xf32, #tpu.memory_space<smem>>
    %895 = vector.extract_strided_slice %16 {offsets = [2, 0, 0], sizes = [1, 16, 16], strides = [1, 1, 1]} : vector<4x16x16xf32> to vector<1x16x16xf32>
    %896 = vector.shape_cast %895 : vector<1x16x16xf32> to vector<16x16xf32>
    %897 = vector.broadcast %894 : f32 to vector<16x16xf32>
    %898 = arith.mulf %897, %896 : vector<16x16xf32>
    %899 = arith.addf %893, %898 : vector<16x16xf32>
    %c143 = arith.constant 143 : index
    %900 = memref.load %arg5[%c143] : memref<144xf32, #tpu.memory_space<smem>>
    %901 = vector.extract_strided_slice %16 {offsets = [3, 0, 0], sizes = [1, 16, 16], strides = [1, 1, 1]} : vector<4x16x16xf32> to vector<1x16x16xf32>
    %902 = vector.shape_cast %901 : vector<1x16x16xf32> to vector<16x16xf32>
    %903 = vector.broadcast %900 : f32 to vector<16x16xf32>
    %904 = arith.mulf %903, %902 : vector<16x16xf32>
    %905 = arith.addf %899, %904 : vector<16x16xf32>
    %c0_35 = arith.constant 0 : index
    %c3_36 = arith.constant 3 : index
    %c0_37 = arith.constant 0 : index
    %c0_38 = arith.constant 0 : index
    %906 = vector.load %arg7[%c0_35, %c3_36, %c0_37, %c0_38] : memref<1x4x16x16xf32, #tpu.memory_space<vmem>>, vector<1x1x16x16xf32>
    %907 = vector.shape_cast %906 : vector<1x1x16x16xf32> to vector<16x16xf32>
    %908 = vector.shape_cast %905 : vector<16x16xf32> to vector<1x1x16x16xf32>
    tpu.vector_store %arg7[%c0_35, %c3_36, %c0_37, %c0_38], %908 {strides = array<i32>} : memref<1x4x16x16xf32, #tpu.memory_space<vmem>>, vector<1x1x16x16xf32>,
    return
  }
  func.func @transform_0(%arg0: i32) -> (i32, i32, i32, i32) {
    %c0_i32 = arith.constant 0 : i32
    %c0_i32_0 = arith.constant 0 : i32
    %c0_i32_1 = arith.constant 0 : i32
    %c0_i32_2 = arith.constant 0 : i32
    return %arg0, %c0_i32, %c0_i32_0, %c0_i32_1 : i32, i32, i32, i32
  }
  func.func @transform_1(%arg0: i32) -> (i32, i32, i32, i32) {
    %c0_i32 = arith.constant 0 : i32
    %c0_i32_0 = arith.constant 0 : i32
    %c0_i32_1 = arith.constant 0 : i32
    %c0_i32_2 = arith.constant 0 : i32
    return %arg0, %c0_i32, %c0_i32_0, %c0_i32_1 : i32, i32, i32, i32
  }
  func.func @transform_2(%arg0: i32) -> (i32, i32, i32, i32) {
    %c0_i32 = arith.constant 0 : i32
    %c0_i32_0 = arith.constant 0 : i32
    %c0_i32_1 = arith.constant 0 : i32
    %c0_i32_2 = arith.constant 0 : i32
    return %arg0, %c0_i32, %c0_i32_0, %c0_i32_1 : i32, i32, i32, i32
  }
  func.func @transform_3(%arg0: i32) -> (i32, i32, i32, i32) {
    %c0_i32 = arith.constant 0 : i32
    %c0_i32_0 = arith.constant 0 : i32
    %c0_i32_1 = arith.constant 0 : i32
    %c0_i32_2 = arith.constant 0 : i32
    return %arg0, %c0_i32, %c0_i32_0, %c0_i32_1 : i32, i32, i32, i32
  }
  func.func @transform_4(%arg0: i32) -> i32 {
    %c0_i32 = arith.constant 0 : i32
    %c0_i32_0 = arith.constant 0 : i32
    return %c0_i32 : i32
  }
  func.func @transform_5(%arg0: i32) -> i32 {
    %c0_i32 = arith.constant 0 : i32
    %c0_i32_0 = arith.constant 0 : i32
    return %c0_i32 : i32
  }
  func.func @transform_6(%arg0: i32) -> (i32, i32, i32, i32) {
    %c0_i32 = arith.constant 0 : i32
    %c0_i32_0 = arith.constant 0 : i32
    %c0_i32_1 = arith.constant 0 : i32
    %c0_i32_2 = arith.constant 0 : i32
    return %arg0, %c0_i32, %c0_i32_0, %c0_i32_1 : i32, i32, i32, i32
  }
}

module attributes {stable_mosaic.version = 11 : i64} {
  func.func @_lowres_branch_kernel(%arg0: i32, %arg1: memref<1x4x16xf32, #tpu.memory_space<vmem>>, %arg2: memref<9x16x16xf32, #tpu.memory_space<vmem>>, %arg3: memref<3x9x4x4xf32, #tpu.memory_space<vmem>>, %arg4: memref<3x4x1xf32, #tpu.memory_space<vmem>>, %arg5: memref<1x4x16xf32, #tpu.memory_space<vmem>>) attributes {dimension_semantics = [#tpu.dimension_semantics<parallel>], iteration_bounds = array<i64: 2>, scalar_prefetch = 0 : i64, scratch_operands = 0 : i64, tpu.core_type = #tpu.core_type<tc>, window_params = [{transform_indices = @transform_0, window_bounds = array<i64: 1, 4, 16>}, {pipeline_mode = #tpu.pipeline_mode<synchronous>, transform_indices = @transform_1, window_bounds = array<i64: 9, 16, 16>}, {pipeline_mode = #tpu.pipeline_mode<synchronous>, transform_indices = @transform_2, window_bounds = array<i64: 3, 9, 4, 4>}, {pipeline_mode = #tpu.pipeline_mode<synchronous>, transform_indices = @transform_3, window_bounds = array<i64: 3, 4, 1>}, {transform_indices = @transform_4, window_bounds = array<i64: 1, 4, 16>}]} {
    %c0 = arith.constant 0 : index
    %c0_0 = arith.constant 0 : index
    %c0_1 = arith.constant 0 : index
    %0 = vector.load %arg1[%c0, %c0_0, %c0_1] : memref<1x4x16xf32, #tpu.memory_space<vmem>>, vector<1x4x16xf32>
    %1 = vector.shape_cast %0 : vector<1x4x16xf32> to vector<4x16xf32>
    %cst = arith.constant 0.000000e+00 : f32
    %2 = vector.broadcast %cst : f32 to vector<4x16xf32>
    %c0_2 = arith.constant 0 : index
    %c0_3 = arith.constant 0 : index
    %c0_4 = arith.constant 0 : index
    %3 = vector.load %arg4[%c0_2, %c0_3, %c0_4] : memref<3x4x1xf32, #tpu.memory_space<vmem>>, vector<1x4x1xf32>
    %4 = vector.shape_cast %3 : vector<1x4x1xf32> to vector<4x1xf32>
    %5 = vector.broadcast %4 : vector<4x1xf32> to vector<4x16xf32>
    %6 = arith.addf %2, %5 : vector<4x16xf32>
    %c0_5 = arith.constant 0 : index
    %c0_6 = arith.constant 0 : index
    %c0_7 = arith.constant 0 : index
    %7 = vector.load %arg2[%c0_5, %c0_6, %c0_7] : memref<9x16x16xf32, #tpu.memory_space<vmem>>, vector<1x16x16xf32>
    %8 = vector.shape_cast %7 : vector<1x16x16xf32> to vector<16x16xf32>
    %cst_8 = arith.constant dense<0.000000e+00> : vector<4x16xf32>
    %9 = tpu.matmul %1, %8, %cst_8 {dimension_numbers = #tpu.dot_dimension_numbers<[1], [0], [0], [1], [0, 0, 1, 1], [], []>} : vector<4x16xf32>, vector<16x16xf32>, vector<4x16xf32> -> vector<4x16xf32>
    %c0_9 = arith.constant 0 : index
    %c0_10 = arith.constant 0 : index
    %c0_11 = arith.constant 0 : index
    %c0_12 = arith.constant 0 : index
    %10 = vector.load %arg3[%c0_9, %c0_10, %c0_11, %c0_12] : memref<3x9x4x4xf32, #tpu.memory_space<vmem>>, vector<1x1x4x4xf32>
    %11 = vector.shape_cast %10 : vector<1x1x4x4xf32> to vector<4x4xf32>
    %cst_13 = arith.constant dense<0.000000e+00> : vector<4x16xf32>
    %12 = tpu.matmul %11, %9, %cst_13 {dimension_numbers = #tpu.dot_dimension_numbers<[1], [0], [0], [1], [0, 0, 1, 1], [], []>} : vector<4x4xf32>, vector<4x16xf32>, vector<4x16xf32> -> vector<4x16xf32>
    %13 = arith.addf %6, %12 : vector<4x16xf32>
    %c1 = arith.constant 1 : index
    %c0_14 = arith.constant 0 : index
    %c0_15 = arith.constant 0 : index
    %14 = vector.load %arg2[%c1, %c0_14, %c0_15] : memref<9x16x16xf32, #tpu.memory_space<vmem>>, vector<1x16x16xf32>
    %15 = vector.shape_cast %14 : vector<1x16x16xf32> to vector<16x16xf32>
    %cst_16 = arith.constant dense<0.000000e+00> : vector<4x16xf32>
    %16 = tpu.matmul %1, %15, %cst_16 {dimension_numbers = #tpu.dot_dimension_numbers<[1], [0], [0], [1], [0, 0, 1, 1], [], []>} : vector<4x16xf32>, vector<16x16xf32>, vector<4x16xf32> -> vector<4x16xf32>
    %c0_17 = arith.constant 0 : index
    %c1_18 = arith.constant 1 : index
    %c0_19 = arith.constant 0 : index
    %c0_20 = arith.constant 0 : index
    %17 = vector.load %arg3[%c0_17, %c1_18, %c0_19, %c0_20] : memref<3x9x4x4xf32, #tpu.memory_space<vmem>>, vector<1x1x4x4xf32>
    %18 = vector.shape_cast %17 : vector<1x1x4x4xf32> to vector<4x4xf32>
    %cst_21 = arith.constant dense<0.000000e+00> : vector<4x16xf32>
    %19 = tpu.matmul %18, %16, %cst_21 {dimension_numbers = #tpu.dot_dimension_numbers<[1], [0], [0], [1], [0, 0, 1, 1], [], []>} : vector<4x4xf32>, vector<4x16xf32>, vector<4x16xf32> -> vector<4x16xf32>
    %20 = arith.addf %13, %19 : vector<4x16xf32>
    %c2 = arith.constant 2 : index
    %c0_22 = arith.constant 0 : index
    %c0_23 = arith.constant 0 : index
    %21 = vector.load %arg2[%c2, %c0_22, %c0_23] : memref<9x16x16xf32, #tpu.memory_space<vmem>>, vector<1x16x16xf32>
    %22 = vector.shape_cast %21 : vector<1x16x16xf32> to vector<16x16xf32>
    %cst_24 = arith.constant dense<0.000000e+00> : vector<4x16xf32>
    %23 = tpu.matmul %1, %22, %cst_24 {dimension_numbers = #tpu.dot_dimension_numbers<[1], [0], [0], [1], [0, 0, 1, 1], [], []>} : vector<4x16xf32>, vector<16x16xf32>, vector<4x16xf32> -> vector<4x16xf32>
    %c0_25 = arith.constant 0 : index
    %c2_26 = arith.constant 2 : index
    %c0_27 = arith.constant 0 : index
    %c0_28 = arith.constant 0 : index
    %24 = vector.load %arg3[%c0_25, %c2_26, %c0_27, %c0_28] : memref<3x9x4x4xf32, #tpu.memory_space<vmem>>, vector<1x1x4x4xf32>
    %25 = vector.shape_cast %24 : vector<1x1x4x4xf32> to vector<4x4xf32>
    %cst_29 = arith.constant dense<0.000000e+00> : vector<4x16xf32>
    %26 = tpu.matmul %25, %23, %cst_29 {dimension_numbers = #tpu.dot_dimension_numbers<[1], [0], [0], [1], [0, 0, 1, 1], [], []>} : vector<4x4xf32>, vector<4x16xf32>, vector<4x16xf32> -> vector<4x16xf32>
    %27 = arith.addf %20, %26 : vector<4x16xf32>
    %c3 = arith.constant 3 : index
    %c0_30 = arith.constant 0 : index
    %c0_31 = arith.constant 0 : index
    %28 = vector.load %arg2[%c3, %c0_30, %c0_31] : memref<9x16x16xf32, #tpu.memory_space<vmem>>, vector<1x16x16xf32>
    %29 = vector.shape_cast %28 : vector<1x16x16xf32> to vector<16x16xf32>
    %cst_32 = arith.constant dense<0.000000e+00> : vector<4x16xf32>
    %30 = tpu.matmul %1, %29, %cst_32 {dimension_numbers = #tpu.dot_dimension_numbers<[1], [0], [0], [1], [0, 0, 1, 1], [], []>} : vector<4x16xf32>, vector<16x16xf32>, vector<4x16xf32> -> vector<4x16xf32>
    %c0_33 = arith.constant 0 : index
    %c3_34 = arith.constant 3 : index
    %c0_35 = arith.constant 0 : index
    %c0_36 = arith.constant 0 : index
    %31 = vector.load %arg3[%c0_33, %c3_34, %c0_35, %c0_36] : memref<3x9x4x4xf32, #tpu.memory_space<vmem>>, vector<1x1x4x4xf32>
    %32 = vector.shape_cast %31 : vector<1x1x4x4xf32> to vector<4x4xf32>
    %cst_37 = arith.constant dense<0.000000e+00> : vector<4x16xf32>
    %33 = tpu.matmul %32, %30, %cst_37 {dimension_numbers = #tpu.dot_dimension_numbers<[1], [0], [0], [1], [0, 0, 1, 1], [], []>} : vector<4x4xf32>, vector<4x16xf32>, vector<4x16xf32> -> vector<4x16xf32>
    %34 = arith.addf %27, %33 : vector<4x16xf32>
    %c4 = arith.constant 4 : index
    %c0_38 = arith.constant 0 : index
    %c0_39 = arith.constant 0 : index
    %35 = vector.load %arg2[%c4, %c0_38, %c0_39] : memref<9x16x16xf32, #tpu.memory_space<vmem>>, vector<1x16x16xf32>
    %36 = vector.shape_cast %35 : vector<1x16x16xf32> to vector<16x16xf32>
    %cst_40 = arith.constant dense<0.000000e+00> : vector<4x16xf32>
    %37 = tpu.matmul %1, %36, %cst_40 {dimension_numbers = #tpu.dot_dimension_numbers<[1], [0], [0], [1], [0, 0, 1, 1], [], []>} : vector<4x16xf32>, vector<16x16xf32>, vector<4x16xf32> -> vector<4x16xf32>
    %c0_41 = arith.constant 0 : index
    %c4_42 = arith.constant 4 : index
    %c0_43 = arith.constant 0 : index
    %c0_44 = arith.constant 0 : index
    %38 = vector.load %arg3[%c0_41, %c4_42, %c0_43, %c0_44] : memref<3x9x4x4xf32, #tpu.memory_space<vmem>>, vector<1x1x4x4xf32>
    %39 = vector.shape_cast %38 : vector<1x1x4x4xf32> to vector<4x4xf32>
    %cst_45 = arith.constant dense<0.000000e+00> : vector<4x16xf32>
    %40 = tpu.matmul %39, %37, %cst_45 {dimension_numbers = #tpu.dot_dimension_numbers<[1], [0], [0], [1], [0, 0, 1, 1], [], []>} : vector<4x4xf32>, vector<4x16xf32>, vector<4x16xf32> -> vector<4x16xf32>
    %41 = arith.addf %34, %40 : vector<4x16xf32>
    %c5 = arith.constant 5 : index
    %c0_46 = arith.constant 0 : index
    %c0_47 = arith.constant 0 : index
    %42 = vector.load %arg2[%c5, %c0_46, %c0_47] : memref<9x16x16xf32, #tpu.memory_space<vmem>>, vector<1x16x16xf32>
    %43 = vector.shape_cast %42 : vector<1x16x16xf32> to vector<16x16xf32>
    %cst_48 = arith.constant dense<0.000000e+00> : vector<4x16xf32>
    %44 = tpu.matmul %1, %43, %cst_48 {dimension_numbers = #tpu.dot_dimension_numbers<[1], [0], [0], [1], [0, 0, 1, 1], [], []>} : vector<4x16xf32>, vector<16x16xf32>, vector<4x16xf32> -> vector<4x16xf32>
    %c0_49 = arith.constant 0 : index
    %c5_50 = arith.constant 5 : index
    %c0_51 = arith.constant 0 : index
    %c0_52 = arith.constant 0 : index
    %45 = vector.load %arg3[%c0_49, %c5_50, %c0_51, %c0_52] : memref<3x9x4x4xf32, #tpu.memory_space<vmem>>, vector<1x1x4x4xf32>
    %46 = vector.shape_cast %45 : vector<1x1x4x4xf32> to vector<4x4xf32>
    %cst_53 = arith.constant dense<0.000000e+00> : vector<4x16xf32>
    %47 = tpu.matmul %46, %44, %cst_53 {dimension_numbers = #tpu.dot_dimension_numbers<[1], [0], [0], [1], [0, 0, 1, 1], [], []>} : vector<4x4xf32>, vector<4x16xf32>, vector<4x16xf32> -> vector<4x16xf32>
    %48 = arith.addf %41, %47 : vector<4x16xf32>
    %c6 = arith.constant 6 : index
    %c0_54 = arith.constant 0 : index
    %c0_55 = arith.constant 0 : index
    %49 = vector.load %arg2[%c6, %c0_54, %c0_55] : memref<9x16x16xf32, #tpu.memory_space<vmem>>, vector<1x16x16xf32>
    %50 = vector.shape_cast %49 : vector<1x16x16xf32> to vector<16x16xf32>
    %cst_56 = arith.constant dense<0.000000e+00> : vector<4x16xf32>
    %51 = tpu.matmul %1, %50, %cst_56 {dimension_numbers = #tpu.dot_dimension_numbers<[1], [0], [0], [1], [0, 0, 1, 1], [], []>} : vector<4x16xf32>, vector<16x16xf32>, vector<4x16xf32> -> vector<4x16xf32>
    %c0_57 = arith.constant 0 : index
    %c6_58 = arith.constant 6 : index
    %c0_59 = arith.constant 0 : index
    %c0_60 = arith.constant 0 : index
    %52 = vector.load %arg3[%c0_57, %c6_58, %c0_59, %c0_60] : memref<3x9x4x4xf32, #tpu.memory_space<vmem>>, vector<1x1x4x4xf32>
    %53 = vector.shape_cast %52 : vector<1x1x4x4xf32> to vector<4x4xf32>
    %cst_61 = arith.constant dense<0.000000e+00> : vector<4x16xf32>
    %54 = tpu.matmul %53, %51, %cst_61 {dimension_numbers = #tpu.dot_dimension_numbers<[1], [0], [0], [1], [0, 0, 1, 1], [], []>} : vector<4x4xf32>, vector<4x16xf32>, vector<4x16xf32> -> vector<4x16xf32>
    %55 = arith.addf %48, %54 : vector<4x16xf32>
    %c7 = arith.constant 7 : index
    %c0_62 = arith.constant 0 : index
    %c0_63 = arith.constant 0 : index
    %56 = vector.load %arg2[%c7, %c0_62, %c0_63] : memref<9x16x16xf32, #tpu.memory_space<vmem>>, vector<1x16x16xf32>
    %57 = vector.shape_cast %56 : vector<1x16x16xf32> to vector<16x16xf32>
    %cst_64 = arith.constant dense<0.000000e+00> : vector<4x16xf32>
    %58 = tpu.matmul %1, %57, %cst_64 {dimension_numbers = #tpu.dot_dimension_numbers<[1], [0], [0], [1], [0, 0, 1, 1], [], []>} : vector<4x16xf32>, vector<16x16xf32>, vector<4x16xf32> -> vector<4x16xf32>
    %c0_65 = arith.constant 0 : index
    %c7_66 = arith.constant 7 : index
    %c0_67 = arith.constant 0 : index
    %c0_68 = arith.constant 0 : index
    %59 = vector.load %arg3[%c0_65, %c7_66, %c0_67, %c0_68] : memref<3x9x4x4xf32, #tpu.memory_space<vmem>>, vector<1x1x4x4xf32>
    %60 = vector.shape_cast %59 : vector<1x1x4x4xf32> to vector<4x4xf32>
    %cst_69 = arith.constant dense<0.000000e+00> : vector<4x16xf32>
    %61 = tpu.matmul %60, %58, %cst_69 {dimension_numbers = #tpu.dot_dimension_numbers<[1], [0], [0], [1], [0, 0, 1, 1], [], []>} : vector<4x4xf32>, vector<4x16xf32>, vector<4x16xf32> -> vector<4x16xf32>
    %62 = arith.addf %55, %61 : vector<4x16xf32>
    %c8 = arith.constant 8 : index
    %c0_70 = arith.constant 0 : index
    %c0_71 = arith.constant 0 : index
    %63 = vector.load %arg2[%c8, %c0_70, %c0_71] : memref<9x16x16xf32, #tpu.memory_space<vmem>>, vector<1x16x16xf32>
    %64 = vector.shape_cast %63 : vector<1x16x16xf32> to vector<16x16xf32>
    %cst_72 = arith.constant dense<0.000000e+00> : vector<4x16xf32>
    %65 = tpu.matmul %1, %64, %cst_72 {dimension_numbers = #tpu.dot_dimension_numbers<[1], [0], [0], [1], [0, 0, 1, 1], [], []>} : vector<4x16xf32>, vector<16x16xf32>, vector<4x16xf32> -> vector<4x16xf32>
    %c0_73 = arith.constant 0 : index
    %c8_74 = arith.constant 8 : index
    %c0_75 = arith.constant 0 : index
    %c0_76 = arith.constant 0 : index
    %66 = vector.load %arg3[%c0_73, %c8_74, %c0_75, %c0_76] : memref<3x9x4x4xf32, #tpu.memory_space<vmem>>, vector<1x1x4x4xf32>
    %67 = vector.shape_cast %66 : vector<1x1x4x4xf32> to vector<4x4xf32>
    %cst_77 = arith.constant dense<0.000000e+00> : vector<4x16xf32>
    %68 = tpu.matmul %67, %65, %cst_77 {dimension_numbers = #tpu.dot_dimension_numbers<[1], [0], [0], [1], [0, 0, 1, 1], [], []>} : vector<4x4xf32>, vector<4x16xf32>, vector<4x16xf32> -> vector<4x16xf32>
    %69 = arith.addf %62, %68 : vector<4x16xf32>
    %cst_78 = arith.constant 0.000000e+00 : f32
    %70 = vector.broadcast %cst_78 : f32 to vector<4x16xf32>
    %71 = arith.maximumf %69, %70 : vector<4x16xf32>
    %cst_79 = arith.constant 0.000000e+00 : f32
    %72 = vector.broadcast %cst_79 : f32 to vector<4x16xf32>
    %c1_80 = arith.constant 1 : index
    %c0_81 = arith.constant 0 : index
    %c0_82 = arith.constant 0 : index
    %73 = vector.load %arg4[%c1_80, %c0_81, %c0_82] : memref<3x4x1xf32, #tpu.memory_space<vmem>>, vector<1x4x1xf32>
    %74 = vector.shape_cast %73 : vector<1x4x1xf32> to vector<4x1xf32>
    %75 = vector.broadcast %74 : vector<4x1xf32> to vector<4x16xf32>
    %76 = arith.addf %72, %75 : vector<4x16xf32>
    %c0_83 = arith.constant 0 : index
    %c0_84 = arith.constant 0 : index
    %c0_85 = arith.constant 0 : index
    %77 = vector.load %arg2[%c0_83, %c0_84, %c0_85] : memref<9x16x16xf32, #tpu.memory_space<vmem>>, vector<1x16x16xf32>
    %78 = vector.shape_cast %77 : vector<1x16x16xf32> to vector<16x16xf32>
    %cst_86 = arith.constant dense<0.000000e+00> : vector<4x16xf32>
    %79 = tpu.matmul %71, %78, %cst_86 {dimension_numbers = #tpu.dot_dimension_numbers<[1], [0], [0], [1], [0, 0, 1, 1], [], []>} : vector<4x16xf32>, vector<16x16xf32>, vector<4x16xf32> -> vector<4x16xf32>
    %c1_87 = arith.constant 1 : index
    %c0_88 = arith.constant 0 : index
    %c0_89 = arith.constant 0 : index
    %c0_90 = arith.constant 0 : index
    %80 = vector.load %arg3[%c1_87, %c0_88, %c0_89, %c0_90] : memref<3x9x4x4xf32, #tpu.memory_space<vmem>>, vector<1x1x4x4xf32>
    %81 = vector.shape_cast %80 : vector<1x1x4x4xf32> to vector<4x4xf32>
    %cst_91 = arith.constant dense<0.000000e+00> : vector<4x16xf32>
    %82 = tpu.matmul %81, %79, %cst_91 {dimension_numbers = #tpu.dot_dimension_numbers<[1], [0], [0], [1], [0, 0, 1, 1], [], []>} : vector<4x4xf32>, vector<4x16xf32>, vector<4x16xf32> -> vector<4x16xf32>
    %83 = arith.addf %76, %82 : vector<4x16xf32>
    %c1_92 = arith.constant 1 : index
    %c0_93 = arith.constant 0 : index
    %c0_94 = arith.constant 0 : index
    %84 = vector.load %arg2[%c1_92, %c0_93, %c0_94] : memref<9x16x16xf32, #tpu.memory_space<vmem>>, vector<1x16x16xf32>
    %85 = vector.shape_cast %84 : vector<1x16x16xf32> to vector<16x16xf32>
    %cst_95 = arith.constant dense<0.000000e+00> : vector<4x16xf32>
    %86 = tpu.matmul %71, %85, %cst_95 {dimension_numbers = #tpu.dot_dimension_numbers<[1], [0], [0], [1], [0, 0, 1, 1], [], []>} : vector<4x16xf32>, vector<16x16xf32>, vector<4x16xf32> -> vector<4x16xf32>
    %c1_96 = arith.constant 1 : index
    %c1_97 = arith.constant 1 : index
    %c0_98 = arith.constant 0 : index
    %c0_99 = arith.constant 0 : index
    %87 = vector.load %arg3[%c1_96, %c1_97, %c0_98, %c0_99] : memref<3x9x4x4xf32, #tpu.memory_space<vmem>>, vector<1x1x4x4xf32>
    %88 = vector.shape_cast %87 : vector<1x1x4x4xf32> to vector<4x4xf32>
    %cst_100 = arith.constant dense<0.000000e+00> : vector<4x16xf32>
    %89 = tpu.matmul %88, %86, %cst_100 {dimension_numbers = #tpu.dot_dimension_numbers<[1], [0], [0], [1], [0, 0, 1, 1], [], []>} : vector<4x4xf32>, vector<4x16xf32>, vector<4x16xf32> -> vector<4x16xf32>
    %90 = arith.addf %83, %89 : vector<4x16xf32>
    %c2_101 = arith.constant 2 : index
    %c0_102 = arith.constant 0 : index
    %c0_103 = arith.constant 0 : index
    %91 = vector.load %arg2[%c2_101, %c0_102, %c0_103] : memref<9x16x16xf32, #tpu.memory_space<vmem>>, vector<1x16x16xf32>
    %92 = vector.shape_cast %91 : vector<1x16x16xf32> to vector<16x16xf32>
    %cst_104 = arith.constant dense<0.000000e+00> : vector<4x16xf32>
    %93 = tpu.matmul %71, %92, %cst_104 {dimension_numbers = #tpu.dot_dimension_numbers<[1], [0], [0], [1], [0, 0, 1, 1], [], []>} : vector<4x16xf32>, vector<16x16xf32>, vector<4x16xf32> -> vector<4x16xf32>
    %c1_105 = arith.constant 1 : index
    %c2_106 = arith.constant 2 : index
    %c0_107 = arith.constant 0 : index
    %c0_108 = arith.constant 0 : index
    %94 = vector.load %arg3[%c1_105, %c2_106, %c0_107, %c0_108] : memref<3x9x4x4xf32, #tpu.memory_space<vmem>>, vector<1x1x4x4xf32>
    %95 = vector.shape_cast %94 : vector<1x1x4x4xf32> to vector<4x4xf32>
    %cst_109 = arith.constant dense<0.000000e+00> : vector<4x16xf32>
    %96 = tpu.matmul %95, %93, %cst_109 {dimension_numbers = #tpu.dot_dimension_numbers<[1], [0], [0], [1], [0, 0, 1, 1], [], []>} : vector<4x4xf32>, vector<4x16xf32>, vector<4x16xf32> -> vector<4x16xf32>
    %97 = arith.addf %90, %96 : vector<4x16xf32>
    %c3_110 = arith.constant 3 : index
    %c0_111 = arith.constant 0 : index
    %c0_112 = arith.constant 0 : index
    %98 = vector.load %arg2[%c3_110, %c0_111, %c0_112] : memref<9x16x16xf32, #tpu.memory_space<vmem>>, vector<1x16x16xf32>
    %99 = vector.shape_cast %98 : vector<1x16x16xf32> to vector<16x16xf32>
    %cst_113 = arith.constant dense<0.000000e+00> : vector<4x16xf32>
    %100 = tpu.matmul %71, %99, %cst_113 {dimension_numbers = #tpu.dot_dimension_numbers<[1], [0], [0], [1], [0, 0, 1, 1], [], []>} : vector<4x16xf32>, vector<16x16xf32>, vector<4x16xf32> -> vector<4x16xf32>
    %c1_114 = arith.constant 1 : index
    %c3_115 = arith.constant 3 : index
    %c0_116 = arith.constant 0 : index
    %c0_117 = arith.constant 0 : index
    %101 = vector.load %arg3[%c1_114, %c3_115, %c0_116, %c0_117] : memref<3x9x4x4xf32, #tpu.memory_space<vmem>>, vector<1x1x4x4xf32>
    %102 = vector.shape_cast %101 : vector<1x1x4x4xf32> to vector<4x4xf32>
    %cst_118 = arith.constant dense<0.000000e+00> : vector<4x16xf32>
    %103 = tpu.matmul %102, %100, %cst_118 {dimension_numbers = #tpu.dot_dimension_numbers<[1], [0], [0], [1], [0, 0, 1, 1], [], []>} : vector<4x4xf32>, vector<4x16xf32>, vector<4x16xf32> -> vector<4x16xf32>
    %104 = arith.addf %97, %103 : vector<4x16xf32>
    %c4_119 = arith.constant 4 : index
    %c0_120 = arith.constant 0 : index
    %c0_121 = arith.constant 0 : index
    %105 = vector.load %arg2[%c4_119, %c0_120, %c0_121] : memref<9x16x16xf32, #tpu.memory_space<vmem>>, vector<1x16x16xf32>
    %106 = vector.shape_cast %105 : vector<1x16x16xf32> to vector<16x16xf32>
    %cst_122 = arith.constant dense<0.000000e+00> : vector<4x16xf32>
    %107 = tpu.matmul %71, %106, %cst_122 {dimension_numbers = #tpu.dot_dimension_numbers<[1], [0], [0], [1], [0, 0, 1, 1], [], []>} : vector<4x16xf32>, vector<16x16xf32>, vector<4x16xf32> -> vector<4x16xf32>
    %c1_123 = arith.constant 1 : index
    %c4_124 = arith.constant 4 : index
    %c0_125 = arith.constant 0 : index
    %c0_126 = arith.constant 0 : index
    %108 = vector.load %arg3[%c1_123, %c4_124, %c0_125, %c0_126] : memref<3x9x4x4xf32, #tpu.memory_space<vmem>>, vector<1x1x4x4xf32>
    %109 = vector.shape_cast %108 : vector<1x1x4x4xf32> to vector<4x4xf32>
    %cst_127 = arith.constant dense<0.000000e+00> : vector<4x16xf32>
    %110 = tpu.matmul %109, %107, %cst_127 {dimension_numbers = #tpu.dot_dimension_numbers<[1], [0], [0], [1], [0, 0, 1, 1], [], []>} : vector<4x4xf32>, vector<4x16xf32>, vector<4x16xf32> -> vector<4x16xf32>
    %111 = arith.addf %104, %110 : vector<4x16xf32>
    %c5_128 = arith.constant 5 : index
    %c0_129 = arith.constant 0 : index
    %c0_130 = arith.constant 0 : index
    %112 = vector.load %arg2[%c5_128, %c0_129, %c0_130] : memref<9x16x16xf32, #tpu.memory_space<vmem>>, vector<1x16x16xf32>
    %113 = vector.shape_cast %112 : vector<1x16x16xf32> to vector<16x16xf32>
    %cst_131 = arith.constant dense<0.000000e+00> : vector<4x16xf32>
    %114 = tpu.matmul %71, %113, %cst_131 {dimension_numbers = #tpu.dot_dimension_numbers<[1], [0], [0], [1], [0, 0, 1, 1], [], []>} : vector<4x16xf32>, vector<16x16xf32>, vector<4x16xf32> -> vector<4x16xf32>
    %c1_132 = arith.constant 1 : index
    %c5_133 = arith.constant 5 : index
    %c0_134 = arith.constant 0 : index
    %c0_135 = arith.constant 0 : index
    %115 = vector.load %arg3[%c1_132, %c5_133, %c0_134, %c0_135] : memref<3x9x4x4xf32, #tpu.memory_space<vmem>>, vector<1x1x4x4xf32>
    %116 = vector.shape_cast %115 : vector<1x1x4x4xf32> to vector<4x4xf32>
    %cst_136 = arith.constant dense<0.000000e+00> : vector<4x16xf32>
    %117 = tpu.matmul %116, %114, %cst_136 {dimension_numbers = #tpu.dot_dimension_numbers<[1], [0], [0], [1], [0, 0, 1, 1], [], []>} : vector<4x4xf32>, vector<4x16xf32>, vector<4x16xf32> -> vector<4x16xf32>
    %118 = arith.addf %111, %117 : vector<4x16xf32>
    %c6_137 = arith.constant 6 : index
    %c0_138 = arith.constant 0 : index
    %c0_139 = arith.constant 0 : index
    %119 = vector.load %arg2[%c6_137, %c0_138, %c0_139] : memref<9x16x16xf32, #tpu.memory_space<vmem>>, vector<1x16x16xf32>
    %120 = vector.shape_cast %119 : vector<1x16x16xf32> to vector<16x16xf32>
    %cst_140 = arith.constant dense<0.000000e+00> : vector<4x16xf32>
    %121 = tpu.matmul %71, %120, %cst_140 {dimension_numbers = #tpu.dot_dimension_numbers<[1], [0], [0], [1], [0, 0, 1, 1], [], []>} : vector<4x16xf32>, vector<16x16xf32>, vector<4x16xf32> -> vector<4x16xf32>
    %c1_141 = arith.constant 1 : index
    %c6_142 = arith.constant 6 : index
    %c0_143 = arith.constant 0 : index
    %c0_144 = arith.constant 0 : index
    %122 = vector.load %arg3[%c1_141, %c6_142, %c0_143, %c0_144] : memref<3x9x4x4xf32, #tpu.memory_space<vmem>>, vector<1x1x4x4xf32>
    %123 = vector.shape_cast %122 : vector<1x1x4x4xf32> to vector<4x4xf32>
    %cst_145 = arith.constant dense<0.000000e+00> : vector<4x16xf32>
    %124 = tpu.matmul %123, %121, %cst_145 {dimension_numbers = #tpu.dot_dimension_numbers<[1], [0], [0], [1], [0, 0, 1, 1], [], []>} : vector<4x4xf32>, vector<4x16xf32>, vector<4x16xf32> -> vector<4x16xf32>
    %125 = arith.addf %118, %124 : vector<4x16xf32>
    %c7_146 = arith.constant 7 : index
    %c0_147 = arith.constant 0 : index
    %c0_148 = arith.constant 0 : index
    %126 = vector.load %arg2[%c7_146, %c0_147, %c0_148] : memref<9x16x16xf32, #tpu.memory_space<vmem>>, vector<1x16x16xf32>
    %127 = vector.shape_cast %126 : vector<1x16x16xf32> to vector<16x16xf32>
    %cst_149 = arith.constant dense<0.000000e+00> : vector<4x16xf32>
    %128 = tpu.matmul %71, %127, %cst_149 {dimension_numbers = #tpu.dot_dimension_numbers<[1], [0], [0], [1], [0, 0, 1, 1], [], []>} : vector<4x16xf32>, vector<16x16xf32>, vector<4x16xf32> -> vector<4x16xf32>
    %c1_150 = arith.constant 1 : index
    %c7_151 = arith.constant 7 : index
    %c0_152 = arith.constant 0 : index
    %c0_153 = arith.constant 0 : index
    %129 = vector.load %arg3[%c1_150, %c7_151, %c0_152, %c0_153] : memref<3x9x4x4xf32, #tpu.memory_space<vmem>>, vector<1x1x4x4xf32>
    %130 = vector.shape_cast %129 : vector<1x1x4x4xf32> to vector<4x4xf32>
    %cst_154 = arith.constant dense<0.000000e+00> : vector<4x16xf32>
    %131 = tpu.matmul %130, %128, %cst_154 {dimension_numbers = #tpu.dot_dimension_numbers<[1], [0], [0], [1], [0, 0, 1, 1], [], []>} : vector<4x4xf32>, vector<4x16xf32>, vector<4x16xf32> -> vector<4x16xf32>
    %132 = arith.addf %125, %131 : vector<4x16xf32>
    %c8_155 = arith.constant 8 : index
    %c0_156 = arith.constant 0 : index
    %c0_157 = arith.constant 0 : index
    %133 = vector.load %arg2[%c8_155, %c0_156, %c0_157] : memref<9x16x16xf32, #tpu.memory_space<vmem>>, vector<1x16x16xf32>
    %134 = vector.shape_cast %133 : vector<1x16x16xf32> to vector<16x16xf32>
    %cst_158 = arith.constant dense<0.000000e+00> : vector<4x16xf32>
    %135 = tpu.matmul %71, %134, %cst_158 {dimension_numbers = #tpu.dot_dimension_numbers<[1], [0], [0], [1], [0, 0, 1, 1], [], []>} : vector<4x16xf32>, vector<16x16xf32>, vector<4x16xf32> -> vector<4x16xf32>
    %c1_159 = arith.constant 1 : index
    %c8_160 = arith.constant 8 : index
    %c0_161 = arith.constant 0 : index
    %c0_162 = arith.constant 0 : index
    %136 = vector.load %arg3[%c1_159, %c8_160, %c0_161, %c0_162] : memref<3x9x4x4xf32, #tpu.memory_space<vmem>>, vector<1x1x4x4xf32>
    %137 = vector.shape_cast %136 : vector<1x1x4x4xf32> to vector<4x4xf32>
    %cst_163 = arith.constant dense<0.000000e+00> : vector<4x16xf32>
    %138 = tpu.matmul %137, %135, %cst_163 {dimension_numbers = #tpu.dot_dimension_numbers<[1], [0], [0], [1], [0, 0, 1, 1], [], []>} : vector<4x4xf32>, vector<4x16xf32>, vector<4x16xf32> -> vector<4x16xf32>
    %139 = arith.addf %132, %138 : vector<4x16xf32>
    %cst_164 = arith.constant 0.000000e+00 : f32
    %140 = vector.broadcast %cst_164 : f32 to vector<4x16xf32>
    %141 = arith.maximumf %139, %140 : vector<4x16xf32>
    %cst_165 = arith.constant 0.000000e+00 : f32
    %142 = vector.broadcast %cst_165 : f32 to vector<4x16xf32>
    %c2_166 = arith.constant 2 : index
    %c0_167 = arith.constant 0 : index
    %c0_168 = arith.constant 0 : index
    %143 = vector.load %arg4[%c2_166, %c0_167, %c0_168] : memref<3x4x1xf32, #tpu.memory_space<vmem>>, vector<1x4x1xf32>
    %144 = vector.shape_cast %143 : vector<1x4x1xf32> to vector<4x1xf32>
    %145 = vector.broadcast %144 : vector<4x1xf32> to vector<4x16xf32>
    %146 = arith.addf %142, %145 : vector<4x16xf32>
    %c0_169 = arith.constant 0 : index
    %c0_170 = arith.constant 0 : index
    %c0_171 = arith.constant 0 : index
    %147 = vector.load %arg2[%c0_169, %c0_170, %c0_171] : memref<9x16x16xf32, #tpu.memory_space<vmem>>, vector<1x16x16xf32>
    %148 = vector.shape_cast %147 : vector<1x16x16xf32> to vector<16x16xf32>
    %cst_172 = arith.constant dense<0.000000e+00> : vector<4x16xf32>
    %149 = tpu.matmul %141, %148, %cst_172 {dimension_numbers = #tpu.dot_dimension_numbers<[1], [0], [0], [1], [0, 0, 1, 1], [], []>} : vector<4x16xf32>, vector<16x16xf32>, vector<4x16xf32> -> vector<4x16xf32>
    %c2_173 = arith.constant 2 : index
    %c0_174 = arith.constant 0 : index
    %c0_175 = arith.constant 0 : index
    %c0_176 = arith.constant 0 : index
    %150 = vector.load %arg3[%c2_173, %c0_174, %c0_175, %c0_176] : memref<3x9x4x4xf32, #tpu.memory_space<vmem>>, vector<1x1x4x4xf32>
    %151 = vector.shape_cast %150 : vector<1x1x4x4xf32> to vector<4x4xf32>
    %cst_177 = arith.constant dense<0.000000e+00> : vector<4x16xf32>
    %152 = tpu.matmul %151, %149, %cst_177 {dimension_numbers = #tpu.dot_dimension_numbers<[1], [0], [0], [1], [0, 0, 1, 1], [], []>} : vector<4x4xf32>, vector<4x16xf32>, vector<4x16xf32> -> vector<4x16xf32>
    %153 = arith.addf %146, %152 : vector<4x16xf32>
    %c1_178 = arith.constant 1 : index
    %c0_179 = arith.constant 0 : index
    %c0_180 = arith.constant 0 : index
    %154 = vector.load %arg2[%c1_178, %c0_179, %c0_180] : memref<9x16x16xf32, #tpu.memory_space<vmem>>, vector<1x16x16xf32>
    %155 = vector.shape_cast %154 : vector<1x16x16xf32> to vector<16x16xf32>
    %cst_181 = arith.constant dense<0.000000e+00> : vector<4x16xf32>
    %156 = tpu.matmul %141, %155, %cst_181 {dimension_numbers = #tpu.dot_dimension_numbers<[1], [0], [0], [1], [0, 0, 1, 1], [], []>} : vector<4x16xf32>, vector<16x16xf32>, vector<4x16xf32> -> vector<4x16xf32>
    %c2_182 = arith.constant 2 : index
    %c1_183 = arith.constant 1 : index
    %c0_184 = arith.constant 0 : index
    %c0_185 = arith.constant 0 : index
    %157 = vector.load %arg3[%c2_182, %c1_183, %c0_184, %c0_185] : memref<3x9x4x4xf32, #tpu.memory_space<vmem>>, vector<1x1x4x4xf32>
    %158 = vector.shape_cast %157 : vector<1x1x4x4xf32> to vector<4x4xf32>
    %cst_186 = arith.constant dense<0.000000e+00> : vector<4x16xf32>
    %159 = tpu.matmul %158, %156, %cst_186 {dimension_numbers = #tpu.dot_dimension_numbers<[1], [0], [0], [1], [0, 0, 1, 1], [], []>} : vector<4x4xf32>, vector<4x16xf32>, vector<4x16xf32> -> vector<4x16xf32>
    %160 = arith.addf %153, %159 : vector<4x16xf32>
    %c2_187 = arith.constant 2 : index
    %c0_188 = arith.constant 0 : index
    %c0_189 = arith.constant 0 : index
    %161 = vector.load %arg2[%c2_187, %c0_188, %c0_189] : memref<9x16x16xf32, #tpu.memory_space<vmem>>, vector<1x16x16xf32>
    %162 = vector.shape_cast %161 : vector<1x16x16xf32> to vector<16x16xf32>
    %cst_190 = arith.constant dense<0.000000e+00> : vector<4x16xf32>
    %163 = tpu.matmul %141, %162, %cst_190 {dimension_numbers = #tpu.dot_dimension_numbers<[1], [0], [0], [1], [0, 0, 1, 1], [], []>} : vector<4x16xf32>, vector<16x16xf32>, vector<4x16xf32> -> vector<4x16xf32>
    %c2_191 = arith.constant 2 : index
    %c2_192 = arith.constant 2 : index
    %c0_193 = arith.constant 0 : index
    %c0_194 = arith.constant 0 : index
    %164 = vector.load %arg3[%c2_191, %c2_192, %c0_193, %c0_194] : memref<3x9x4x4xf32, #tpu.memory_space<vmem>>, vector<1x1x4x4xf32>
    %165 = vector.shape_cast %164 : vector<1x1x4x4xf32> to vector<4x4xf32>
    %cst_195 = arith.constant dense<0.000000e+00> : vector<4x16xf32>
    %166 = tpu.matmul %165, %163, %cst_195 {dimension_numbers = #tpu.dot_dimension_numbers<[1], [0], [0], [1], [0, 0, 1, 1], [], []>} : vector<4x4xf32>, vector<4x16xf32>, vector<4x16xf32> -> vector<4x16xf32>
    %167 = arith.addf %160, %166 : vector<4x16xf32>
    %c3_196 = arith.constant 3 : index
    %c0_197 = arith.constant 0 : index
    %c0_198 = arith.constant 0 : index
    %168 = vector.load %arg2[%c3_196, %c0_197, %c0_198] : memref<9x16x16xf32, #tpu.memory_space<vmem>>, vector<1x16x16xf32>
    %169 = vector.shape_cast %168 : vector<1x16x16xf32> to vector<16x16xf32>
    %cst_199 = arith.constant dense<0.000000e+00> : vector<4x16xf32>
    %170 = tpu.matmul %141, %169, %cst_199 {dimension_numbers = #tpu.dot_dimension_numbers<[1], [0], [0], [1], [0, 0, 1, 1], [], []>} : vector<4x16xf32>, vector<16x16xf32>, vector<4x16xf32> -> vector<4x16xf32>
    %c2_200 = arith.constant 2 : index
    %c3_201 = arith.constant 3 : index
    %c0_202 = arith.constant 0 : index
    %c0_203 = arith.constant 0 : index
    %171 = vector.load %arg3[%c2_200, %c3_201, %c0_202, %c0_203] : memref<3x9x4x4xf32, #tpu.memory_space<vmem>>, vector<1x1x4x4xf32>
    %172 = vector.shape_cast %171 : vector<1x1x4x4xf32> to vector<4x4xf32>
    %cst_204 = arith.constant dense<0.000000e+00> : vector<4x16xf32>
    %173 = tpu.matmul %172, %170, %cst_204 {dimension_numbers = #tpu.dot_dimension_numbers<[1], [0], [0], [1], [0, 0, 1, 1], [], []>} : vector<4x4xf32>, vector<4x16xf32>, vector<4x16xf32> -> vector<4x16xf32>
    %174 = arith.addf %167, %173 : vector<4x16xf32>
    %c4_205 = arith.constant 4 : index
    %c0_206 = arith.constant 0 : index
    %c0_207 = arith.constant 0 : index
    %175 = vector.load %arg2[%c4_205, %c0_206, %c0_207] : memref<9x16x16xf32, #tpu.memory_space<vmem>>, vector<1x16x16xf32>
    %176 = vector.shape_cast %175 : vector<1x16x16xf32> to vector<16x16xf32>
    %cst_208 = arith.constant dense<0.000000e+00> : vector<4x16xf32>
    %177 = tpu.matmul %141, %176, %cst_208 {dimension_numbers = #tpu.dot_dimension_numbers<[1], [0], [0], [1], [0, 0, 1, 1], [], []>} : vector<4x16xf32>, vector<16x16xf32>, vector<4x16xf32> -> vector<4x16xf32>
    %c2_209 = arith.constant 2 : index
    %c4_210 = arith.constant 4 : index
    %c0_211 = arith.constant 0 : index
    %c0_212 = arith.constant 0 : index
    %178 = vector.load %arg3[%c2_209, %c4_210, %c0_211, %c0_212] : memref<3x9x4x4xf32, #tpu.memory_space<vmem>>, vector<1x1x4x4xf32>
    %179 = vector.shape_cast %178 : vector<1x1x4x4xf32> to vector<4x4xf32>
    %cst_213 = arith.constant dense<0.000000e+00> : vector<4x16xf32>
    %180 = tpu.matmul %179, %177, %cst_213 {dimension_numbers = #tpu.dot_dimension_numbers<[1], [0], [0], [1], [0, 0, 1, 1], [], []>} : vector<4x4xf32>, vector<4x16xf32>, vector<4x16xf32> -> vector<4x16xf32>
    %181 = arith.addf %174, %180 : vector<4x16xf32>
    %c5_214 = arith.constant 5 : index
    %c0_215 = arith.constant 0 : index
    %c0_216 = arith.constant 0 : index
    %182 = vector.load %arg2[%c5_214, %c0_215, %c0_216] : memref<9x16x16xf32, #tpu.memory_space<vmem>>, vector<1x16x16xf32>
    %183 = vector.shape_cast %182 : vector<1x16x16xf32> to vector<16x16xf32>
    %cst_217 = arith.constant dense<0.000000e+00> : vector<4x16xf32>
    %184 = tpu.matmul %141, %183, %cst_217 {dimension_numbers = #tpu.dot_dimension_numbers<[1], [0], [0], [1], [0, 0, 1, 1], [], []>} : vector<4x16xf32>, vector<16x16xf32>, vector<4x16xf32> -> vector<4x16xf32>
    %c2_218 = arith.constant 2 : index
    %c5_219 = arith.constant 5 : index
    %c0_220 = arith.constant 0 : index
    %c0_221 = arith.constant 0 : index
    %185 = vector.load %arg3[%c2_218, %c5_219, %c0_220, %c0_221] : memref<3x9x4x4xf32, #tpu.memory_space<vmem>>, vector<1x1x4x4xf32>
    %186 = vector.shape_cast %185 : vector<1x1x4x4xf32> to vector<4x4xf32>
    %cst_222 = arith.constant dense<0.000000e+00> : vector<4x16xf32>
    %187 = tpu.matmul %186, %184, %cst_222 {dimension_numbers = #tpu.dot_dimension_numbers<[1], [0], [0], [1], [0, 0, 1, 1], [], []>} : vector<4x4xf32>, vector<4x16xf32>, vector<4x16xf32> -> vector<4x16xf32>
    %188 = arith.addf %181, %187 : vector<4x16xf32>
    %c6_223 = arith.constant 6 : index
    %c0_224 = arith.constant 0 : index
    %c0_225 = arith.constant 0 : index
    %189 = vector.load %arg2[%c6_223, %c0_224, %c0_225] : memref<9x16x16xf32, #tpu.memory_space<vmem>>, vector<1x16x16xf32>
    %190 = vector.shape_cast %189 : vector<1x16x16xf32> to vector<16x16xf32>
    %cst_226 = arith.constant dense<0.000000e+00> : vector<4x16xf32>
    %191 = tpu.matmul %141, %190, %cst_226 {dimension_numbers = #tpu.dot_dimension_numbers<[1], [0], [0], [1], [0, 0, 1, 1], [], []>} : vector<4x16xf32>, vector<16x16xf32>, vector<4x16xf32> -> vector<4x16xf32>
    %c2_227 = arith.constant 2 : index
    %c6_228 = arith.constant 6 : index
    %c0_229 = arith.constant 0 : index
    %c0_230 = arith.constant 0 : index
    %192 = vector.load %arg3[%c2_227, %c6_228, %c0_229, %c0_230] : memref<3x9x4x4xf32, #tpu.memory_space<vmem>>, vector<1x1x4x4xf32>
    %193 = vector.shape_cast %192 : vector<1x1x4x4xf32> to vector<4x4xf32>
    %cst_231 = arith.constant dense<0.000000e+00> : vector<4x16xf32>
    %194 = tpu.matmul %193, %191, %cst_231 {dimension_numbers = #tpu.dot_dimension_numbers<[1], [0], [0], [1], [0, 0, 1, 1], [], []>} : vector<4x4xf32>, vector<4x16xf32>, vector<4x16xf32> -> vector<4x16xf32>
    %195 = arith.addf %188, %194 : vector<4x16xf32>
    %c7_232 = arith.constant 7 : index
    %c0_233 = arith.constant 0 : index
    %c0_234 = arith.constant 0 : index
    %196 = vector.load %arg2[%c7_232, %c0_233, %c0_234] : memref<9x16x16xf32, #tpu.memory_space<vmem>>, vector<1x16x16xf32>
    %197 = vector.shape_cast %196 : vector<1x16x16xf32> to vector<16x16xf32>
    %cst_235 = arith.constant dense<0.000000e+00> : vector<4x16xf32>
    %198 = tpu.matmul %141, %197, %cst_235 {dimension_numbers = #tpu.dot_dimension_numbers<[1], [0], [0], [1], [0, 0, 1, 1], [], []>} : vector<4x16xf32>, vector<16x16xf32>, vector<4x16xf32> -> vector<4x16xf32>
    %c2_236 = arith.constant 2 : index
    %c7_237 = arith.constant 7 : index
    %c0_238 = arith.constant 0 : index
    %c0_239 = arith.constant 0 : index
    %199 = vector.load %arg3[%c2_236, %c7_237, %c0_238, %c0_239] : memref<3x9x4x4xf32, #tpu.memory_space<vmem>>, vector<1x1x4x4xf32>
    %200 = vector.shape_cast %199 : vector<1x1x4x4xf32> to vector<4x4xf32>
    %cst_240 = arith.constant dense<0.000000e+00> : vector<4x16xf32>
    %201 = tpu.matmul %200, %198, %cst_240 {dimension_numbers = #tpu.dot_dimension_numbers<[1], [0], [0], [1], [0, 0, 1, 1], [], []>} : vector<4x4xf32>, vector<4x16xf32>, vector<4x16xf32> -> vector<4x16xf32>
    %202 = arith.addf %195, %201 : vector<4x16xf32>
    %c8_241 = arith.constant 8 : index
    %c0_242 = arith.constant 0 : index
    %c0_243 = arith.constant 0 : index
    %203 = vector.load %arg2[%c8_241, %c0_242, %c0_243] : memref<9x16x16xf32, #tpu.memory_space<vmem>>, vector<1x16x16xf32>
    %204 = vector.shape_cast %203 : vector<1x16x16xf32> to vector<16x16xf32>
    %cst_244 = arith.constant dense<0.000000e+00> : vector<4x16xf32>
    %205 = tpu.matmul %141, %204, %cst_244 {dimension_numbers = #tpu.dot_dimension_numbers<[1], [0], [0], [1], [0, 0, 1, 1], [], []>} : vector<4x16xf32>, vector<16x16xf32>, vector<4x16xf32> -> vector<4x16xf32>
    %c2_245 = arith.constant 2 : index
    %c8_246 = arith.constant 8 : index
    %c0_247 = arith.constant 0 : index
    %c0_248 = arith.constant 0 : index
    %206 = vector.load %arg3[%c2_245, %c8_246, %c0_247, %c0_248] : memref<3x9x4x4xf32, #tpu.memory_space<vmem>>, vector<1x1x4x4xf32>
    %207 = vector.shape_cast %206 : vector<1x1x4x4xf32> to vector<4x4xf32>
    %cst_249 = arith.constant dense<0.000000e+00> : vector<4x16xf32>
    %208 = tpu.matmul %207, %205, %cst_249 {dimension_numbers = #tpu.dot_dimension_numbers<[1], [0], [0], [1], [0, 0, 1, 1], [], []>} : vector<4x4xf32>, vector<4x16xf32>, vector<4x16xf32> -> vector<4x16xf32>
    %209 = arith.addf %202, %208 : vector<4x16xf32>
    %c0_250 = arith.constant 0 : index
    %c0_251 = arith.constant 0 : index
    %c0_252 = arith.constant 0 : index
    %210 = vector.load %arg5[%c0_250, %c0_251, %c0_252] : memref<1x4x16xf32, #tpu.memory_space<vmem>>, vector<1x4x16xf32>
    %211 = vector.shape_cast %210 : vector<1x4x16xf32> to vector<4x16xf32>
    %212 = vector.shape_cast %209 : vector<4x16xf32> to vector<1x4x16xf32>
    tpu.vector_store %arg5[%c0_250, %c0_251, %c0_252], %212 {strides = array<i32>} : memref<1x4x16xf32, #tpu.memory_space<vmem>>, vector<1x4x16xf32>,
    return
  }
  func.func @transform_0(%arg0: i32) -> (i32, i32, i32) {
    %c0_i32 = arith.constant 0 : i32
    %c0_i32_0 = arith.constant 0 : i32
    %c0_i32_1 = arith.constant 0 : i32
    return %arg0, %c0_i32, %c0_i32_0 : i32, i32, i32
  }
  func.func @transform_1(%arg0: i32) -> (i32, i32, i32) {
    %c0_i32 = arith.constant 0 : i32
    %c0_i32_0 = arith.constant 0 : i32
    %c0_i32_1 = arith.constant 0 : i32
    %c0_i32_2 = arith.constant 0 : i32
    return %c0_i32, %c0_i32_0, %c0_i32_1 : i32, i32, i32
  }
  func.func @transform_2(%arg0: i32) -> (i32, i32, i32, i32) {
    %c0_i32 = arith.constant 0 : i32
    %c0_i32_0 = arith.constant 0 : i32
    %c0_i32_1 = arith.constant 0 : i32
    %c0_i32_2 = arith.constant 0 : i32
    %c0_i32_3 = arith.constant 0 : i32
    return %c0_i32, %c0_i32_0, %c0_i32_1, %c0_i32_2 : i32, i32, i32, i32
  }
  func.func @transform_3(%arg0: i32) -> (i32, i32, i32) {
    %c0_i32 = arith.constant 0 : i32
    %c0_i32_0 = arith.constant 0 : i32
    %c0_i32_1 = arith.constant 0 : i32
    %c0_i32_2 = arith.constant 0 : i32
    return %c0_i32, %c0_i32_0, %c0_i32_1 : i32, i32, i32
  }
  func.func @transform_4(%arg0: i32) -> (i32, i32, i32) {
    %c0_i32 = arith.constant 0 : i32
    %c0_i32_0 = arith.constant 0 : i32
    %c0_i32_1 = arith.constant 0 : i32
    return %arg0, %c0_i32, %c0_i32_0 : i32, i32, i32
  }
}

module attributes {stable_mosaic.version = 11 : i64} {
  func.func @_esa_tail_kernel(%arg0: i32, %arg1: i32, %arg2: memref<1x16x512xf32, #tpu.memory_space<vmem>>, %arg3: memref<1x4x16xf32, #tpu.memory_space<vmem>>, %arg4: memref<16x512xf32, #tpu.memory_space<vmem>>, %arg5: memref<4x16xf32, #tpu.memory_space<vmem>>, %arg6: memref<4x1xf32, #tpu.memory_space<vmem>>, %arg7: memref<4x4xf32, #tpu.memory_space<vmem>>, %arg8: memref<4x1xf32, #tpu.memory_space<vmem>>, %arg9: memref<16x4xf32, #tpu.memory_space<vmem>>, %arg10: memref<16x1xf32, #tpu.memory_space<vmem>>, %arg11: memref<1x16x512xf32, #tpu.memory_space<vmem>>) attributes {dimension_semantics = [#tpu.dimension_semantics<parallel>, #tpu.dimension_semantics<parallel>], iteration_bounds = array<i64: 2, 2>, scalar_prefetch = 0 : i64, scratch_operands = 0 : i64, tpu.core_type = #tpu.core_type<tc>, window_params = [{transform_indices = @transform_0, window_bounds = array<i64: 1, 16, 512>}, {transform_indices = @transform_1, window_bounds = array<i64: 1, 4, 16>}, {transform_indices = @transform_2, window_bounds = array<i64: 16, 512>}, {pipeline_mode = #tpu.pipeline_mode<synchronous>, transform_indices = @transform_3, window_bounds = array<i64: 4, 16>}, {pipeline_mode = #tpu.pipeline_mode<synchronous>, transform_indices = @transform_4, window_bounds = array<i64: 4, 1>}, {pipeline_mode = #tpu.pipeline_mode<synchronous>, transform_indices = @transform_5, window_bounds = array<i64: 4, 4>}, {pipeline_mode = #tpu.pipeline_mode<synchronous>, transform_indices = @transform_6, window_bounds = array<i64: 4, 1>}, {pipeline_mode = #tpu.pipeline_mode<synchronous>, transform_indices = @transform_7, window_bounds = array<i64: 16, 4>}, {pipeline_mode = #tpu.pipeline_mode<synchronous>, transform_indices = @transform_8, window_bounds = array<i64: 16, 1>}, {transform_indices = @transform_9, window_bounds = array<i64: 1, 16, 512>}]} {
    %c0 = arith.constant 0 : index
    %c0_0 = arith.constant 0 : index
    %c0_1 = arith.constant 0 : index
    %0 = vector.load %arg2[%c0, %c0_0, %c0_1] : memref<1x16x512xf32, #tpu.memory_space<vmem>>, vector<1x16x512xf32>
    %1 = vector.shape_cast %0 : vector<1x16x512xf32> to vector<16x512xf32>
    %c0_2 = arith.constant 0 : index
    %c0_3 = arith.constant 0 : index
    %2 = vector.load %arg5[%c0_2, %c0_3] : memref<4x16xf32, #tpu.memory_space<vmem>>, vector<4x16xf32>
    %cst = arith.constant dense<0.000000e+00> : vector<4x512xf32>
    %3 = tpu.matmul %2, %1, %cst {dimension_numbers = #tpu.dot_dimension_numbers<[1], [0], [0], [1], [0, 0, 1, 1], [], []>} : vector<4x16xf32>, vector<16x512xf32>, vector<4x512xf32> -> vector<4x512xf32>
    %c0_4 = arith.constant 0 : index
    %c0_5 = arith.constant 0 : index
    %4 = vector.load %arg6[%c0_4, %c0_5] : memref<4x1xf32, #tpu.memory_space<vmem>>, vector<4x1xf32>
    %5 = vector.broadcast %4 : vector<4x1xf32> to vector<4x512xf32>
    %6 = arith.addf %3, %5 : vector<4x512xf32>
    %c0_6 = arith.constant 0 : index
    %c0_7 = arith.constant 0 : index
    %7 = vector.load %arg7[%c0_6, %c0_7] : memref<4x4xf32, #tpu.memory_space<vmem>>, vector<4x4xf32>
    %cst_8 = arith.constant dense<0.000000e+00> : vector<4x512xf32>
    %8 = tpu.matmul %7, %6, %cst_8 {dimension_numbers = #tpu.dot_dimension_numbers<[1], [0], [0], [1], [0, 0, 1, 1], [], []>} : vector<4x4xf32>, vector<4x512xf32>, vector<4x512xf32> -> vector<4x512xf32>
    %c0_9 = arith.constant 0 : index
    %c0_10 = arith.constant 0 : index
    %9 = vector.load %arg8[%c0_9, %c0_10] : memref<4x1xf32, #tpu.memory_space<vmem>>, vector<4x1xf32>
    %10 = vector.broadcast %9 : vector<4x1xf32> to vector<4x512xf32>
    %11 = arith.addf %8, %10 : vector<4x512xf32>
    %c0_11 = arith.constant 0 : index
    %c0_12 = arith.constant 0 : index
    %c0_13 = arith.constant 0 : index
    %12 = vector.load %arg3[%c0_11, %c0_12, %c0_13] : memref<1x4x16xf32, #tpu.memory_space<vmem>>, vector<1x4x16xf32>
    %13 = vector.shape_cast %12 : vector<1x4x16xf32> to vector<4x16xf32>
    %c0_14 = arith.constant 0 : index
    %c0_15 = arith.constant 0 : index
    %14 = vector.load %arg4[%c0_14, %c0_15] : memref<16x512xf32, #tpu.memory_space<vmem>>, vector<16x512xf32>
    %cst_16 = arith.constant dense<0.000000e+00> : vector<4x512xf32>
    %15 = tpu.matmul %13, %14, %cst_16 {dimension_numbers = #tpu.dot_dimension_numbers<[1], [0], [0], [1], [0, 0, 1, 1], [], []>} : vector<4x16xf32>, vector<16x512xf32>, vector<4x512xf32> -> vector<4x512xf32>
    %c0_17 = arith.constant 0 : index
    %c0_18 = arith.constant 0 : index
    %16 = vector.load %arg9[%c0_17, %c0_18] : memref<16x4xf32, #tpu.memory_space<vmem>>, vector<16x4xf32>
    %17 = arith.addf %11, %15 : vector<4x512xf32>
    %cst_19 = arith.constant dense<0.000000e+00> : vector<16x512xf32>
    %18 = tpu.matmul %16, %17, %cst_19 {dimension_numbers = #tpu.dot_dimension_numbers<[1], [0], [0], [1], [0, 0, 1, 1], [], []>} : vector<16x4xf32>, vector<4x512xf32>, vector<16x512xf32> -> vector<16x512xf32>
    %c0_20 = arith.constant 0 : index
    %c0_21 = arith.constant 0 : index
    %19 = vector.load %arg10[%c0_20, %c0_21] : memref<16x1xf32, #tpu.memory_space<vmem>>, vector<16x1xf32>
    %20 = vector.broadcast %19 : vector<16x1xf32> to vector<16x512xf32>
    %21 = arith.addf %18, %20 : vector<16x512xf32>
    %22 = arith.negf %21 : vector<16x512xf32>
    %23 = math.exp %22 : vector<16x512xf32>
    %cst_22 = arith.constant 1.000000e+00 : f32
    %24 = vector.broadcast %cst_22 : f32 to vector<16x512xf32>
    %25 = arith.addf %24, %23 : vector<16x512xf32>
    %26 = arith.divf %24, %25 : vector<16x512xf32>
    %27 = arith.mulf %1, %26 : vector<16x512xf32>
    %c0_23 = arith.constant 0 : index
    %c0_24 = arith.constant 0 : index
    %c0_25 = arith.constant 0 : index
    %28 = vector.load %arg11[%c0_23, %c0_24, %c0_25] : memref<1x16x512xf32, #tpu.memory_space<vmem>>, vector<1x16x512xf32>
    %29 = vector.shape_cast %28 : vector<1x16x512xf32> to vector<16x512xf32>
    %30 = vector.shape_cast %27 : vector<16x512xf32> to vector<1x16x512xf32>
    tpu.vector_store %arg11[%c0_23, %c0_24, %c0_25], %30 {strides = array<i32>} : memref<1x16x512xf32, #tpu.memory_space<vmem>>, vector<1x16x512xf32>,
    return
  }
  func.func @transform_0(%arg0: i32, %arg1: i32) -> (i32, i32, i32) {
    %c0_i32 = arith.constant 0 : i32
    %c0_i32_0 = arith.constant 0 : i32
    return %arg1, %c0_i32, %arg0 : i32, i32, i32
  }
  func.func @transform_1(%arg0: i32, %arg1: i32) -> (i32, i32, i32) {
    %c0_i32 = arith.constant 0 : i32
    %c0_i32_0 = arith.constant 0 : i32
    %c0_i32_1 = arith.constant 0 : i32
    return %arg1, %c0_i32, %c0_i32_0 : i32, i32, i32
  }
  func.func @transform_2(%arg0: i32, %arg1: i32) -> (i32, i32) {
    %c0_i32 = arith.constant 0 : i32
    %c0_i32_0 = arith.constant 0 : i32
    return %c0_i32, %arg0 : i32, i32
  }
  func.func @transform_3(%arg0: i32, %arg1: i32) -> (i32, i32) {
    %c0_i32 = arith.constant 0 : i32
    %c0_i32_0 = arith.constant 0 : i32
    %c0_i32_1 = arith.constant 0 : i32
    return %c0_i32, %c0_i32_0 : i32, i32
  }
  func.func @transform_4(%arg0: i32, %arg1: i32) -> (i32, i32) {
    %c0_i32 = arith.constant 0 : i32
    %c0_i32_0 = arith.constant 0 : i32
    %c0_i32_1 = arith.constant 0 : i32
    return %c0_i32, %c0_i32_0 : i32, i32
  }
  func.func @transform_5(%arg0: i32, %arg1: i32) -> (i32, i32) {
    %c0_i32 = arith.constant 0 : i32
    %c0_i32_0 = arith.constant 0 : i32
    %c0_i32_1 = arith.constant 0 : i32
    return %c0_i32, %c0_i32_0 : i32, i32
  }
  func.func @transform_6(%arg0: i32, %arg1: i32) -> (i32, i32) {
    %c0_i32 = arith.constant 0 : i32
    %c0_i32_0 = arith.constant 0 : i32
    %c0_i32_1 = arith.constant 0 : i32
    return %c0_i32, %c0_i32_0 : i32, i32
  }
  func.func @transform_7(%arg0: i32, %arg1: i32) -> (i32, i32) {
    %c0_i32 = arith.constant 0 : i32
    %c0_i32_0 = arith.constant 0 : i32
    %c0_i32_1 = arith.constant 0 : i32
    return %c0_i32, %c0_i32_0 : i32, i32
  }
  func.func @transform_8(%arg0: i32, %arg1: i32) -> (i32, i32) {
    %c0_i32 = arith.constant 0 : i32
    %c0_i32_0 = arith.constant 0 : i32
    %c0_i32_1 = arith.constant 0 : i32
    return %c0_i32, %c0_i32_0 : i32, i32
  }
  func.func @transform_9(%arg0: i32, %arg1: i32) -> (i32, i32, i32) {
    %c0_i32 = arith.constant 0 : i32
    %c0_i32_0 = arith.constant 0 : i32
    return %arg1, %c0_i32, %arg0 : i32, i32, i32
  }
}

</mosaic_0001>

<llo_original>
// kernel: esa_forward.4
$region0: #{esa_forward.4}
  #allocation0 [shape = 'u32[]', space=smem, size = 0x4, offset = 0x4, fixed_abs, tag = 'smem constant byte address 0x4 - core index']
  #allocation1 [shape = 'u32[144,128]{1,0:T(1,128)}', space=vmem, size = 0x12000, scoped, tag = 'internal scratch']
  %s0 = inlined_call_operand.vmem [shape: f32[2,16,1024], index: 0, kind: input, shape index: {}]
  %s1 = inlined_call_operand.vmem [shape: f32[4,16], index: 1, kind: input, shape index: {}]
  %s2 = inlined_call_operand.vmem [shape: f32[4,1], index: 2, kind: input, shape index: {}]
  %s3 = inlined_call_operand.vmem [shape: f32[2,4,1024], index: 3, kind: output, shape index: {}]
  %s4 = sld [smem:[#allocation0]]
  $region68: #{esa_forward.4} parent=0
    _
  %s6 = ssub.s32 1, %s4
  %s7 = scalar_select 0, %s6, %s4
  $region1: #{esa_forward.4} parent=0
    #allocation2 [shape = 'u8[65536]{0}', space=vmem, size = 0x10000, scoped, tag = 'input window, operand 0']
    loop: start=0, step=1, limit=6
    $region2: #{esa_forward.4} parent=1 // loop_pre_header
      _
    $region3: #{esa_forward.4} parent=1 // loop_header
      %s9 = sphi 0, %s13
      %p10 = scmp.ge.s32.totalorder %s9, 6
      %s16 = sphi 0, %s28
      %s17 = sphi 0, %s24
      %s18 = sphi 0, %s16
      %s19 = sphi 0, %s17
      %s20 = sphi 0, %s18
      %s21 = sphi 0, %s19
      %s33 = sphi 0, %s35
      %s36 = sphi 0, %s33
      %s37 = sphi 0, %s36
      %s53 = sphi 0, %s37
      %s57 = sphi 0, %s57
      %s59 = sphi 0, %s57
      %s60 = sphi 0, %s59
      %s74 = sphi 0, %s60
      %s78 = sphi 0, %s78
      %s80 = sphi 0, %s78
      %s81 = sphi 0, %s80
      %s95 = sphi 0, %s81
      %s103 = sphi 0, %s105
      %s106 = sphi 0, %s103
      %s107 = sphi 0, %s106
      %s123 = sphi 0, %s107
    $region4: #{esa_forward.4} parent=1 // loop_header_branch
      %12 = sbr.rel (%p10) target = $region8
    $region5: #{esa_forward.4} parent=1 // loop_body
      %s14 = ssub.s32 %s9, 1
      %s15 = ssub.s32 %s9, 2
      %s22 = sadd.s32 1, %s17
      %p23 = scmp.ge.s32.totalorder %s22, 2
      %s24 = scalar_select %p23, 0, %s22
      %s25 = sadd.s32 1, %s16
      %s26 = scalar_select %p23, %s25, %s16
      %p27 = scmp.ge.s32.totalorder %s26, 2
      %s28 = scalar_select %p27, 0, %s26
      %s29 = ssub.s32 %s17, %s24
      %s30 = ssub.s32 %s16, %s28
      %s31 = sor.u32 %s29, %s30
      %p32 = scmp.eq.s32.totalorder %s31, 0
      %s34 = sadd.s32 %s33, 1
      %s35 = scalar_select %p32, %s33, %s34
      %p38 = pneg %p32
      %p39 = scmp.eq.s32.totalorder %s9, 3
      %p40 = por %p38, %p39
      %p41 = scmp.ne.s32.totalorder %s33, %s36
      %p42 = scmp.eq.s32.totalorder %s9, 0
      %p43 = por %p41, %p42
      %p44 = scmp.ne.s32.totalorder %s33, %s36
      %p45 = scmp.eq.s32.totalorder %s14, 3
      %p46 = por %p44, %p45
      %p47 = scmp.ne.s32.totalorder %s36, %s37
      %p48 = scmp.eq.s32.totalorder %s14, 0
      %p49 = por %p47, %p48
      %p50 = scmp.ne.s32.totalorder %s36, %s37
      %p51 = scmp.eq.s32.totalorder %s15, 3
      %p52 = por %p50, %p51
      %p54 = scmp.ne.s32.totalorder %s37, %s53
      %p55 = scmp.eq.s32.totalorder %s15, 0
      %p56 = por %p54, %p55
      %s58 = sadd.s32 %s57, 1
      %p61 = scmp.eq.s32.totalorder %s9, 3
      %p62 = scmp.ne.s32.totalorder %s57, %s59
      %p63 = scmp.eq.s32.totalorder %s9, 0
      %p64 = por %p62, %p63
      %p65 = scmp.ne.s32.totalorder %s57, %s59
      %p66 = scmp.eq.s32.totalorder %s14, 3
      %p67 = por %p65, %p66
      %p68 = scmp.ne.s32.totalorder %s59, %s60
      %p69 = scmp.eq.s32.totalorder %s14, 0
      %p70 = por %p68, %p69
      %p71 = scmp.ne.s32.totalorder %s59, %s60
      %p72 = scmp.eq.s32.totalorder %s15, 3
      %p73 = por %p71, %p72
      %p75 = scmp.ne.s32.totalorder %s60, %s74
      %p76 = scmp.eq.s32.totalorder %s15, 0
      %p77 = por %p75, %p76
      %s79 = sadd.s32 %s78, 1
      %p82 = scmp.eq.s32.totalorder %s9, 3
      %p83 = scmp.ne.s32.totalorder %s78, %s80
      %p84 = scmp.eq.s32.totalorder %s9, 0
      %p85 = por %p83, %p84
      %p86 = scmp.ne.s32.totalorder %s78, %s80
      %p87 = scmp.eq.s32.totalorder %s14, 3
      %p88 = por %p86, %p87
      %p89 = scmp.ne.s32.totalorder %s80, %s81
      %p90 = scmp.eq.s32.totalorder %s14, 0
      %p91 = por %p89, %p90
      %p92 = scmp.ne.s32.totalorder %s80, %s81
      %p93 = scmp.eq.s32.totalorder %s15, 3
      %p94 = por %p92, %p93
      %p96 = scmp.ne.s32.totalorder %s81, %s95
      %p97 = scmp.eq.s32.totalorder %s15, 0
      %p98 = por %p96, %p97
      %s99 = ssub.s32 %s17, %s24
      %s100 = ssub.s32 %s16, %s28
      %s101 = sor.u32 %s99, %s100
      %p102 = scmp.eq.s32.totalorder %s101, 0
      %s104 = sadd.s32 %s103, 1
      %s105 = scalar_select %p102, %s103, %s104
      %p108 = pneg %p102
      %p109 = scmp.eq.s32.totalorder %s9, 3
      %p110 = por %p108, %p109
      %p111 = scmp.ne.s32.totalorder %s103, %s106
      %p112 = scmp.eq.s32.totalorder %s9, 0
      %p113 = por %p111, %p112
      %p114 = scmp.ne.s32.totalorder %s103, %s106
      %p115 = scmp.eq.s32.totalorder %s14, 3
      %p116 = por %p114, %p115
      %p117 = scmp.ne.s32.totalorder %s106, %s107
      %p118 = scmp.eq.s32.totalorder %s14, 0
      %p119 = por %p117, %p118
      %p120 = scmp.ne.s32.totalorder %s106, %s107
      %p121 = scmp.eq.s32.totalorder %s15, 3
      %p122 = por %p120, %p121
      %p124 = scmp.ne.s32.totalorder %s107, %s123
      %p125 = scmp.eq.s32.totalorder %s15, 0
      %p126 = por %p124, %p125
      %p127 = scmp.le.s32.totalorder 1, %s9
      %p128 = scmp.lt.s32.totalorder %s9, 5
      %p129 = pnand %p127, %p128
      %p130 = pneg %p129
      // Predicated region
      $region9: #{esa_forward.4} parent=5 // pred_check
        _
      $region10: #{esa_forward.4} parent=5 // pred_check_branch
        %132 = sbr.rel (%p129) target = $region12
      $region11: #{esa_forward.4} parent=5 // pred_region
        %s133 = ssub.s32 %s9, 1
        // Predicated region
        $region13: #{esa_forward.4} parent=11 // pred_check
          %p134 = pneg %p70
        $region14: #{esa_forward.4} parent=11 // pred_check_branch
          %136 = sbr.rel (%p134) target = $region16
        $region15: #{esa_forward.4} parent=11 // pred_region
          _
        $region16: #{esa_forward.4} parent=11 // pred_fallthru
          _
        // Predicated region
        $region17: #{esa_forward.4} parent=11 // pred_check
          %p137 = pneg %p91
        $region18: #{esa_forward.4} parent=11 // pred_check_branch
          %139 = sbr.rel (%p137) target = $region20
        $region19: #{esa_forward.4} parent=11 // pred_region
          _
        $region20: #{esa_forward.4} parent=11 // pred_fallthru
          _
      $region12: #{esa_forward.4} parent=5 // pred_fallthru
        _
      %p140 = scmp.lt.s32.totalorder %s9, 4
      // Predicated region
      $region21: #{esa_forward.4} parent=5 // pred_check
        %p141 = pneg %p140
      $region22: #{esa_forward.4} parent=5 // pred_check_branch
        %143 = sbr.rel (%p141) target = $region24
      $region23: #{esa_forward.4} parent=5 // pred_region
        // Predicated region
        $region25: #{esa_forward.4} parent=23 // pred_check
          %p144 = pneg %p43
        $region26: #{esa_forward.4} parent=23 // pred_check_branch
          %146 = sbr.rel (%p144) target = $region28
        $region27: #{esa_forward.4} parent=23 // pred_region
          %s147 = sand.u32 %s33, 1
          %s148 = sand.u32 %s33, 1
          %s149 = smul.addr %s148, 64
          %s150 = scalar_lea.vmem [#allocation2], %s149
          %s151 = smul.u32 4, %s16
          %s152 = smul.addr %s17, 16
          %s153 = sadd.s32 %s151, %s152
          %s154 = smul.addr %s153, 8
          %s155 = scalar_lea.vmem %s0, %s154
          // Predicated region
          $region29: #{esa_forward.4} parent=27 // pred_check
            _
          $region30: #{esa_forward.4} parent=27 // pred_check_branch
            %157 = sbr.rel (0) target = $region32
          $region31: #{esa_forward.4} parent=27 // pred_region
            // Predicated region
            $region33: #{esa_forward.4} parent=31 // pred_check
              _
            $region34: #{esa_forward.4} parent=31 // pred_check_branch
              %159 = sbr.rel (0) target = $region36
            $region35: #{esa_forward.4} parent=31 // pred_region
              loop: start=0, step=1, limit=1
              $region37: #{esa_forward.4} parent=35 // loop_pre_header
                _
              $region38: #{esa_forward.4} parent=35 // loop_header
                %s161 = sphi 0, %s165
                %p162 = scmp.ge.s32.totalorder %s161, 1
                %s166 = sphi %s155, %s155
                %s167 = sphi %s150, %s150
              $region39: #{esa_forward.4} parent=35 // loop_header_branch
                %164 = sbr.rel (%p162) target = $region43
              $region40: #{esa_forward.4} parent=35 // loop_body
                %v168 = vld [vmem:[%s166] sm:$0xff]
                %169 = vst [vmem:[%s167] sm:$0xff] %v168
                %v170 = vld [vmem:[%s166 + $0x8] sm:$0xff]
                %171 = vst [vmem:[%s167 + $0x8] sm:$0xff] %v170
                %v172 = vld [vmem:[%s166 + $0x10] sm:$0xff]
                %173 = vst [vmem:[%s167 + $0x10] sm:$0xff] %v172
                %v174 = vld [vmem:[%s166 + $0x18] sm:$0xff]
                %175 = vst [vmem:[%s167 + $0x18] sm:$0xff] %v174
                %v176 = vld [vmem:[%s166 + $0x40] sm:$0xff]
                %177 = vst [vmem:[%s167 + $0x20] sm:$0xff] %v176
                %v178 = vld [vmem:[%s166 + $0x48] sm:$0xff]
                %179 = vst [vmem:[%s167 + $0x28] sm:$0xff] %v178
                %v180 = vld [vmem:[%s166 + $0x50] sm:$0xff]
                %181 = vst [vmem:[%s167 + $0x30] sm:$0xff] %v180
                %v182 = vld [vmem:[%s166 + $0x58] sm:$0xff]
                %183 = vst [vmem:[%s167 + $0x38] sm:$0xff] %v182
              $region41: #{esa_forward.4} parent=35 // loop_footer
                %s165 = sadd.s32 1, %s161
              $region42: #{esa_forward.4} parent=35 // loop_footer_branch
                %160 = sbr.rel target = $region38
              $region43: #{esa_forward.4} parent=35 // loop_exit
                _
            $region36: #{esa_forward.4} parent=31 // pred_fallthru
              _
            // Predicated region
            $region44: #{esa_forward.4} parent=31 // pred_check
              _
            $region45: #{esa_forward.4} parent=31 // pred_check_branch
              %185 = sbr.rel target = $region47
            $region46: #{esa_forward.4} parent=31 // pred_region
              _
            $region47: #{esa_forward.4} parent=31 // pred_fallthru
              _
          $region32: #{esa_forward.4} parent=27 // pred_fallthru
            _
          %186 = vnop
        $region28: #{esa_forward.4} parent=23 // pred_fallthru
          _
      $region24: #{esa_forward.4} parent=5 // pred_fallthru
        _
      %p187 = scmp.le.s32.totalorder 1, %s9
      %p188 = scmp.lt.s32.totalorder %s9, 5
      %p189 = pnand %p187, %p188
      %p190 = pneg %p189
      // Predicated region
      $region48: #{esa_forward.4} parent=5 // pred_check
        _
      $region49: #{esa_forward.4} parent=5 // pred_check_branch
        %192 = sbr.rel (%p189) target = $region51
      $region50: #{esa_forward.4} parent=5 // pred_region
        %s193 = ssub.s32 %s9, 1
        %s194 = sand.u32 %s36, 1
        %s195 = sand.u32 %s36, 1
        %s196 = smul.addr %s195, 64
        %s197 = scalar_lea.vmem [#allocation2], %s196
        // Predicated region
        $region52: #{esa_forward.4} parent=50 // pred_check
          %p198 = pneg %p49
        $region53: #{esa_forward.4} parent=50 // pred_check_branch
          %200 = sbr.rel (%p198) target = $region55
        $region54: #{esa_forward.4} parent=50 // pred_region
          _
        $region55: #{esa_forward.4} parent=50 // pred_fallthru
          _
        %s201 = sand.u32 %s36, 1
        %s202 = sand.u32 %s36, 1
        %s203 = smul.addr %s202, 64
        %s204 = scalar_lea.vmem [#allocation2], %s203
        %p205 = pneg %p49
        %p206 = pneg %p46
        %p207 = pneg %p70
        %p208 = pneg %p67
        %p209 = pneg %p91
        %p210 = pneg %p88
        %p211 = pneg %p119
        %p212 = pneg %p116
        %s213 = smul.u32 4, %s18
        %p214 = scmp.lt.s32.totalorder %s19, 1
        %s215 = scalar_select %p214, %s19, 1
        %p216 = scmp.lt.s32.totalorder %s213, 7
        %s217 = scalar_select %p216, %s213, 7
        %s218 = smul.addr %s215, 8
        %s219 = sadd.s32 %s217, %s218
        %s220 = smul.addr %s219, 4
        %s221 = scalar_lea.vmem %s3, %s220
        %s222 = smul.u32 4, %s18
        %s223 = smul.u32 4, %s18
        %p224 = scmp.lt.s32.totalorder %s19, 1
        %s225 = scalar_select %p224, %s19, 1
        %p226 = scmp.lt.s32.totalorder %s223, 7
        %s227 = scalar_select %p226, %s223, 7
        %s228 = smul.addr %s225, 8
        %s229 = sadd.s32 %s227, %s228
        %s230 = smul.addr %s229, 4
        %s231 = scalar_lea.vmem %s3, %s230
        %s232 = smul.u32 4, %s18
        %v233 = vld [vmem:[%s1] sm:$0xf]
        %v234 = vld [vmem:[%s197] sm:$0xff]
        %v235 = vld [vmem:[%s197 + $0x8] sm:$0xff]
        %v236 = vld [vmem:[%s197 + $0x10] sm:$0xff]
        %v237 = vld [vmem:[%s197 + $0x18] sm:$0xff]
        %v238 = vld [vmem:[%s197 + $0x20] sm:$0xff]
        %v239 = vld [vmem:[%s197 + $0x28] sm:$0xff]
        %v240 = vld [vmem:[%s197 + $0x30] sm:$0xff]
        %v241 = vld [vmem:[%s197 + $0x38] sm:$0xff]
        %v242 = vld [vmem:[%s2] sm:$0xf]
        %244 = vset.pattern.permute.xlu0 0
        %245 = vperm.xlu0 %244, %v242
        %v246 = vpop.permute.xlu0 %245
        %vm248 = vcmask 130048
        %v250 = vsel %vm248, %v233, 0
        %252 = vmatprep.subr.mxu0 %v235
        %253 = vmatpush1.msra.mxu0 %v234
        %254 = vmatprep.subr.mxu0 %v239
        %255 = vmatpush1.msra.mxu0 %v238
        %256 = vmatprep.subr.mxu0 0.0
        %257 = vmatpush1.msra.mxu0 0.0
        %258 = vmatprep.subr.mxu0 0.0
        %259 = vmatpush1.msra.mxu0 0.0
        %260 = vmatprep.subr.mxu0 0.0
        %261 = vmatpush1.msra.mxu0 0.0
        %262 = vmatprep.subr.mxu0 0.0
        %263 = vmatpush1.msra.mxu0 0.0
        %264 = vmatprep.subr.mxu0 0.0
        %265 = vmatpush1.msra.mxu0 0.0
        %266 = vmatprep.subr.mxu0 0.0
        %267 = vmatpush1.msra.mxu0 0.0
        %268 = vmatprep.subr.mxu0 0.0
        %269 = vmatpush1.msra.mxu0 0.0
        %270 = vmatprep.subr.mxu0 0.0
        %271 = vmatpush1.msra.mxu0 0.0
        %272 = vmatprep.subr.mxu0 0.0
        %273 = vmatpush1.msra.mxu0 0.0
        %274 = vmatprep.subr.mxu0 0.0
        %275 = vmatpush1.msra.mxu0 0.0
        %276 = vmatprep.subr.mxu0 0.0
        %277 = vmatpush1.msra.mxu0 0.0
        %278 = vmatprep.subr.mxu0 0.0
        %279 = vmatpush1.msra.mxu0 0.0
        %280 = vmatprep.subr.mxu0 0.0
        %281 = vmatpush1.msra.mxu0 0.0
        %282 = vmatprep.subr.mxu0 0.0
        %283 = vmatpush1.msra.mxu0 0.0
        %284 = vmatprep.subr.mxu0 0.0
        %285 = vmatpush1.msra.mxu0 0.0
        %286 = vmatprep.subr.mxu0 0.0
        %287 = vmatpush1.msra.mxu0 0.0
        %288 = vmatprep.subr.mxu0 0.0
        %289 = vmatpush1.msra.mxu0 0.0
        %290 = vmatprep.subr.mxu0 0.0
        %291 = vmatpush1.msra.mxu0 0.0
        %292 = vmatprep.subr.mxu0 0.0
        %293 = vmatpush1.msra.mxu0 0.0
        %294 = vmatprep.subr.mxu0 0.0
        %295 = vmatpush1.msra.mxu0 0.0
        %296 = vmatprep.subr.mxu0 0.0
        %297 = vmatpush1.msra.mxu0 0.0
        %298 = vmatprep.subr.mxu0 0.0
        %299 = vmatpush1.msra.mxu0 0.0
        %300 = vmatprep.subr.mxu0 0.0
        %301 = vmatpush1.msra.mxu0 0.0
        %302 = vmatprep.subr.mxu0 0.0
        %303 = vmatpush1.msra.mxu0 0.0
        %304 = vmatprep.subr.mxu0 0.0
        %305 = vmatpush1.msra.mxu0 0.0
        %306 = vmatprep.subr.mxu0 0.0
        %307 = vmatpush1.msra.mxu0 0.0
        %308 = vmatprep.subr.mxu0 0.0
        %309 = vmatpush1.msra.mxu0 0.0
        %310 = vmatprep.subr.mxu0 0.0
        %311 = vmatpush1.msra.mxu0 0.0
        %312 = vmatprep.subr.mxu0 0.0
        %313 = vmatpush1.msra.mxu0 0.0
        %314 = vmatprep.subr.mxu0 0.0
        %315 = vmatpush1.msra.mxu0 0.0
        %316 = vmatprep.mubr.f32.mxu0 0.0
        %317 = vmatmul.mubr.f32.gmra.mrb[0].mxu0 %v250
        %v318 = vpop.f32.mrb[0].mxu0
        %v319 = vadd.f32 %v246, %v318
        %v320 = vpop.f32.mrb[0].mxu0
        %v321 = vadd.f32 %v246, %v320
        %322 = vdwg.mxu0
        %323 = vmatprep.subr.mxu0 %v237
        %324 = vmatpush1.msra.mxu0 %v236
        %325 = vmatprep.subr.mxu0 %v241
        %326 = vmatpush1.msra.mxu0 %v240
        %327 = vmatprep.subr.mxu0 0.0
        %328 = vmatpush1.msra.mxu0 0.0
        %329 = vmatprep.subr.mxu0 0.0
        %330 = vmatpush1.msra.mxu0 0.0
        %331 = vmatprep.subr.mxu0 0.0
        %332 = vmatpush1.msra.mxu0 0.0
        %333 = vmatprep.subr.mxu0 0.0
        %334 = vmatpush1.msra.mxu0 0.0
        %335 = vmatprep.subr.mxu0 0.0
        %336 = vmatpush1.msra.mxu0 0.0
        %337 = vmatprep.subr.mxu0 0.0
        %338 = vmatpush1.msra.mxu0 0.0
        %339 = vmatprep.subr.mxu0 0.0
        %340 = vmatpush1.msra.mxu0 0.0
        %341 = vmatprep.subr.mxu0 0.0
        %342 = vmatpush1.msra.mxu0 0.0
        %343 = vmatprep.subr.mxu0 0.0
        %344 = vmatpush1.msra.mxu0 0.0
        %345 = vmatprep.subr.mxu0 0.0
        %346 = vmatpush1.msra.mxu0 0.0
        %347 = vmatprep.subr.mxu0 0.0
        %348 = vmatpush1.msra.mxu0 0.0
        %349 = vmatprep.subr.mxu0 0.0
        %350 = vmatpush1.msra.mxu0 0.0
        %351 = vmatprep.subr.mxu0 0.0
        %352 = vmatpush1.msra.mxu0 0.0
        %353 = vmatprep.subr.mxu0 0.0
        %354 = vmatpush1.msra.mxu0 0.0
        %355 = vmatprep.subr.mxu0 0.0
        %356 = vmatpush1.msra.mxu0 0.0
        %357 = vmatprep.subr.mxu0 0.0
        %358 = vmatpush1.msra.mxu0 0.0
        %359 = vmatprep.subr.mxu0 0.0
        %360 = vmatpush1.msra.mxu0 0.0
        %361 = vmatprep.subr.mxu0 0.0
        %362 = vmatpush1.msra.mxu0 0.0
        %363 = vmatprep.subr.mxu0 0.0
        %364 = vmatpush1.msra.mxu0 0.0
        %365 = vmatprep.subr.mxu0 0.0
        %366 = vmatpush1.msra.mxu0 0.0
        %367 = vmatprep.subr.mxu0 0.0
        %368 = vmatpush1.msra.mxu0 0.0
        %369 = vmatprep.subr.mxu0 0.0
        %370 = vmatpush1.msra.mxu0 0.0
        %371 = vmatprep.subr.mxu0 0.0
        %372 = vmatpush1.msra.mxu0 0.0
        %373 = vmatprep.subr.mxu0 0.0
        %374 = vmatpush1.msra.mxu0 0.0
        %375 = vmatprep.subr.mxu0 0.0
        %376 = vmatpush1.msra.mxu0 0.0
        %377 = vmatprep.subr.mxu0 0.0
        %378 = vmatpush1.msra.mxu0 0.0
        %379 = vmatprep.subr.mxu0 0.0
        %380 = vmatpush1.msra.mxu0 0.0
        %381 = vmatprep.subr.mxu0 0.0
        %382 = vmatpush1.msra.mxu0 0.0
        %383 = vmatprep.subr.mxu0 0.0
        %384 = vmatpush1.msra.mxu0 0.0
        %385 = vmatprep.subr.mxu0 0.0
        %386 = vmatpush1.msra.mxu0 0.0
        %387 = vmatprep.mubr.f32.mxu0 0.0
        %388 = vmatmul.mubr.f32.gmra.mrb[0].mxu0 %v250
        %v389 = vpop.f32.mrb[0].mxu0
        %v390 = vadd.f32 %v246, %v389
        %v391 = vpop.f32.mrb[0].mxu0
        %v392 = vadd.f32 %v246, %v391
        %393 = vdwg.mxu0
        %v398 = vcombine.low %v319, %v321
        %v399 = vcombine.low %v390, %v392
        %402 = vst [vmem:[%s231] sm:$0xff] %v398
        %403 = vst [vmem:[%s231 + $0x8] sm:$0xff] %v399
        %s404 = smul.u32 4, %s18
        %p405 = scmp.lt.s32.totalorder %s19, 1
        %s406 = scalar_select %p405, %s19, 1
        %p407 = scmp.lt.s32.totalorder %s404, 7
        %s408 = scalar_select %p407, %s404, 7
        %s409 = smul.addr %s406, 8
        %s410 = sadd.s32 %s408, %s409
        %s411 = smul.addr %s410, 4
        %s412 = scalar_lea.vmem %s3, %s411
        // Predicated region
        $region56: #{esa_forward.4} parent=50 // pred_check
          %p413 = pneg %p116
        $region57: #{esa_forward.4} parent=50 // pred_check_branch
          %415 = sbr.rel (%p413) target = $region59
        $region58: #{esa_forward.4} parent=50 // pred_region
          %s416 = smul.u32 4, %s18
        $region59: #{esa_forward.4} parent=50 // pred_fallthru
          _
      $region51: #{esa_forward.4} parent=5 // pred_fallthru
        _
      %p417 = scmp.le.s32.totalorder 2, %s9
      // Predicated region
      $region60: #{esa_forward.4} parent=5 // pred_check
        %p418 = pneg %p417
      $region61: #{esa_forward.4} parent=5 // pred_check_branch
        %420 = sbr.rel (%p418) target = $region63
      $region62: #{esa_forward.4} parent=5 // pred_region
        %s421 = ssub.s32 %s9, 2
        // Predicated region
        $region64: #{esa_forward.4} parent=62 // pred_check
          %p422 = pneg %p122
        $region65: #{esa_forward.4} parent=62 // pred_check_branch
          %424 = sbr.rel (%p422) target = $region67
        $region66: #{esa_forward.4} parent=62 // pred_region
          %s425 = smul.u32 4, %s20
          %p426 = scmp.lt.s32.totalorder %s21, 1
          %s427 = scalar_select %p426, %s21, 1
          %p428 = scmp.lt.s32.totalorder %s425, 7
          %s429 = scalar_select %p428, %s425, 7
          %s430 = smul.addr %s427, 8
          %s431 = sadd.s32 %s429, %s430
          %s432 = smul.addr %s431, 4
          %s433 = scalar_lea.vmem %s3, %s432
        $region67: #{esa_forward.4} parent=62 // pred_fallthru
          _
      $region63: #{esa_forward.4} parent=5 // pred_fallthru
        _
    $region6: #{esa_forward.4} parent=1 // loop_footer
      %s13 = sadd.s32 1, %s9
    $region7: #{esa_forward.4} parent=1 // loop_footer_branch
      %8 = sbr.rel target = $region3
    $region8: #{esa_forward.4} parent=1 // loop_exit
      _

// kernel: esa_forward.7
$region0: #{esa_forward.7}
  #allocation0 [shape = 'u32[]', space=smem, size = 0x4, offset = 0x4, fixed_abs, tag = 'smem constant byte address 0x4 - core index']
  #allocation1 [shape = 'u32[144,128]{1,0:T(1,128)}', space=vmem, size = 0x12000, scoped, tag = 'internal scratch']
  %s0 = inlined_call_operand.vmem [shape: f32[2,16,1024], index: 0, kind: input, shape index: {}]
  %s1 = inlined_call_operand.vmem [shape: f32[2,4,16], index: 1, kind: input, shape index: {}]
  %s2 = inlined_call_operand.vmem [shape: f32[16,1024], index: 2, kind: input, shape index: {}]
  %s3 = inlined_call_operand.vmem [shape: f32[4,16], index: 3, kind: input, shape index: {}]
  %s4 = inlined_call_operand.vmem [shape: f32[4,1], index: 4, kind: input, shape index: {}]
  %s5 = inlined_call_operand.vmem [shape: f32[4,4], index: 5, kind: input, shape index: {}]
  %s6 = inlined_call_operand.vmem [shape: f32[4,1], index: 6, kind: input, shape index: {}]
  %s7 = inlined_call_operand.vmem [shape: f32[16,4], index: 7, kind: input, shape index: {}]
  %s8 = inlined_call_operand.vmem [shape: f32[16,1], index: 8, kind: input, shape index: {}]
  %s9 = inlined_call_operand.vmem [shape: f32[2,16,1024], index: 9, kind: output, shape index: {}]
  %s10 = sld [smem:[#allocation0]]
  $region134: #{esa_forward.7} parent=0
    _
  %s12 = ssub.s32 1, %s10
  %s13 = scalar_select 0, %s12, %s10
  $region1: #{esa_forward.7} parent=0
    #allocation2 [shape = 'u8[65536]{0}', space=vmem, size = 0x10000, scoped, tag = 'input window, operand 0']
    #allocation3 [shape = 'u8[65536]{0}', space=vmem, size = 0x10000, scoped, tag = 'input window, operand 2']
    #allocation4 [shape = 'u8[65536]{0}', space=vmem, size = 0x10000, scoped, tag = 'output window, operand 0']
    loop: start=0, step=1, limit=6
    $region2: #{esa_forward.7} parent=1 // loop_pre_header
      _
    $region3: #{esa_forward.7} parent=1 // loop_header
      %s15 = sphi 0, %s19
      %p16 = scmp.ge.s32.totalorder %s15, 6
      %s22 = sphi 0, %s34
      %s23 = sphi 0, %s30
      %s24 = sphi 0, %s22
      %s25 = sphi 0, %s23
      %s26 = sphi 0, %s24
      %s27 = sphi 0, %s25
      %s39 = sphi 0, %s41
      %s42 = sphi 0, %s39
      %s43 = sphi 0, %s42
      %s59 = sphi 0, %s43
      %s65 = sphi 0, %s67
      %s68 = sphi 0, %s65
      %s69 = sphi 0, %s68
      %s85 = sphi 0, %s69
      %s91 = sphi 0, %s93
      %s94 = sphi 0, %s91
      %s95 = sphi 0, %s94
      %s111 = sphi 0, %s95
      %s115 = sphi 0, %s115
      %s117 = sphi 0, %s115
      %s118 = sphi 0, %s117
      %s132 = sphi 0, %s118
      %s136 = sphi 0, %s136
      %s138 = sphi 0, %s136
      %s139 = sphi 0, %s138
      %s153 = sphi 0, %s139
      %s157 = sphi 0, %s157
      %s159 = sphi 0, %s157
      %s160 = sphi 0, %s159
      %s174 = sphi 0, %s160
      %s178 = sphi 0, %s178
      %s180 = sphi 0, %s178
      %s181 = sphi 0, %s180
      %s195 = sphi 0, %s181
      %s199 = sphi 0, %s199
      %s201 = sphi 0, %s199
      %s202 = sphi 0, %s201
      %s216 = sphi 0, %s202
      %s220 = sphi 0, %s220
      %s222 = sphi 0, %s220
      %s223 = sphi 0, %s222
      %s237 = sphi 0, %s223
      %s245 = sphi 0, %s247
      %s248 = sphi 0, %s245
      %s249 = sphi 0, %s248
      %s265 = sphi 0, %s249
    $region4: #{esa_forward.7} parent=1 // loop_header_branch
      %18 = sbr.rel (%p16) target = $region8
    $region5: #{esa_forward.7} parent=1 // loop_body
      %s20 = ssub.s32 %s15, 1
      %s21 = ssub.s32 %s15, 2
      %s28 = sadd.s32 1, %s23
      %p29 = scmp.ge.s32.totalorder %s28, 2
      %s30 = scalar_select %p29, 0, %s28
      %s31 = sadd.s32 1, %s22
      %s32 = scalar_select %p29, %s31, %s22
      %p33 = scmp.ge.s32.totalorder %s32, 2
      %s34 = scalar_select %p33, 0, %s32
      %s35 = ssub.s32 %s23, %s30
      %s36 = ssub.s32 %s22, %s34
      %s37 = sor.u32 %s35, %s36
      %p38 = scmp.eq.s32.totalorder %s37, 0
      %s40 = sadd.s32 %s39, 1
      %s41 = scalar_select %p38, %s39, %s40
      %p44 = pneg %p38
      %p45 = scmp.eq.s32.totalorder %s15, 3
      %p46 = por %p44, %p45
      %p47 = scmp.ne.s32.totalorder %s39, %s42
      %p48 = scmp.eq.s32.totalorder %s15, 0
      %p49 = por %p47, %p48
      %p50 = scmp.ne.s32.totalorder %s39, %s42
      %p51 = scmp.eq.s32.totalorder %s20, 3
      %p52 = por %p50, %p51
      %p53 = scmp.ne.s32.totalorder %s42, %s43
      %p54 = scmp.eq.s32.totalorder %s20, 0
      %p55 = por %p53, %p54
      %p56 = scmp.ne.s32.totalorder %s42, %s43
      %p57 = scmp.eq.s32.totalorder %s21, 3
      %p58 = por %p56, %p57
      %p60 = scmp.ne.s32.totalorder %s43, %s59
      %p61 = scmp.eq.s32.totalorder %s21, 0
      %p62 = por %p60, %p61
      %s63 = ssub.s32 %s23, %s30
      %p64 = scmp.eq.s32.totalorder %s63, 0
      %s66 = sadd.s32 %s65, 1
      %s67 = scalar_select %p64, %s65, %s66
      %p70 = pneg %p64
      %p71 = scmp.eq.s32.totalorder %s15, 3
      %p72 = por %p70, %p71
      %p73 = scmp.ne.s32.totalorder %s65, %s68
      %p74 = scmp.eq.s32.totalorder %s15, 0
      %p75 = por %p73, %p74
      %p76 = scmp.ne.s32.totalorder %s65, %s68
      %p77 = scmp.eq.s32.totalorder %s20, 3
      %p78 = por %p76, %p77
      %p79 = scmp.ne.s32.totalorder %s68, %s69
      %p80 = scmp.eq.s32.totalorder %s20, 0
      %p81 = por %p79, %p80
      %p82 = scmp.ne.s32.totalorder %s68, %s69
      %p83 = scmp.eq.s32.totalorder %s21, 3
      %p84 = por %p82, %p83
      %p86 = scmp.ne.s32.totalorder %s69, %s85
      %p87 = scmp.eq.s32.totalorder %s21, 0
      %p88 = por %p86, %p87
      %s89 = ssub.s32 %s22, %s34
      %p90 = scmp.eq.s32.totalorder %s89, 0
      %s92 = sadd.s32 %s91, 1
      %s93 = scalar_select %p90, %s91, %s92
      %p96 = pneg %p90
      %p97 = scmp.eq.s32.totalorder %s15, 3
      %p98 = por %p96, %p97
      %p99 = scmp.ne.s32.totalorder %s91, %s94
      %p100 = scmp.eq.s32.totalorder %s15, 0
      %p101 = por %p99, %p100
      %p102 = scmp.ne.s32.totalorder %s91, %s94
      %p103 = scmp.eq.s32.totalorder %s20, 3
      %p104 = por %p102, %p103
      %p105 = scmp.ne.s32.totalorder %s94, %s95
      %p106 = scmp.eq.s32.totalorder %s20, 0
      %p107 = por %p105, %p106
      %p108 = scmp.ne.s32.totalorder %s94, %s95
      %p109 = scmp.eq.s32.totalorder %s21, 3
      %p110 = por %p108, %p109
      %p112 = scmp.ne.s32.totalorder %s95, %s111
      %p113 = scmp.eq.s32.totalorder %s21, 0
      %p114 = por %p112, %p113
      %s116 = sadd.s32 %s115, 1
      %p119 = scmp.eq.s32.totalorder %s15, 3
      %p120 = scmp.ne.s32.totalorder %s115, %s117
      %p121 = scmp.eq.s32.totalorder %s15, 0
      %p122 = por %p120, %p121
      %p123 = scmp.ne.s32.totalorder %s115, %s117
      %p124 = scmp.eq.s32.totalorder %s20, 3
      %p125 = por %p123, %p124
      %p126 = scmp.ne.s32.totalorder %s117, %s118
      %p127 = scmp.eq.s32.totalorder %s20, 0
      %p128 = por %p126, %p127
      %p129 = scmp.ne.s32.totalorder %s117, %s118
      %p130 = scmp.eq.s32.totalorder %s21, 3
      %p131 = por %p129, %p130
      %p133 = scmp.ne.s32.totalorder %s118, %s132
      %p134 = scmp.eq.s32.totalorder %s21, 0
      %p135 = por %p133, %p134
      %s137 = sadd.s32 %s136, 1
      %p140 = scmp.eq.s32.totalorder %s15, 3
      %p141 = scmp.ne.s32.totalorder %s136, %s138
      %p142 = scmp.eq.s32.totalorder %s15, 0
      %p143 = por %p141, %p142
      %p144 = scmp.ne.s32.totalorder %s136, %s138
      %p145 = scmp.eq.s32.totalorder %s20, 3
      %p146 = por %p144, %p145
      %p147 = scmp.ne.s32.totalorder %s138, %s139
      %p148 = scmp.eq.s32.totalorder %s20, 0
      %p149 = por %p147, %p148
      %p150 = scmp.ne.s32.totalorder %s138, %s139
      %p151 = scmp.eq.s32.totalorder %s21, 3
      %p152 = por %p150, %p151
      %p154 = scmp.ne.s32.totalorder %s139, %s153
      %p155 = scmp.eq.s32.totalorder %s21, 0
      %p156 = por %p154, %p155
      %s158 = sadd.s32 %s157, 1
      %p161 = scmp.eq.s32.totalorder %s15, 3
      %p162 = scmp.ne.s32.totalorder %s157, %s159
      %p163 = scmp.eq.s32.totalorder %s15, 0
      %p164 = por %p162, %p163
      %p165 = scmp.ne.s32.totalorder %s157, %s159
      %p166 = scmp.eq.s32.totalorder %s20, 3
      %p167 = por %p165, %p166
      %p168 = scmp.ne.s32.totalorder %s159, %s160
      %p169 = scmp.eq.s32.totalorder %s20, 0
      %p170 = por %p168, %p169
      %p171 = scmp.ne.s32.totalorder %s159, %s160
      %p172 = scmp.eq.s32.totalorder %s21, 3
      %p173 = por %p171, %p172
      %p175 = scmp.ne.s32.totalorder %s160, %s174
      %p176 = scmp.eq.s32.totalorder %s21, 0
      %p177 = por %p175, %p176
      %s179 = sadd.s32 %s178, 1
      %p182 = scmp.eq.s32.totalorder %s15, 3
      %p183 = scmp.ne.s32.totalorder %s178, %s180
      %p184 = scmp.eq.s32.totalorder %s15, 0
      %p185 = por %p183, %p184
      %p186 = scmp.ne.s32.totalorder %s178, %s180
      %p187 = scmp.eq.s32.totalorder %s20, 3
      %p188 = por %p186, %p187
      %p189 = scmp.ne.s32.totalorder %s180, %s181
      %p190 = scmp.eq.s32.totalorder %s20, 0
      %p191 = por %p189, %p190
      %p192 = scmp.ne.s32.totalorder %s180, %s181
      %p193 = scmp.eq.s32.totalorder %s21, 3
      %p194 = por %p192, %p193
      %p196 = scmp.ne.s32.totalorder %s181, %s195
      %p197 = scmp.eq.s32.totalorder %s21, 0
      %p198 = por %p196, %p197
      %s200 = sadd.s32 %s199, 1
      %p203 = scmp.eq.s32.totalorder %s15, 3
      %p204 = scmp.ne.s32.totalorder %s199, %s201
      %p205 = scmp.eq.s32.totalorder %s15, 0
      %p206 = por %p204, %p205
      %p207 = scmp.ne.s32.totalorder %s199, %s201
      %p208 = scmp.eq.s32.totalorder %s20, 3
      %p209 = por %p207, %p208
      %p210 = scmp.ne.s32.totalorder %s201, %s202
      %p211 = scmp.eq.s32.totalorder %s20, 0
      %p212 = por %p210, %p211
      %p213 = scmp.ne.s32.totalorder %s201, %s202
      %p214 = scmp.eq.s32.totalorder %s21, 3
      %p215 = por %p213, %p214
      %p217 = scmp.ne.s32.totalorder %s202, %s216
      %p218 = scmp.eq.s32.totalorder %s21, 0
      %p219 = por %p217, %p218
      %s221 = sadd.s32 %s220, 1
      %p224 = scmp.eq.s32.totalorder %s15, 3
      %p225 = scmp.ne.s32.totalorder %s220, %s222
      %p226 = scmp.eq.s32.totalorder %s15, 0
      %p227 = por %p225, %p226
      %p228 = scmp.ne.s32.totalorder %s220, %s222
      %p229 = scmp.eq.s32.totalorder %s20, 3
      %p230 = por %p228, %p229
      %p231 = scmp.ne.s32.totalorder %s222, %s223
      %p232 = scmp.eq.s32.totalorder %s20, 0
      %p233 = por %p231, %p232
      %p234 = scmp.ne.s32.totalorder %s222, %s223
      %p235 = scmp.eq.s32.totalorder %s21, 3
      %p236 = por %p234, %p235
      %p238 = scmp.ne.s32.totalorder %s223, %s237
      %p239 = scmp.eq.s32.totalorder %s21, 0
      %p240 = por %p238, %p239
      %s241 = ssub.s32 %s23, %s30
      %s242 = ssub.s32 %s22, %s34
      %s243 = sor.u32 %s241, %s242
      %p244 = scmp.eq.s32.totalorder %s243, 0
      %s246 = sadd.s32 %s245, 1
      %s247 = scalar_select %p244, %s245, %s246
      %p250 = pneg %p244
      %p251 = scmp.eq.s32.totalorder %s15, 3
      %p252 = por %p250, %p251
      %p253 = scmp.ne.s32.totalorder %s245, %s248
      %p254 = scmp.eq.s32.totalorder %s15, 0
      %p255 = por %p253, %p254
      %p256 = scmp.ne.s32.totalorder %s245, %s248
      %p257 = scmp.eq.s32.totalorder %s20, 3
      %p258 = por %p256, %p257
      %p259 = scmp.ne.s32.totalorder %s248, %s249
      %p260 = scmp.eq.s32.totalorder %s20, 0
      %p261 = por %p259, %p260
      %p262 = scmp.ne.s32.totalorder %s248, %s249
      %p263 = scmp.eq.s32.totalorder %s21, 3
      %p264 = por %p262, %p263
      %p266 = scmp.ne.s32.totalorder %s249, %s265
      %p267 = scmp.eq.s32.totalorder %s21, 0
      %p268 = por %p266, %p267
      %p269 = scmp.le.s32.totalorder 1, %s15
      %p270 = scmp.lt.s32.totalorder %s15, 5
      %p271 = pnand %p269, %p270
      %p272 = pneg %p271
      // Predicated region
      $region9: #{esa_forward.7} parent=5 // pred_check
        _
      $region10: #{esa_forward.7} parent=5 // pred_check_branch
        %274 = sbr.rel (%p271) target = $region12
      $region11: #{esa_forward.7} parent=5 // pred_region
        %s275 = ssub.s32 %s15, 1
        // Predicated region
        $region13: #{esa_forward.7} parent=11 // pred_check
          %p276 = pneg %p128
        $region14: #{esa_forward.7} parent=11 // pred_check_branch
          %278 = sbr.rel (%p276) target = $region16
        $region15: #{esa_forward.7} parent=11 // pred_region
          _
        $region16: #{esa_forward.7} parent=11 // pred_fallthru
          _
        // Predicated region
        $region17: #{esa_forward.7} parent=11 // pred_check
          %p279 = pneg %p149
        $region18: #{esa_forward.7} parent=11 // pred_check_branch
          %281 = sbr.rel (%p279) target = $region20
        $region19: #{esa_forward.7} parent=11 // pred_region
          _
        $region20: #{esa_forward.7} parent=11 // pred_fallthru
          _
        // Predicated region
        $region21: #{esa_forward.7} parent=11 // pred_check
          %p282 = pneg %p170
        $region22: #{esa_forward.7} parent=11 // pred_check_branch
          %284 = sbr.rel (%p282) target = $region24
        $region23: #{esa_forward.7} parent=11 // pred_region
          _
        $region24: #{esa_forward.7} parent=11 // pred_fallthru
          _
        // Predicated region
        $region25: #{esa_forward.7} parent=11 // pred_check
          %p285 = pneg %p191
        $region26: #{esa_forward.7} parent=11 // pred_check_branch
          %287 = sbr.rel (%p285) target = $region28
        $region27: #{esa_forward.7} parent=11 // pred_region
          _
        $region28: #{esa_forward.7} parent=11 // pred_fallthru
          _
        // Predicated region
        $region29: #{esa_forward.7} parent=11 // pred_check
          %p288 = pneg %p212
        $region30: #{esa_forward.7} parent=11 // pred_check_branch
          %290 = sbr.rel (%p288) target = $region32
        $region31: #{esa_forward.7} parent=11 // pred_region
          _
        $region32: #{esa_forward.7} parent=11 // pred_fallthru
          _
        // Predicated region
        $region33: #{esa_forward.7} parent=11 // pred_check
          %p291 = pneg %p233
        $region34: #{esa_forward.7} parent=11 // pred_check_branch
          %293 = sbr.rel (%p291) target = $region36
        $region35: #{esa_forward.7} parent=11 // pred_region
          _
        $region36: #{esa_forward.7} parent=11 // pred_fallthru
          _
      $region12: #{esa_forward.7} parent=5 // pred_fallthru
        _
      %p294 = scmp.lt.s32.totalorder %s15, 4
      // Predicated region
      $region37: #{esa_forward.7} parent=5 // pred_check
        %p295 = pneg %p294
      $region38: #{esa_forward.7} parent=5 // pred_check_branch
        %297 = sbr.rel (%p295) target = $region40
      $region39: #{esa_forward.7} parent=5 // pred_region
        // Predicated region
        $region41: #{esa_forward.7} parent=39 // pred_check
          %p298 = pneg %p49
        $region42: #{esa_forward.7} parent=39 // pred_check_branch
          %300 = sbr.rel (%p298) target = $region44
        $region43: #{esa_forward.7} parent=39 // pred_region
          %s301 = sand.u32 %s39, 1
          %s302 = sand.u32 %s39, 1
          %s303 = smul.addr %s302, 64
          %s304 = scalar_lea.vmem [#allocation2], %s303
          %s305 = smul.u32 4, %s22
          %s306 = smul.addr %s23, 16
          %s307 = sadd.s32 %s305, %s306
          %s308 = smul.addr %s307, 8
          %s309 = scalar_lea.vmem %s0, %s308
          // Predicated region
          $region45: #{esa_forward.7} parent=43 // pred_check
            _
          $region46: #{esa_forward.7} parent=43 // pred_check_branch
            %311 = sbr.rel (0) target = $region48
          $region47: #{esa_forward.7} parent=43 // pred_region
            // Predicated region
            $region49: #{esa_forward.7} parent=47 // pred_check
              _
            $region50: #{esa_forward.7} parent=47 // pred_check_branch
              %313 = sbr.rel (0) target = $region52
            $region51: #{esa_forward.7} parent=47 // pred_region
              loop: start=0, step=1, limit=1
              $region53: #{esa_forward.7} parent=51 // loop_pre_header
                _
              $region54: #{esa_forward.7} parent=51 // loop_header
                %s315 = sphi 0, %s319
                %p316 = scmp.ge.s32.totalorder %s315, 1
                %s320 = sphi %s309, %s309
                %s321 = sphi %s304, %s304
              $region55: #{esa_forward.7} parent=51 // loop_header_branch
                %318 = sbr.rel (%p316) target = $region59
              $region56: #{esa_forward.7} parent=51 // loop_body
                %v322 = vld [vmem:[%s320] sm:$0xff]
                %323 = vst [vmem:[%s321] sm:$0xff] %v322
                %v324 = vld [vmem:[%s320 + $0x8] sm:$0xff]
                %325 = vst [vmem:[%s321 + $0x8] sm:$0xff] %v324
                %v326 = vld [vmem:[%s320 + $0x10] sm:$0xff]
                %327 = vst [vmem:[%s321 + $0x10] sm:$0xff] %v326
                %v328 = vld [vmem:[%s320 + $0x18] sm:$0xff]
                %329 = vst [vmem:[%s321 + $0x18] sm:$0xff] %v328
                %v330 = vld [vmem:[%s320 + $0x40] sm:$0xff]
                %331 = vst [vmem:[%s321 + $0x20] sm:$0xff] %v330
                %v332 = vld [vmem:[%s320 + $0x48] sm:$0xff]
                %333 = vst [vmem:[%s321 + $0x28] sm:$0xff] %v332
                %v334 = vld [vmem:[%s320 + $0x50] sm:$0xff]
                %335 = vst [vmem:[%s321 + $0x30] sm:$0xff] %v334
                %v336 = vld [vmem:[%s320 + $0x58] sm:$0xff]
                %337 = vst [vmem:[%s321 + $0x38] sm:$0xff] %v336
              $region57: #{esa_forward.7} parent=51 // loop_footer
                %s319 = sadd.s32 1, %s315
              $region58: #{esa_forward.7} parent=51 // loop_footer_branch
                %314 = sbr.rel target = $region54
              $region59: #{esa_forward.7} parent=51 // loop_exit
                _
            $region52: #{esa_forward.7} parent=47 // pred_fallthru
              _
            // Predicated region
            $region60: #{esa_forward.7} parent=47 // pred_check
              _
            $region61: #{esa_forward.7} parent=47 // pred_check_branch
              %339 = sbr.rel target = $region63
            $region62: #{esa_forward.7} parent=47 // pred_region
              _
            $region63: #{esa_forward.7} parent=47 // pred_fallthru
              _
          $region48: #{esa_forward.7} parent=43 // pred_fallthru
            _
          %340 = vnop
        $region44: #{esa_forward.7} parent=39 // pred_fallthru
          _
        // Predicated region
        $region64: #{esa_forward.7} parent=39 // pred_check
          %p341 = pneg %p75
        $region65: #{esa_forward.7} parent=39 // pred_check_branch
          %343 = sbr.rel (%p341) target = $region67
        $region66: #{esa_forward.7} parent=39 // pred_region
          %p344 = scmp.lt.s32.totalorder %s23, 1
          %s345 = scalar_select %p344, %s23, 1
          %s346 = smul.addr %s345, 4
          %s347 = scalar_lea.vmem %s1, %s346
        $region67: #{esa_forward.7} parent=39 // pred_fallthru
          _
        // Predicated region
        $region68: #{esa_forward.7} parent=39 // pred_check
          %p348 = pneg %p101
        $region69: #{esa_forward.7} parent=39 // pred_check_branch
          %350 = sbr.rel (%p348) target = $region71
        $region70: #{esa_forward.7} parent=39 // pred_region
          %s351 = sand.u32 %s91, 1
          %s352 = sand.u32 %s91, 1
          %s353 = smul.addr %s352, 64
          %s354 = scalar_lea.vmem [#allocation3], %s353
          %s355 = smul.u32 4, %s22
          %s356 = smul.addr %s355, 8
          %s357 = scalar_lea.vmem %s2, %s356
          // Predicated region
          $region72: #{esa_forward.7} parent=70 // pred_check
            _
          $region73: #{esa_forward.7} parent=70 // pred_check_branch
            %359 = sbr.rel (0) target = $region75
          $region74: #{esa_forward.7} parent=70 // pred_region
            // Predicated region
            $region76: #{esa_forward.7} parent=74 // pred_check
              _
            $region77: #{esa_forward.7} parent=74 // pred_check_branch
              %361 = sbr.rel (0) target = $region79
            $region78: #{esa_forward.7} parent=74 // pred_region
              loop: start=0, step=1, limit=1
              $region80: #{esa_forward.7} parent=78 // loop_pre_header
                _
              $region81: #{esa_forward.7} parent=78 // loop_header
                %s363 = sphi 0, %s367
                %p364 = scmp.ge.s32.totalorder %s363, 1
                %s368 = sphi %s357, %s357
                %s369 = sphi %s354, %s354
              $region82: #{esa_forward.7} parent=78 // loop_header_branch
                %366 = sbr.rel (%p364) target = $region86
              $region83: #{esa_forward.7} parent=78 // loop_body
                %v370 = vld [vmem:[%s368] sm:$0xff]
                %371 = vst [vmem:[%s369] sm:$0xff] %v370
                %v372 = vld [vmem:[%s368 + $0x8] sm:$0xff]
                %373 = vst [vmem:[%s369 + $0x8] sm:$0xff] %v372
                %v374 = vld [vmem:[%s368 + $0x10] sm:$0xff]
                %375 = vst [vmem:[%s369 + $0x10] sm:$0xff] %v374
                %v376 = vld [vmem:[%s368 + $0x18] sm:$0xff]
                %377 = vst [vmem:[%s369 + $0x18] sm:$0xff] %v376
                %v378 = vld [vmem:[%s368 + $0x40] sm:$0xff]
                %379 = vst [vmem:[%s369 + $0x20] sm:$0xff] %v378
                %v380 = vld [vmem:[%s368 + $0x48] sm:$0xff]
                %381 = vst [vmem:[%s369 + $0x28] sm:$0xff] %v380
                %v382 = vld [vmem:[%s368 + $0x50] sm:$0xff]
                %383 = vst [vmem:[%s369 + $0x30] sm:$0xff] %v382
                %v384 = vld [vmem:[%s368 + $0x58] sm:$0xff]
                %385 = vst [vmem:[%s369 + $0x38] sm:$0xff] %v384
              $region84: #{esa_forward.7} parent=78 // loop_footer
                %s367 = sadd.s32 1, %s363
              $region85: #{esa_forward.7} parent=78 // loop_footer_branch
                %362 = sbr.rel target = $region81
              $region86: #{esa_forward.7} parent=78 // loop_exit
                _
            $region79: #{esa_forward.7} parent=74 // pred_fallthru
              _
            // Predicated region
            $region87: #{esa_forward.7} parent=74 // pred_check
              _
            $region88: #{esa_forward.7} parent=74 // pred_check_branch
              %387 = sbr.rel target = $region90
            $region89: #{esa_forward.7} parent=74 // pred_region
              _
            $region90: #{esa_forward.7} parent=74 // pred_fallthru
              _
          $region75: #{esa_forward.7} parent=70 // pred_fallthru
            _
          %388 = vnop
        $region71: #{esa_forward.7} parent=39 // pred_fallthru
          _
      $region40: #{esa_forward.7} parent=5 // pred_fallthru
        _
      %p389 = scmp.le.s32.totalorder 1, %s15
      %p390 = scmp.lt.s32.totalorder %s15, 5
      %p391 = pnand %p389, %p390
      %p392 = pneg %p391
      // Predicated region
      $region91: #{esa_forward.7} parent=5 // pred_check
        _
      $region92: #{esa_forward.7} parent=5 // pred_check_branch
        %394 = sbr.rel (%p391) target = $region94
      $region93: #{esa_forward.7} parent=5 // pred_region
        %s395 = ssub.s32 %s15, 1
        %s396 = sand.u32 %s42, 1
        %s397 = sand.u32 %s42, 1
        %s398 = smul.addr %s397, 64
        %s399 = scalar_lea.vmem [#allocation2], %s398
        // Predicated region
        $region95: #{esa_forward.7} parent=93 // pred_check
          %p400 = pneg %p55
        $region96: #{esa_forward.7} parent=93 // pred_check_branch
          %402 = sbr.rel (%p400) target = $region98
        $region97: #{esa_forward.7} parent=93 // pred_region
          _
        $region98: #{esa_forward.7} parent=93 // pred_fallthru
          _
        %s403 = sand.u32 %s94, 1
        %s404 = sand.u32 %s94, 1
        %s405 = smul.addr %s404, 64
        %s406 = scalar_lea.vmem [#allocation3], %s405
        // Predicated region
        $region99: #{esa_forward.7} parent=93 // pred_check
          %p407 = pneg %p107
        $region100: #{esa_forward.7} parent=93 // pred_check_branch
          %409 = sbr.rel (%p407) target = $region102
        $region101: #{esa_forward.7} parent=93 // pred_region
          _
        $region102: #{esa_forward.7} parent=93 // pred_fallthru
          _
        %s410 = sand.u32 %s42, 1
        %s411 = sand.u32 %s42, 1
        %s412 = smul.addr %s411, 64
        %s413 = scalar_lea.vmem [#allocation2], %s412
        %p414 = pneg %p55
        %p415 = pneg %p52
        %p416 = scmp.lt.s32.totalorder %s25, 1
        %s417 = scalar_select %p416, %s25, 1
        %s418 = smul.addr %s417, 4
        %s419 = scalar_lea.vmem %s1, %s418
        %p420 = pneg %p81
        %p421 = pneg %p78
        %s422 = sand.u32 %s94, 1
        %s423 = sand.u32 %s94, 1
        %s424 = smul.addr %s423, 64
        %s425 = scalar_lea.vmem [#allocation3], %s424
        %p426 = pneg %p107
        %p427 = pneg %p104
        %p428 = pneg %p128
        %p429 = pneg %p125
        %p430 = pneg %p149
        %p431 = pneg %p146
        %p432 = pneg %p170
        %p433 = pneg %p167
        %p434 = pneg %p191
        %p435 = pneg %p188
        %p436 = pneg %p212
        %p437 = pneg %p209
        %p438 = pneg %p233
        %p439 = pneg %p230
        %p440 = pneg %p261
        %p441 = pneg %p258
        %s442 = sand.u32 %s248, 1
        %s443 = sand.u32 %s248, 1
        %s444 = smul.addr %s443, 64
        %s445 = scalar_lea.vmem [#allocation4], %s444
        %s446 = smul.u32 4, %s24
        %p447 = scmp.lt.s32.totalorder %s25, 1
        %s448 = scalar_select %p447, %s25, 1
        %s449 = smul.addr %s448, 4
        %s450 = scalar_lea.vmem %s1, %s449
        %s451 = smul.u32 4, %s24
        %s452 = smul.u32 4, %s24
        %v453 = vld [vmem:[%s399] sm:$0xff]
        %v454 = vld [vmem:[%s399 + $0x8] sm:$0xff]
        %v455 = vld [vmem:[%s399 + $0x10] sm:$0xff]
        %v456 = vld [vmem:[%s399 + $0x18] sm:$0xff]
        %v457 = vld [vmem:[%s399 + $0x20] sm:$0xff]
        %v458 = vld [vmem:[%s399 + $0x28] sm:$0xff]
        %v459 = vld [vmem:[%s399 + $0x30] sm:$0xff]
        %v460 = vld [vmem:[%s399 + $0x38] sm:$0xff]
        %v461 = vld [vmem:[%s3] sm:$0xf]
        %v462 = vld [vmem:[%s4] sm:$0xf]
        %464 = vset.pattern.permute.xlu0 0
        %465 = vperm.xlu0 %464, %v462
        %v466 = vpop.permute.xlu0 %465
        %vm468 = vcmask 130048
        %v470 = vsel %vm468, %v461, 0
        %472 = vmatprep.subr.mxu0 %v454
        %473 = vmatpush1.msra.mxu0 %v453
        %474 = vmatprep.subr.mxu0 %v458
        %475 = vmatpush1.msra.mxu0 %v457
        %476 = vmatprep.subr.mxu0 0.0
        %477 = vmatpush1.msra.mxu0 0.0
        %478 = vmatprep.subr.mxu0 0.0
        %479 = vmatpush1.msra.mxu0 0.0
        %480 = vmatprep.subr.mxu0 0.0
        %481 = vmatpush1.msra.mxu0 0.0
        %482 = vmatprep.subr.mxu0 0.0
        %483 = vmatpush1.msra.mxu0 0.0
        %484 = vmatprep.subr.mxu0 0.0
        %485 = vmatpush1.msra.mxu0 0.0
        %486 = vmatprep.subr.mxu0 0.0
        %487 = vmatpush1.msra.mxu0 0.0
        %488 = vmatprep.subr.mxu0 0.0
        %489 = vmatpush1.msra.mxu0 0.0
        %490 = vmatprep.subr.mxu0 0.0
        %491 = vmatpush1.msra.mxu0 0.0
        %492 = vmatprep.subr.mxu0 0.0
        %493 = vmatpush1.msra.mxu0 0.0
        %494 = vmatprep.subr.mxu0 0.0
        %495 = vmatpush1.msra.mxu0 0.0
        %496 = vmatprep.subr.mxu0 0.0
        %497 = vmatpush1.msra.mxu0 0.0
        %498 = vmatprep.subr.mxu0 0.0
        %499 = vmatpush1.msra.mxu0 0.0
        %500 = vmatprep.subr.mxu0 0.0
        %501 = vmatpush1.msra.mxu0 0.0
        %502 = vmatprep.subr.mxu0 0.0
        %503 = vmatpush1.msra.mxu0 0.0
        %504 = vmatprep.subr.mxu0 0.0
        %505 = vmatpush1.msra.mxu0 0.0
        %506 = vmatprep.subr.mxu0 0.0
        %507 = vmatpush1.msra.mxu0 0.0
        %508 = vmatprep.subr.mxu0 0.0
        %509 = vmatpush1.msra.mxu0 0.0
        %510 = vmatprep.subr.mxu0 0.0
        %511 = vmatpush1.msra.mxu0 0.0
        %512 = vmatprep.subr.mxu0 0.0
        %513 = vmatpush1.msra.mxu0 0.0
        %514 = vmatprep.subr.mxu0 0.0
        %515 = vmatpush1.msra.mxu0 0.0
        %516 = vmatprep.subr.mxu0 0.0
        %517 = vmatpush1.msra.mxu0 0.0
        %518 = vmatprep.subr.mxu0 0.0
        %519 = vmatpush1.msra.mxu0 0.0
        %520 = vmatprep.subr.mxu0 0.0
        %521 = vmatpush1.msra.mxu0 0.0
        %522 = vmatprep.subr.mxu0 0.0
        %523 = vmatpush1.msra.mxu0 0.0
        %524 = vmatprep.subr.mxu0 0.0
        %525 = vmatpush1.msra.mxu0 0.0
        %526 = vmatprep.subr.mxu0 0.0
        %527 = vmatpush1.msra.mxu0 0.0
        %528 = vmatprep.subr.mxu0 0.0
        %529 = vmatpush1.msra.mxu0 0.0
        %530 = vmatprep.subr.mxu0 0.0
        %531 = vmatpush1.msra.mxu0 0.0
        %532 = vmatprep.subr.mxu0 0.0
        %533 = vmatpush1.msra.mxu0 0.0
        %534 = vmatprep.subr.mxu0 0.0
        %535 = vmatpush1.msra.mxu0 0.0
        %536 = vmatprep.mubr.f32.mxu0 0.0
        %537 = vmatmul.mubr.f32.gmra.mrb[0].mxu0 %v470
        %v538 = vpop.f32.mrb[0].mxu0
        %v539 = vadd.f32 %v466, %v538
        %v540 = vpop.f32.mrb[0].mxu0
        %v541 = vadd.f32 %v466, %v540
        %542 = vdwg.mxu0
        %543 = vmatprep.subr.mxu0 %v456
        %544 = vmatpush1.msra.mxu0 %v455
        %545 = vmatprep.subr.mxu0 %v460
        %546 = vmatpush1.msra.mxu0 %v459
        %547 = vmatprep.subr.mxu0 0.0
        %548 = vmatpush1.msra.mxu0 0.0
        %549 = vmatprep.subr.mxu0 0.0
        %550 = vmatpush1.msra.mxu0 0.0
        %551 = vmatprep.subr.mxu0 0.0
        %552 = vmatpush1.msra.mxu0 0.0
        %553 = vmatprep.subr.mxu0 0.0
        %554 = vmatpush1.msra.mxu0 0.0
        %555 = vmatprep.subr.mxu0 0.0
        %556 = vmatpush1.msra.mxu0 0.0
        %557 = vmatprep.subr.mxu0 0.0
        %558 = vmatpush1.msra.mxu0 0.0
        %559 = vmatprep.subr.mxu0 0.0
        %560 = vmatpush1.msra.mxu0 0.0
        %561 = vmatprep.subr.mxu0 0.0
        %562 = vmatpush1.msra.mxu0 0.0
        %563 = vmatprep.subr.mxu0 0.0
        %564 = vmatpush1.msra.mxu0 0.0
        %565 = vmatprep.subr.mxu0 0.0
        %566 = vmatpush1.msra.mxu0 0.0
        %567 = vmatprep.subr.mxu0 0.0
        %568 = vmatpush1.msra.mxu0 0.0
        %569 = vmatprep.subr.mxu0 0.0
        %570 = vmatpush1.msra.mxu0 0.0
        %571 = vmatprep.subr.mxu0 0.0
        %572 = vmatpush1.msra.mxu0 0.0
        %573 = vmatprep.subr.mxu0 0.0
        %574 = vmatpush1.msra.mxu0 0.0
        %575 = vmatprep.subr.mxu0 0.0
        %576 = vmatpush1.msra.mxu0 0.0
        %577 = vmatprep.subr.mxu0 0.0
        %578 = vmatpush1.msra.mxu0 0.0
        %579 = vmatprep.subr.mxu0 0.0
        %580 = vmatpush1.msra.mxu0 0.0
        %581 = vmatprep.subr.mxu0 0.0
        %582 = vmatpush1.msra.mxu0 0.0
        %583 = vmatprep.subr.mxu0 0.0
        %584 = vmatpush1.msra.mxu0 0.0
        %585 = vmatprep.subr.mxu0 0.0
        %586 = vmatpush1.msra.mxu0 0.0
        %587 = vmatprep.subr.mxu0 0.0
        %588 = vmatpush1.msra.mxu0 0.0
        %589 = vmatprep.subr.mxu0 0.0
        %590 = vmatpush1.msra.mxu0 0.0
        %591 = vmatprep.subr.mxu0 0.0
        %592 = vmatpush1.msra.mxu0 0.0
        %593 = vmatprep.subr.mxu0 0.0
        %594 = vmatpush1.msra.mxu0 0.0
        %595 = vmatprep.subr.mxu0 0.0
        %596 = vmatpush1.msra.mxu0 0.0
        %597 = vmatprep.subr.mxu0 0.0
        %598 = vmatpush1.msra.mxu0 0.0
        %599 = vmatprep.subr.mxu0 0.0
        %600 = vmatpush1.msra.mxu0 0.0
        %601 = vmatprep.subr.mxu0 0.0
        %602 = vmatpush1.msra.mxu0 0.0
        %603 = vmatprep.subr.mxu0 0.0
        %604 = vmatpush1.msra.mxu0 0.0
        %605 = vmatprep.subr.mxu0 0.0
        %606 = vmatpush1.msra.mxu0 0.0
        %607 = vmatprep.mubr.f32.mxu0 0.0
        %608 = vmatmul.mubr.f32.gmra.mrb[0].mxu0 %v470
        %v609 = vpop.f32.mrb[0].mxu0
        %v610 = vadd.f32 %v466, %v609
        %v611 = vpop.f32.mrb[0].mxu0
        %v612 = vadd.f32 %v466, %v611
        %613 = vdwg.mxu0
        %v614 = vld [vmem:[%s5] sm:$0xf]
        %v615 = vld [vmem:[%s6] sm:$0xf]
        %617 = vset.pattern.permute.xlu0 0
        %618 = vperm.xlu0 %617, %v615
        %v619 = vpop.permute.xlu0 %618
        %vm621 = vcmask 31744
        %v623 = vsel %vm621, %v614, 0
        %vm625 = vcmask 1043456
        %v627 = vsel %vm625, %v539, 0
        %v630 = vsel %vm625, %v541, 0
        %v633 = vsel %vm625, %v610, 0
        %v636 = vsel %vm625, %v612, 0
        %638 = vmatprep.subr.mxu0 %v630
        %639 = vmatpush1.msra.mxu0 %v627
        %640 = vmatprep.subr.mxu0 0.0
        %641 = vmatpush1.msra.mxu0 0.0
        %642 = vmatprep.subr.mxu0 0.0
        %643 = vmatpush1.msra.mxu0 0.0
        %644 = vmatprep.subr.mxu0 0.0
        %645 = vmatpush1.msra.mxu0 0.0
        %646 = vmatprep.subr.mxu0 0.0
        %647 = vmatpush1.msra.mxu0 0.0
        %648 = vmatprep.subr.mxu0 0.0
        %649 = vmatpush1.msra.mxu0 0.0
        %650 = vmatprep.subr.mxu0 0.0
        %651 = vmatpush1.msra.mxu0 0.0
        %652 = vmatprep.subr.mxu0 0.0
        %653 = vmatpush1.msra.mxu0 0.0
        %654 = vmatprep.subr.mxu0 0.0
        %655 = vmatpush1.msra.mxu0 0.0
        %656 = vmatprep.subr.mxu0 0.0
        %657 = vmatpush1.msra.mxu0 0.0
        %658 = vmatprep.subr.mxu0 0.0
        %659 = vmatpush1.msra.mxu0 0.0
        %660 = vmatprep.subr.mxu0 0.0
        %661 = vmatpush1.msra.mxu0 0.0
        %662 = vmatprep.subr.mxu0 0.0
        %663 = vmatpush1.msra.mxu0 0.0
        %664 = vmatprep.subr.mxu0 0.0
        %665 = vmatpush1.msra.mxu0 0.0
        %666 = vmatprep.subr.mxu0 0.0
        %667 = vmatpush1.msra.mxu0 0.0
        %668 = vmatprep.subr.mxu0 0.0
        %669 = vmatpush1.msra.mxu0 0.0
        %670 = vmatprep.subr.mxu0 0.0
        %671 = vmatpush1.msra.mxu0 0.0
        %672 = vmatprep.subr.mxu0 0.0
        %673 = vmatpush1.msra.mxu0 0.0
        %674 = vmatprep.subr.mxu0 0.0
        %675 = vmatpush1.msra.mxu0 0.0
        %676 = vmatprep.subr.mxu0 0.0
        %677 = vmatpush1.msra.mxu0 0.0
        %678 = vmatprep.subr.mxu0 0.0
        %679 = vmatpush1.msra.mxu0 0.0
        %680 = vmatprep.subr.mxu0 0.0
        %681 = vmatpush1.msra.mxu0 0.0
        %682 = vmatprep.subr.mxu0 0.0
        %683 = vmatpush1.msra.mxu0 0.0
        %684 = vmatprep.subr.mxu0 0.0
        %685 = vmatpush1.msra.mxu0 0.0
        %686 = vmatprep.subr.mxu0 0.0
        %687 = vmatpush1.msra.mxu0 0.0
        %688 = vmatprep.subr.mxu0 0.0
        %689 = vmatpush1.msra.mxu0 0.0
        %690 = vmatprep.subr.mxu0 0.0
        %691 = vmatpush1.msra.mxu0 0.0
        %692 = vmatprep.subr.mxu0 0.0
        %693 = vmatpush1.msra.mxu0 0.0
        %694 = vmatprep.subr.mxu0 0.0
        %695 = vmatpush1.msra.mxu0 0.0
        %696 = vmatprep.subr.mxu0 0.0
        %697 = vmatpush1.msra.mxu0 0.0
        %698 = vmatprep.subr.mxu0 0.0
        %699 = vmatpush1.msra.mxu0 0.0
        %700 = vmatprep.subr.mxu0 0.0
        %701 = vmatpush1.msra.mxu0 0.0
        %702 = vmatprep.mubr.f32.mxu0 0.0
        %703 = vmatmul.mubr.f32.gmra.mrb[0].mxu0 %v623
        %v704 = vpop.f32.mrb[0].mxu0
        %v705 = vadd.f32 %v619, %v704
        %v706 = vpop.f32.mrb[0].mxu0
        %v707 = vadd.f32 %v619, %v706
        %708 = vdwg.mxu0
        %709 = vmatprep.subr.mxu0 %v636
        %710 = vmatpush1.msra.mxu0 %v633
        %711 = vmatprep.subr.mxu0 0.0
        %712 = vmatpush1.msra.mxu0 0.0
        %713 = vmatprep.subr.mxu0 0.0
        %714 = vmatpush1.msra.mxu0 0.0
        %715 = vmatprep.subr.mxu0 0.0
        %716 = vmatpush1.msra.mxu0 0.0
        %717 = vmatprep.subr.mxu0 0.0
        %718 = vmatpush1.msra.mxu0 0.0
        %719 = vmatprep.subr.mxu0 0.0
        %720 = vmatpush1.msra.mxu0 0.0
        %721 = vmatprep.subr.mxu0 0.0
        %722 = vmatpush1.msra.mxu0 0.0
        %723 = vmatprep.subr.mxu0 0.0
        %724 = vmatpush1.msra.mxu0 0.0
        %725 = vmatprep.subr.mxu0 0.0
        %726 = vmatpush1.msra.mxu0 0.0
        %727 = vmatprep.subr.mxu0 0.0
        %728 = vmatpush1.msra.mxu0 0.0
        %729 = vmatprep.subr.mxu0 0.0
        %730 = vmatpush1.msra.mxu0 0.0
        %731 = vmatprep.subr.mxu0 0.0
        %732 = vmatpush1.msra.mxu0 0.0
        %733 = vmatprep.subr.mxu0 0.0
        %734 = vmatpush1.msra.mxu0 0.0
        %735 = vmatprep.subr.mxu0 0.0
        %736 = vmatpush1.msra.mxu0 0.0
        %737 = vmatprep.subr.mxu0 0.0
        %738 = vmatpush1.msra.mxu0 0.0
        %739 = vmatprep.subr.mxu0 0.0
        %740 = vmatpush1.msra.mxu0 0.0
        %741 = vmatprep.subr.mxu0 0.0
        %742 = vmatpush1.msra.mxu0 0.0
        %743 = vmatprep.subr.mxu0 0.0
        %744 = vmatpush1.msra.mxu0 0.0
        %745 = vmatprep.subr.mxu0 0.0
        %746 = vmatpush1.msra.mxu0 0.0
        %747 = vmatprep.subr.mxu0 0.0
        %748 = vmatpush1.msra.mxu0 0.0
        %749 = vmatprep.subr.mxu0 0.0
        %750 = vmatpush1.msra.mxu0 0.0
        %751 = vmatprep.subr.mxu0 0.0
        %752 = vmatpush1.msra.mxu0 0.0
        %753 = vmatprep.subr.mxu0 0.0
        %754 = vmatpush1.msra.mxu0 0.0
        %755 = vmatprep.subr.mxu0 0.0
        %756 = vmatpush1.msra.mxu0 0.0
        %757 = vmatprep.subr.mxu0 0.0
        %758 = vmatpush1.msra.mxu0 0.0
        %759 = vmatprep.subr.mxu0 0.0
        %760 = vmatpush1.msra.mxu0 0.0
        %761 = vmatprep.subr.mxu0 0.0
        %762 = vmatpush1.msra.mxu0 0.0
        %763 = vmatprep.subr.mxu0 0.0
        %764 = vmatpush1.msra.mxu0 0.0
        %765 = vmatprep.subr.mxu0 0.0
        %766 = vmatpush1.msra.mxu0 0.0
        %767 = vmatprep.subr.mxu0 0.0
        %768 = vmatpush1.msra.mxu0 0.0
        %769 = vmatprep.subr.mxu0 0.0
        %770 = vmatpush1.msra.mxu0 0.0
        %771 = vmatprep.subr.mxu0 0.0
        %772 = vmatpush1.msra.mxu0 0.0
        %773 = vmatprep.mubr.f32.mxu0 0.0
        %774 = vmatmul.mubr.f32.gmra.mrb[0].mxu0 %v623
        %v775 = vpop.f32.mrb[0].mxu0
        %v776 = vadd.f32 %v619, %v775
        %v777 = vpop.f32.mrb[0].mxu0
        %v778 = vadd.f32 %v619, %v777
        %779 = vdwg.mxu0
        %v780 = vld [vmem:[%s450] sm:$0xf]
        %v781 = vld [vmem:[%s406] sm:$0xff]
        %v782 = vld [vmem:[%s406 + $0x8] sm:$0xff]
        %v783 = vld [vmem:[%s406 + $0x10] sm:$0xff]
        %v784 = vld [vmem:[%s406 + $0x18] sm:$0xff]
        %v785 = vld [vmem:[%s406 + $0x20] sm:$0xff]
        %v786 = vld [vmem:[%s406 + $0x28] sm:$0xff]
        %v787 = vld [vmem:[%s406 + $0x30] sm:$0xff]
        %v788 = vld [vmem:[%s406 + $0x38] sm:$0xff]
        %v790 = vsel %vm468, %v780, 0
        %792 = vmatprep.subr.mxu0 %v782
        %793 = vmatpush1.msra.mxu0 %v781
        %794 = vmatprep.subr.mxu0 %v786
        %795 = vmatpush1.msra.mxu0 %v785
        %796 = vmatprep.subr.mxu0 0.0
        %797 = vmatpush1.msra.mxu0 0.0
        %798 = vmatprep.subr.mxu0 0.0
        %799 = vmatpush1.msra.mxu0 0.0
        %800 = vmatprep.subr.mxu0 0.0
        %801 = vmatpush1.msra.mxu0 0.0
        %802 = vmatprep.subr.mxu0 0.0
        %803 = vmatpush1.msra.mxu0 0.0
        %804 = vmatprep.subr.mxu0 0.0
        %805 = vmatpush1.msra.mxu0 0.0
        %806 = vmatprep.subr.mxu0 0.0
        %807 = vmatpush1.msra.mxu0 0.0
        %808 = vmatprep.subr.mxu0 0.0
        %809 = vmatpush1.msra.mxu0 0.0
        %810 = vmatprep.subr.mxu0 0.0
        %811 = vmatpush1.msra.mxu0 0.0
        %812 = vmatprep.subr.mxu0 0.0
        %813 = vmatpush1.msra.mxu0 0.0
        %814 = vmatprep.subr.mxu0 0.0
        %815 = vmatpush1.msra.mxu0 0.0
        %816 = vmatprep.subr.mxu0 0.0
        %817 = vmatpush1.msra.mxu0 0.0
        %818 = vmatprep.subr.mxu0 0.0
        %819 = vmatpush1.msra.mxu0 0.0
        %820 = vmatprep.subr.mxu0 0.0
        %821 = vmatpush1.msra.mxu0 0.0
        %822 = vmatprep.subr.mxu0 0.0
        %823 = vmatpush1.msra.mxu0 0.0
        %824 = vmatprep.subr.mxu0 0.0
        %825 = vmatpush1.msra.mxu0 0.0
        %826 = vmatprep.subr.mxu0 0.0
        %827 = vmatpush1.msra.mxu0 0.0
        %828 = vmatprep.subr.mxu0 0.0
        %829 = vmatpush1.msra.mxu0 0.0
        %830 = vmatprep.subr.mxu0 0.0
        %831 = vmatpush1.msra.mxu0 0.0
        %832 = vmatprep.subr.mxu0 0.0
        %833 = vmatpush1.msra.mxu0 0.0
        %834 = vmatprep.subr.mxu0 0.0
        %835 = vmatpush1.msra.mxu0 0.0
        %836 = vmatprep.subr.mxu0 0.0
        %837 = vmatpush1.msra.mxu0 0.0
        %838 = vmatprep.subr.mxu0 0.0
        %839 = vmatpush1.msra.mxu0 0.0
        %840 = vmatprep.subr.mxu0 0.0
        %841 = vmatpush1.msra.mxu0 0.0
        %842 = vmatprep.subr.mxu0 0.0
        %843 = vmatpush1.msra.mxu0 0.0
        %844 = vmatprep.subr.mxu0 0.0
        %845 = vmatpush1.msra.mxu0 0.0
        %846 = vmatprep.subr.mxu0 0.0
        %847 = vmatpush1.msra.mxu0 0.0
        %848 = vmatprep.subr.mxu0 0.0
        %849 = vmatpush1.msra.mxu0 0.0
        %850 = vmatprep.subr.mxu0 0.0
        %851 = vmatpush1.msra.mxu0 0.0
        %852 = vmatprep.subr.mxu0 0.0
        %853 = vmatpush1.msra.mxu0 0.0
        %854 = vmatprep.subr.mxu0 0.0
        %855 = vmatpush1.msra.mxu0 0.0
        %856 = vmatprep.mubr.f32.mxu0 0.0
        %857 = vmatmul.mubr.f32.gmra.mrb[0].mxu0 %v790
        %v858 = vpop.f32.mrb[0].mxu0
        %v859 = vadd.f32 0.0, %v858
        %v860 = vpop.f32.mrb[0].mxu0
        %v861 = vadd.f32 0.0, %v860
        %862 = vdwg.mxu0
        %863 = vmatprep.subr.mxu0 %v784
        %864 = vmatpush1.msra.mxu0 %v783
        %865 = vmatprep.subr.mxu0 %v788
        %866 = vmatpush1.msra.mxu0 %v787
        %867 = vmatprep.subr.mxu0 0.0
        %868 = vmatpush1.msra.mxu0 0.0
        %869 = vmatprep.subr.mxu0 0.0
        %870 = vmatpush1.msra.mxu0 0.0
        %871 = vmatprep.subr.mxu0 0.0
        %872 = vmatpush1.msra.mxu0 0.0
        %873 = vmatprep.subr.mxu0 0.0
        %874 = vmatpush1.msra.mxu0 0.0
        %875 = vmatprep.subr.mxu0 0.0
        %876 = vmatpush1.msra.mxu0 0.0
        %877 = vmatprep.subr.mxu0 0.0
        %878 = vmatpush1.msra.mxu0 0.0
        %879 = vmatprep.subr.mxu0 0.0
        %880 = vmatpush1.msra.mxu0 0.0
        %881 = vmatprep.subr.mxu0 0.0
        %882 = vmatpush1.msra.mxu0 0.0
        %883 = vmatprep.subr.mxu0 0.0
        %884 = vmatpush1.msra.mxu0 0.0
        %885 = vmatprep.subr.mxu0 0.0
        %886 = vmatpush1.msra.mxu0 0.0
        %887 = vmatprep.subr.mxu0 0.0
        %888 = vmatpush1.msra.mxu0 0.0
        %889 = vmatprep.subr.mxu0 0.0
        %890 = vmatpush1.msra.mxu0 0.0
        %891 = vmatprep.subr.mxu0 0.0
        %892 = vmatpush1.msra.mxu0 0.0
        %893 = vmatprep.subr.mxu0 0.0
        %894 = vmatpush1.msra.mxu0 0.0
        %895 = vmatprep.subr.mxu0 0.0
        %896 = vmatpush1.msra.mxu0 0.0
        %897 = vmatprep.subr.mxu0 0.0
        %898 = vmatpush1.msra.mxu0 0.0
        %899 = vmatprep.subr.mxu0 0.0
        %900 = vmatpush1.msra.mxu0 0.0
        %901 = vmatprep.subr.mxu0 0.0
        %902 = vmatpush1.msra.mxu0 0.0
        %903 = vmatprep.subr.mxu0 0.0
        %904 = vmatpush1.msra.mxu0 0.0
        %905 = vmatprep.subr.mxu0 0.0
        %906 = vmatpush1.msra.mxu0 0.0
        %907 = vmatprep.subr.mxu0 0.0
        %908 = vmatpush1.msra.mxu0 0.0
        %909 = vmatprep.subr.mxu0 0.0
        %910 = vmatpush1.msra.mxu0 0.0
        %911 = vmatprep.subr.mxu0 0.0
        %912 = vmatpush1.msra.mxu0 0.0
        %913 = vmatprep.subr.mxu0 0.0
        %914 = vmatpush1.msra.mxu0 0.0
        %915 = vmatprep.subr.mxu0 0.0
        %916 = vmatpush1.msra.mxu0 0.0
        %917 = vmatprep.subr.mxu0 0.0
        %918 = vmatpush1.msra.mxu0 0.0
        %919 = vmatprep.subr.mxu0 0.0
        %920 = vmatpush1.msra.mxu0 0.0
        %921 = vmatprep.subr.mxu0 0.0
        %922 = vmatpush1.msra.mxu0 0.0
        %923 = vmatprep.subr.mxu0 0.0
        %924 = vmatpush1.msra.mxu0 0.0
        %925 = vmatprep.subr.mxu0 0.0
        %926 = vmatpush1.msra.mxu0 0.0
        %927 = vmatprep.mubr.f32.mxu0 0.0
        %928 = vmatmul.mubr.f32.gmra.mrb[0].mxu0 %v790
        %v929 = vpop.f32.mrb[0].mxu0
        %v930 = vadd.f32 0.0, %v929
        %v931 = vpop.f32.mrb[0].mxu0
        %v932 = vadd.f32 0.0, %v931
        %933 = vdwg.mxu0
        %v934 = vld [vmem:[%s7] sm:$0xff]
        %v935 = vld [vmem:[%s7 + $0x8] sm:$0xff]
        %v936 = vadd.f32 %v705, %v859
        %v937 = vadd.f32 %v707, %v861
        %v938 = vadd.f32 %v776, %v930
        %v939 = vadd.f32 %v778, %v932
        %v940 = vld [vmem:[%s8] sm:$0xff]
        %v941 = vld [vmem:[%s8 + $0x8] sm:$0xff]
        %943 = vset.pattern.permute.xlu0 0
        %944 = vperm.xlu0 %943, %v940
        %v945 = vpop.permute.xlu0 %944
        %948 = vset.pattern.permute.xlu0 0
        %949 = vperm.xlu0 %948, %v941
        %v950 = vpop.permute.xlu0 %949
        %v953 = vsel %vm621, %v934, 0
        %v956 = vsel %vm621, %v935, 0
        %v959 = vsel %vm625, %v936, 0
        %v962 = vsel %vm625, %v937, 0
        %v965 = vsel %vm625, %v938, 0
        %v968 = vsel %vm625, %v939, 0
        %970 = vmatprep.subr.mxu0 %v962
        %971 = vmatpush1.msra.mxu0 %v959
        %972 = vmatprep.subr.mxu0 0.0
        %973 = vmatpush1.msra.mxu0 0.0
        %974 = vmatprep.subr.mxu0 0.0
        %975 = vmatpush1.msra.mxu0 0.0
        %976 = vmatprep.subr.mxu0 0.0
        %977 = vmatpush1.msra.mxu0 0.0
        %978 = vmatprep.subr.mxu0 0.0
        %979 = vmatpush1.msra.mxu0 0.0
        %980 = vmatprep.subr.mxu0 0.0
        %981 = vmatpush1.msra.mxu0 0.0
        %982 = vmatprep.subr.mxu0 0.0
        %983 = vmatpush1.msra.mxu0 0.0
        %984 = vmatprep.subr.mxu0 0.0
        %985 = vmatpush1.msra.mxu0 0.0
        %986 = vmatprep.subr.mxu0 0.0
        %987 = vmatpush1.msra.mxu0 0.0
        %988 = vmatprep.subr.mxu0 0.0
        %989 = vmatpush1.msra.mxu0 0.0
        %990 = vmatprep.subr.mxu0 0.0
        %991 = vmatpush1.msra.mxu0 0.0
        %992 = vmatprep.subr.mxu0 0.0
        %993 = vmatpush1.msra.mxu0 0.0
        %994 = vmatprep.subr.mxu0 0.0
        %995 = vmatpush1.msra.mxu0 0.0
        %996 = vmatprep.subr.mxu0 0.0
        %997 = vmatpush1.msra.mxu0 0.0
        %998 = vmatprep.subr.mxu0 0.0
        %999 = vmatpush1.msra.mxu0 0.0
        %1000 = vmatprep.subr.mxu0 0.0
        %1001 = vmatpush1.msra.mxu0 0.0
        %1002 = vmatprep.subr.mxu0 0.0
        %1003 = vmatpush1.msra.mxu0 0.0
        %1004 = vmatprep.subr.mxu0 0.0
        %1005 = vmatpush1.msra.mxu0 0.0
        %1006 = vmatprep.subr.mxu0 0.0
        %1007 = vmatpush1.msra.mxu0 0.0
        %1008 = vmatprep.subr.mxu0 0.0
        %1009 = vmatpush1.msra.mxu0 0.0
        %1010 = vmatprep.subr.mxu0 0.0
        %1011 = vmatpush1.msra.mxu0 0.0
        %1012 = vmatprep.subr.mxu0 0.0
        %1013 = vmatpush1.msra.mxu0 0.0
        %1014 = vmatprep.subr.mxu0 0.0
        %1015 = vmatpush1.msra.mxu0 0.0
        %1016 = vmatprep.subr.mxu0 0.0
        %1017 = vmatpush1.msra.mxu0 0.0
        %1018 = vmatprep.subr.mxu0 0.0
        %1019 = vmatpush1.msra.mxu0 0.0
        %1020 = vmatprep.subr.mxu0 0.0
        %1021 = vmatpush1.msra.mxu0 0.0
        %1022 = vmatprep.subr.mxu0 0.0
        %1023 = vmatpush1.msra.mxu0 0.0
        %1024 = vmatprep.subr.mxu0 0.0
        %1025 = vmatpush1.msra.mxu0 0.0
        %1026 = vmatprep.subr.mxu0 0.0
        %1027 = vmatpush1.msra.mxu0 0.0
        %1028 = vmatprep.subr.mxu0 0.0
        %1029 = vmatpush1.msra.mxu0 0.0
        %1030 = vmatprep.subr.mxu0 0.0
        %1031 = vmatpush1.msra.mxu0 0.0
        %1032 = vmatprep.subr.mxu0 0.0
        %1033 = vmatpush1.msra.mxu0 0.0
        %1034 = vmatprep.mubr.f32.mxu0 0.0
        %1035 = vmatmul.mubr.f32.gmra.mrb[0].mxu0 %v953
        %v1036 = vpop.f32.mrb[0].mxu0
        %v1037 = vadd.f32 %v945, %v1036
        %v1038 = vpop.f32.mrb[0].mxu0
        %v1039 = vadd.f32 %v945, %v1038
        %1040 = vmatprep.mubr.f32.mxu0 0.0
        %1041 = vmatmul.mubr.f32.gmra.mrb[0].mxu0 %v956
        %v1042 = vpop.f32.mrb[0].mxu0
        %v1043 = vadd.f32 %v950, %v1042
        %v1044 = vpop.f32.mrb[0].mxu0
        %v1045 = vadd.f32 %v950, %v1044
        %1046 = vdwg.mxu0
        %1047 = vmatprep.subr.mxu0 %v968
        %1048 = vmatpush1.msra.mxu0 %v965
        %1049 = vmatprep.subr.mxu0 0.0
        %1050 = vmatpush1.msra.mxu0 0.0
        %1051 = vmatprep.subr.mxu0 0.0
        %1052 = vmatpush1.msra.mxu0 0.0
        %1053 = vmatprep.subr.mxu0 0.0
        %1054 = vmatpush1.msra.mxu0 0.0
        %1055 = vmatprep.subr.mxu0 0.0
        %1056 = vmatpush1.msra.mxu0 0.0
        %1057 = vmatprep.subr.mxu0 0.0
        %1058 = vmatpush1.msra.mxu0 0.0
        %1059 = vmatprep.subr.mxu0 0.0
        %1060 = vmatpush1.msra.mxu0 0.0
        %1061 = vmatprep.subr.mxu0 0.0
        %1062 = vmatpush1.msra.mxu0 0.0
        %1063 = vmatprep.subr.mxu0 0.0
        %1064 = vmatpush1.msra.mxu0 0.0
        %1065 = vmatprep.subr.mxu0 0.0
        %1066 = vmatpush1.msra.mxu0 0.0
        %1067 = vmatprep.subr.mxu0 0.0
        %1068 = vmatpush1.msra.mxu0 0.0
        %1069 = vmatprep.subr.mxu0 0.0
        %1070 = vmatpush1.msra.mxu0 0.0
        %1071 = vmatprep.subr.mxu0 0.0
        %1072 = vmatpush1.msra.mxu0 0.0
        %1073 = vmatprep.subr.mxu0 0.0
        %1074 = vmatpush1.msra.mxu0 0.0
        %1075 = vmatprep.subr.mxu0 0.0
        %1076 = vmatpush1.msra.mxu0 0.0
        %1077 = vmatprep.subr.mxu0 0.0
        %1078 = vmatpush1.msra.mxu0 0.0
        %1079 = vmatprep.subr.mxu0 0.0
        %1080 = vmatpush1.msra.mxu0 0.0
        %1081 = vmatprep.subr.mxu0 0.0
        %1082 = vmatpush1.msra.mxu0 0.0
        %1083 = vmatprep.subr.mxu0 0.0
        %1084 = vmatpush1.msra.mxu0 0.0
        %1085 = vmatprep.subr.mxu0 0.0
        %1086 = vmatpush1.msra.mxu0 0.0
        %1087 = vmatprep.subr.mxu0 0.0
        %1088 = vmatpush1.msra.mxu0 0.0
        %1089 = vmatprep.subr.mxu0 0.0
        %1090 = vmatpush1.msra.mxu0 0.0
        %1091 = vmatprep.subr.mxu0 0.0
        %1092 = vmatpush1.msra.mxu0 0.0
        %1093 = vmatprep.subr.mxu0 0.0
        %1094 = vmatpush1.msra.mxu0 0.0
        %1095 = vmatprep.subr.mxu0 0.0
        %1096 = vmatpush1.msra.mxu0 0.0
        %1097 = vmatprep.subr.mxu0 0.0
        %1098 = vmatpush1.msra.mxu0 0.0
        %1099 = vmatprep.subr.mxu0 0.0
        %1100 = vmatpush1.msra.mxu0 0.0
        %1101 = vmatprep.subr.mxu0 0.0
        %1102 = vmatpush1.msra.mxu0 0.0
        %1103 = vmatprep.subr.mxu0 0.0
        %1104 = vmatpush1.msra.mxu0 0.0
        %1105 = vmatprep.subr.mxu0 0.0
        %1106 = vmatpush1.msra.mxu0 0.0
        %1107 = vmatprep.subr.mxu0 0.0
        %1108 = vmatpush1.msra.mxu0 0.0
        %1109 = vmatprep.subr.mxu0 0.0
        %1110 = vmatpush1.msra.mxu0 0.0
        %1111 = vmatprep.mubr.f32.mxu0 0.0
        %1112 = vmatmul.mubr.f32.gmra.mrb[0].mxu0 %v953
        %v1113 = vpop.f32.mrb[0].mxu0
        %v1114 = vadd.f32 %v945, %v1113
        %v1115 = vpop.f32.mrb[0].mxu0
        %v1116 = vadd.f32 %v945, %v1115
        %1117 = vmatprep.mubr.f32.mxu0 0.0
        %1118 = vmatmul.mubr.f32.gmra.mrb[0].mxu0 %v956
        %v1119 = vpop.f32.mrb[0].mxu0
        %v1120 = vadd.f32 %v950, %v1119
        %v1121 = vpop.f32.mrb[0].mxu0
        %v1122 = vadd.f32 %v950, %v1121
        %1123 = vdwg.mxu0
        %v1124 = vxor.u32 %v1037, 2147483648
        %v1125 = vxor.u32 %v1039, 2147483648
        %v1126 = vxor.u32 %v1114, 2147483648
        %v1127 = vxor.u32 %v1116, 2147483648
        %v1128 = vxor.u32 %v1043, 2147483648
        %v1129 = vxor.u32 %v1045, 2147483648
        %v1130 = vxor.u32 %v1120, 2147483648
        %v1131 = vxor.u32 %v1122, 2147483648
        %v1132 = vmul.f32 %v1124, 1.442695
        %v1133 = vpow.pop %v1132
        %v1134 = vmul.f32 %v1125, 1.442695
        %v1135 = vpow.pop %v1134
        %v1136 = vmul.f32 %v1126, 1.442695
        %v1137 = vpow.pop %v1136
        %v1138 = vmul.f32 %v1127, 1.442695
        %v1139 = vpow.pop %v1138
        %v1140 = vmul.f32 %v1128, 1.442695
        %v1141 = vpow.pop %v1140
        %v1142 = vmul.f32 %v1129, 1.442695
        %v1143 = vpow.pop %v1142
        %v1144 = vmul.f32 %v1130, 1.442695
        %v1145 = vpow.pop %v1144
        %v1146 = vmul.f32 %v1131, 1.442695
        %v1147 = vpow.pop %v1146
        %v1148 = vadd.f32 %v1133, 1.0
        %v1149 = vadd.f32 %v1135, 1.0
        %v1150 = vadd.f32 %v1137, 1.0
        %v1151 = vadd.f32 %v1139, 1.0
        %v1152 = vadd.f32 %v1141, 1.0
        %v1153 = vadd.f32 %v1143, 1.0
        %v1154 = vadd.f32 %v1145, 1.0
        %v1155 = vadd.f32 %v1147, 1.0
        %v1156 = vrcp.pop %v1148
        %v1157 = vmul.f32 1.0, %v1156
        %v1158 = vrcp.pop %v1149
        %v1159 = vmul.f32 1.0, %v1158
        %v1160 = vrcp.pop %v1150
        %v1161 = vmul.f32 1.0, %v1160
        %v1162 = vrcp.pop %v1151
        %v1163 = vmul.f32 1.0, %v1162
        %v1164 = vrcp.pop %v1152
        %v1165 = vmul.f32 1.0, %v1164
        %v1166 = vrcp.pop %v1153
        %v1167 = vmul.f32 1.0, %v1166
        %v1168 = vrcp.pop %v1154
        %v1169 = vmul.f32 1.0, %v1168
        %v1170 = vrcp.pop %v1155
        %v1171 = vmul.f32 1.0, %v1170
        %v1172 = vmul.f32 %v453, %v1157
        %v1173 = vmul.f32 %v454, %v1159
        %v1174 = vmul.f32 %v455, %v1161
        %v1175 = vmul.f32 %v456, %v1163
        %v1176 = vmul.f32 %v457, %v1165
        %v1177 = vmul.f32 %v458, %v1167
        %v1178 = vmul.f32 %v459, %v1169
        %v1179 = vmul.f32 %v460, %v1171
        %1180 = vst [vmem:[%s445] sm:$0xff] %v1172
        %1181 = vst [vmem:[%s445 + $0x8] sm:$0xff] %v1173
        %1182 = vst [vmem:[%s445 + $0x10] sm:$0xff] %v1174
        %1183 = vst [vmem:[%s445 + $0x18] sm:$0xff] %v1175
        %1184 = vst [vmem:[%s445 + $0x20] sm:$0xff] %v1176
        %1185 = vst [vmem:[%s445 + $0x28] sm:$0xff] %v1177
        %1186 = vst [vmem:[%s445 + $0x30] sm:$0xff] %v1178
        %1187 = vst [vmem:[%s445 + $0x38] sm:$0xff] %v1179
        %s1188 = sand.u32 %s248, 1
        %s1189 = sand.u32 %s248, 1
        %s1190 = smul.addr %s1189, 64
        %s1191 = scalar_lea.vmem [#allocation4], %s1190
        // Predicated region
        $region103: #{esa_forward.7} parent=93 // pred_check
          %p1192 = pneg %p258
        $region104: #{esa_forward.7} parent=93 // pred_check_branch
          %1194 = sbr.rel (%p1192) target = $region106
        $region105: #{esa_forward.7} parent=93 // pred_region
          %s1195 = smul.u32 4, %s24
          %s1196 = smul.addr %s25, 16
          %s1197 = sadd.s32 %s1195, %s1196
          %s1198 = smul.addr %s1197, 8
          %s1199 = scalar_lea.vmem %s9, %s1198
          // Predicated region
          $region107: #{esa_forward.7} parent=105 // pred_check
            _
          $region108: #{esa_forward.7} parent=105 // pred_check_branch
            %1201 = sbr.rel (0) target = $region110
          $region109: #{esa_forward.7} parent=105 // pred_region
            // Predicated region
            $region111: #{esa_forward.7} parent=109 // pred_check
              _
            $region112: #{esa_forward.7} parent=109 // pred_check_branch
              %1203 = sbr.rel (0) target = $region114
            $region113: #{esa_forward.7} parent=109 // pred_region
              loop: start=0, step=1, limit=1
              $region115: #{esa_forward.7} parent=113 // loop_pre_header
                _
              $region116: #{esa_forward.7} parent=113 // loop_header
                %s1205 = sphi 0, %s1209
                %p1206 = scmp.ge.s32.totalorder %s1205, 1
                %s1210 = sphi %s1191, %s1191
                %s1211 = sphi %s1199, %s1199
              $region117: #{esa_forward.7} parent=113 // loop_header_branch
                %1208 = sbr.rel (%p1206) target = $region121
              $region118: #{esa_forward.7} parent=113 // loop_body
                %v1212 = vld [vmem:[%s1210] sm:$0xff]
                %1213 = vst [vmem:[%s1211] sm:$0xff] %v1212
                %v1214 = vld [vmem:[%s1210 + $0x8] sm:$0xff]
                %1215 = vst [vmem:[%s1211 + $0x8] sm:$0xff] %v1214
                %v1216 = vld [vmem:[%s1210 + $0x10] sm:$0xff]
                %1217 = vst [vmem:[%s1211 + $0x10] sm:$0xff] %v1216
                %v1218 = vld [vmem:[%s1210 + $0x18] sm:$0xff]
                %1219 = vst [vmem:[%s1211 + $0x18] sm:$0xff] %v1218
                %v1220 = vld [vmem:[%s1210 + $0x20] sm:$0xff]
                %1221 = vst [vmem:[%s1211 + $0x40] sm:$0xff] %v1220
                %v1222 = vld [vmem:[%s1210 + $0x28] sm:$0xff]
                %1223 = vst [vmem:[%s1211 + $0x48] sm:$0xff] %v1222
                %v1224 = vld [vmem:[%s1210 + $0x30] sm:$0xff]
                %1225 = vst [vmem:[%s1211 + $0x50] sm:$0xff] %v1224
                %v1226 = vld [vmem:[%s1210 + $0x38] sm:$0xff]
                %1227 = vst [vmem:[%s1211 + $0x58] sm:$0xff] %v1226
              $region119: #{esa_forward.7} parent=113 // loop_footer
                %s1209 = sadd.s32 1, %s1205
              $region120: #{esa_forward.7} parent=113 // loop_footer_branch
                %1204 = sbr.rel target = $region116
              $region121: #{esa_forward.7} parent=113 // loop_exit
                _
            $region114: #{esa_forward.7} parent=109 // pred_fallthru
              _
            // Predicated region
            $region122: #{esa_forward.7} parent=109 // pred_check
              _
            $region123: #{esa_forward.7} parent=109 // pred_check_branch
              %1229 = sbr.rel target = $region125
            $region124: #{esa_forward.7} parent=109 // pred_region
              _
            $region125: #{esa_forward.7} parent=109 // pred_fallthru
              _
          $region110: #{esa_forward.7} parent=105 // pred_fallthru
            _
          %1230 = vnop
        $region106: #{esa_forward.7} parent=93 // pred_fallthru
          _
      $region94: #{esa_forward.7} parent=5 // pred_fallthru
        _
      %p1231 = scmp.le.s32.totalorder 2, %s15
      // Predicated region
      $region126: #{esa_forward.7} parent=5 // pred_check
        %p1232 = pneg %p1231
      $region127: #{esa_forward.7} parent=5 // pred_check_branch
        %1234 = sbr.rel (%p1232) target = $region129
      $region128: #{esa_forward.7} parent=5 // pred_region
        %s1235 = ssub.s32 %s15, 2
        // Predicated region
        $region130: #{esa_forward.7} parent=128 // pred_check
          %p1236 = pneg %p264
        $region131: #{esa_forward.7} parent=128 // pred_check_branch
          %1238 = sbr.rel (%p1236) target = $region133
        $region132: #{esa_forward.7} parent=128 // pred_region
          %s1239 = sand.u32 %s249, 1
          %s1240 = sand.u32 %s249, 1
          %s1241 = smul.addr %s1240, 64
          %s1242 = scalar_lea.vmem [#allocation4], %s1241
        $region133: #{esa_forward.7} parent=128 // pred_fallthru
          _
      $region129: #{esa_forward.7} parent=5 // pred_fallthru
        _
    $region6: #{esa_forward.7} parent=1 // loop_footer
      %s19 = sadd.s32 1, %s15
    $region7: #{esa_forward.7} parent=1 // loop_footer_branch
      %14 = sbr.rel target = $region3
    $region8: #{esa_forward.7} parent=1 // loop_exit
      _

// kernel: esa_forward.5
$region0: #{esa_forward.5}
  #allocation0 [shape = 'u32[]', space=smem, size = 0x4, offset = 0x4, fixed_abs, tag = 'smem constant byte address 0x4 - core index']
  #allocation1 [shape = 'u32[144,128]{1,0:T(1,128)}', space=vmem, size = 0x12000, scoped, tag = 'internal scratch']
  %s0 = inlined_call_operand.vmem [shape: f32[2,4,17,17], index: 0, kind: input, shape index: {}]
  %s1 = inlined_call_operand.vmem [shape: f32[2,4,17,17], index: 1, kind: input, shape index: {}]
  %s2 = inlined_call_operand.vmem [shape: f32[2,4,17,17], index: 2, kind: input, shape index: {}]
  %s3 = inlined_call_operand.vmem [shape: f32[2,4,17,17], index: 3, kind: input, shape index: {}]
  %s4 = inlined_call_operand.vmem [shape: f32[144], index: 4, kind: input, shape index: {}]
  %s5 = inlined_call_operand.vmem [shape: f32[4], index: 5, kind: input, shape index: {}]
  %s6 = inlined_call_operand.vmem [shape: f32[2,4,16,16], index: 6, kind: output, shape index: {}]
  %s7 = sld [smem:[#allocation0]]
  $region65: #{esa_forward.5} parent=0
    _
  %s9 = ssub.s32 1, %s7
  %s10 = scalar_select 0, %s9, %s7
  $region1: #{esa_forward.5} parent=0
    #allocation2 [shape = 'u8[1024]{0}', space=smem, size = 0x400, scoped, tag = 'input window, operand 4, single buffered']
    #allocation3 [shape = 's32[2]{0}', space=sflag, size = 0x8, scoped, tag = 'scoped memory for esa_forward.5']
    #allocation4 [shape = 'u8[512]{0}', space=smem, size = 0x200, scoped, tag = 'input window, operand 5, single buffered']
    #allocation5 [shape = 's32[1]{0}', space=sflag, size = 0x4, scoped, tag = 'scoped memory for esa_forward.5']
    %11 = vsyncpa [#allocation3], 0
    %12 = vsyncpa [#allocation5], 0
    loop: start=0, step=1, limit=4
    $region2: #{esa_forward.5} parent=1 // loop_pre_header
      _
    $region3: #{esa_forward.5} parent=1 // loop_header
      %s14 = sphi 0, %s18
      %p15 = scmp.ge.s32.totalorder %s14, 4
      %s24 = sphi 0, %s26
      %s27 = sphi 0, %s24
      %s28 = sphi 0, %s27
      %s44 = sphi 0, %s28
      %s50 = sphi 0, %s52
      %s53 = sphi 0, %s50
      %s54 = sphi 0, %s53
      %s70 = sphi 0, %s54
      %s76 = sphi 0, %s78
      %s79 = sphi 0, %s76
      %s80 = sphi 0, %s79
      %s96 = sphi 0, %s80
      %s102 = sphi 0, %s104
      %s105 = sphi 0, %s102
      %s106 = sphi 0, %s105
      %s122 = sphi 0, %s106
      %s126 = sphi 0, %s126
      %s128 = sphi 0, %s126
      %s129 = sphi 0, %s128
      %s143 = sphi 0, %s129
      %s147 = sphi 0, %s147
      %s149 = sphi 0, %s147
      %s150 = sphi 0, %s149
      %s164 = sphi 0, %s150
      %s170 = sphi 0, %s172
      %s173 = sphi 0, %s170
      %s174 = sphi 0, %s173
      %s190 = sphi 0, %s174
    $region4: #{esa_forward.5} parent=1 // loop_header_branch
      %17 = sbr.rel (%p15) target = $region8
    $region5: #{esa_forward.5} parent=1 // loop_body
      %s19 = ssub.s32 %s14, 1
      %s20 = ssub.s32 %s14, 2
      %s21 = sadd.s32 %s14, 1
      %s22 = ssub.s32 %s14, %s21
      %p23 = scmp.eq.s32.totalorder %s22, 0
      %s25 = sadd.s32 %s24, 1
      %s26 = scalar_select %p23, %s24, %s25
      %p29 = pneg %p23
      %p30 = scmp.eq.s32.totalorder %s14, 1
      %p31 = por %p29, %p30
      %p32 = scmp.ne.s32.totalorder %s24, %s27
      %p33 = scmp.eq.s32.totalorder %s14, 0
      %p34 = por %p32, %p33
      %p35 = scmp.ne.s32.totalorder %s24, %s27
      %p36 = scmp.eq.s32.totalorder %s19, 1
      %p37 = por %p35, %p36
      %p38 = scmp.ne.s32.totalorder %s27, %s28
      %p39 = scmp.eq.s32.totalorder %s19, 0
      %p40 = por %p38, %p39
      %p41 = scmp.ne.s32.totalorder %s27, %s28
      %p42 = scmp.eq.s32.totalorder %s20, 1
      %p43 = por %p41, %p42
      %p45 = scmp.ne.s32.totalorder %s28, %s44
      %p46 = scmp.eq.s32.totalorder %s20, 0
      %p47 = por %p45, %p46
      %s48 = ssub.s32 %s14, %s21
      %p49 = scmp.eq.s32.totalorder %s48, 0
      %s51 = sadd.s32 %s50, 1
      %s52 = scalar_select %p49, %s50, %s51
      %p55 = pneg %p49
      %p56 = scmp.eq.s32.totalorder %s14, 1
      %p57 = por %p55, %p56
      %p58 = scmp.ne.s32.totalorder %s50, %s53
      %p59 = scmp.eq.s32.totalorder %s14, 0
      %p60 = por %p58, %p59
      %p61 = scmp.ne.s32.totalorder %s50, %s53
      %p62 = scmp.eq.s32.totalorder %s19, 1
      %p63 = por %p61, %p62
      %p64 = scmp.ne.s32.totalorder %s53, %s54
      %p65 = scmp.eq.s32.totalorder %s19, 0
      %p66 = por %p64, %p65
      %p67 = scmp.ne.s32.totalorder %s53, %s54
      %p68 = scmp.eq.s32.totalorder %s20, 1
      %p69 = por %p67, %p68
      %p71 = scmp.ne.s32.totalorder %s54, %s70
      %p72 = scmp.eq.s32.totalorder %s20, 0
      %p73 = por %p71, %p72
      %s74 = ssub.s32 %s14, %s21
      %p75 = scmp.eq.s32.totalorder %s74, 0
      %s77 = sadd.s32 %s76, 1
      %s78 = scalar_select %p75, %s76, %s77
      %p81 = pneg %p75
      %p82 = scmp.eq.s32.totalorder %s14, 1
      %p83 = por %p81, %p82
      %p84 = scmp.ne.s32.totalorder %s76, %s79
      %p85 = scmp.eq.s32.totalorder %s14, 0
      %p86 = por %p84, %p85
      %p87 = scmp.ne.s32.totalorder %s76, %s79
      %p88 = scmp.eq.s32.totalorder %s19, 1
      %p89 = por %p87, %p88
      %p90 = scmp.ne.s32.totalorder %s79, %s80
      %p91 = scmp.eq.s32.totalorder %s19, 0
      %p92 = por %p90, %p91
      %p93 = scmp.ne.s32.totalorder %s79, %s80
      %p94 = scmp.eq.s32.totalorder %s20, 1
      %p95 = por %p93, %p94
      %p97 = scmp.ne.s32.totalorder %s80, %s96
      %p98 = scmp.eq.s32.totalorder %s20, 0
      %p99 = por %p97, %p98
      %s100 = ssub.s32 %s14, %s21
      %p101 = scmp.eq.s32.totalorder %s100, 0
      %s103 = sadd.s32 %s102, 1
      %s104 = scalar_select %p101, %s102, %s103
      %p107 = pneg %p101
      %p108 = scmp.eq.s32.totalorder %s14, 1
      %p109 = por %p107, %p108
      %p110 = scmp.ne.s32.totalorder %s102, %s105
      %p111 = scmp.eq.s32.totalorder %s14, 0
      %p112 = por %p110, %p111
      %p113 = scmp.ne.s32.totalorder %s102, %s105
      %p114 = scmp.eq.s32.totalorder %s19, 1
      %p115 = por %p113, %p114
      %p116 = scmp.ne.s32.totalorder %s105, %s106
      %p117 = scmp.eq.s32.totalorder %s19, 0
      %p118 = por %p116, %p117
      %p119 = scmp.ne.s32.totalorder %s105, %s106
      %p120 = scmp.eq.s32.totalorder %s20, 1
      %p121 = por %p119, %p120
      %p123 = scmp.ne.s32.totalorder %s106, %s122
      %p124 = scmp.eq.s32.totalorder %s20, 0
      %p125 = por %p123, %p124
      %s127 = sadd.s32 %s126, 1
      %p130 = scmp.eq.s32.totalorder %s14, 1
      %p131 = scmp.ne.s32.totalorder %s126, %s128
      %p132 = scmp.eq.s32.totalorder %s14, 0
      %p133 = por %p131, %p132
      %p134 = scmp.ne.s32.totalorder %s126, %s128
      %p135 = scmp.eq.s32.totalorder %s19, 1
      %p136 = por %p134, %p135
      %p137 = scmp.ne.s32.totalorder %s128, %s129
      %p138 = scmp.eq.s32.totalorder %s19, 0
      %p139 = por %p137, %p138
      %p140 = scmp.ne.s32.totalorder %s128, %s129
      %p141 = scmp.eq.s32.totalorder %s20, 1
      %p142 = por %p140, %p141
      %p144 = scmp.ne.s32.totalorder %s129, %s143
      %p145 = scmp.eq.s32.totalorder %s20, 0
      %p146 = por %p144, %p145
      %s148 = sadd.s32 %s147, 1
      %p151 = scmp.eq.s32.totalorder %s14, 1
      %p152 = scmp.ne.s32.totalorder %s147, %s149
      %p153 = scmp.eq.s32.totalorder %s14, 0
      %p154 = por %p152, %p153
      %p155 = scmp.ne.s32.totalorder %s147, %s149
      %p156 = scmp.eq.s32.totalorder %s19, 1
      %p157 = por %p155, %p156
      %p158 = scmp.ne.s32.totalorder %s149, %s150
      %p159 = scmp.eq.s32.totalorder %s19, 0
      %p160 = por %p158, %p159
      %p161 = scmp.ne.s32.totalorder %s149, %s150
      %p162 = scmp.eq.s32.totalorder %s20, 1
      %p163 = por %p161, %p162
      %p165 = scmp.ne.s32.totalorder %s150, %s164
      %p166 = scmp.eq.s32.totalorder %s20, 0
      %p167 = por %p165, %p166
      %s168 = ssub.s32 %s14, %s21
      %p169 = scmp.eq.s32.totalorder %s168, 0
      %s171 = sadd.s32 %s170, 1
      %s172 = scalar_select %p169, %s170, %s171
      %p175 = pneg %p169
      %p176 = scmp.eq.s32.totalorder %s14, 1
      %p177 = por %p175, %p176
      %p178 = scmp.ne.s32.totalorder %s170, %s173
      %p179 = scmp.eq.s32.totalorder %s14, 0
      %p180 = por %p178, %p179
      %p181 = scmp.ne.s32.totalorder %s170, %s173
      %p182 = scmp.eq.s32.totalorder %s19, 1
      %p183 = por %p181, %p182
      %p184 = scmp.ne.s32.totalorder %s173, %s174
      %p185 = scmp.eq.s32.totalorder %s19, 0
      %p186 = por %p184, %p185
      %p187 = scmp.ne.s32.totalorder %s173, %s174
      %p188 = scmp.eq.s32.totalorder %s20, 1
      %p189 = por %p187, %p188
      %p191 = scmp.ne.s32.totalorder %s174, %s190
      %p192 = scmp.eq.s32.totalorder %s20, 0
      %p193 = por %p191, %p192
      %p194 = scmp.le.s32.totalorder 1, %s14
      %p195 = scmp.lt.s32.totalorder %s14, 3
      %p196 = pnand %p194, %p195
      %p197 = pneg %p196
      // Predicated region
      $region9: #{esa_forward.5} parent=5 // pred_check
        _
      $region10: #{esa_forward.5} parent=5 // pred_check_branch
        %199 = sbr.rel (%p196) target = $region12
      $region11: #{esa_forward.5} parent=5 // pred_region
        %s200 = ssub.s32 %s14, 1
        // Predicated region
        $region13: #{esa_forward.5} parent=11 // pred_check
          %p201 = pneg %p139
        $region14: #{esa_forward.5} parent=11 // pred_check_branch
          %203 = sbr.rel (%p201) target = $region16
        $region15: #{esa_forward.5} parent=11 // pred_region
          %s205 = ssub.s32 32, 32
          %206 = vsyncadd [#allocation3], %s205
          %s208 = sshll.u32 %s4, 4
          %s209 = int_to_ptr.vmem [resolvable:$true] %s208
          %211 = dma.vmem_to_smem %s209, 32, [#allocation2], [#allocation3]
        $region16: #{esa_forward.5} parent=11 // pred_fallthru
          _
        // Predicated region
        $region17: #{esa_forward.5} parent=11 // pred_check
          %p212 = pneg %p160
        $region18: #{esa_forward.5} parent=11 // pred_check_branch
          %214 = sbr.rel (%p212) target = $region20
        $region19: #{esa_forward.5} parent=11 // pred_region
          %s216 = ssub.s32 16, 16
          %217 = vsyncadd [#allocation5], %s216
          %s219 = sshll.u32 %s5, 4
          %s220 = int_to_ptr.vmem [resolvable:$true] %s219
          %222 = dma.vmem_to_smem %s220, 16, [#allocation4], [#allocation5]
        $region20: #{esa_forward.5} parent=11 // pred_fallthru
          _
      $region12: #{esa_forward.5} parent=5 // pred_fallthru
        _
      %p223 = scmp.lt.s32.totalorder %s14, 2
      // Predicated region
      $region21: #{esa_forward.5} parent=5 // pred_check
        %p224 = pneg %p223
      $region22: #{esa_forward.5} parent=5 // pred_check_branch
        %226 = sbr.rel (%p224) target = $region24
      $region23: #{esa_forward.5} parent=5 // pred_region
        // Predicated region
        $region25: #{esa_forward.5} parent=23 // pred_check
          %p227 = pneg %p34
        $region26: #{esa_forward.5} parent=23 // pred_check_branch
          %229 = sbr.rel (%p227) target = $region28
        $region27: #{esa_forward.5} parent=23 // pred_region
          %p230 = scmp.lt.s32.totalorder %s14, 1
          %s231 = scalar_select %p230, %s14, 1
          %s232 = smul.addr %s231, 12
          %s233 = smul.addr %s232, 8
          %s234 = scalar_lea.vmem %s0, %s233
        $region28: #{esa_forward.5} parent=23 // pred_fallthru
          _
        // Predicated region
        $region29: #{esa_forward.5} parent=23 // pred_check
          %p235 = pneg %p60
        $region30: #{esa_forward.5} parent=23 // pred_check_branch
          %237 = sbr.rel (%p235) target = $region32
        $region31: #{esa_forward.5} parent=23 // pred_region
          %p238 = scmp.lt.s32.totalorder %s14, 1
          %s239 = scalar_select %p238, %s14, 1
          %s240 = smul.addr %s239, 12
          %s241 = smul.addr %s240, 8
          %s242 = scalar_lea.vmem %s1, %s241
        $region32: #{esa_forward.5} parent=23 // pred_fallthru
          _
        // Predicated region
        $region33: #{esa_forward.5} parent=23 // pred_check
          %p243 = pneg %p86
        $region34: #{esa_forward.5} parent=23 // pred_check_branch
          %245 = sbr.rel (%p243) target = $region36
        $region35: #{esa_forward.5} parent=23 // pred_region
          %p246 = scmp.lt.s32.totalorder %s14, 1
          %s247 = scalar_select %p246, %s14, 1
          %s248 = smul.addr %s247, 12
          %s249 = smul.addr %s248, 8
          %s250 = scalar_lea.vmem %s2, %s249
        $region36: #{esa_forward.5} parent=23 // pred_fallthru
          _
        // Predicated region
        $region37: #{esa_forward.5} parent=23 // pred_check
          %p251 = pneg %p112
        $region38: #{esa_forward.5} parent=23 // pred_check_branch
          %253 = sbr.rel (%p251) target = $region40
        $region39: #{esa_forward.5} parent=23 // pred_region
          %p254 = scmp.lt.s32.totalorder %s14, 1
          %s255 = scalar_select %p254, %s14, 1
          %s256 = smul.addr %s255, 12
          %s257 = smul.addr %s256, 8
          %s258 = scalar_lea.vmem %s3, %s257
        $region40: #{esa_forward.5} parent=23 // pred_fallthru
          _
      $region24: #{esa_forward.5} parent=5 // pred_fallthru
        _
      %p259 = scmp.le.s32.totalorder 1, %s14
      %p260 = scmp.lt.s32.totalorder %s14, 3
      %p261 = pnand %p259, %p260
      %p262 = pneg %p261
      // Predicated region
      $region41: #{esa_forward.5} parent=5 // pred_check
        _
      $region42: #{esa_forward.5} parent=5 // pred_check_branch
        %264 = sbr.rel (%p261) target = $region44
      $region43: #{esa_forward.5} parent=5 // pred_region
        %s265 = ssub.s32 %s14, 1
        // Predicated region
        $region45: #{esa_forward.5} parent=43 // pred_check
          %p266 = pneg %p139
        $region46: #{esa_forward.5} parent=43 // pred_check_branch
          %268 = sbr.rel (%p266) target = $region48
        $region47: #{esa_forward.5} parent=43 // pred_region
          %269 = dma.done [#allocation3], 32
        $region48: #{esa_forward.5} parent=43 // pred_fallthru
          _
        // Predicated region
        $region49: #{esa_forward.5} parent=43 // pred_check
          %p270 = pneg %p160
        $region50: #{esa_forward.5} parent=43 // pred_check_branch
          %272 = sbr.rel (%p270) target = $region52
        $region51: #{esa_forward.5} parent=43 // pred_region
          %273 = dma.done [#allocation5], 16
        $region52: #{esa_forward.5} parent=43 // pred_fallthru
          _
        %274 = sfence
        %p275 = scmp.lt.s32.totalorder %s19, 1
        %s276 = scalar_select %p275, %s19, 1
        %s277 = smul.addr %s276, 12
        %s278 = smul.addr %s277, 8
        %s279 = scalar_lea.vmem %s0, %s278
        %p280 = pneg %p40
        %p281 = pneg %p37
        %p282 = scmp.lt.s32.totalorder %s19, 1
        %s283 = scalar_select %p282, %s19, 1
        %s284 = smul.addr %s283, 12
        %s285 = smul.addr %s284, 8
        %s286 = scalar_lea.vmem %s1, %s285
        %p287 = pneg %p66
        %p288 = pneg %p63
        %p289 = scmp.lt.s32.totalorder %s19, 1
        %s290 = scalar_select %p289, %s19, 1
        %s291 = smul.addr %s290, 12
        %s292 = smul.addr %s291, 8
        %s293 = scalar_lea.vmem %s2, %s292
        %p294 = pneg %p92
        %p295 = pneg %p89
        %p296 = scmp.lt.s32.totalorder %s19, 1
        %s297 = scalar_select %p296, %s19, 1
        %s298 = smul.addr %s297, 12
        %s299 = smul.addr %s298, 8
        %s300 = scalar_lea.vmem %s3, %s299
        %p301 = pneg %p118
        %p302 = pneg %p115
        %p303 = pneg %p139
        %p304 = pneg %p136
        %p305 = pneg %p160
        %p306 = pneg %p157
        %p307 = pneg %p186
        %p308 = pneg %p183
        %p309 = scmp.lt.s32.totalorder %s19, 1
        %s310 = scalar_select %p309, %s19, 1
        %s311 = smul.addr %s310, 8
        %s312 = smul.addr %s311, 8
        %s313 = scalar_lea.vmem %s6, %s312
        %p314 = scmp.lt.s32.totalorder %s19, 1
        %s315 = scalar_select %p314, %s19, 1
        %s316 = smul.addr %s315, 12
        %s317 = smul.addr %s316, 8
        %s318 = scalar_lea.vmem %s0, %s317
        %p319 = scmp.lt.s32.totalorder %s19, 1
        %s320 = scalar_select %p319, %s19, 1
        %s321 = smul.addr %s320, 12
        %s322 = smul.addr %s321, 8
        %s323 = scalar_lea.vmem %s1, %s322
        %p324 = scmp.lt.s32.totalorder %s19, 1
        %s325 = scalar_select %p324, %s19, 1
        %s326 = smul.addr %s325, 12
        %s327 = smul.addr %s326, 8
        %s328 = scalar_lea.vmem %s2, %s327
        %p329 = scmp.lt.s32.totalorder %s19, 1
        %s330 = scalar_select %p329, %s19, 1
        %s331 = smul.addr %s330, 12
        %s332 = smul.addr %s331, 8
        %s333 = scalar_lea.vmem %s3, %s332
        %p334 = scmp.lt.s32.totalorder %s19, 1
        %s335 = scalar_select %p334, %s19, 1
        %s336 = smul.addr %s335, 8
        %s337 = smul.addr %s336, 8
        %s338 = scalar_lea.vmem %s6, %s337
        %v339 = vld [vmem:[%s318] sm:$0xff]
        %v340 = vld [vmem:[%s318 + $0x8] sm:$0xff]
        %v341 = vld [vmem:[%s318 + $0x10] sm:$0x1]
        %v342 = vld [vmem:[%s318 + $0x18] sm:$0xff]
        %v343 = vld [vmem:[%s318 + $0x20] sm:$0xff]
        %v344 = vld [vmem:[%s318 + $0x28] sm:$0x1]
        %v345 = vld [vmem:[%s318 + $0x30] sm:$0xff]
        %v346 = vld [vmem:[%s318 + $0x38] sm:$0xff]
        %v347 = vld [vmem:[%s318 + $0x40] sm:$0x1]
        %v348 = vld [vmem:[%s318 + $0x48] sm:$0xff]
        %v349 = vld [vmem:[%s318 + $0x50] sm:$0xff]
        %v350 = vld [vmem:[%s318 + $0x58] sm:$0x1]
        %v351 = vld [vmem:[%s323] sm:$0xff]
        %v352 = vld [vmem:[%s323 + $0x8] sm:$0xff]
        %v353 = vld [vmem:[%s323 + $0x10] sm:$0x1]
        %v354 = vld [vmem:[%s323 + $0x18] sm:$0xff]
        %v355 = vld [vmem:[%s323 + $0x20] sm:$0xff]
        %v356 = vld [vmem:[%s323 + $0x28] sm:$0x1]
        %v357 = vld [vmem:[%s323 + $0x30] sm:$0xff]
        %v358 = vld [vmem:[%s323 + $0x38] sm:$0xff]
        %v359 = vld [vmem:[%s323 + $0x40] sm:$0x1]
        %v360 = vld [vmem:[%s323 + $0x48] sm:$0xff]
        %v361 = vld [vmem:[%s323 + $0x50] sm:$0xff]
        %v362 = vld [vmem:[%s323 + $0x58] sm:$0x1]
        %v363 = vld [vmem:[%s328] sm:$0xff]
        %v364 = vld [vmem:[%s328 + $0x8] sm:$0xff]
        %v365 = vld [vmem:[%s328 + $0x18] sm:$0xff]
        %v366 = vld [vmem:[%s328 + $0x20] sm:$0xff]
        %v367 = vld [vmem:[%s328 + $0x30] sm:$0xff]
        %v368 = vld [vmem:[%s328 + $0x38] sm:$0xff]
        %v369 = vld [vmem:[%s328 + $0x48] sm:$0xff]
        %v370 = vld [vmem:[%s328 + $0x50] sm:$0xff]
        %v371 = vld [vmem:[%s333] sm:$0xff]
        %v372 = vld [vmem:[%s333 + $0x8] sm:$0xff]
        %v373 = vld [vmem:[%s333 + $0x18] sm:$0xff]
        %v374 = vld [vmem:[%s333 + $0x20] sm:$0xff]
        %v375 = vld [vmem:[%s333 + $0x30] sm:$0xff]
        %v376 = vld [vmem:[%s333 + $0x38] sm:$0xff]
        %v377 = vld [vmem:[%s333 + $0x48] sm:$0xff]
        %v378 = vld [vmem:[%s333 + $0x50] sm:$0xff]
        %s379 = sld [smem:[#allocation4]]
        %v380 = vstv %s379
        %v381 = vadd.f32 %v380, 0.0
        %s382 = sld [smem:[#allocation2]]
        %v383 = vstv %s382
        %v384 = vmul.f32 %v383, %v339
        %v385 = vmul.f32 %v383, %v340
        %v386 = vadd.f32 %v381, %v384
        %v387 = vadd.f32 %v381, %v385
        %s388 = sld [smem:[#allocation2 + $0x1]]
        %v389 = vstv %s388
        %v390 = vmul.f32 %v389, %v342
        %v391 = vmul.f32 %v389, %v343
        %v392 = vadd.f32 %v386, %v390
        %v393 = vadd.f32 %v387, %v391
        %s394 = sld [smem:[#allocation2 + $0x2]]
        %v395 = vstv %s394
        %v396 = vmul.f32 %v395, %v345
        %v397 = vmul.f32 %v395, %v346
        %v398 = vadd.f32 %v392, %v396
        %v399 = vadd.f32 %v393, %v397
        %s400 = sld [smem:[#allocation2 + $0x3]]
        %v401 = vstv %s400
        %v402 = vmul.f32 %v401, %v348
        %v403 = vmul.f32 %v401, %v349
        %v404 = vadd.f32 %v398, %v402
        %v405 = vadd.f32 %v399, %v403
        %s406 = sld [smem:[#allocation2 + $0x10]]
        %v407 = vstv %s406
        %v408 = vmul.f32 %v407, %v351
        %v409 = vmul.f32 %v407, %v352
        %v410 = vadd.f32 %v404, %v408
        %v411 = vadd.f32 %v405, %v409
        %s412 = sld [smem:[#allocation2 + $0x11]]
        %v413 = vstv %s412
        %v414 = vmul.f32 %v413, %v354
        %v415 = vmul.f32 %v413, %v355
        %v416 = vadd.f32 %v410, %v414
        %v417 = vadd.f32 %v411, %v415
        %s418 = sld [smem:[#allocation2 + $0x12]]
        %v419 = vstv %s418
        %v420 = vmul.f32 %v419, %v357
        %v421 = vmul.f32 %v419, %v358
        %v422 = vadd.f32 %v416, %v420
        %v423 = vadd.f32 %v417, %v421
        %s424 = sld [smem:[#allocation2 + $0x13]]
        %v425 = vstv %s424
        %v426 = vmul.f32 %v425, %v360
        %v427 = vmul.f32 %v425, %v361
        %v428 = vadd.f32 %v422, %v426
        %v429 = vadd.f32 %v423, %v427
        %s430 = sld [smem:[#allocation2 + $0x20]]
        %v431 = vstv %s430
        %v432 = vmul.f32 %v431, %v339
        %v433 = vmul.f32 %v431, %v340
        %436 = vrot.lane.b32.xlu0 %v432, 127
        %v437 = vpop.permute.xlu0 %436
        %438 = vrot.lane.b32.xlu0 %v433, 127
        %v439 = vpop.permute.xlu0 %438
        %v442 = vadd.f32 %v428, %v437
        %v443 = vadd.f32 %v429, %v439
        %s444 = sld [smem:[#allocation2 + $0x21]]
        %v445 = vstv %s444
        %v446 = vmul.f32 %v445, %v342
        %v447 = vmul.f32 %v445, %v343
        %450 = vrot.lane.b32.xlu0 %v446, 127
        %v451 = vpop.permute.xlu0 %450
        %452 = vrot.lane.b32.xlu0 %v447, 127
        %v453 = vpop.permute.xlu0 %452
        %v456 = vadd.f32 %v442, %v451
        %v457 = vadd.f32 %v443, %v453
        %s458 = sld [smem:[#allocation2 + $0x22]]
        %v459 = vstv %s458
        %v460 = vmul.f32 %v459, %v345
        %v461 = vmul.f32 %v459, %v346
        %464 = vrot.lane.b32.xlu0 %v460, 127
        %v465 = vpop.permute.xlu0 %464
        %466 = vrot.lane.b32.xlu0 %v461, 127
        %v467 = vpop.permute.xlu0 %466
        %v470 = vadd.f32 %v456, %v465
        %v471 = vadd.f32 %v457, %v467
        %s472 = sld [smem:[#allocation2 + $0x23]]
        %v473 = vstv %s472
        %v474 = vmul.f32 %v473, %v348
        %v475 = vmul.f32 %v473, %v349
        %478 = vrot.lane.b32.xlu0 %v474, 127
        %v479 = vpop.permute.xlu0 %478
        %480 = vrot.lane.b32.xlu0 %v475, 127
        %v481 = vpop.permute.xlu0 %480
        %v484 = vadd.f32 %v470, %v479
        %v485 = vadd.f32 %v471, %v481
        %s486 = sld [smem:[#allocation2 + $0x30]]
        %v487 = vstv %s486
        %v488 = vmul.f32 %v487, %v363
        %v489 = vmul.f32 %v487, %v364
        %v490 = vadd.f32 %v484, %v488
        %v491 = vadd.f32 %v485, %v489
        %s492 = sld [smem:[#allocation2 + $0x31]]
        %v493 = vstv %s492
        %v494 = vmul.f32 %v493, %v365
        %v495 = vmul.f32 %v493, %v366
        %v496 = vadd.f32 %v490, %v494
        %v497 = vadd.f32 %v491, %v495
        %s498 = sld [smem:[#allocation2 + $0x32]]
        %v499 = vstv %s498
        %v500 = vmul.f32 %v499, %v367
        %v501 = vmul.f32 %v499, %v368
        %v502 = vadd.f32 %v496, %v500
        %v503 = vadd.f32 %v497, %v501
        %s504 = sld [smem:[#allocation2 + $0x33]]
        %v505 = vstv %s504
        %v506 = vmul.f32 %v505, %v369
        %v507 = vmul.f32 %v505, %v370
        %v508 = vadd.f32 %v502, %v506
        %v509 = vadd.f32 %v503, %v507
        %s510 = sld [smem:[#allocation2 + $0x40]]
        %v511 = vstv %s510
        %v512 = vmul.f32 %v511, %v371
        %v513 = vmul.f32 %v511, %v372
        %v514 = vadd.f32 %v508, %v512
        %v515 = vadd.f32 %v509, %v513
        %s516 = sld [smem:[#allocation2 + $0x41]]
        %v517 = vstv %s516
        %v518 = vmul.f32 %v517, %v373
        %v519 = vmul.f32 %v517, %v374
        %v520 = vadd.f32 %v514, %v518
        %v521 = vadd.f32 %v515, %v519
        %s522 = sld [smem:[#allocation2 + $0x42]]
        %v523 = vstv %s522
        %v524 = vmul.f32 %v523, %v375
        %v525 = vmul.f32 %v523, %v376
        %v526 = vadd.f32 %v520, %v524
        %v527 = vadd.f32 %v521, %v525
        %s528 = sld [smem:[#allocation2 + $0x43]]
        %v529 = vstv %s528
        %v530 = vmul.f32 %v529, %v377
        %v531 = vmul.f32 %v529, %v378
        %v532 = vadd.f32 %v526, %v530
        %v533 = vadd.f32 %v527, %v531
        %s534 = sld [smem:[#allocation2 + $0x50]]
        %v535 = vstv %s534
        %v536 = vmul.f32 %v535, %v363
        %v537 = vmul.f32 %v535, %v364
        %540 = vrot.lane.b32.xlu0 %v536, 127
        %v541 = vpop.permute.xlu0 %540
        %542 = vrot.lane.b32.xlu0 %v537, 127
        %v543 = vpop.permute.xlu0 %542
        %v546 = vadd.f32 %v532, %v541
        %v547 = vadd.f32 %v533, %v543
        %s548 = sld [smem:[#allocation2 + $0x51]]
        %v549 = vstv %s548
        %v550 = vmul.f32 %v549, %v365
        %v551 = vmul.f32 %v549, %v366
        %554 = vrot.lane.b32.xlu0 %v550, 127
        %v555 = vpop.permute.xlu0 %554
        %556 = vrot.lane.b32.xlu0 %v551, 127
        %v557 = vpop.permute.xlu0 %556
        %v560 = vadd.f32 %v546, %v555
        %v561 = vadd.f32 %v547, %v557
        %s562 = sld [smem:[#allocation2 + $0x52]]
        %v563 = vstv %s562
        %v564 = vmul.f32 %v563, %v367
        %v565 = vmul.f32 %v563, %v368
        %568 = vrot.lane.b32.xlu0 %v564, 127
        %v569 = vpop.permute.xlu0 %568
        %570 = vrot.lane.b32.xlu0 %v565, 127
        %v571 = vpop.permute.xlu0 %570
        %v574 = vadd.f32 %v560, %v569
        %v575 = vadd.f32 %v561, %v571
        %s576 = sld [smem:[#allocation2 + $0x53]]
        %v577 = vstv %s576
        %v578 = vmul.f32 %v577, %v369
        %v579 = vmul.f32 %v577, %v370
        %582 = vrot.lane.b32.xlu0 %v578, 127
        %v583 = vpop.permute.xlu0 %582
        %584 = vrot.lane.b32.xlu0 %v579, 127
        %v585 = vpop.permute.xlu0 %584
        %v588 = vadd.f32 %v574, %v583
        %v589 = vadd.f32 %v575, %v585
        %s590 = sld [smem:[#allocation2 + $0x60]]
        %v591 = vstv %s590
        %v592 = vmul.f32 %v591, %v339
        %v593 = vmul.f32 %v591, %v340
        %v594 = vmul.f32 %v591, %v341
        %vm598 = vcmask 1046528
        %v599 = vrot.slane %v592, 1
        %v600 = vrot.slane %v593, 1
        %v601 = vsel %vm598, %v599, %v600
        %v602 = vrot.slane %v594, 1
        %v603 = vsel %vm598, %v600, %v602
        %v606 = vadd.f32 %v588, %v601
        %v607 = vadd.f32 %v589, %v603
        %s608 = sld [smem:[#allocation2 + $0x61]]
        %v609 = vstv %s608
        %v610 = vmul.f32 %v609, %v342
        %v611 = vmul.f32 %v609, %v343
        %v612 = vmul.f32 %v609, %v344
        %v616 = vrot.slane %v610, 1
        %v617 = vrot.slane %v611, 1
        %v618 = vsel %vm598, %v616, %v617
        %v619 = vrot.slane %v612, 1
        %v620 = vsel %vm598, %v617, %v619
        %v623 = vadd.f32 %v606, %v618
        %v624 = vadd.f32 %v607, %v620
        %s625 = sld [smem:[#allocation2 + $0x62]]
        %v626 = vstv %s625
        %v627 = vmul.f32 %v626, %v345
        %v628 = vmul.f32 %v626, %v346
        %v629 = vmul.f32 %v626, %v347
        %v633 = vrot.slane %v627, 1
        %v634 = vrot.slane %v628, 1
        %v635 = vsel %vm598, %v633, %v634
        %v636 = vrot.slane %v629, 1
        %v637 = vsel %vm598, %v634, %v636
        %v640 = vadd.f32 %v623, %v635
        %v641 = vadd.f32 %v624, %v637
        %s642 = sld [smem:[#allocation2 + $0x63]]
        %v643 = vstv %s642
        %v644 = vmul.f32 %v643, %v348
        %v645 = vmul.f32 %v643, %v349
        %v646 = vmul.f32 %v643, %v350
        %v650 = vrot.slane %v644, 1
        %v651 = vrot.slane %v645, 1
        %v652 = vsel %vm598, %v650, %v651
        %v653 = vrot.slane %v646, 1
        %v654 = vsel %vm598, %v651, %v653
        %v657 = vadd.f32 %v640, %v652
        %v658 = vadd.f32 %v641, %v654
        %s659 = sld [smem:[#allocation2 + $0x70]]
        %v660 = vstv %s659
        %v661 = vmul.f32 %v660, %v351
        %v662 = vmul.f32 %v660, %v352
        %v663 = vmul.f32 %v660, %v353
        %v667 = vrot.slane %v661, 1
        %v668 = vrot.slane %v662, 1
        %v669 = vsel %vm598, %v667, %v668
        %v670 = vrot.slane %v663, 1
        %v671 = vsel %vm598, %v668, %v670
        %v674 = vadd.f32 %v657, %v669
        %v675 = vadd.f32 %v658, %v671
        %s676 = sld [smem:[#allocation2 + $0x71]]
        %v677 = vstv %s676
        %v678 = vmul.f32 %v677, %v354
        %v679 = vmul.f32 %v677, %v355
        %v680 = vmul.f32 %v677, %v356
        %v684 = vrot.slane %v678, 1
        %v685 = vrot.slane %v679, 1
        %v686 = vsel %vm598, %v684, %v685
        %v687 = vrot.slane %v680, 1
        %v688 = vsel %vm598, %v685, %v687
        %v691 = vadd.f32 %v674, %v686
        %v692 = vadd.f32 %v675, %v688
        %s693 = sld [smem:[#allocation2 + $0x72]]
        %v694 = vstv %s693
        %v695 = vmul.f32 %v694, %v357
        %v696 = vmul.f32 %v694, %v358
        %v697 = vmul.f32 %v694, %v359
        %v701 = vrot.slane %v695, 1
        %v702 = vrot.slane %v696, 1
        %v703 = vsel %vm598, %v701, %v702
        %v704 = vrot.slane %v697, 1
        %v705 = vsel %vm598, %v702, %v704
        %v708 = vadd.f32 %v691, %v703
        %v709 = vadd.f32 %v692, %v705
        %s710 = sld [smem:[#allocation2 + $0x73]]
        %v711 = vstv %s710
        %v712 = vmul.f32 %v711, %v360
        %v713 = vmul.f32 %v711, %v361
        %v714 = vmul.f32 %v711, %v362
        %v718 = vrot.slane %v712, 1
        %v719 = vrot.slane %v713, 1
        %v720 = vsel %vm598, %v718, %v719
        %v721 = vrot.slane %v714, 1
        %v722 = vsel %vm598, %v719, %v721
        %v725 = vadd.f32 %v708, %v720
        %v726 = vadd.f32 %v709, %v722
        %s727 = sld [smem:[#allocation2 + $0x80]]
        %v728 = vstv %s727
        %v729 = vmul.f32 %v728, %v339
        %v730 = vmul.f32 %v728, %v340
        %v731 = vmul.f32 %v728, %v341
        %v735 = vrot.slane %v729, 1
        %v736 = vrot.slane %v730, 1
        %v737 = vsel %vm598, %v735, %v736
        %v738 = vrot.slane %v731, 1
        %v739 = vsel %vm598, %v736, %v738
        %740 = vrot.lane.b32.xlu0 %v737, 127
        %v741 = vpop.permute.xlu0 %740
        %742 = vrot.lane.b32.xlu0 %v739, 127
        %v743 = vpop.permute.xlu0 %742
        %v746 = vadd.f32 %v725, %v741
        %v747 = vadd.f32 %v726, %v743
        %s748 = sld [smem:[#allocation2 + $0x81]]
        %v749 = vstv %s748
        %v750 = vmul.f32 %v749, %v342
        %v751 = vmul.f32 %v749, %v343
        %v752 = vmul.f32 %v749, %v344
        %v756 = vrot.slane %v750, 1
        %v757 = vrot.slane %v751, 1
        %v758 = vsel %vm598, %v756, %v757
        %v759 = vrot.slane %v752, 1
        %v760 = vsel %vm598, %v757, %v759
        %761 = vrot.lane.b32.xlu0 %v758, 127
        %v762 = vpop.permute.xlu0 %761
        %763 = vrot.lane.b32.xlu0 %v760, 127
        %v764 = vpop.permute.xlu0 %763
        %v767 = vadd.f32 %v746, %v762
        %v768 = vadd.f32 %v747, %v764
        %s769 = sld [smem:[#allocation2 + $0x82]]
        %v770 = vstv %s769
        %v771 = vmul.f32 %v770, %v345
        %v772 = vmul.f32 %v770, %v346
        %v773 = vmul.f32 %v770, %v347
        %v777 = vrot.slane %v771, 1
        %v778 = vrot.slane %v772, 1
        %v779 = vsel %vm598, %v777, %v778
        %v780 = vrot.slane %v773, 1
        %v781 = vsel %vm598, %v778, %v780
        %782 = vrot.lane.b32.xlu0 %v779, 127
        %v783 = vpop.permute.xlu0 %782
        %784 = vrot.lane.b32.xlu0 %v781, 127
        %v785 = vpop.permute.xlu0 %784
        %v788 = vadd.f32 %v767, %v783
        %v789 = vadd.f32 %v768, %v785
        %s790 = sld [smem:[#allocation2 + $0x83]]
        %v791 = vstv %s790
        %v792 = vmul.f32 %v791, %v348
        %v793 = vmul.f32 %v791, %v349
        %v794 = vmul.f32 %v791, %v350
        %v798 = vrot.slane %v792, 1
        %v799 = vrot.slane %v793, 1
        %v800 = vsel %vm598, %v798, %v799
        %v801 = vrot.slane %v794, 1
        %v802 = vsel %vm598, %v799, %v801
        %803 = vrot.lane.b32.xlu0 %v800, 127
        %v804 = vpop.permute.xlu0 %803
        %805 = vrot.lane.b32.xlu0 %v802, 127
        %v806 = vpop.permute.xlu0 %805
        %v809 = vadd.f32 %v788, %v804
        %v810 = vadd.f32 %v789, %v806
        %vm811 = vcmask 130048
        %812 = vst.msk [vmem:[%s338] sm:$0xff] %vm811, %v809
        %813 = vst.msk [vmem:[%s338 + $0x8] sm:$0xff] %vm811, %v810
        %s814 = sld [smem:[#allocation4 + $0x1]]
        %v815 = vstv %s814
        %v816 = vadd.f32 %v815, 0.0
        %s817 = sld [smem:[#allocation2 + $0x4]]
        %v818 = vstv %s817
        %v819 = vmul.f32 %v818, %v339
        %v820 = vmul.f32 %v818, %v340
        %v821 = vadd.f32 %v816, %v819
        %v822 = vadd.f32 %v816, %v820
        %s823 = sld [smem:[#allocation2 + $0x5]]
        %v824 = vstv %s823
        %v825 = vmul.f32 %v824, %v342
        %v826 = vmul.f32 %v824, %v343
        %v827 = vadd.f32 %v821, %v825
        %v828 = vadd.f32 %v822, %v826
        %s829 = sld [smem:[#allocation2 + $0x6]]
        %v830 = vstv %s829
        %v831 = vmul.f32 %v830, %v345
        %v832 = vmul.f32 %v830, %v346
        %v833 = vadd.f32 %v827, %v831
        %v834 = vadd.f32 %v828, %v832
        %s835 = sld [smem:[#allocation2 + $0x7]]
        %v836 = vstv %s835
        %v837 = vmul.f32 %v836, %v348
        %v838 = vmul.f32 %v836, %v349
        %v839 = vadd.f32 %v833, %v837
        %v840 = vadd.f32 %v834, %v838
        %s841 = sld [smem:[#allocation2 + $0x14]]
        %v842 = vstv %s841
        %v843 = vmul.f32 %v842, %v351
        %v844 = vmul.f32 %v842, %v352
        %v845 = vadd.f32 %v839, %v843
        %v846 = vadd.f32 %v840, %v844
        %s847 = sld [smem:[#allocation2 + $0x15]]
        %v848 = vstv %s847
        %v849 = vmul.f32 %v848, %v354
        %v850 = vmul.f32 %v848, %v355
        %v851 = vadd.f32 %v845, %v849
        %v852 = vadd.f32 %v846, %v850
        %s853 = sld [smem:[#allocation2 + $0x16]]
        %v854 = vstv %s853
        %v855 = vmul.f32 %v854, %v357
        %v856 = vmul.f32 %v854, %v358
        %v857 = vadd.f32 %v851, %v855
        %v858 = vadd.f32 %v852, %v856
        %s859 = sld [smem:[#allocation2 + $0x17]]
        %v860 = vstv %s859
        %v861 = vmul.f32 %v860, %v360
        %v862 = vmul.f32 %v860, %v361
        %v863 = vadd.f32 %v857, %v861
        %v864 = vadd.f32 %v858, %v862
        %s865 = sld [smem:[#allocation2 + $0x24]]
        %v866 = vstv %s865
        %v867 = vmul.f32 %v866, %v339
        %v868 = vmul.f32 %v866, %v340
        %871 = vrot.lane.b32.xlu0 %v867, 127
        %v872 = vpop.permute.xlu0 %871
        %873 = vrot.lane.b32.xlu0 %v868, 127
        %v874 = vpop.permute.xlu0 %873
        %v877 = vadd.f32 %v863, %v872
        %v878 = vadd.f32 %v864, %v874
        %s879 = sld [smem:[#allocation2 + $0x25]]
        %v880 = vstv %s879
        %v881 = vmul.f32 %v880, %v342
        %v882 = vmul.f32 %v880, %v343
        %885 = vrot.lane.b32.xlu0 %v881, 127
        %v886 = vpop.permute.xlu0 %885
        %887 = vrot.lane.b32.xlu0 %v882, 127
        %v888 = vpop.permute.xlu0 %887
        %v891 = vadd.f32 %v877, %v886
        %v892 = vadd.f32 %v878, %v888
        %s893 = sld [smem:[#allocation2 + $0x26]]
        %v894 = vstv %s893
        %v895 = vmul.f32 %v894, %v345
        %v896 = vmul.f32 %v894, %v346
        %899 = vrot.lane.b32.xlu0 %v895, 127
        %v900 = vpop.permute.xlu0 %899
        %901 = vrot.lane.b32.xlu0 %v896, 127
        %v902 = vpop.permute.xlu0 %901
        %v905 = vadd.f32 %v891, %v900
        %v906 = vadd.f32 %v892, %v902
        %s907 = sld [smem:[#allocation2 + $0x27]]
        %v908 = vstv %s907
        %v909 = vmul.f32 %v908, %v348
        %v910 = vmul.f32 %v908, %v349
        %913 = vrot.lane.b32.xlu0 %v909, 127
        %v914 = vpop.permute.xlu0 %913
        %915 = vrot.lane.b32.xlu0 %v910, 127
        %v916 = vpop.permute.xlu0 %915
        %v919 = vadd.f32 %v905, %v914
        %v920 = vadd.f32 %v906, %v916
        %s921 = sld [smem:[#allocation2 + $0x34]]
        %v922 = vstv %s921
        %v923 = vmul.f32 %v922, %v363
        %v924 = vmul.f32 %v922, %v364
        %v925 = vadd.f32 %v919, %v923
        %v926 = vadd.f32 %v920, %v924
        %s927 = sld [smem:[#allocation2 + $0x35]]
        %v928 = vstv %s927
        %v929 = vmul.f32 %v928, %v365
        %v930 = vmul.f32 %v928, %v366
        %v931 = vadd.f32 %v925, %v929
        %v932 = vadd.f32 %v926, %v930
        %s933 = sld [smem:[#allocation2 + $0x36]]
        %v934 = vstv %s933
        %v935 = vmul.f32 %v934, %v367
        %v936 = vmul.f32 %v934, %v368
        %v937 = vadd.f32 %v931, %v935
        %v938 = vadd.f32 %v932, %v936
        %s939 = sld [smem:[#allocation2 + $0x37]]
        %v940 = vstv %s939
        %v941 = vmul.f32 %v940, %v369
        %v942 = vmul.f32 %v940, %v370
        %v943 = vadd.f32 %v937, %v941
        %v944 = vadd.f32 %v938, %v942
        %s945 = sld [smem:[#allocation2 + $0x44]]
        %v946 = vstv %s945
        %v947 = vmul.f32 %v946, %v371
        %v948 = vmul.f32 %v946, %v372
        %v949 = vadd.f32 %v943, %v947
        %v950 = vadd.f32 %v944, %v948
        %s951 = sld [smem:[#allocation2 + $0x45]]
        %v952 = vstv %s951
        %v953 = vmul.f32 %v952, %v373
        %v954 = vmul.f32 %v952, %v374
        %v955 = vadd.f32 %v949, %v953
        %v956 = vadd.f32 %v950, %v954
        %s957 = sld [smem:[#allocation2 + $0x46]]
        %v958 = vstv %s957
        %v959 = vmul.f32 %v958, %v375
        %v960 = vmul.f32 %v958, %v376
        %v961 = vadd.f32 %v955, %v959
        %v962 = vadd.f32 %v956, %v960
        %s963 = sld [smem:[#allocation2 + $0x47]]
        %v964 = vstv %s963
        %v965 = vmul.f32 %v964, %v377
        %v966 = vmul.f32 %v964, %v378
        %v967 = vadd.f32 %v961, %v965
        %v968 = vadd.f32 %v962, %v966
        %s969 = sld [smem:[#allocation2 + $0x54]]
        %v970 = vstv %s969
        %v971 = vmul.f32 %v970, %v363
        %v972 = vmul.f32 %v970, %v364
        %975 = vrot.lane.b32.xlu0 %v971, 127
        %v976 = vpop.permute.xlu0 %975
        %977 = vrot.lane.b32.xlu0 %v972, 127
        %v978 = vpop.permute.xlu0 %977
        %v981 = vadd.f32 %v967, %v976
        %v982 = vadd.f32 %v968, %v978
        %s983 = sld [smem:[#allocation2 + $0x55]]
        %v984 = vstv %s983
        %v985 = vmul.f32 %v984, %v365
        %v986 = vmul.f32 %v984, %v366
        %989 = vrot.lane.b32.xlu0 %v985, 127
        %v990 = vpop.permute.xlu0 %989
        %991 = vrot.lane.b32.xlu0 %v986, 127
        %v992 = vpop.permute.xlu0 %991
        %v995 = vadd.f32 %v981, %v990
        %v996 = vadd.f32 %v982, %v992
        %s997 = sld [smem:[#allocation2 + $0x56]]
        %v998 = vstv %s997
        %v999 = vmul.f32 %v998, %v367
        %v1000 = vmul.f32 %v998, %v368
        %1003 = vrot.lane.b32.xlu0 %v999, 127
        %v1004 = vpop.permute.xlu0 %1003
        %1005 = vrot.lane.b32.xlu0 %v1000, 127
        %v1006 = vpop.permute.xlu0 %1005
        %v1009 = vadd.f32 %v995, %v1004
        %v1010 = vadd.f32 %v996, %v1006
        %s1011 = sld [smem:[#allocation2 + $0x57]]
        %v1012 = vstv %s1011
        %v1013 = vmul.f32 %v1012, %v369
        %v1014 = vmul.f32 %v1012, %v370
        %1017 = vrot.lane.b32.xlu0 %v1013, 127
        %v1018 = vpop.permute.xlu0 %1017
        %1019 = vrot.lane.b32.xlu0 %v1014, 127
        %v1020 = vpop.permute.xlu0 %1019
        %v1023 = vadd.f32 %v1009, %v1018
        %v1024 = vadd.f32 %v1010, %v1020
        %s1025 = sld [smem:[#allocation2 + $0x64]]
        %v1026 = vstv %s1025
        %v1027 = vmul.f32 %v1026, %v339
        %v1028 = vmul.f32 %v1026, %v340
        %v1029 = vmul.f32 %v1026, %v341
        %v1033 = vrot.slane %v1027, 1
        %v1034 = vrot.slane %v1028, 1
        %v1035 = vsel %vm598, %v1033, %v1034
        %v1036 = vrot.slane %v1029, 1
        %v1037 = vsel %vm598, %v1034, %v1036
        %v1040 = vadd.f32 %v1023, %v1035
        %v1041 = vadd.f32 %v1024, %v1037
        %s1042 = sld [smem:[#allocation2 + $0x65]]
        %v1043 = vstv %s1042
        %v1044 = vmul.f32 %v1043, %v342
        %v1045 = vmul.f32 %v1043, %v343
        %v1046 = vmul.f32 %v1043, %v344
        %v1050 = vrot.slane %v1044, 1
        %v1051 = vrot.slane %v1045, 1
        %v1052 = vsel %vm598, %v1050, %v1051
        %v1053 = vrot.slane %v1046, 1
        %v1054 = vsel %vm598, %v1051, %v1053
        %v1057 = vadd.f32 %v1040, %v1052
        %v1058 = vadd.f32 %v1041, %v1054
        %s1059 = sld [smem:[#allocation2 + $0x66]]
        %v1060 = vstv %s1059
        %v1061 = vmul.f32 %v1060, %v345
        %v1062 = vmul.f32 %v1060, %v346
        %v1063 = vmul.f32 %v1060, %v347
        %v1067 = vrot.slane %v1061, 1
        %v1068 = vrot.slane %v1062, 1
        %v1069 = vsel %vm598, %v1067, %v1068
        %v1070 = vrot.slane %v1063, 1
        %v1071 = vsel %vm598, %v1068, %v1070
        %v1074 = vadd.f32 %v1057, %v1069
        %v1075 = vadd.f32 %v1058, %v1071
        %s1076 = sld [smem:[#allocation2 + $0x67]]
        %v1077 = vstv %s1076
        %v1078 = vmul.f32 %v1077, %v348
        %v1079 = vmul.f32 %v1077, %v349
        %v1080 = vmul.f32 %v1077, %v350
        %v1084 = vrot.slane %v1078, 1
        %v1085 = vrot.slane %v1079, 1
        %v1086 = vsel %vm598, %v1084, %v1085
        %v1087 = vrot.slane %v1080, 1
        %v1088 = vsel %vm598, %v1085, %v1087
        %v1091 = vadd.f32 %v1074, %v1086
        %v1092 = vadd.f32 %v1075, %v1088
        %s1093 = sld [smem:[#allocation2 + $0x74]]
        %v1094 = vstv %s1093
        %v1095 = vmul.f32 %v1094, %v351
        %v1096 = vmul.f32 %v1094, %v352
        %v1097 = vmul.f32 %v1094, %v353
        %v1101 = vrot.slane %v1095, 1
        %v1102 = vrot.slane %v1096, 1
        %v1103 = vsel %vm598, %v1101, %v1102
        %v1104 = vrot.slane %v1097, 1
        %v1105 = vsel %vm598, %v1102, %v1104
        %v1108 = vadd.f32 %v1091, %v1103
        %v1109 = vadd.f32 %v1092, %v1105
        %s1110 = sld [smem:[#allocation2 + $0x75]]
        %v1111 = vstv %s1110
        %v1112 = vmul.f32 %v1111, %v354
        %v1113 = vmul.f32 %v1111, %v355
        %v1114 = vmul.f32 %v1111, %v356
        %v1118 = vrot.slane %v1112, 1
        %v1119 = vrot.slane %v1113, 1
        %v1120 = vsel %vm598, %v1118, %v1119
        %v1121 = vrot.slane %v1114, 1
        %v1122 = vsel %vm598, %v1119, %v1121
        %v1125 = vadd.f32 %v1108, %v1120
        %v1126 = vadd.f32 %v1109, %v1122
        %s1127 = sld [smem:[#allocation2 + $0x76]]
        %v1128 = vstv %s1127
        %v1129 = vmul.f32 %v1128, %v357
        %v1130 = vmul.f32 %v1128, %v358
        %v1131 = vmul.f32 %v1128, %v359
        %v1135 = vrot.slane %v1129, 1
        %v1136 = vrot.slane %v1130, 1
        %v1137 = vsel %vm598, %v1135, %v1136
        %v1138 = vrot.slane %v1131, 1
        %v1139 = vsel %vm598, %v1136, %v1138
        %v1142 = vadd.f32 %v1125, %v1137
        %v1143 = vadd.f32 %v1126, %v1139
        %s1144 = sld [smem:[#allocation2 + $0x77]]
        %v1145 = vstv %s1144
        %v1146 = vmul.f32 %v1145, %v360
        %v1147 = vmul.f32 %v1145, %v361
        %v1148 = vmul.f32 %v1145, %v362
        %v1152 = vrot.slane %v1146, 1
        %v1153 = vrot.slane %v1147, 1
        %v1154 = vsel %vm598, %v1152, %v1153
        %v1155 = vrot.slane %v1148, 1
        %v1156 = vsel %vm598, %v1153, %v1155
        %v1159 = vadd.f32 %v1142, %v1154
        %v1160 = vadd.f32 %v1143, %v1156
        %s1161 = sld [smem:[#allocation2 + $0x84]]
        %v1162 = vstv %s1161
        %v1163 = vmul.f32 %v1162, %v339
        %v1164 = vmul.f32 %v1162, %v340
        %v1165 = vmul.f32 %v1162, %v341
        %v1169 = vrot.slane %v1163, 1
        %v1170 = vrot.slane %v1164, 1
        %v1171 = vsel %vm598, %v1169, %v1170
        %v1172 = vrot.slane %v1165, 1
        %v1173 = vsel %vm598, %v1170, %v1172
        %1174 = vrot.lane.b32.xlu0 %v1171, 127
        %v1175 = vpop.permute.xlu0 %1174
        %1176 = vrot.lane.b32.xlu0 %v1173, 127
        %v1177 = vpop.permute.xlu0 %1176
        %v1180 = vadd.f32 %v1159, %v1175
        %v1181 = vadd.f32 %v1160, %v1177
        %s1182 = sld [smem:[#allocation2 + $0x85]]
        %v1183 = vstv %s1182
        %v1184 = vmul.f32 %v1183, %v342
        %v1185 = vmul.f32 %v1183, %v343
        %v1186 = vmul.f32 %v1183, %v344
        %v1190 = vrot.slane %v1184, 1
        %v1191 = vrot.slane %v1185, 1
        %v1192 = vsel %vm598, %v1190, %v1191
        %v1193 = vrot.slane %v1186, 1
        %v1194 = vsel %vm598, %v1191, %v1193
        %1195 = vrot.lane.b32.xlu0 %v1192, 127
        %v1196 = vpop.permute.xlu0 %1195
        %1197 = vrot.lane.b32.xlu0 %v1194, 127
        %v1198 = vpop.permute.xlu0 %1197
        %v1201 = vadd.f32 %v1180, %v1196
        %v1202 = vadd.f32 %v1181, %v1198
        %s1203 = sld [smem:[#allocation2 + $0x86]]
        %v1204 = vstv %s1203
        %v1205 = vmul.f32 %v1204, %v345
        %v1206 = vmul.f32 %v1204, %v346
        %v1207 = vmul.f32 %v1204, %v347
        %v1211 = vrot.slane %v1205, 1
        %v1212 = vrot.slane %v1206, 1
        %v1213 = vsel %vm598, %v1211, %v1212
        %v1214 = vrot.slane %v1207, 1
        %v1215 = vsel %vm598, %v1212, %v1214
        %1216 = vrot.lane.b32.xlu0 %v1213, 127
        %v1217 = vpop.permute.xlu0 %1216
        %1218 = vrot.lane.b32.xlu0 %v1215, 127
        %v1219 = vpop.permute.xlu0 %1218
        %v1222 = vadd.f32 %v1201, %v1217
        %v1223 = vadd.f32 %v1202, %v1219
        %s1224 = sld [smem:[#allocation2 + $0x87]]
        %v1225 = vstv %s1224
        %v1226 = vmul.f32 %v1225, %v348
        %v1227 = vmul.f32 %v1225, %v349
        %v1228 = vmul.f32 %v1225, %v350
        %v1232 = vrot.slane %v1226, 1
        %v1233 = vrot.slane %v1227, 1
        %v1234 = vsel %vm598, %v1232, %v1233
        %v1235 = vrot.slane %v1228, 1
        %v1236 = vsel %vm598, %v1233, %v1235
        %1237 = vrot.lane.b32.xlu0 %v1234, 127
        %v1238 = vpop.permute.xlu0 %1237
        %1239 = vrot.lane.b32.xlu0 %v1236, 127
        %v1240 = vpop.permute.xlu0 %1239
        %v1243 = vadd.f32 %v1222, %v1238
        %v1244 = vadd.f32 %v1223, %v1240
        %s1245 = scalar_lea.vmem %s338, 16
        %1246 = vst.msk [vmem:[%s1245] sm:$0xff] %vm811, %v1243
        %1247 = vst.msk [vmem:[%s1245 + $0x8] sm:$0xff] %vm811, %v1244
        %s1248 = sld [smem:[#allocation4 + $0x2]]
        %v1249 = vstv %s1248
        %v1250 = vadd.f32 %v1249, 0.0
        %s1251 = sld [smem:[#allocation2 + $0x8]]
        %v1252 = vstv %s1251
        %v1253 = vmul.f32 %v1252, %v339
        %v1254 = vmul.f32 %v1252, %v340
        %v1255 = vadd.f32 %v1250, %v1253
        %v1256 = vadd.f32 %v1250, %v1254
        %s1257 = sld [smem:[#allocation2 + $0x9]]
        %v1258 = vstv %s1257
        %v1259 = vmul.f32 %v1258, %v342
        %v1260 = vmul.f32 %v1258, %v343
        %v1261 = vadd.f32 %v1255, %v1259
        %v1262 = vadd.f32 %v1256, %v1260
        %s1263 = sld [smem:[#allocation2 + $0xa]]
        %v1264 = vstv %s1263
        %v1265 = vmul.f32 %v1264, %v345
        %v1266 = vmul.f32 %v1264, %v346
        %v1267 = vadd.f32 %v1261, %v1265
        %v1268 = vadd.f32 %v1262, %v1266
        %s1269 = sld [smem:[#allocation2 + $0xb]]
        %v1270 = vstv %s1269
        %v1271 = vmul.f32 %v1270, %v348
        %v1272 = vmul.f32 %v1270, %v349
        %v1273 = vadd.f32 %v1267, %v1271
        %v1274 = vadd.f32 %v1268, %v1272
        %s1275 = sld [smem:[#allocation2 + $0x18]]
        %v1276 = vstv %s1275
        %v1277 = vmul.f32 %v1276, %v351
        %v1278 = vmul.f32 %v1276, %v352
        %v1279 = vadd.f32 %v1273, %v1277
        %v1280 = vadd.f32 %v1274, %v1278
        %s1281 = sld [smem:[#allocation2 + $0x19]]
        %v1282 = vstv %s1281
        %v1283 = vmul.f32 %v1282, %v354
        %v1284 = vmul.f32 %v1282, %v355
        %v1285 = vadd.f32 %v1279, %v1283
        %v1286 = vadd.f32 %v1280, %v1284
        %s1287 = sld [smem:[#allocation2 + $0x1a]]
        %v1288 = vstv %s1287
        %v1289 = vmul.f32 %v1288, %v357
        %v1290 = vmul.f32 %v1288, %v358
        %v1291 = vadd.f32 %v1285, %v1289
        %v1292 = vadd.f32 %v1286, %v1290
        %s1293 = sld [smem:[#allocation2 + $0x1b]]
        %v1294 = vstv %s1293
        %v1295 = vmul.f32 %v1294, %v360
        %v1296 = vmul.f32 %v1294, %v361
        %v1297 = vadd.f32 %v1291, %v1295
        %v1298 = vadd.f32 %v1292, %v1296
        %s1299 = sld [smem:[#allocation2 + $0x28]]
        %v1300 = vstv %s1299
        %v1301 = vmul.f32 %v1300, %v339
        %v1302 = vmul.f32 %v1300, %v340
        %1305 = vrot.lane.b32.xlu0 %v1301, 127
        %v1306 = vpop.permute.xlu0 %1305
        %1307 = vrot.lane.b32.xlu0 %v1302, 127
        %v1308 = vpop.permute.xlu0 %1307
        %v1311 = vadd.f32 %v1297, %v1306
        %v1312 = vadd.f32 %v1298, %v1308
        %s1313 = sld [smem:[#allocation2 + $0x29]]
        %v1314 = vstv %s1313
        %v1315 = vmul.f32 %v1314, %v342
        %v1316 = vmul.f32 %v1314, %v343
        %1319 = vrot.lane.b32.xlu0 %v1315, 127
        %v1320 = vpop.permute.xlu0 %1319
        %1321 = vrot.lane.b32.xlu0 %v1316, 127
        %v1322 = vpop.permute.xlu0 %1321
        %v1325 = vadd.f32 %v1311, %v1320
        %v1326 = vadd.f32 %v1312, %v1322
        %s1327 = sld [smem:[#allocation2 + $0x2a]]
        %v1328 = vstv %s1327
        %v1329 = vmul.f32 %v1328, %v345
        %v1330 = vmul.f32 %v1328, %v346
        %1333 = vrot.lane.b32.xlu0 %v1329, 127
        %v1334 = vpop.permute.xlu0 %1333
        %1335 = vrot.lane.b32.xlu0 %v1330, 127
        %v1336 = vpop.permute.xlu0 %1335
        %v1339 = vadd.f32 %v1325, %v1334
        %v1340 = vadd.f32 %v1326, %v1336
        %s1341 = sld [smem:[#allocation2 + $0x2b]]
        %v1342 = vstv %s1341
        %v1343 = vmul.f32 %v1342, %v348
        %v1344 = vmul.f32 %v1342, %v349
        %1347 = vrot.lane.b32.xlu0 %v1343, 127
        %v1348 = vpop.permute.xlu0 %1347
        %1349 = vrot.lane.b32.xlu0 %v1344, 127
        %v1350 = vpop.permute.xlu0 %1349
        %v1353 = vadd.f32 %v1339, %v1348
        %v1354 = vadd.f32 %v1340, %v1350
        %s1355 = sld [smem:[#allocation2 + $0x38]]
        %v1356 = vstv %s1355
        %v1357 = vmul.f32 %v1356, %v363
        %v1358 = vmul.f32 %v1356, %v364
        %v1359 = vadd.f32 %v1353, %v1357
        %v1360 = vadd.f32 %v1354, %v1358
        %s1361 = sld [smem:[#allocation2 + $0x39]]
        %v1362 = vstv %s1361
        %v1363 = vmul.f32 %v1362, %v365
        %v1364 = vmul.f32 %v1362, %v366
        %v1365 = vadd.f32 %v1359, %v1363
        %v1366 = vadd.f32 %v1360, %v1364
        %s1367 = sld [smem:[#allocation2 + $0x3a]]
        %v1368 = vstv %s1367
        %v1369 = vmul.f32 %v1368, %v367
        %v1370 = vmul.f32 %v1368, %v368
        %v1371 = vadd.f32 %v1365, %v1369
        %v1372 = vadd.f32 %v1366, %v1370
        %s1373 = sld [smem:[#allocation2 + $0x3b]]
        %v1374 = vstv %s1373
        %v1375 = vmul.f32 %v1374, %v369
        %v1376 = vmul.f32 %v1374, %v370
        %v1377 = vadd.f32 %v1371, %v1375
        %v1378 = vadd.f32 %v1372, %v1376
        %s1379 = sld [smem:[#allocation2 + $0x48]]
        %v1380 = vstv %s1379
        %v1381 = vmul.f32 %v1380, %v371
        %v1382 = vmul.f32 %v1380, %v372
        %v1383 = vadd.f32 %v1377, %v1381
        %v1384 = vadd.f32 %v1378, %v1382
        %s1385 = sld [smem:[#allocation2 + $0x49]]
        %v1386 = vstv %s1385
        %v1387 = vmul.f32 %v1386, %v373
        %v1388 = vmul.f32 %v1386, %v374
        %v1389 = vadd.f32 %v1383, %v1387
        %v1390 = vadd.f32 %v1384, %v1388
        %s1391 = sld [smem:[#allocation2 + $0x4a]]
        %v1392 = vstv %s1391
        %v1393 = vmul.f32 %v1392, %v375
        %v1394 = vmul.f32 %v1392, %v376
        %v1395 = vadd.f32 %v1389, %v1393
        %v1396 = vadd.f32 %v1390, %v1394
        %s1397 = sld [smem:[#allocation2 + $0x4b]]
        %v1398 = vstv %s1397
        %v1399 = vmul.f32 %v1398, %v377
        %v1400 = vmul.f32 %v1398, %v378
        %v1401 = vadd.f32 %v1395, %v1399
        %v1402 = vadd.f32 %v1396, %v1400
        %s1403 = sld [smem:[#allocation2 + $0x58]]
        %v1404 = vstv %s1403
        %v1405 = vmul.f32 %v1404, %v363
        %v1406 = vmul.f32 %v1404, %v364
        %1409 = vrot.lane.b32.xlu0 %v1405, 127
        %v1410 = vpop.permute.xlu0 %1409
        %1411 = vrot.lane.b32.xlu0 %v1406, 127
        %v1412 = vpop.permute.xlu0 %1411
        %v1415 = vadd.f32 %v1401, %v1410
        %v1416 = vadd.f32 %v1402, %v1412
        %s1417 = sld [smem:[#allocation2 + $0x59]]
        %v1418 = vstv %s1417
        %v1419 = vmul.f32 %v1418, %v365
        %v1420 = vmul.f32 %v1418, %v366
        %1423 = vrot.lane.b32.xlu0 %v1419, 127
        %v1424 = vpop.permute.xlu0 %1423
        %1425 = vrot.lane.b32.xlu0 %v1420, 127
        %v1426 = vpop.permute.xlu0 %1425
        %v1429 = vadd.f32 %v1415, %v1424
        %v1430 = vadd.f32 %v1416, %v1426
        %s1431 = sld [smem:[#allocation2 + $0x5a]]
        %v1432 = vstv %s1431
        %v1433 = vmul.f32 %v1432, %v367
        %v1434 = vmul.f32 %v1432, %v368
        %1437 = vrot.lane.b32.xlu0 %v1433, 127
        %v1438 = vpop.permute.xlu0 %1437
        %1439 = vrot.lane.b32.xlu0 %v1434, 127
        %v1440 = vpop.permute.xlu0 %1439
        %v1443 = vadd.f32 %v1429, %v1438
        %v1444 = vadd.f32 %v1430, %v1440
        %s1445 = sld [smem:[#allocation2 + $0x5b]]
        %v1446 = vstv %s1445
        %v1447 = vmul.f32 %v1446, %v369
        %v1448 = vmul.f32 %v1446, %v370
        %1451 = vrot.lane.b32.xlu0 %v1447, 127
        %v1452 = vpop.permute.xlu0 %1451
        %1453 = vrot.lane.b32.xlu0 %v1448, 127
        %v1454 = vpop.permute.xlu0 %1453
        %v1457 = vadd.f32 %v1443, %v1452
        %v1458 = vadd.f32 %v1444, %v1454
        %s1459 = sld [smem:[#allocation2 + $0x68]]
        %v1460 = vstv %s1459
        %v1461 = vmul.f32 %v1460, %v339
        %v1462 = vmul.f32 %v1460, %v340
        %v1463 = vmul.f32 %v1460, %v341
        %v1467 = vrot.slane %v1461, 1
        %v1468 = vrot.slane %v1462, 1
        %v1469 = vsel %vm598, %v1467, %v1468
        %v1470 = vrot.slane %v1463, 1
        %v1471 = vsel %vm598, %v1468, %v1470
        %v1474 = vadd.f32 %v1457, %v1469
        %v1475 = vadd.f32 %v1458, %v1471
        %s1476 = sld [smem:[#allocation2 + $0x69]]
        %v1477 = vstv %s1476
        %v1478 = vmul.f32 %v1477, %v342
        %v1479 = vmul.f32 %v1477, %v343
        %v1480 = vmul.f32 %v1477, %v344
        %v1484 = vrot.slane %v1478, 1
        %v1485 = vrot.slane %v1479, 1
        %v1486 = vsel %vm598, %v1484, %v1485
        %v1487 = vrot.slane %v1480, 1
        %v1488 = vsel %vm598, %v1485, %v1487
        %v1491 = vadd.f32 %v1474, %v1486
        %v1492 = vadd.f32 %v1475, %v1488
        %s1493 = sld [smem:[#allocation2 + $0x6a]]
        %v1494 = vstv %s1493
        %v1495 = vmul.f32 %v1494, %v345
        %v1496 = vmul.f32 %v1494, %v346
        %v1497 = vmul.f32 %v1494, %v347
        %v1501 = vrot.slane %v1495, 1
        %v1502 = vrot.slane %v1496, 1
        %v1503 = vsel %vm598, %v1501, %v1502
        %v1504 = vrot.slane %v1497, 1
        %v1505 = vsel %vm598, %v1502, %v1504
        %v1508 = vadd.f32 %v1491, %v1503
        %v1509 = vadd.f32 %v1492, %v1505
        %s1510 = sld [smem:[#allocation2 + $0x6b]]
        %v1511 = vstv %s1510
        %v1512 = vmul.f32 %v1511, %v348
        %v1513 = vmul.f32 %v1511, %v349
        %v1514 = vmul.f32 %v1511, %v350
        %v1518 = vrot.slane %v1512, 1
        %v1519 = vrot.slane %v1513, 1
        %v1520 = vsel %vm598, %v1518, %v1519
        %v1521 = vrot.slane %v1514, 1
        %v1522 = vsel %vm598, %v1519, %v1521
        %v1525 = vadd.f32 %v1508, %v1520
        %v1526 = vadd.f32 %v1509, %v1522
        %s1527 = sld [smem:[#allocation2 + $0x78]]
        %v1528 = vstv %s1527
        %v1529 = vmul.f32 %v1528, %v351
        %v1530 = vmul.f32 %v1528, %v352
        %v1531 = vmul.f32 %v1528, %v353
        %v1535 = vrot.slane %v1529, 1
        %v1536 = vrot.slane %v1530, 1
        %v1537 = vsel %vm598, %v1535, %v1536
        %v1538 = vrot.slane %v1531, 1
        %v1539 = vsel %vm598, %v1536, %v1538
        %v1542 = vadd.f32 %v1525, %v1537
        %v1543 = vadd.f32 %v1526, %v1539
        %s1544 = sld [smem:[#allocation2 + $0x79]]
        %v1545 = vstv %s1544
        %v1546 = vmul.f32 %v1545, %v354
        %v1547 = vmul.f32 %v1545, %v355
        %v1548 = vmul.f32 %v1545, %v356
        %v1552 = vrot.slane %v1546, 1
        %v1553 = vrot.slane %v1547, 1
        %v1554 = vsel %vm598, %v1552, %v1553
        %v1555 = vrot.slane %v1548, 1
        %v1556 = vsel %vm598, %v1553, %v1555
        %v1559 = vadd.f32 %v1542, %v1554
        %v1560 = vadd.f32 %v1543, %v1556
        %s1561 = sld [smem:[#allocation2 + $0x7a]]
        %v1562 = vstv %s1561
        %v1563 = vmul.f32 %v1562, %v357
        %v1564 = vmul.f32 %v1562, %v358
        %v1565 = vmul.f32 %v1562, %v359
        %v1569 = vrot.slane %v1563, 1
        %v1570 = vrot.slane %v1564, 1
        %v1571 = vsel %vm598, %v1569, %v1570
        %v1572 = vrot.slane %v1565, 1
        %v1573 = vsel %vm598, %v1570, %v1572
        %v1576 = vadd.f32 %v1559, %v1571
        %v1577 = vadd.f32 %v1560, %v1573
        %s1578 = sld [smem:[#allocation2 + $0x7b]]
        %v1579 = vstv %s1578
        %v1580 = vmul.f32 %v1579, %v360
        %v1581 = vmul.f32 %v1579, %v361
        %v1582 = vmul.f32 %v1579, %v362
        %v1586 = vrot.slane %v1580, 1
        %v1587 = vrot.slane %v1581, 1
        %v1588 = vsel %vm598, %v1586, %v1587
        %v1589 = vrot.slane %v1582, 1
        %v1590 = vsel %vm598, %v1587, %v1589
        %v1593 = vadd.f32 %v1576, %v1588
        %v1594 = vadd.f32 %v1577, %v1590
        %s1595 = sld [smem:[#allocation2 + $0x88]]
        %v1596 = vstv %s1595
        %v1597 = vmul.f32 %v1596, %v339
        %v1598 = vmul.f32 %v1596, %v340
        %v1599 = vmul.f32 %v1596, %v341
        %v1603 = vrot.slane %v1597, 1
        %v1604 = vrot.slane %v1598, 1
        %v1605 = vsel %vm598, %v1603, %v1604
        %v1606 = vrot.slane %v1599, 1
        %v1607 = vsel %vm598, %v1604, %v1606
        %1608 = vrot.lane.b32.xlu0 %v1605, 127
        %v1609 = vpop.permute.xlu0 %1608
        %1610 = vrot.lane.b32.xlu0 %v1607, 127
        %v1611 = vpop.permute.xlu0 %1610
        %v1614 = vadd.f32 %v1593, %v1609
        %v1615 = vadd.f32 %v1594, %v1611
        %s1616 = sld [smem:[#allocation2 + $0x89]]
        %v1617 = vstv %s1616
        %v1618 = vmul.f32 %v1617, %v342
        %v1619 = vmul.f32 %v1617, %v343
        %v1620 = vmul.f32 %v1617, %v344
        %v1624 = vrot.slane %v1618, 1
        %v1625 = vrot.slane %v1619, 1
        %v1626 = vsel %vm598, %v1624, %v1625
        %v1627 = vrot.slane %v1620, 1
        %v1628 = vsel %vm598, %v1625, %v1627
        %1629 = vrot.lane.b32.xlu0 %v1626, 127
        %v1630 = vpop.permute.xlu0 %1629
        %1631 = vrot.lane.b32.xlu0 %v1628, 127
        %v1632 = vpop.permute.xlu0 %1631
        %v1635 = vadd.f32 %v1614, %v1630
        %v1636 = vadd.f32 %v1615, %v1632
        %s1637 = sld [smem:[#allocation2 + $0x8a]]
        %v1638 = vstv %s1637
        %v1639 = vmul.f32 %v1638, %v345
        %v1640 = vmul.f32 %v1638, %v346
        %v1641 = vmul.f32 %v1638, %v347
        %v1645 = vrot.slane %v1639, 1
        %v1646 = vrot.slane %v1640, 1
        %v1647 = vsel %vm598, %v1645, %v1646
        %v1648 = vrot.slane %v1641, 1
        %v1649 = vsel %vm598, %v1646, %v1648
        %1650 = vrot.lane.b32.xlu0 %v1647, 127
        %v1651 = vpop.permute.xlu0 %1650
        %1652 = vrot.lane.b32.xlu0 %v1649, 127
        %v1653 = vpop.permute.xlu0 %1652
        %v1656 = vadd.f32 %v1635, %v1651
        %v1657 = vadd.f32 %v1636, %v1653
        %s1658 = sld [smem:[#allocation2 + $0x8b]]
        %v1659 = vstv %s1658
        %v1660 = vmul.f32 %v1659, %v348
        %v1661 = vmul.f32 %v1659, %v349
        %v1662 = vmul.f32 %v1659, %v350
        %v1666 = vrot.slane %v1660, 1
        %v1667 = vrot.slane %v1661, 1
        %v1668 = vsel %vm598, %v1666, %v1667
        %v1669 = vrot.slane %v1662, 1
        %v1670 = vsel %vm598, %v1667, %v1669
        %1671 = vrot.lane.b32.xlu0 %v1668, 127
        %v1672 = vpop.permute.xlu0 %1671
        %1673 = vrot.lane.b32.xlu0 %v1670, 127
        %v1674 = vpop.permute.xlu0 %1673
        %v1677 = vadd.f32 %v1656, %v1672
        %v1678 = vadd.f32 %v1657, %v1674
        %s1679 = scalar_lea.vmem %s338, 32
        %1680 = vst.msk [vmem:[%s1679] sm:$0xff] %vm811, %v1677
        %1681 = vst.msk [vmem:[%s1679 + $0x8] sm:$0xff] %vm811, %v1678
        %s1682 = sld [smem:[#allocation4 + $0x3]]
        %v1683 = vstv %s1682
        %v1684 = vadd.f32 %v1683, 0.0
        %s1685 = sld [smem:[#allocation2 + $0xc]]
        %v1686 = vstv %s1685
        %v1687 = vmul.f32 %v1686, %v339
        %v1688 = vmul.f32 %v1686, %v340
        %v1689 = vadd.f32 %v1684, %v1687
        %v1690 = vadd.f32 %v1684, %v1688
        %s1691 = sld [smem:[#allocation2 + $0xd]]
        %v1692 = vstv %s1691
        %v1693 = vmul.f32 %v1692, %v342
        %v1694 = vmul.f32 %v1692, %v343
        %v1695 = vadd.f32 %v1689, %v1693
        %v1696 = vadd.f32 %v1690, %v1694
        %s1697 = sld [smem:[#allocation2 + $0xe]]
        %v1698 = vstv %s1697
        %v1699 = vmul.f32 %v1698, %v345
        %v1700 = vmul.f32 %v1698, %v346
        %v1701 = vadd.f32 %v1695, %v1699
        %v1702 = vadd.f32 %v1696, %v1700
        %s1703 = sld [smem:[#allocation2 + $0xf]]
        %v1704 = vstv %s1703
        %v1705 = vmul.f32 %v1704, %v348
        %v1706 = vmul.f32 %v1704, %v349
        %v1707 = vadd.f32 %v1701, %v1705
        %v1708 = vadd.f32 %v1702, %v1706
        %s1709 = sld [smem:[#allocation2 + $0x1c]]
        %v1710 = vstv %s1709
        %v1711 = vmul.f32 %v1710, %v351
        %v1712 = vmul.f32 %v1710, %v352
        %v1713 = vadd.f32 %v1707, %v1711
        %v1714 = vadd.f32 %v1708, %v1712
        %s1715 = sld [smem:[#allocation2 + $0x1d]]
        %v1716 = vstv %s1715
        %v1717 = vmul.f32 %v1716, %v354
        %v1718 = vmul.f32 %v1716, %v355
        %v1719 = vadd.f32 %v1713, %v1717
        %v1720 = vadd.f32 %v1714, %v1718
        %s1721 = sld [smem:[#allocation2 + $0x1e]]
        %v1722 = vstv %s1721
        %v1723 = vmul.f32 %v1722, %v357
        %v1724 = vmul.f32 %v1722, %v358
        %v1725 = vadd.f32 %v1719, %v1723
        %v1726 = vadd.f32 %v1720, %v1724
        %s1727 = sld [smem:[#allocation2 + $0x1f]]
        %v1728 = vstv %s1727
        %v1729 = vmul.f32 %v1728, %v360
        %v1730 = vmul.f32 %v1728, %v361
        %v1731 = vadd.f32 %v1725, %v1729
        %v1732 = vadd.f32 %v1726, %v1730
        %s1733 = sld [smem:[#allocation2 + $0x2c]]
        %v1734 = vstv %s1733
        %v1735 = vmul.f32 %v1734, %v339
        %v1736 = vmul.f32 %v1734, %v340
        %1739 = vrot.lane.b32.xlu0 %v1735, 127
        %v1740 = vpop.permute.xlu0 %1739
        %1741 = vrot.lane.b32.xlu0 %v1736, 127
        %v1742 = vpop.permute.xlu0 %1741
        %v1745 = vadd.f32 %v1731, %v1740
        %v1746 = vadd.f32 %v1732, %v1742
        %s1747 = sld [smem:[#allocation2 + $0x2d]]
        %v1748 = vstv %s1747
        %v1749 = vmul.f32 %v1748, %v342
        %v1750 = vmul.f32 %v1748, %v343
        %1753 = vrot.lane.b32.xlu0 %v1749, 127
        %v1754 = vpop.permute.xlu0 %1753
        %1755 = vrot.lane.b32.xlu0 %v1750, 127
        %v1756 = vpop.permute.xlu0 %1755
        %v1759 = vadd.f32 %v1745, %v1754
        %v1760 = vadd.f32 %v1746, %v1756
        %s1761 = sld [smem:[#allocation2 + $0x2e]]
        %v1762 = vstv %s1761
        %v1763 = vmul.f32 %v1762, %v345
        %v1764 = vmul.f32 %v1762, %v346
        %1767 = vrot.lane.b32.xlu0 %v1763, 127
        %v1768 = vpop.permute.xlu0 %1767
        %1769 = vrot.lane.b32.xlu0 %v1764, 127
        %v1770 = vpop.permute.xlu0 %1769
        %v1773 = vadd.f32 %v1759, %v1768
        %v1774 = vadd.f32 %v1760, %v1770
        %s1775 = sld [smem:[#allocation2 + $0x2f]]
        %v1776 = vstv %s1775
        %v1777 = vmul.f32 %v1776, %v348
        %v1778 = vmul.f32 %v1776, %v349
        %1781 = vrot.lane.b32.xlu0 %v1777, 127
        %v1782 = vpop.permute.xlu0 %1781
        %1783 = vrot.lane.b32.xlu0 %v1778, 127
        %v1784 = vpop.permute.xlu0 %1783
        %v1787 = vadd.f32 %v1773, %v1782
        %v1788 = vadd.f32 %v1774, %v1784
        %s1789 = sld [smem:[#allocation2 + $0x3c]]
        %v1790 = vstv %s1789
        %v1791 = vmul.f32 %v1790, %v363
        %v1792 = vmul.f32 %v1790, %v364
        %v1793 = vadd.f32 %v1787, %v1791
        %v1794 = vadd.f32 %v1788, %v1792
        %s1795 = sld [smem:[#allocation2 + $0x3d]]
        %v1796 = vstv %s1795
        %v1797 = vmul.f32 %v1796, %v365
        %v1798 = vmul.f32 %v1796, %v366
        %v1799 = vadd.f32 %v1793, %v1797
        %v1800 = vadd.f32 %v1794, %v1798
        %s1801 = sld [smem:[#allocation2 + $0x3e]]
        %v1802 = vstv %s1801
        %v1803 = vmul.f32 %v1802, %v367
        %v1804 = vmul.f32 %v1802, %v368
        %v1805 = vadd.f32 %v1799, %v1803
        %v1806 = vadd.f32 %v1800, %v1804
        %s1807 = sld [smem:[#allocation2 + $0x3f]]
        %v1808 = vstv %s1807
        %v1809 = vmul.f32 %v1808, %v369
        %v1810 = vmul.f32 %v1808, %v370
        %v1811 = vadd.f32 %v1805, %v1809
        %v1812 = vadd.f32 %v1806, %v1810
        %s1813 = sld [smem:[#allocation2 + $0x4c]]
        %v1814 = vstv %s1813
        %v1815 = vmul.f32 %v1814, %v371
        %v1816 = vmul.f32 %v1814, %v372
        %v1817 = vadd.f32 %v1811, %v1815
        %v1818 = vadd.f32 %v1812, %v1816
        %s1819 = sld [smem:[#allocation2 + $0x4d]]
        %v1820 = vstv %s1819
        %v1821 = vmul.f32 %v1820, %v373
        %v1822 = vmul.f32 %v1820, %v374
        %v1823 = vadd.f32 %v1817, %v1821
        %v1824 = vadd.f32 %v1818, %v1822
        %s1825 = sld [smem:[#allocation2 + $0x4e]]
        %v1826 = vstv %s1825
        %v1827 = vmul.f32 %v1826, %v375
        %v1828 = vmul.f32 %v1826, %v376
        %v1829 = vadd.f32 %v1823, %v1827
        %v1830 = vadd.f32 %v1824, %v1828
        %s1831 = sld [smem:[#allocation2 + $0x4f]]
        %v1832 = vstv %s1831
        %v1833 = vmul.f32 %v1832, %v377
        %v1834 = vmul.f32 %v1832, %v378
        %v1835 = vadd.f32 %v1829, %v1833
        %v1836 = vadd.f32 %v1830, %v1834
        %s1837 = sld [smem:[#allocation2 + $0x5c]]
        %v1838 = vstv %s1837
        %v1839 = vmul.f32 %v1838, %v363
        %v1840 = vmul.f32 %v1838, %v364
        %1843 = vrot.lane.b32.xlu0 %v1839, 127
        %v1844 = vpop.permute.xlu0 %1843
        %1845 = vrot.lane.b32.xlu0 %v1840, 127
        %v1846 = vpop.permute.xlu0 %1845
        %v1849 = vadd.f32 %v1835, %v1844
        %v1850 = vadd.f32 %v1836, %v1846
        %s1851 = sld [smem:[#allocation2 + $0x5d]]
        %v1852 = vstv %s1851
        %v1853 = vmul.f32 %v1852, %v365
        %v1854 = vmul.f32 %v1852, %v366
        %1857 = vrot.lane.b32.xlu0 %v1853, 127
        %v1858 = vpop.permute.xlu0 %1857
        %1859 = vrot.lane.b32.xlu0 %v1854, 127
        %v1860 = vpop.permute.xlu0 %1859
        %v1863 = vadd.f32 %v1849, %v1858
        %v1864 = vadd.f32 %v1850, %v1860
        %s1865 = sld [smem:[#allocation2 + $0x5e]]
        %v1866 = vstv %s1865
        %v1867 = vmul.f32 %v1866, %v367
        %v1868 = vmul.f32 %v1866, %v368
        %1871 = vrot.lane.b32.xlu0 %v1867, 127
        %v1872 = vpop.permute.xlu0 %1871
        %1873 = vrot.lane.b32.xlu0 %v1868, 127
        %v1874 = vpop.permute.xlu0 %1873
        %v1877 = vadd.f32 %v1863, %v1872
        %v1878 = vadd.f32 %v1864, %v1874
        %s1879 = sld [smem:[#allocation2 + $0x5f]]
        %v1880 = vstv %s1879
        %v1881 = vmul.f32 %v1880, %v369
        %v1882 = vmul.f32 %v1880, %v370
        %1885 = vrot.lane.b32.xlu0 %v1881, 127
        %v1886 = vpop.permute.xlu0 %1885
        %1887 = vrot.lane.b32.xlu0 %v1882, 127
        %v1888 = vpop.permute.xlu0 %1887
        %v1891 = vadd.f32 %v1877, %v1886
        %v1892 = vadd.f32 %v1878, %v1888
        %s1893 = sld [smem:[#allocation2 + $0x6c]]
        %v1894 = vstv %s1893
        %v1895 = vmul.f32 %v1894, %v339
        %v1896 = vmul.f32 %v1894, %v340
        %v1897 = vmul.f32 %v1894, %v341
        %v1901 = vrot.slane %v1895, 1
        %v1902 = vrot.slane %v1896, 1
        %v1903 = vsel %vm598, %v1901, %v1902
        %v1904 = vrot.slane %v1897, 1
        %v1905 = vsel %vm598, %v1902, %v1904
        %v1908 = vadd.f32 %v1891, %v1903
        %v1909 = vadd.f32 %v1892, %v1905
        %s1910 = sld [smem:[#allocation2 + $0x6d]]
        %v1911 = vstv %s1910
        %v1912 = vmul.f32 %v1911, %v342
        %v1913 = vmul.f32 %v1911, %v343
        %v1914 = vmul.f32 %v1911, %v344
        %v1918 = vrot.slane %v1912, 1
        %v1919 = vrot.slane %v1913, 1
        %v1920 = vsel %vm598, %v1918, %v1919
        %v1921 = vrot.slane %v1914, 1
        %v1922 = vsel %vm598, %v1919, %v1921
        %v1925 = vadd.f32 %v1908, %v1920
        %v1926 = vadd.f32 %v1909, %v1922
        %s1927 = sld [smem:[#allocation2 + $0x6e]]
        %v1928 = vstv %s1927
        %v1929 = vmul.f32 %v1928, %v345
        %v1930 = vmul.f32 %v1928, %v346
        %v1931 = vmul.f32 %v1928, %v347
        %v1935 = vrot.slane %v1929, 1
        %v1936 = vrot.slane %v1930, 1
        %v1937 = vsel %vm598, %v1935, %v1936
        %v1938 = vrot.slane %v1931, 1
        %v1939 = vsel %vm598, %v1936, %v1938
        %v1942 = vadd.f32 %v1925, %v1937
        %v1943 = vadd.f32 %v1926, %v1939
        %s1944 = sld [smem:[#allocation2 + $0x6f]]
        %v1945 = vstv %s1944
        %v1946 = vmul.f32 %v1945, %v348
        %v1947 = vmul.f32 %v1945, %v349
        %v1948 = vmul.f32 %v1945, %v350
        %v1952 = vrot.slane %v1946, 1
        %v1953 = vrot.slane %v1947, 1
        %v1954 = vsel %vm598, %v1952, %v1953
        %v1955 = vrot.slane %v1948, 1
        %v1956 = vsel %vm598, %v1953, %v1955
        %v1959 = vadd.f32 %v1942, %v1954
        %v1960 = vadd.f32 %v1943, %v1956
        %s1961 = sld [smem:[#allocation2 + $0x7c]]
        %v1962 = vstv %s1961
        %v1963 = vmul.f32 %v1962, %v351
        %v1964 = vmul.f32 %v1962, %v352
        %v1965 = vmul.f32 %v1962, %v353
        %v1969 = vrot.slane %v1963, 1
        %v1970 = vrot.slane %v1964, 1
        %v1971 = vsel %vm598, %v1969, %v1970
        %v1972 = vrot.slane %v1965, 1
        %v1973 = vsel %vm598, %v1970, %v1972
        %v1976 = vadd.f32 %v1959, %v1971
        %v1977 = vadd.f32 %v1960, %v1973
        %s1978 = sld [smem:[#allocation2 + $0x7d]]
        %v1979 = vstv %s1978
        %v1980 = vmul.f32 %v1979, %v354
        %v1981 = vmul.f32 %v1979, %v355
        %v1982 = vmul.f32 %v1979, %v356
        %v1986 = vrot.slane %v1980, 1
        %v1987 = vrot.slane %v1981, 1
        %v1988 = vsel %vm598, %v1986, %v1987
        %v1989 = vrot.slane %v1982, 1
        %v1990 = vsel %vm598, %v1987, %v1989
        %v1993 = vadd.f32 %v1976, %v1988
        %v1994 = vadd.f32 %v1977, %v1990
        %s1995 = sld [smem:[#allocation2 + $0x7e]]
        %v1996 = vstv %s1995
        %v1997 = vmul.f32 %v1996, %v357
        %v1998 = vmul.f32 %v1996, %v358
        %v1999 = vmul.f32 %v1996, %v359
        %v2003 = vrot.slane %v1997, 1
        %v2004 = vrot.slane %v1998, 1
        %v2005 = vsel %vm598, %v2003, %v2004
        %v2006 = vrot.slane %v1999, 1
        %v2007 = vsel %vm598, %v2004, %v2006
        %v2010 = vadd.f32 %v1993, %v2005
        %v2011 = vadd.f32 %v1994, %v2007
        %s2012 = sld [smem:[#allocation2 + $0x7f]]
        %v2013 = vstv %s2012
        %v2014 = vmul.f32 %v2013, %v360
        %v2015 = vmul.f32 %v2013, %v361
        %v2016 = vmul.f32 %v2013, %v362
        %v2020 = vrot.slane %v2014, 1
        %v2021 = vrot.slane %v2015, 1
        %v2022 = vsel %vm598, %v2020, %v2021
        %v2023 = vrot.slane %v2016, 1
        %v2024 = vsel %vm598, %v2021, %v2023
        %v2027 = vadd.f32 %v2010, %v2022
        %v2028 = vadd.f32 %v2011, %v2024
        %s2029 = sld [smem:[#allocation2 + $0x8c]]
        %v2030 = vstv %s2029
        %v2031 = vmul.f32 %v2030, %v339
        %v2032 = vmul.f32 %v2030, %v340
        %v2033 = vmul.f32 %v2030, %v341
        %v2037 = vrot.slane %v2031, 1
        %v2038 = vrot.slane %v2032, 1
        %v2039 = vsel %vm598, %v2037, %v2038
        %v2040 = vrot.slane %v2033, 1
        %v2041 = vsel %vm598, %v2038, %v2040
        %2042 = vrot.lane.b32.xlu0 %v2039, 127
        %v2043 = vpop.permute.xlu0 %2042
        %2044 = vrot.lane.b32.xlu0 %v2041, 127
        %v2045 = vpop.permute.xlu0 %2044
        %v2048 = vadd.f32 %v2027, %v2043
        %v2049 = vadd.f32 %v2028, %v2045
        %s2050 = sld [smem:[#allocation2 + $0x8d]]
        %v2051 = vstv %s2050
        %v2052 = vmul.f32 %v2051, %v342
        %v2053 = vmul.f32 %v2051, %v343
        %v2054 = vmul.f32 %v2051, %v344
        %v2058 = vrot.slane %v2052, 1
        %v2059 = vrot.slane %v2053, 1
        %v2060 = vsel %vm598, %v2058, %v2059
        %v2061 = vrot.slane %v2054, 1
        %v2062 = vsel %vm598, %v2059, %v2061
        %2063 = vrot.lane.b32.xlu0 %v2060, 127
        %v2064 = vpop.permute.xlu0 %2063
        %2065 = vrot.lane.b32.xlu0 %v2062, 127
        %v2066 = vpop.permute.xlu0 %2065
        %v2069 = vadd.f32 %v2048, %v2064
        %v2070 = vadd.f32 %v2049, %v2066
        %s2071 = sld [smem:[#allocation2 + $0x8e]]
        %v2072 = vstv %s2071
        %v2073 = vmul.f32 %v2072, %v345
        %v2074 = vmul.f32 %v2072, %v346
        %v2075 = vmul.f32 %v2072, %v347
        %v2079 = vrot.slane %v2073, 1
        %v2080 = vrot.slane %v2074, 1
        %v2081 = vsel %vm598, %v2079, %v2080
        %v2082 = vrot.slane %v2075, 1
        %v2083 = vsel %vm598, %v2080, %v2082
        %2084 = vrot.lane.b32.xlu0 %v2081, 127
        %v2085 = vpop.permute.xlu0 %2084
        %2086 = vrot.lane.b32.xlu0 %v2083, 127
        %v2087 = vpop.permute.xlu0 %2086
        %v2090 = vadd.f32 %v2069, %v2085
        %v2091 = vadd.f32 %v2070, %v2087
        %s2092 = sld [smem:[#allocation2 + $0x8f]]
        %v2093 = vstv %s2092
        %v2094 = vmul.f32 %v2093, %v348
        %v2095 = vmul.f32 %v2093, %v349
        %v2096 = vmul.f32 %v2093, %v350
        %v2100 = vrot.slane %v2094, 1
        %v2101 = vrot.slane %v2095, 1
        %v2102 = vsel %vm598, %v2100, %v2101
        %v2103 = vrot.slane %v2096, 1
        %v2104 = vsel %vm598, %v2101, %v2103
        %2105 = vrot.lane.b32.xlu0 %v2102, 127
        %v2106 = vpop.permute.xlu0 %2105
        %2107 = vrot.lane.b32.xlu0 %v2104, 127
        %v2108 = vpop.permute.xlu0 %2107
        %v2111 = vadd.f32 %v2090, %v2106
        %v2112 = vadd.f32 %v2091, %v2108
        %s2113 = scalar_lea.vmem %s338, 48
        %2114 = vst.msk [vmem:[%s2113] sm:$0xff] %vm811, %v2111
        %2115 = vst.msk [vmem:[%s2113 + $0x8] sm:$0xff] %vm811, %v2112
        %p2116 = scmp.lt.s32.totalorder %s19, 1
        %s2117 = scalar_select %p2116, %s19, 1
        %s2118 = smul.addr %s2117, 8
        %s2119 = smul.addr %s2118, 8
        %s2120 = scalar_lea.vmem %s6, %s2119
        // Predicated region
        $region53: #{esa_forward.5} parent=43 // pred_check
          %p2121 = pneg %p183
        $region54: #{esa_forward.5} parent=43 // pred_check_branch
          %2123 = sbr.rel (%p2121) target = $region56
        $region55: #{esa_forward.5} parent=43 // pred_region
          _
        $region56: #{esa_forward.5} parent=43 // pred_fallthru
          _
      $region44: #{esa_forward.5} parent=5 // pred_fallthru
        _
      %p2124 = scmp.le.s32.totalorder 2, %s14
      // Predicated region
      $region57: #{esa_forward.5} parent=5 // pred_check
        %p2125 = pneg %p2124
      $region58: #{esa_forward.5} parent=5 // pred_check_branch
        %2127 = sbr.rel (%p2125) target = $region60
      $region59: #{esa_forward.5} parent=5 // pred_region
        %s2128 = ssub.s32 %s14, 2
        // Predicated region
        $region61: #{esa_forward.5} parent=59 // pred_check
          %p2129 = pneg %p189
        $region62: #{esa_forward.5} parent=59 // pred_check_branch
          %2131 = sbr.rel (%p2129) target = $region64
        $region63: #{esa_forward.5} parent=59 // pred_region
          %p2132 = scmp.lt.s32.totalorder %s20, 1
          %s2133 = scalar_select %p2132, %s20, 1
          %s2134 = smul.addr %s2133, 8
          %s2135 = smul.addr %s2134, 8
          %s2136 = scalar_lea.vmem %s6, %s2135
        $region64: #{esa_forward.5} parent=59 // pred_fallthru
          _
      $region60: #{esa_forward.5} parent=5 // pred_fallthru
        _
    $region6: #{esa_forward.5} parent=1 // loop_footer
      %s18 = sadd.s32 1, %s14
    $region7: #{esa_forward.5} parent=1 // loop_footer_branch
      %13 = sbr.rel target = $region3
    $region8: #{esa_forward.5} parent=1 // loop_exit
      _
    %2137 = vsyncpa [#allocation3], 1
    %s2138 = scalar_lea.sflag [#allocation3], 1
    %2139 = vsyncpa %s2138, 1
    %2140 = vsyncpa [#allocation5], 1

// kernel: esa_forward.6
$region0: #{esa_forward.6}
  #allocation0 [shape = 'u32[]', space=smem, size = 0x4, offset = 0x4, fixed_abs, tag = 'smem constant byte address 0x4 - core index']
  #allocation1 [shape = 'u32[144,128]{1,0:T(1,128)}', space=vmem, size = 0x12000, scoped, tag = 'internal scratch']
  %s0 = inlined_call_operand.vmem [shape: f32[2,4,16], index: 0, kind: input, shape index: {}]
  %s1 = inlined_call_operand.vmem [shape: f32[9,16,16], index: 1, kind: input, shape index: {}]
  %s2 = inlined_call_operand.vmem [shape: f32[3,9,4,4], index: 2, kind: input, shape index: {}]
  %s3 = inlined_call_operand.vmem [shape: f32[3,4,1], index: 3, kind: input, shape index: {}]
  %s4 = inlined_call_operand.vmem [shape: f32[2,4,16], index: 4, kind: output, shape index: {}]
  %s5 = sld [smem:[#allocation0]]
  $region49: #{esa_forward.6} parent=0
    _
  %s7 = ssub.s32 1, %s5
  %s8 = scalar_select 0, %s7, %s5
  loop: start=0, step=1, limit=4
  $region2: #{esa_forward.6} parent=0 // loop_pre_header
    _
  $region3: #{esa_forward.6} parent=0 // loop_header
    %s10 = sphi 0, %s14
    %p11 = scmp.ge.s32.totalorder %s10, 4
    %s20 = sphi 0, %s22
    %s23 = sphi 0, %s20
    %s24 = sphi 0, %s23
    %s40 = sphi 0, %s24
    %s44 = sphi 0, %s44
    %s46 = sphi 0, %s44
    %s47 = sphi 0, %s46
    %s61 = sphi 0, %s47
    %s65 = sphi 0, %s65
    %s67 = sphi 0, %s65
    %s68 = sphi 0, %s67
    %s82 = sphi 0, %s68
    %s86 = sphi 0, %s86
    %s88 = sphi 0, %s86
    %s89 = sphi 0, %s88
    %s103 = sphi 0, %s89
    %s109 = sphi 0, %s111
    %s112 = sphi 0, %s109
    %s113 = sphi 0, %s112
    %s129 = sphi 0, %s113
  $region4: #{esa_forward.6} parent=0 // loop_header_branch
    %13 = sbr.rel (%p11) target = $region8
  $region5: #{esa_forward.6} parent=0 // loop_body
    %s15 = ssub.s32 %s10, 1
    %s16 = ssub.s32 %s10, 2
    %s17 = sadd.s32 %s10, 1
    %s18 = ssub.s32 %s10, %s17
    %p19 = scmp.eq.s32.totalorder %s18, 0
    %s21 = sadd.s32 %s20, 1
    %s22 = scalar_select %p19, %s20, %s21
    %p25 = pneg %p19
    %p26 = scmp.eq.s32.totalorder %s10, 1
    %p27 = por %p25, %p26
    %p28 = scmp.ne.s32.totalorder %s20, %s23
    %p29 = scmp.eq.s32.totalorder %s10, 0
    %p30 = por %p28, %p29
    %p31 = scmp.ne.s32.totalorder %s20, %s23
    %p32 = scmp.eq.s32.totalorder %s15, 1
    %p33 = por %p31, %p32
    %p34 = scmp.ne.s32.totalorder %s23, %s24
    %p35 = scmp.eq.s32.totalorder %s15, 0
    %p36 = por %p34, %p35
    %p37 = scmp.ne.s32.totalorder %s23, %s24
    %p38 = scmp.eq.s32.totalorder %s16, 1
    %p39 = por %p37, %p38
    %p41 = scmp.ne.s32.totalorder %s24, %s40
    %p42 = scmp.eq.s32.totalorder %s16, 0
    %p43 = por %p41, %p42
    %s45 = sadd.s32 %s44, 1
    %p48 = scmp.eq.s32.totalorder %s10, 1
    %p49 = scmp.ne.s32.totalorder %s44, %s46
    %p50 = scmp.eq.s32.totalorder %s10, 0
    %p51 = por %p49, %p50
    %p52 = scmp.ne.s32.totalorder %s44, %s46
    %p53 = scmp.eq.s32.totalorder %s15, 1
    %p54 = por %p52, %p53
    %p55 = scmp.ne.s32.totalorder %s46, %s47
    %p56 = scmp.eq.s32.totalorder %s15, 0
    %p57 = por %p55, %p56
    %p58 = scmp.ne.s32.totalorder %s46, %s47
    %p59 = scmp.eq.s32.totalorder %s16, 1
    %p60 = por %p58, %p59
    %p62 = scmp.ne.s32.totalorder %s47, %s61
    %p63 = scmp.eq.s32.totalorder %s16, 0
    %p64 = por %p62, %p63
    %s66 = sadd.s32 %s65, 1
    %p69 = scmp.eq.s32.totalorder %s10, 1
    %p70 = scmp.ne.s32.totalorder %s65, %s67
    %p71 = scmp.eq.s32.totalorder %s10, 0
    %p72 = por %p70, %p71
    %p73 = scmp.ne.s32.totalorder %s65, %s67
    %p74 = scmp.eq.s32.totalorder %s15, 1
    %p75 = por %p73, %p74
    %p76 = scmp.ne.s32.totalorder %s67, %s68
    %p77 = scmp.eq.s32.totalorder %s15, 0
    %p78 = por %p76, %p77
    %p79 = scmp.ne.s32.totalorder %s67, %s68
    %p80 = scmp.eq.s32.totalorder %s16, 1
    %p81 = por %p79, %p80
    %p83 = scmp.ne.s32.totalorder %s68, %s82
    %p84 = scmp.eq.s32.totalorder %s16, 0
    %p85 = por %p83, %p84
    %s87 = sadd.s32 %s86, 1
    %p90 = scmp.eq.s32.totalorder %s10, 1
    %p91 = scmp.ne.s32.totalorder %s86, %s88
    %p92 = scmp.eq.s32.totalorder %s10, 0
    %p93 = por %p91, %p92
    %p94 = scmp.ne.s32.totalorder %s86, %s88
    %p95 = scmp.eq.s32.totalorder %s15, 1
    %p96 = por %p94, %p95
    %p97 = scmp.ne.s32.totalorder %s88, %s89
    %p98 = scmp.eq.s32.totalorder %s15, 0
    %p99 = por %p97, %p98
    %p100 = scmp.ne.s32.totalorder %s88, %s89
    %p101 = scmp.eq.s32.totalorder %s16, 1
    %p102 = por %p100, %p101
    %p104 = scmp.ne.s32.totalorder %s89, %s103
    %p105 = scmp.eq.s32.totalorder %s16, 0
    %p106 = por %p104, %p105
    %s107 = ssub.s32 %s10, %s17
    %p108 = scmp.eq.s32.totalorder %s107, 0
    %s110 = sadd.s32 %s109, 1
    %s111 = scalar_select %p108, %s109, %s110
    %p114 = pneg %p108
    %p115 = scmp.eq.s32.totalorder %s10, 1
    %p116 = por %p114, %p115
    %p117 = scmp.ne.s32.totalorder %s109, %s112
    %p118 = scmp.eq.s32.totalorder %s10, 0
    %p119 = por %p117, %p118
    %p120 = scmp.ne.s32.totalorder %s109, %s112
    %p121 = scmp.eq.s32.totalorder %s15, 1
    %p122 = por %p120, %p121
    %p123 = scmp.ne.s32.totalorder %s112, %s113
    %p124 = scmp.eq.s32.totalorder %s15, 0
    %p125 = por %p123, %p124
    %p126 = scmp.ne.s32.totalorder %s112, %s113
    %p127 = scmp.eq.s32.totalorder %s16, 1
    %p128 = por %p126, %p127
    %p130 = scmp.ne.s32.totalorder %s113, %s129
    %p131 = scmp.eq.s32.totalorder %s16, 0
    %p132 = por %p130, %p131
    %p133 = scmp.le.s32.totalorder 1, %s10
    %p134 = scmp.lt.s32.totalorder %s10, 3
    %p135 = pnand %p133, %p134
    %p136 = pneg %p135
    // Predicated region
    $region9: #{esa_forward.6} parent=5 // pred_check
      _
    $region10: #{esa_forward.6} parent=5 // pred_check_branch
      %138 = sbr.rel (%p135) target = $region12
    $region11: #{esa_forward.6} parent=5 // pred_region
      %s139 = ssub.s32 %s10, 1
      // Predicated region
      $region13: #{esa_forward.6} parent=11 // pred_check
        %p140 = pneg %p57
      $region14: #{esa_forward.6} parent=11 // pred_check_branch
        %142 = sbr.rel (%p140) target = $region16
      $region15: #{esa_forward.6} parent=11 // pred_region
        _
      $region16: #{esa_forward.6} parent=11 // pred_fallthru
        _
      // Predicated region
      $region17: #{esa_forward.6} parent=11 // pred_check
        %p143 = pneg %p78
      $region18: #{esa_forward.6} parent=11 // pred_check_branch
        %145 = sbr.rel (%p143) target = $region20
      $region19: #{esa_forward.6} parent=11 // pred_region
        _
      $region20: #{esa_forward.6} parent=11 // pred_fallthru
        _
      // Predicated region
      $region21: #{esa_forward.6} parent=11 // pred_check
        %p146 = pneg %p99
      $region22: #{esa_forward.6} parent=11 // pred_check_branch
        %148 = sbr.rel (%p146) target = $region24
      $region23: #{esa_forward.6} parent=11 // pred_region
        _
      $region24: #{esa_forward.6} parent=11 // pred_fallthru
        _
    $region12: #{esa_forward.6} parent=5 // pred_fallthru
      _
    %p149 = scmp.lt.s32.totalorder %s10, 2
    // Predicated region
    $region25: #{esa_forward.6} parent=5 // pred_check
      %p150 = pneg %p149
    $region26: #{esa_forward.6} parent=5 // pred_check_branch
      %152 = sbr.rel (%p150) target = $region28
    $region27: #{esa_forward.6} parent=5 // pred_region
      // Predicated region
      $region29: #{esa_forward.6} parent=27 // pred_check
        %p153 = pneg %p30
      $region30: #{esa_forward.6} parent=27 // pred_check_branch
        %155 = sbr.rel (%p153) target = $region32
      $region31: #{esa_forward.6} parent=27 // pred_region
        %p156 = scmp.lt.s32.totalorder %s10, 1
        %s157 = scalar_select %p156, %s10, 1
        %s158 = smul.addr %s157, 4
        %s159 = scalar_lea.vmem %s0, %s158
      $region32: #{esa_forward.6} parent=27 // pred_fallthru
        _
    $region28: #{esa_forward.6} parent=5 // pred_fallthru
      _
    %p160 = scmp.le.s32.totalorder 1, %s10
    %p161 = scmp.lt.s32.totalorder %s10, 3
    %p162 = pnand %p160, %p161
    %p163 = pneg %p162
    // Predicated region
    $region33: #{esa_forward.6} parent=5 // pred_check
      _
    $region34: #{esa_forward.6} parent=5 // pred_check_branch
      %165 = sbr.rel (%p162) target = $region36
    $region35: #{esa_forward.6} parent=5 // pred_region
      %s166 = ssub.s32 %s10, 1
      %p167 = scmp.lt.s32.totalorder %s15, 1
      %s168 = scalar_select %p167, %s15, 1
      %s169 = smul.addr %s168, 4
      %s170 = scalar_lea.vmem %s0, %s169
      %p171 = pneg %p36
      %p172 = pneg %p33
      %p173 = pneg %p57
      %p174 = pneg %p54
      %p175 = pneg %p78
      %p176 = pneg %p75
      %p177 = pneg %p99
      %p178 = pneg %p96
      %p179 = pneg %p125
      %p180 = pneg %p122
      %p181 = scmp.lt.s32.totalorder %s15, 1
      %s182 = scalar_select %p181, %s15, 1
      %s183 = smul.addr %s182, 4
      %s184 = scalar_lea.vmem %s4, %s183
      %p185 = scmp.lt.s32.totalorder %s15, 1
      %s186 = scalar_select %p185, %s15, 1
      %s187 = smul.addr %s186, 4
      %s188 = scalar_lea.vmem %s0, %s187
      %p189 = scmp.lt.s32.totalorder %s15, 1
      %s190 = scalar_select %p189, %s15, 1
      %s191 = smul.addr %s190, 4
      %s192 = scalar_lea.vmem %s4, %s191
      %v193 = vld [vmem:[%s188] sm:$0xf]
      %v194 = vld [vmem:[%s3] sm:$0xf]
      %196 = vset.pattern.permute.xlu0 0
      %197 = vperm.xlu0 %196, %v194
      %v198 = vpop.permute.xlu0 %197
      %v200 = vadd.f32 %v198, 0.0
      %v201 = vld [vmem:[%s1] sm:$0xff]
      %v202 = vld [vmem:[%s1 + $0x8] sm:$0xff]
      %vm203 = vcmask 130048
      %v205 = vsel %vm203, %v193, 0
      %207 = vmatprep.subr.mxu0 0.0
      %208 = vmatpush1.msra.mxu0 %v201
      %209 = vmatprep.subr.mxu0 0.0
      %210 = vmatpush1.msra.mxu0 %v202
      %211 = vmatprep.subr.mxu0 0.0
      %212 = vmatpush1.msra.mxu0 0.0
      %213 = vmatprep.subr.mxu0 0.0
      %214 = vmatpush1.msra.mxu0 0.0
      %215 = vmatprep.subr.mxu0 0.0
      %216 = vmatpush1.msra.mxu0 0.0
      %217 = vmatprep.subr.mxu0 0.0
      %218 = vmatpush1.msra.mxu0 0.0
      %219 = vmatprep.subr.mxu0 0.0
      %220 = vmatpush1.msra.mxu0 0.0
      %221 = vmatprep.subr.mxu0 0.0
      %222 = vmatpush1.msra.mxu0 0.0
      %223 = vmatprep.subr.mxu0 0.0
      %224 = vmatpush1.msra.mxu0 0.0
      %225 = vmatprep.subr.mxu0 0.0
      %226 = vmatpush1.msra.mxu0 0.0
      %227 = vmatprep.subr.mxu0 0.0
      %228 = vmatpush1.msra.mxu0 0.0
      %229 = vmatprep.subr.mxu0 0.0
      %230 = vmatpush1.msra.mxu0 0.0
      %231 = vmatprep.subr.mxu0 0.0
      %232 = vmatpush1.msra.mxu0 0.0
      %233 = vmatprep.subr.mxu0 0.0
      %234 = vmatpush1.msra.mxu0 0.0
      %235 = vmatprep.subr.mxu0 0.0
      %236 = vmatpush1.msra.mxu0 0.0
      %237 = vmatprep.subr.mxu0 0.0
      %238 = vmatpush1.msra.mxu0 0.0
      %239 = vmatprep.subr.mxu0 0.0
      %240 = vmatpush1.msra.mxu0 0.0
      %241 = vmatprep.subr.mxu0 0.0
      %242 = vmatpush1.msra.mxu0 0.0
      %243 = vmatprep.subr.mxu0 0.0
      %244 = vmatpush1.msra.mxu0 0.0
      %245 = vmatprep.subr.mxu0 0.0
      %246 = vmatpush1.msra.mxu0 0.0
      %247 = vmatprep.subr.mxu0 0.0
      %248 = vmatpush1.msra.mxu0 0.0
      %249 = vmatprep.subr.mxu0 0.0
      %250 = vmatpush1.msra.mxu0 0.0
      %251 = vmatprep.subr.mxu0 0.0
      %252 = vmatpush1.msra.mxu0 0.0
      %253 = vmatprep.subr.mxu0 0.0
      %254 = vmatpush1.msra.mxu0 0.0
      %255 = vmatprep.subr.mxu0 0.0
      %256 = vmatpush1.msra.mxu0 0.0
      %257 = vmatprep.subr.mxu0 0.0
      %258 = vmatpush1.msra.mxu0 0.0
      %259 = vmatprep.subr.mxu0 0.0
      %260 = vmatpush1.msra.mxu0 0.0
      %261 = vmatprep.subr.mxu0 0.0
      %262 = vmatpush1.msra.mxu0 0.0
      %263 = vmatprep.subr.mxu0 0.0
      %264 = vmatpush1.msra.mxu0 0.0
      %265 = vmatprep.subr.mxu0 0.0
      %266 = vmatpush1.msra.mxu0 0.0
      %267 = vmatprep.subr.mxu0 0.0
      %268 = vmatpush1.msra.mxu0 0.0
      %269 = vmatprep.subr.mxu0 0.0
      %270 = vmatpush1.msra.mxu0 0.0
      %271 = vmatprep.mubr.f32.mxu0 0.0
      %272 = vmatmul.mubr.f32.gmra.mrb[0].mxu0 %v205
      %v273 = vpop.f32.mrb[0].mxu0
      %v274 = vadd.f32 0.0, %v273
      %v275 = vpop.f32.mrb[0].mxu0
      %276 = vdwg.mxu0
      %v277 = vld [vmem:[%s2] sm:$0xf]
      %vm278 = vcmask 31744
      %v280 = vsel %vm278, %v277, 0
      %vm282 = vcmask 1043456
      %v284 = vsel %vm282, %v274, 0
      %286 = vmatprep.subr.mxu0 0.0
      %287 = vmatpush1.msra.mxu0 %v284
      %288 = vmatprep.subr.mxu0 0.0
      %289 = vmatpush1.msra.mxu0 0.0
      %290 = vmatprep.subr.mxu0 0.0
      %291 = vmatpush1.msra.mxu0 0.0
      %292 = vmatprep.subr.mxu0 0.0
      %293 = vmatpush1.msra.mxu0 0.0
      %294 = vmatprep.subr.mxu0 0.0
      %295 = vmatpush1.msra.mxu0 0.0
      %296 = vmatprep.subr.mxu0 0.0
      %297 = vmatpush1.msra.mxu0 0.0
      %298 = vmatprep.subr.mxu0 0.0
      %299 = vmatpush1.msra.mxu0 0.0
      %300 = vmatprep.subr.mxu0 0.0
      %301 = vmatpush1.msra.mxu0 0.0
      %302 = vmatprep.subr.mxu0 0.0
      %303 = vmatpush1.msra.mxu0 0.0
      %304 = vmatprep.subr.mxu0 0.0
      %305 = vmatpush1.msra.mxu0 0.0
      %306 = vmatprep.subr.mxu0 0.0
      %307 = vmatpush1.msra.mxu0 0.0
      %308 = vmatprep.subr.mxu0 0.0
      %309 = vmatpush1.msra.mxu0 0.0
      %310 = vmatprep.subr.mxu0 0.0
      %311 = vmatpush1.msra.mxu0 0.0
      %312 = vmatprep.subr.mxu0 0.0
      %313 = vmatpush1.msra.mxu0 0.0
      %314 = vmatprep.subr.mxu0 0.0
      %315 = vmatpush1.msra.mxu0 0.0
      %316 = vmatprep.subr.mxu0 0.0
      %317 = vmatpush1.msra.mxu0 0.0
      %318 = vmatprep.subr.mxu0 0.0
      %319 = vmatpush1.msra.mxu0 0.0
      %320 = vmatprep.subr.mxu0 0.0
      %321 = vmatpush1.msra.mxu0 0.0
      %322 = vmatprep.subr.mxu0 0.0
      %323 = vmatpush1.msra.mxu0 0.0
      %324 = vmatprep.subr.mxu0 0.0
      %325 = vmatpush1.msra.mxu0 0.0
      %326 = vmatprep.subr.mxu0 0.0
      %327 = vmatpush1.msra.mxu0 0.0
      %328 = vmatprep.subr.mxu0 0.0
      %329 = vmatpush1.msra.mxu0 0.0
      %330 = vmatprep.subr.mxu0 0.0
      %331 = vmatpush1.msra.mxu0 0.0
      %332 = vmatprep.subr.mxu0 0.0
      %333 = vmatpush1.msra.mxu0 0.0
      %334 = vmatprep.subr.mxu0 0.0
      %335 = vmatpush1.msra.mxu0 0.0
      %336 = vmatprep.subr.mxu0 0.0
      %337 = vmatpush1.msra.mxu0 0.0
      %338 = vmatprep.subr.mxu0 0.0
      %339 = vmatpush1.msra.mxu0 0.0
      %340 = vmatprep.subr.mxu0 0.0
      %341 = vmatpush1.msra.mxu0 0.0
      %342 = vmatprep.subr.mxu0 0.0
      %343 = vmatpush1.msra.mxu0 0.0
      %344 = vmatprep.subr.mxu0 0.0
      %345 = vmatpush1.msra.mxu0 0.0
      %346 = vmatprep.subr.mxu0 0.0
      %347 = vmatpush1.msra.mxu0 0.0
      %348 = vmatprep.subr.mxu0 0.0
      %349 = vmatpush1.msra.mxu0 0.0
      %350 = vmatprep.mubr.f32.mxu0 0.0
      %351 = vmatmul.mubr.f32.gmra.mrb[0].mxu0 %v280
      %v352 = vpop.f32.mrb[0].mxu0
      %v353 = vadd.f32 0.0, %v352
      %v354 = vpop.f32.mrb[0].mxu0
      %355 = vdwg.mxu0
      %v356 = vadd.f32 %v200, %v353
      %s357 = scalar_lea.vmem %s1, 16
      %v358 = vld [vmem:[%s357] sm:$0xff]
      %v359 = vld [vmem:[%s357 + $0x8] sm:$0xff]
      %360 = vmatprep.subr.mxu0 0.0
      %361 = vmatpush1.msra.mxu0 %v358
      %362 = vmatprep.subr.mxu0 0.0
      %363 = vmatpush1.msra.mxu0 %v359
      %364 = vmatprep.subr.mxu0 0.0
      %365 = vmatpush1.msra.mxu0 0.0
      %366 = vmatprep.subr.mxu0 0.0
      %367 = vmatpush1.msra.mxu0 0.0
      %368 = vmatprep.subr.mxu0 0.0
      %369 = vmatpush1.msra.mxu0 0.0
      %370 = vmatprep.subr.mxu0 0.0
      %371 = vmatpush1.msra.mxu0 0.0
      %372 = vmatprep.subr.mxu0 0.0
      %373 = vmatpush1.msra.mxu0 0.0
      %374 = vmatprep.subr.mxu0 0.0
      %375 = vmatpush1.msra.mxu0 0.0
      %376 = vmatprep.subr.mxu0 0.0
      %377 = vmatpush1.msra.mxu0 0.0
      %378 = vmatprep.subr.mxu0 0.0
      %379 = vmatpush1.msra.mxu0 0.0
      %380 = vmatprep.subr.mxu0 0.0
      %381 = vmatpush1.msra.mxu0 0.0
      %382 = vmatprep.subr.mxu0 0.0
      %383 = vmatpush1.msra.mxu0 0.0
      %384 = vmatprep.subr.mxu0 0.0
      %385 = vmatpush1.msra.mxu0 0.0
      %386 = vmatprep.subr.mxu0 0.0
      %387 = vmatpush1.msra.mxu0 0.0
      %388 = vmatprep.subr.mxu0 0.0
      %389 = vmatpush1.msra.mxu0 0.0
      %390 = vmatprep.subr.mxu0 0.0
      %391 = vmatpush1.msra.mxu0 0.0
      %392 = vmatprep.subr.mxu0 0.0
      %393 = vmatpush1.msra.mxu0 0.0
      %394 = vmatprep.subr.mxu0 0.0
      %395 = vmatpush1.msra.mxu0 0.0
      %396 = vmatprep.subr.mxu0 0.0
      %397 = vmatpush1.msra.mxu0 0.0
      %398 = vmatprep.subr.mxu0 0.0
      %399 = vmatpush1.msra.mxu0 0.0
      %400 = vmatprep.subr.mxu0 0.0
      %401 = vmatpush1.msra.mxu0 0.0
      %402 = vmatprep.subr.mxu0 0.0
      %403 = vmatpush1.msra.mxu0 0.0
      %404 = vmatprep.subr.mxu0 0.0
      %405 = vmatpush1.msra.mxu0 0.0
      %406 = vmatprep.subr.mxu0 0.0
      %407 = vmatpush1.msra.mxu0 0.0
      %408 = vmatprep.subr.mxu0 0.0
      %409 = vmatpush1.msra.mxu0 0.0
      %410 = vmatprep.subr.mxu0 0.0
      %411 = vmatpush1.msra.mxu0 0.0
      %412 = vmatprep.subr.mxu0 0.0
      %413 = vmatpush1.msra.mxu0 0.0
      %414 = vmatprep.subr.mxu0 0.0
      %415 = vmatpush1.msra.mxu0 0.0
      %416 = vmatprep.subr.mxu0 0.0
      %417 = vmatpush1.msra.mxu0 0.0
      %418 = vmatprep.subr.mxu0 0.0
      %419 = vmatpush1.msra.mxu0 0.0
      %420 = vmatprep.subr.mxu0 0.0
      %421 = vmatpush1.msra.mxu0 0.0
      %422 = vmatprep.subr.mxu0 0.0
      %423 = vmatpush1.msra.mxu0 0.0
      %424 = vmatprep.mubr.f32.mxu0 0.0
      %425 = vmatmul.mubr.f32.gmra.mrb[0].mxu0 %v205
      %v426 = vpop.f32.mrb[0].mxu0
      %v427 = vadd.f32 0.0, %v426
      %v428 = vpop.f32.mrb[0].mxu0
      %429 = vdwg.mxu0
      %s430 = scalar_lea.vmem %s2, 4
      %v431 = vld [vmem:[%s430] sm:$0xf]
      %v433 = vsel %vm278, %v431, 0
      %v436 = vsel %vm282, %v427, 0
      %438 = vmatprep.subr.mxu0 0.0
      %439 = vmatpush1.msra.mxu0 %v436
      %440 = vmatprep.subr.mxu0 0.0
      %441 = vmatpush1.msra.mxu0 0.0
      %442 = vmatprep.subr.mxu0 0.0
      %443 = vmatpush1.msra.mxu0 0.0
      %444 = vmatprep.subr.mxu0 0.0
      %445 = vmatpush1.msra.mxu0 0.0
      %446 = vmatprep.subr.mxu0 0.0
      %447 = vmatpush1.msra.mxu0 0.0
      %448 = vmatprep.subr.mxu0 0.0
      %449 = vmatpush1.msra.mxu0 0.0
      %450 = vmatprep.subr.mxu0 0.0
      %451 = vmatpush1.msra.mxu0 0.0
      %452 = vmatprep.subr.mxu0 0.0
      %453 = vmatpush1.msra.mxu0 0.0
      %454 = vmatprep.subr.mxu0 0.0
      %455 = vmatpush1.msra.mxu0 0.0
      %456 = vmatprep.subr.mxu0 0.0
      %457 = vmatpush1.msra.mxu0 0.0
      %458 = vmatprep.subr.mxu0 0.0
      %459 = vmatpush1.msra.mxu0 0.0
      %460 = vmatprep.subr.mxu0 0.0
      %461 = vmatpush1.msra.mxu0 0.0
      %462 = vmatprep.subr.mxu0 0.0
      %463 = vmatpush1.msra.mxu0 0.0
      %464 = vmatprep.subr.mxu0 0.0
      %465 = vmatpush1.msra.mxu0 0.0
      %466 = vmatprep.subr.mxu0 0.0
      %467 = vmatpush1.msra.mxu0 0.0
      %468 = vmatprep.subr.mxu0 0.0
      %469 = vmatpush1.msra.mxu0 0.0
      %470 = vmatprep.subr.mxu0 0.0
      %471 = vmatpush1.msra.mxu0 0.0
      %472 = vmatprep.subr.mxu0 0.0
      %473 = vmatpush1.msra.mxu0 0.0
      %474 = vmatprep.subr.mxu0 0.0
      %475 = vmatpush1.msra.mxu0 0.0
      %476 = vmatprep.subr.mxu0 0.0
      %477 = vmatpush1.msra.mxu0 0.0
      %478 = vmatprep.subr.mxu0 0.0
      %479 = vmatpush1.msra.mxu0 0.0
      %480 = vmatprep.subr.mxu0 0.0
      %481 = vmatpush1.msra.mxu0 0.0
      %482 = vmatprep.subr.mxu0 0.0
      %483 = vmatpush1.msra.mxu0 0.0
      %484 = vmatprep.subr.mxu0 0.0
      %485 = vmatpush1.msra.mxu0 0.0
      %486 = vmatprep.subr.mxu0 0.0
      %487 = vmatpush1.msra.mxu0 0.0
      %488 = vmatprep.subr.mxu0 0.0
      %489 = vmatpush1.msra.mxu0 0.0
      %490 = vmatprep.subr.mxu0 0.0
      %491 = vmatpush1.msra.mxu0 0.0
      %492 = vmatprep.subr.mxu0 0.0
      %493 = vmatpush1.msra.mxu0 0.0
      %494 = vmatprep.subr.mxu0 0.0
      %495 = vmatpush1.msra.mxu0 0.0
      %496 = vmatprep.subr.mxu0 0.0
      %497 = vmatpush1.msra.mxu0 0.0
      %498 = vmatprep.subr.mxu0 0.0
      %499 = vmatpush1.msra.mxu0 0.0
      %500 = vmatprep.subr.mxu0 0.0
      %501 = vmatpush1.msra.mxu0 0.0
      %502 = vmatprep.mubr.f32.mxu0 0.0
      %503 = vmatmul.mubr.f32.gmra.mrb[0].mxu0 %v433
      %v504 = vpop.f32.mrb[0].mxu0
      %v505 = vadd.f32 0.0, %v504
      %v506 = vpop.f32.mrb[0].mxu0
      %507 = vdwg.mxu0
      %v508 = vadd.f32 %v356, %v505
      %s509 = scalar_lea.vmem %s1, 32
      %v510 = vld [vmem:[%s509] sm:$0xff]
      %v511 = vld [vmem:[%s509 + $0x8] sm:$0xff]
      %512 = vmatprep.subr.mxu0 0.0
      %513 = vmatpush1.msra.mxu0 %v510
      %514 = vmatprep.subr.mxu0 0.0
      %515 = vmatpush1.msra.mxu0 %v511
      %516 = vmatprep.subr.mxu0 0.0
      %517 = vmatpush1.msra.mxu0 0.0
      %518 = vmatprep.subr.mxu0 0.0
      %519 = vmatpush1.msra.mxu0 0.0
      %520 = vmatprep.subr.mxu0 0.0
      %521 = vmatpush1.msra.mxu0 0.0
      %522 = vmatprep.subr.mxu0 0.0
      %523 = vmatpush1.msra.mxu0 0.0
      %524 = vmatprep.subr.mxu0 0.0
      %525 = vmatpush1.msra.mxu0 0.0
      %526 = vmatprep.subr.mxu0 0.0
      %527 = vmatpush1.msra.mxu0 0.0
      %528 = vmatprep.subr.mxu0 0.0
      %529 = vmatpush1.msra.mxu0 0.0
      %530 = vmatprep.subr.mxu0 0.0
      %531 = vmatpush1.msra.mxu0 0.0
      %532 = vmatprep.subr.mxu0 0.0
      %533 = vmatpush1.msra.mxu0 0.0
      %534 = vmatprep.subr.mxu0 0.0
      %535 = vmatpush1.msra.mxu0 0.0
      %536 = vmatprep.subr.mxu0 0.0
      %537 = vmatpush1.msra.mxu0 0.0
      %538 = vmatprep.subr.mxu0 0.0
      %539 = vmatpush1.msra.mxu0 0.0
      %540 = vmatprep.subr.mxu0 0.0
      %541 = vmatpush1.msra.mxu0 0.0
      %542 = vmatprep.subr.mxu0 0.0
      %543 = vmatpush1.msra.mxu0 0.0
      %544 = vmatprep.subr.mxu0 0.0
      %545 = vmatpush1.msra.mxu0 0.0
      %546 = vmatprep.subr.mxu0 0.0
      %547 = vmatpush1.msra.mxu0 0.0
      %548 = vmatprep.subr.mxu0 0.0
      %549 = vmatpush1.msra.mxu0 0.0
      %550 = vmatprep.subr.mxu0 0.0
      %551 = vmatpush1.msra.mxu0 0.0
      %552 = vmatprep.subr.mxu0 0.0
      %553 = vmatpush1.msra.mxu0 0.0
      %554 = vmatprep.subr.mxu0 0.0
      %555 = vmatpush1.msra.mxu0 0.0
      %556 = vmatprep.subr.mxu0 0.0
      %557 = vmatpush1.msra.mxu0 0.0
      %558 = vmatprep.subr.mxu0 0.0
      %559 = vmatpush1.msra.mxu0 0.0
      %560 = vmatprep.subr.mxu0 0.0
      %561 = vmatpush1.msra.mxu0 0.0
      %562 = vmatprep.subr.mxu0 0.0
      %563 = vmatpush1.msra.mxu0 0.0
      %564 = vmatprep.subr.mxu0 0.0
      %565 = vmatpush1.msra.mxu0 0.0
      %566 = vmatprep.subr.mxu0 0.0
      %567 = vmatpush1.msra.mxu0 0.0
      %568 = vmatprep.subr.mxu0 0.0
      %569 = vmatpush1.msra.mxu0 0.0
      %570 = vmatprep.subr.mxu0 0.0
      %571 = vmatpush1.msra.mxu0 0.0
      %572 = vmatprep.subr.mxu0 0.0
      %573 = vmatpush1.msra.mxu0 0.0
      %574 = vmatprep.subr.mxu0 0.0
      %575 = vmatpush1.msra.mxu0 0.0
      %576 = vmatprep.mubr.f32.mxu0 0.0
      %577 = vmatmul.mubr.f32.gmra.mrb[0].mxu0 %v205
      %v578 = vpop.f32.mrb[0].mxu0
      %v579 = vadd.f32 0.0, %v578
      %v580 = vpop.f32.mrb[0].mxu0
      %581 = vdwg.mxu0
      %s582 = scalar_lea.vmem %s2, 8
      %v583 = vld [vmem:[%s582] sm:$0xf]
      %v585 = vsel %vm278, %v583, 0
      %v588 = vsel %vm282, %v579, 0
      %590 = vmatprep.subr.mxu0 0.0
      %591 = vmatpush1.msra.mxu0 %v588
      %592 = vmatprep.subr.mxu0 0.0
      %593 = vmatpush1.msra.mxu0 0.0
      %594 = vmatprep.subr.mxu0 0.0
      %595 = vmatpush1.msra.mxu0 0.0
      %596 = vmatprep.subr.mxu0 0.0
      %597 = vmatpush1.msra.mxu0 0.0
      %598 = vmatprep.subr.mxu0 0.0
      %599 = vmatpush1.msra.mxu0 0.0
      %600 = vmatprep.subr.mxu0 0.0
      %601 = vmatpush1.msra.mxu0 0.0
      %602 = vmatprep.subr.mxu0 0.0
      %603 = vmatpush1.msra.mxu0 0.0
      %604 = vmatprep.subr.mxu0 0.0
      %605 = vmatpush1.msra.mxu0 0.0
      %606 = vmatprep.subr.mxu0 0.0
      %607 = vmatpush1.msra.mxu0 0.0
      %608 = vmatprep.subr.mxu0 0.0
      %609 = vmatpush1.msra.mxu0 0.0
      %610 = vmatprep.subr.mxu0 0.0
      %611 = vmatpush1.msra.mxu0 0.0
      %612 = vmatprep.subr.mxu0 0.0
      %613 = vmatpush1.msra.mxu0 0.0
      %614 = vmatprep.subr.mxu0 0.0
      %615 = vmatpush1.msra.mxu0 0.0
      %616 = vmatprep.subr.mxu0 0.0
      %617 = vmatpush1.msra.mxu0 0.0
      %618 = vmatprep.subr.mxu0 0.0
      %619 = vmatpush1.msra.mxu0 0.0
      %620 = vmatprep.subr.mxu0 0.0
      %621 = vmatpush1.msra.mxu0 0.0
      %622 = vmatprep.subr.mxu0 0.0
      %623 = vmatpush1.msra.mxu0 0.0
      %624 = vmatprep.subr.mxu0 0.0
      %625 = vmatpush1.msra.mxu0 0.0
      %626 = vmatprep.subr.mxu0 0.0
      %627 = vmatpush1.msra.mxu0 0.0
      %628 = vmatprep.subr.mxu0 0.0
      %629 = vmatpush1.msra.mxu0 0.0
      %630 = vmatprep.subr.mxu0 0.0
      %631 = vmatpush1.msra.mxu0 0.0
      %632 = vmatprep.subr.mxu0 0.0
      %633 = vmatpush1.msra.mxu0 0.0
      %634 = vmatprep.subr.mxu0 0.0
      %635 = vmatpush1.msra.mxu0 0.0
      %636 = vmatprep.subr.mxu0 0.0
      %637 = vmatpush1.msra.mxu0 0.0
      %638 = vmatprep.subr.mxu0 0.0
      %639 = vmatpush1.msra.mxu0 0.0
      %640 = vmatprep.subr.mxu0 0.0
      %641 = vmatpush1.msra.mxu0 0.0
      %642 = vmatprep.subr.mxu0 0.0
      %643 = vmatpush1.msra.mxu0 0.0
      %644 = vmatprep.subr.mxu0 0.0
      %645 = vmatpush1.msra.mxu0 0.0
      %646 = vmatprep.subr.mxu0 0.0
      %647 = vmatpush1.msra.mxu0 0.0
      %648 = vmatprep.subr.mxu0 0.0
      %649 = vmatpush1.msra.mxu0 0.0
      %650 = vmatprep.subr.mxu0 0.0
      %651 = vmatpush1.msra.mxu0 0.0
      %652 = vmatprep.subr.mxu0 0.0
      %653 = vmatpush1.msra.mxu0 0.0
      %654 = vmatprep.mubr.f32.mxu0 0.0
      %655 = vmatmul.mubr.f32.gmra.mrb[0].mxu0 %v585
      %v656 = vpop.f32.mrb[0].mxu0
      %v657 = vadd.f32 0.0, %v656
      %v658 = vpop.f32.mrb[0].mxu0
      %659 = vdwg.mxu0
      %v660 = vadd.f32 %v508, %v657
      %s661 = scalar_lea.vmem %s1, 48
      %v662 = vld [vmem:[%s661] sm:$0xff]
      %v663 = vld [vmem:[%s661 + $0x8] sm:$0xff]
      %664 = vmatprep.subr.mxu0 0.0
      %665 = vmatpush1.msra.mxu0 %v662
      %666 = vmatprep.subr.mxu0 0.0
      %667 = vmatpush1.msra.mxu0 %v663
      %668 = vmatprep.subr.mxu0 0.0
      %669 = vmatpush1.msra.mxu0 0.0
      %670 = vmatprep.subr.mxu0 0.0
      %671 = vmatpush1.msra.mxu0 0.0
      %672 = vmatprep.subr.mxu0 0.0
      %673 = vmatpush1.msra.mxu0 0.0
      %674 = vmatprep.subr.mxu0 0.0
      %675 = vmatpush1.msra.mxu0 0.0
      %676 = vmatprep.subr.mxu0 0.0
      %677 = vmatpush1.msra.mxu0 0.0
      %678 = vmatprep.subr.mxu0 0.0
      %679 = vmatpush1.msra.mxu0 0.0
      %680 = vmatprep.subr.mxu0 0.0
      %681 = vmatpush1.msra.mxu0 0.0
      %682 = vmatprep.subr.mxu0 0.0
      %683 = vmatpush1.msra.mxu0 0.0
      %684 = vmatprep.subr.mxu0 0.0
      %685 = vmatpush1.msra.mxu0 0.0
      %686 = vmatprep.subr.mxu0 0.0
      %687 = vmatpush1.msra.mxu0 0.0
      %688 = vmatprep.subr.mxu0 0.0
      %689 = vmatpush1.msra.mxu0 0.0
      %690 = vmatprep.subr.mxu0 0.0
      %691 = vmatpush1.msra.mxu0 0.0
      %692 = vmatprep.subr.mxu0 0.0
      %693 = vmatpush1.msra.mxu0 0.0
      %694 = vmatprep.subr.mxu0 0.0
      %695 = vmatpush1.msra.mxu0 0.0
      %696 = vmatprep.subr.mxu0 0.0
      %697 = vmatpush1.msra.mxu0 0.0
      %698 = vmatprep.subr.mxu0 0.0
      %699 = vmatpush1.msra.mxu0 0.0
      %700 = vmatprep.subr.mxu0 0.0
      %701 = vmatpush1.msra.mxu0 0.0
      %702 = vmatprep.subr.mxu0 0.0
      %703 = vmatpush1.msra.mxu0 0.0
      %704 = vmatprep.subr.mxu0 0.0
      %705 = vmatpush1.msra.mxu0 0.0
      %706 = vmatprep.subr.mxu0 0.0
      %707 = vmatpush1.msra.mxu0 0.0
      %708 = vmatprep.subr.mxu0 0.0
      %709 = vmatpush1.msra.mxu0 0.0
      %710 = vmatprep.subr.mxu0 0.0
      %711 = vmatpush1.msra.mxu0 0.0
      %712 = vmatprep.subr.mxu0 0.0
      %713 = vmatpush1.msra.mxu0 0.0
      %714 = vmatprep.subr.mxu0 0.0
      %715 = vmatpush1.msra.mxu0 0.0
      %716 = vmatprep.subr.mxu0 0.0
      %717 = vmatpush1.msra.mxu0 0.0
      %718 = vmatprep.subr.mxu0 0.0
      %719 = vmatpush1.msra.mxu0 0.0
      %720 = vmatprep.subr.mxu0 0.0
      %721 = vmatpush1.msra.mxu0 0.0
      %722 = vmatprep.subr.mxu0 0.0
      %723 = vmatpush1.msra.mxu0 0.0
      %724 = vmatprep.subr.mxu0 0.0
      %725 = vmatpush1.msra.mxu0 0.0
      %726 = vmatprep.subr.mxu0 0.0
      %727 = vmatpush1.msra.mxu0 0.0
      %728 = vmatprep.mubr.f32.mxu0 0.0
      %729 = vmatmul.mubr.f32.gmra.mrb[0].mxu0 %v205
      %v730 = vpop.f32.mrb[0].mxu0
      %v731 = vadd.f32 0.0, %v730
      %v732 = vpop.f32.mrb[0].mxu0
      %733 = vdwg.mxu0
      %s734 = scalar_lea.vmem %s2, 12
      %v735 = vld [vmem:[%s734] sm:$0xf]
      %v737 = vsel %vm278, %v735, 0
      %v740 = vsel %vm282, %v731, 0
      %742 = vmatprep.subr.mxu0 0.0
      %743 = vmatpush1.msra.mxu0 %v740
      %744 = vmatprep.subr.mxu0 0.0
      %745 = vmatpush1.msra.mxu0 0.0
      %746 = vmatprep.subr.mxu0 0.0
      %747 = vmatpush1.msra.mxu0 0.0
      %748 = vmatprep.subr.mxu0 0.0
      %749 = vmatpush1.msra.mxu0 0.0
      %750 = vmatprep.subr.mxu0 0.0
      %751 = vmatpush1.msra.mxu0 0.0
      %752 = vmatprep.subr.mxu0 0.0
      %753 = vmatpush1.msra.mxu0 0.0
      %754 = vmatprep.subr.mxu0 0.0
      %755 = vmatpush1.msra.mxu0 0.0
      %756 = vmatprep.subr.mxu0 0.0
      %757 = vmatpush1.msra.mxu0 0.0
      %758 = vmatprep.subr.mxu0 0.0
      %759 = vmatpush1.msra.mxu0 0.0
      %760 = vmatprep.subr.mxu0 0.0
      %761 = vmatpush1.msra.mxu0 0.0
      %762 = vmatprep.subr.mxu0 0.0
      %763 = vmatpush1.msra.mxu0 0.0
      %764 = vmatprep.subr.mxu0 0.0
      %765 = vmatpush1.msra.mxu0 0.0
      %766 = vmatprep.subr.mxu0 0.0
      %767 = vmatpush1.msra.mxu0 0.0
      %768 = vmatprep.subr.mxu0 0.0
      %769 = vmatpush1.msra.mxu0 0.0
      %770 = vmatprep.subr.mxu0 0.0
      %771 = vmatpush1.msra.mxu0 0.0
      %772 = vmatprep.subr.mxu0 0.0
      %773 = vmatpush1.msra.mxu0 0.0
      %774 = vmatprep.subr.mxu0 0.0
      %775 = vmatpush1.msra.mxu0 0.0
      %776 = vmatprep.subr.mxu0 0.0
      %777 = vmatpush1.msra.mxu0 0.0
      %778 = vmatprep.subr.mxu0 0.0
      %779 = vmatpush1.msra.mxu0 0.0
      %780 = vmatprep.subr.mxu0 0.0
      %781 = vmatpush1.msra.mxu0 0.0
      %782 = vmatprep.subr.mxu0 0.0
      %783 = vmatpush1.msra.mxu0 0.0
      %784 = vmatprep.subr.mxu0 0.0
      %785 = vmatpush1.msra.mxu0 0.0
      %786 = vmatprep.subr.mxu0 0.0
      %787 = vmatpush1.msra.mxu0 0.0
      %788 = vmatprep.subr.mxu0 0.0
      %789 = vmatpush1.msra.mxu0 0.0
      %790 = vmatprep.subr.mxu0 0.0
      %791 = vmatpush1.msra.mxu0 0.0
      %792 = vmatprep.subr.mxu0 0.0
      %793 = vmatpush1.msra.mxu0 0.0
      %794 = vmatprep.subr.mxu0 0.0
      %795 = vmatpush1.msra.mxu0 0.0
      %796 = vmatprep.subr.mxu0 0.0
      %797 = vmatpush1.msra.mxu0 0.0
      %798 = vmatprep.subr.mxu0 0.0
      %799 = vmatpush1.msra.mxu0 0.0
      %800 = vmatprep.subr.mxu0 0.0
      %801 = vmatpush1.msra.mxu0 0.0
      %802 = vmatprep.subr.mxu0 0.0
      %803 = vmatpush1.msra.mxu0 0.0
      %804 = vmatprep.subr.mxu0 0.0
      %805 = vmatpush1.msra.mxu0 0.0
      %806 = vmatprep.mubr.f32.mxu0 0.0
      %807 = vmatmul.mubr.f32.gmra.mrb[0].mxu0 %v737
      %v808 = vpop.f32.mrb[0].mxu0
      %v809 = vadd.f32 0.0, %v808
      %v810 = vpop.f32.mrb[0].mxu0
      %811 = vdwg.mxu0
      %v812 = vadd.f32 %v660, %v809
      %s813 = scalar_lea.vmem %s1, 64
      %v814 = vld [vmem:[%s813] sm:$0xff]
      %v815 = vld [vmem:[%s813 + $0x8] sm:$0xff]
      %816 = vmatprep.subr.mxu0 0.0
      %817 = vmatpush1.msra.mxu0 %v814
      %818 = vmatprep.subr.mxu0 0.0
      %819 = vmatpush1.msra.mxu0 %v815
      %820 = vmatprep.subr.mxu0 0.0
      %821 = vmatpush1.msra.mxu0 0.0
      %822 = vmatprep.subr.mxu0 0.0
      %823 = vmatpush1.msra.mxu0 0.0
      %824 = vmatprep.subr.mxu0 0.0
      %825 = vmatpush1.msra.mxu0 0.0
      %826 = vmatprep.subr.mxu0 0.0
      %827 = vmatpush1.msra.mxu0 0.0
      %828 = vmatprep.subr.mxu0 0.0
      %829 = vmatpush1.msra.mxu0 0.0
      %830 = vmatprep.subr.mxu0 0.0
      %831 = vmatpush1.msra.mxu0 0.0
      %832 = vmatprep.subr.mxu0 0.0
      %833 = vmatpush1.msra.mxu0 0.0
      %834 = vmatprep.subr.mxu0 0.0
      %835 = vmatpush1.msra.mxu0 0.0
      %836 = vmatprep.subr.mxu0 0.0
      %837 = vmatpush1.msra.mxu0 0.0
      %838 = vmatprep.subr.mxu0 0.0
      %839 = vmatpush1.msra.mxu0 0.0
      %840 = vmatprep.subr.mxu0 0.0
      %841 = vmatpush1.msra.mxu0 0.0
      %842 = vmatprep.subr.mxu0 0.0
      %843 = vmatpush1.msra.mxu0 0.0
      %844 = vmatprep.subr.mxu0 0.0
      %845 = vmatpush1.msra.mxu0 0.0
      %846 = vmatprep.subr.mxu0 0.0
      %847 = vmatpush1.msra.mxu0 0.0
      %848 = vmatprep.subr.mxu0 0.0
      %849 = vmatpush1.msra.mxu0 0.0
      %850 = vmatprep.subr.mxu0 0.0
      %851 = vmatpush1.msra.mxu0 0.0
      %852 = vmatprep.subr.mxu0 0.0
      %853 = vmatpush1.msra.mxu0 0.0
      %854 = vmatprep.subr.mxu0 0.0
      %855 = vmatpush1.msra.mxu0 0.0
      %856 = vmatprep.subr.mxu0 0.0
      %857 = vmatpush1.msra.mxu0 0.0
      %858 = vmatprep.subr.mxu0 0.0
      %859 = vmatpush1.msra.mxu0 0.0
      %860 = vmatprep.subr.mxu0 0.0
      %861 = vmatpush1.msra.mxu0 0.0
      %862 = vmatprep.subr.mxu0 0.0
      %863 = vmatpush1.msra.mxu0 0.0
      %864 = vmatprep.subr.mxu0 0.0
      %865 = vmatpush1.msra.mxu0 0.0
      %866 = vmatprep.subr.mxu0 0.0
      %867 = vmatpush1.msra.mxu0 0.0
      %868 = vmatprep.subr.mxu0 0.0
      %869 = vmatpush1.msra.mxu0 0.0
      %870 = vmatprep.subr.mxu0 0.0
      %871 = vmatpush1.msra.mxu0 0.0
      %872 = vmatprep.subr.mxu0 0.0
      %873 = vmatpush1.msra.mxu0 0.0
      %874 = vmatprep.subr.mxu0 0.0
      %875 = vmatpush1.msra.mxu0 0.0
      %876 = vmatprep.subr.mxu0 0.0
      %877 = vmatpush1.msra.mxu0 0.0
      %878 = vmatprep.subr.mxu0 0.0
      %879 = vmatpush1.msra.mxu0 0.0
      %880 = vmatprep.mubr.f32.mxu0 0.0
      %881 = vmatmul.mubr.f32.gmra.mrb[0].mxu0 %v205
      %v882 = vpop.f32.mrb[0].mxu0
      %v883 = vadd.f32 0.0, %v882
      %v884 = vpop.f32.mrb[0].mxu0
      %885 = vdwg.mxu0
      %s886 = scalar_lea.vmem %s2, 16
      %v887 = vld [vmem:[%s886] sm:$0xf]
      %v889 = vsel %vm278, %v887, 0
      %v892 = vsel %vm282, %v883, 0
      %894 = vmatprep.subr.mxu0 0.0
      %895 = vmatpush1.msra.mxu0 %v892
      %896 = vmatprep.subr.mxu0 0.0
      %897 = vmatpush1.msra.mxu0 0.0
      %898 = vmatprep.subr.mxu0 0.0
      %899 = vmatpush1.msra.mxu0 0.0
      %900 = vmatprep.subr.mxu0 0.0
      %901 = vmatpush1.msra.mxu0 0.0
      %902 = vmatprep.subr.mxu0 0.0
      %903 = vmatpush1.msra.mxu0 0.0
      %904 = vmatprep.subr.mxu0 0.0
      %905 = vmatpush1.msra.mxu0 0.0
      %906 = vmatprep.subr.mxu0 0.0
      %907 = vmatpush1.msra.mxu0 0.0
      %908 = vmatprep.subr.mxu0 0.0
      %909 = vmatpush1.msra.mxu0 0.0
      %910 = vmatprep.subr.mxu0 0.0
      %911 = vmatpush1.msra.mxu0 0.0
      %912 = vmatprep.subr.mxu0 0.0
      %913 = vmatpush1.msra.mxu0 0.0
      %914 = vmatprep.subr.mxu0 0.0
      %915 = vmatpush1.msra.mxu0 0.0
      %916 = vmatprep.subr.mxu0 0.0
      %917 = vmatpush1.msra.mxu0 0.0
      %918 = vmatprep.subr.mxu0 0.0
      %919 = vmatpush1.msra.mxu0 0.0
      %920 = vmatprep.subr.mxu0 0.0
      %921 = vmatpush1.msra.mxu0 0.0
      %922 = vmatprep.subr.mxu0 0.0
      %923 = vmatpush1.msra.mxu0 0.0
      %924 = vmatprep.subr.mxu0 0.0
      %925 = vmatpush1.msra.mxu0 0.0
      %926 = vmatprep.subr.mxu0 0.0
      %927 = vmatpush1.msra.mxu0 0.0
      %928 = vmatprep.subr.mxu0 0.0
      %929 = vmatpush1.msra.mxu0 0.0
      %930 = vmatprep.subr.mxu0 0.0
      %931 = vmatpush1.msra.mxu0 0.0
      %932 = vmatprep.subr.mxu0 0.0
      %933 = vmatpush1.msra.mxu0 0.0
      %934 = vmatprep.subr.mxu0 0.0
      %935 = vmatpush1.msra.mxu0 0.0
      %936 = vmatprep.subr.mxu0 0.0
      %937 = vmatpush1.msra.mxu0 0.0
      %938 = vmatprep.subr.mxu0 0.0
      %939 = vmatpush1.msra.mxu0 0.0
      %940 = vmatprep.subr.mxu0 0.0
      %941 = vmatpush1.msra.mxu0 0.0
      %942 = vmatprep.subr.mxu0 0.0
      %943 = vmatpush1.msra.mxu0 0.0
      %944 = vmatprep.subr.mxu0 0.0
      %945 = vmatpush1.msra.mxu0 0.0
      %946 = vmatprep.subr.mxu0 0.0
      %947 = vmatpush1.msra.mxu0 0.0
      %948 = vmatprep.subr.mxu0 0.0
      %949 = vmatpush1.msra.mxu0 0.0
      %950 = vmatprep.subr.mxu0 0.0
      %951 = vmatpush1.msra.mxu0 0.0
      %952 = vmatprep.subr.mxu0 0.0
      %953 = vmatpush1.msra.mxu0 0.0
      %954 = vmatprep.subr.mxu0 0.0
      %955 = vmatpush1.msra.mxu0 0.0
      %956 = vmatprep.subr.mxu0 0.0
      %957 = vmatpush1.msra.mxu0 0.0
      %958 = vmatprep.mubr.f32.mxu0 0.0
      %959 = vmatmul.mubr.f32.gmra.mrb[0].mxu0 %v889
      %v960 = vpop.f32.mrb[0].mxu0
      %v961 = vadd.f32 0.0, %v960
      %v962 = vpop.f32.mrb[0].mxu0
      %963 = vdwg.mxu0
      %v964 = vadd.f32 %v812, %v961
      %s965 = scalar_lea.vmem %s1, 80
      %v966 = vld [vmem:[%s965] sm:$0xff]
      %v967 = vld [vmem:[%s965 + $0x8] sm:$0xff]
      %968 = vmatprep.subr.mxu0 0.0
      %969 = vmatpush1.msra.mxu0 %v966
      %970 = vmatprep.subr.mxu0 0.0
      %971 = vmatpush1.msra.mxu0 %v967
      %972 = vmatprep.subr.mxu0 0.0
      %973 = vmatpush1.msra.mxu0 0.0
      %974 = vmatprep.subr.mxu0 0.0
      %975 = vmatpush1.msra.mxu0 0.0
      %976 = vmatprep.subr.mxu0 0.0
      %977 = vmatpush1.msra.mxu0 0.0
      %978 = vmatprep.subr.mxu0 0.0
      %979 = vmatpush1.msra.mxu0 0.0
      %980 = vmatprep.subr.mxu0 0.0
      %981 = vmatpush1.msra.mxu0 0.0
      %982 = vmatprep.subr.mxu0 0.0
      %983 = vmatpush1.msra.mxu0 0.0
      %984 = vmatprep.subr.mxu0 0.0
      %985 = vmatpush1.msra.mxu0 0.0
      %986 = vmatprep.subr.mxu0 0.0
      %987 = vmatpush1.msra.mxu0 0.0
      %988 = vmatprep.subr.mxu0 0.0
      %989 = vmatpush1.msra.mxu0 0.0
      %990 = vmatprep.subr.mxu0 0.0
      %991 = vmatpush1.msra.mxu0 0.0
      %992 = vmatprep.subr.mxu0 0.0
      %993 = vmatpush1.msra.mxu0 0.0
      %994 = vmatprep.subr.mxu0 0.0
      %995 = vmatpush1.msra.mxu0 0.0
      %996 = vmatprep.subr.mxu0 0.0
      %997 = vmatpush1.msra.mxu0 0.0
      %998 = vmatprep.subr.mxu0 0.0
      %999 = vmatpush1.msra.mxu0 0.0
      %1000 = vmatprep.subr.mxu0 0.0
      %1001 = vmatpush1.msra.mxu0 0.0
      %1002 = vmatprep.subr.mxu0 0.0
      %1003 = vmatpush1.msra.mxu0 0.0
      %1004 = vmatprep.subr.mxu0 0.0
      %1005 = vmatpush1.msra.mxu0 0.0
      %1006 = vmatprep.subr.mxu0 0.0
      %1007 = vmatpush1.msra.mxu0 0.0
      %1008 = vmatprep.subr.mxu0 0.0
      %1009 = vmatpush1.msra.mxu0 0.0
      %1010 = vmatprep.subr.mxu0 0.0
      %1011 = vmatpush1.msra.mxu0 0.0
      %1012 = vmatprep.subr.mxu0 0.0
      %1013 = vmatpush1.msra.mxu0 0.0
      %1014 = vmatprep.subr.mxu0 0.0
      %1015 = vmatpush1.msra.mxu0 0.0
      %1016 = vmatprep.subr.mxu0 0.0
      %1017 = vmatpush1.msra.mxu0 0.0
      %1018 = vmatprep.subr.mxu0 0.0
      %1019 = vmatpush1.msra.mxu0 0.0
      %1020 = vmatprep.subr.mxu0 0.0
      %1021 = vmatpush1.msra.mxu0 0.0
      %1022 = vmatprep.subr.mxu0 0.0
      %1023 = vmatpush1.msra.mxu0 0.0
      %1024 = vmatprep.subr.mxu0 0.0
      %1025 = vmatpush1.msra.mxu0 0.0
      %1026 = vmatprep.subr.mxu0 0.0
      %1027 = vmatpush1.msra.mxu0 0.0
      %1028 = vmatprep.subr.mxu0 0.0
      %1029 = vmatpush1.msra.mxu0 0.0
      %1030 = vmatprep.subr.mxu0 0.0
      %1031 = vmatpush1.msra.mxu0 0.0
      %1032 = vmatprep.mubr.f32.mxu0 0.0
      %1033 = vmatmul.mubr.f32.gmra.mrb[0].mxu0 %v205
      %v1034 = vpop.f32.mrb[0].mxu0
      %v1035 = vadd.f32 0.0, %v1034
      %v1036 = vpop.f32.mrb[0].mxu0
      %1037 = vdwg.mxu0
      %s1038 = scalar_lea.vmem %s2, 20
      %v1039 = vld [vmem:[%s1038] sm:$0xf]
      %v1041 = vsel %vm278, %v1039, 0
      %v1044 = vsel %vm282, %v1035, 0
      %1046 = vmatprep.subr.mxu0 0.0
      %1047 = vmatpush1.msra.mxu0 %v1044
      %1048 = vmatprep.subr.mxu0 0.0
      %1049 = vmatpush1.msra.mxu0 0.0
      %1050 = vmatprep.subr.mxu0 0.0
      %1051 = vmatpush1.msra.mxu0 0.0
      %1052 = vmatprep.subr.mxu0 0.0
      %1053 = vmatpush1.msra.mxu0 0.0
      %1054 = vmatprep.subr.mxu0 0.0
      %1055 = vmatpush1.msra.mxu0 0.0
      %1056 = vmatprep.subr.mxu0 0.0
      %1057 = vmatpush1.msra.mxu0 0.0
      %1058 = vmatprep.subr.mxu0 0.0
      %1059 = vmatpush1.msra.mxu0 0.0
      %1060 = vmatprep.subr.mxu0 0.0
      %1061 = vmatpush1.msra.mxu0 0.0
      %1062 = vmatprep.subr.mxu0 0.0
      %1063 = vmatpush1.msra.mxu0 0.0
      %1064 = vmatprep.subr.mxu0 0.0
      %1065 = vmatpush1.msra.mxu0 0.0
      %1066 = vmatprep.subr.mxu0 0.0
      %1067 = vmatpush1.msra.mxu0 0.0
      %1068 = vmatprep.subr.mxu0 0.0
      %1069 = vmatpush1.msra.mxu0 0.0
      %1070 = vmatprep.subr.mxu0 0.0
      %1071 = vmatpush1.msra.mxu0 0.0
      %1072 = vmatprep.subr.mxu0 0.0
      %1073 = vmatpush1.msra.mxu0 0.0
      %1074 = vmatprep.subr.mxu0 0.0
      %1075 = vmatpush1.msra.mxu0 0.0
      %1076 = vmatprep.subr.mxu0 0.0
      %1077 = vmatpush1.msra.mxu0 0.0
      %1078 = vmatprep.subr.mxu0 0.0
      %1079 = vmatpush1.msra.mxu0 0.0
      %1080 = vmatprep.subr.mxu0 0.0
      %1081 = vmatpush1.msra.mxu0 0.0
      %1082 = vmatprep.subr.mxu0 0.0
      %1083 = vmatpush1.msra.mxu0 0.0
      %1084 = vmatprep.subr.mxu0 0.0
      %1085 = vmatpush1.msra.mxu0 0.0
      %1086 = vmatprep.subr.mxu0 0.0
      %1087 = vmatpush1.msra.mxu0 0.0
      %1088 = vmatprep.subr.mxu0 0.0
      %1089 = vmatpush1.msra.mxu0 0.0
      %1090 = vmatprep.subr.mxu0 0.0
      %1091 = vmatpush1.msra.mxu0 0.0
      %1092 = vmatprep.subr.mxu0 0.0
      %1093 = vmatpush1.msra.mxu0 0.0
      %1094 = vmatprep.subr.mxu0 0.0
      %1095 = vmatpush1.msra.mxu0 0.0
      %1096 = vmatprep.subr.mxu0 0.0
      %1097 = vmatpush1.msra.mxu0 0.0
      %1098 = vmatprep.subr.mxu0 0.0
      %1099 = vmatpush1.msra.mxu0 0.0
      %1100 = vmatprep.subr.mxu0 0.0
      %1101 = vmatpush1.msra.mxu0 0.0
      %1102 = vmatprep.subr.mxu0 0.0
      %1103 = vmatpush1.msra.mxu0 0.0
      %1104 = vmatprep.subr.mxu0 0.0
      %1105 = vmatpush1.msra.mxu0 0.0
      %1106 = vmatprep.subr.mxu0 0.0
      %1107 = vmatpush1.msra.mxu0 0.0
      %1108 = vmatprep.subr.mxu0 0.0
      %1109 = vmatpush1.msra.mxu0 0.0
      %1110 = vmatprep.mubr.f32.mxu0 0.0
      %1111 = vmatmul.mubr.f32.gmra.mrb[0].mxu0 %v1041
      %v1112 = vpop.f32.mrb[0].mxu0
      %v1113 = vadd.f32 0.0, %v1112
      %v1114 = vpop.f32.mrb[0].mxu0
      %1115 = vdwg.mxu0
      %v1116 = vadd.f32 %v964, %v1113
      %s1117 = scalar_lea.vmem %s1, 96
      %v1118 = vld [vmem:[%s1117] sm:$0xff]
      %v1119 = vld [vmem:[%s1117 + $0x8] sm:$0xff]
      %1120 = vmatprep.subr.mxu0 0.0
      %1121 = vmatpush1.msra.mxu0 %v1118
      %1122 = vmatprep.subr.mxu0 0.0
      %1123 = vmatpush1.msra.mxu0 %v1119
      %1124 = vmatprep.subr.mxu0 0.0
      %1125 = vmatpush1.msra.mxu0 0.0
      %1126 = vmatprep.subr.mxu0 0.0
      %1127 = vmatpush1.msra.mxu0 0.0
      %1128 = vmatprep.subr.mxu0 0.0
      %1129 = vmatpush1.msra.mxu0 0.0
      %1130 = vmatprep.subr.mxu0 0.0
      %1131 = vmatpush1.msra.mxu0 0.0
      %1132 = vmatprep.subr.mxu0 0.0
      %1133 = vmatpush1.msra.mxu0 0.0
      %1134 = vmatprep.subr.mxu0 0.0
      %1135 = vmatpush1.msra.mxu0 0.0
      %1136 = vmatprep.subr.mxu0 0.0
      %1137 = vmatpush1.msra.mxu0 0.0
      %1138 = vmatprep.subr.mxu0 0.0
      %1139 = vmatpush1.msra.mxu0 0.0
      %1140 = vmatprep.subr.mxu0 0.0
      %1141 = vmatpush1.msra.mxu0 0.0
      %1142 = vmatprep.subr.mxu0 0.0
      %1143 = vmatpush1.msra.mxu0 0.0
      %1144 = vmatprep.subr.mxu0 0.0
      %1145 = vmatpush1.msra.mxu0 0.0
      %1146 = vmatprep.subr.mxu0 0.0
      %1147 = vmatpush1.msra.mxu0 0.0
      %1148 = vmatprep.subr.mxu0 0.0
      %1149 = vmatpush1.msra.mxu0 0.0
      %1150 = vmatprep.subr.mxu0 0.0
      %1151 = vmatpush1.msra.mxu0 0.0
      %1152 = vmatprep.subr.mxu0 0.0
      %1153 = vmatpush1.msra.mxu0 0.0
      %1154 = vmatprep.subr.mxu0 0.0
      %1155 = vmatpush1.msra.mxu0 0.0
      %1156 = vmatprep.subr.mxu0 0.0
      %1157 = vmatpush1.msra.mxu0 0.0
      %1158 = vmatprep.subr.mxu0 0.0
      %1159 = vmatpush1.msra.mxu0 0.0
      %1160 = vmatprep.subr.mxu0 0.0
      %1161 = vmatpush1.msra.mxu0 0.0
      %1162 = vmatprep.subr.mxu0 0.0
      %1163 = vmatpush1.msra.mxu0 0.0
      %1164 = vmatprep.subr.mxu0 0.0
      %1165 = vmatpush1.msra.mxu0 0.0
      %1166 = vmatprep.subr.mxu0 0.0
      %1167 = vmatpush1.msra.mxu0 0.0
      %1168 = vmatprep.subr.mxu0 0.0
      %1169 = vmatpush1.msra.mxu0 0.0
      %1170 = vmatprep.subr.mxu0 0.0
      %1171 = vmatpush1.msra.mxu0 0.0
      %1172 = vmatprep.subr.mxu0 0.0
      %1173 = vmatpush1.msra.mxu0 0.0
      %1174 = vmatprep.subr.mxu0 0.0
      %1175 = vmatpush1.msra.mxu0 0.0
      %1176 = vmatprep.subr.mxu0 0.0
      %1177 = vmatpush1.msra.mxu0 0.0
      %1178 = vmatprep.subr.mxu0 0.0
      %1179 = vmatpush1.msra.mxu0 0.0
      %1180 = vmatprep.subr.mxu0 0.0
      %1181 = vmatpush1.msra.mxu0 0.0
      %1182 = vmatprep.subr.mxu0 0.0
      %1183 = vmatpush1.msra.mxu0 0.0
      %1184 = vmatprep.mubr.f32.mxu0 0.0
      %1185 = vmatmul.mubr.f32.gmra.mrb[0].mxu0 %v205
      %v1186 = vpop.f32.mrb[0].mxu0
      %v1187 = vadd.f32 0.0, %v1186
      %v1188 = vpop.f32.mrb[0].mxu0
      %1189 = vdwg.mxu0
      %s1190 = scalar_lea.vmem %s2, 24
      %v1191 = vld [vmem:[%s1190] sm:$0xf]
      %v1193 = vsel %vm278, %v1191, 0
      %v1196 = vsel %vm282, %v1187, 0
      %1198 = vmatprep.subr.mxu0 0.0
      %1199 = vmatpush1.msra.mxu0 %v1196
      %1200 = vmatprep.subr.mxu0 0.0
      %1201 = vmatpush1.msra.mxu0 0.0
      %1202 = vmatprep.subr.mxu0 0.0
      %1203 = vmatpush1.msra.mxu0 0.0
      %1204 = vmatprep.subr.mxu0 0.0
      %1205 = vmatpush1.msra.mxu0 0.0
      %1206 = vmatprep.subr.mxu0 0.0
      %1207 = vmatpush1.msra.mxu0 0.0
      %1208 = vmatprep.subr.mxu0 0.0
      %1209 = vmatpush1.msra.mxu0 0.0
      %1210 = vmatprep.subr.mxu0 0.0
      %1211 = vmatpush1.msra.mxu0 0.0
      %1212 = vmatprep.subr.mxu0 0.0
      %1213 = vmatpush1.msra.mxu0 0.0
      %1214 = vmatprep.subr.mxu0 0.0
      %1215 = vmatpush1.msra.mxu0 0.0
      %1216 = vmatprep.subr.mxu0 0.0
      %1217 = vmatpush1.msra.mxu0 0.0
      %1218 = vmatprep.subr.mxu0 0.0
      %1219 = vmatpush1.msra.mxu0 0.0
      %1220 = vmatprep.subr.mxu0 0.0
      %1221 = vmatpush1.msra.mxu0 0.0
      %1222 = vmatprep.subr.mxu0 0.0
      %1223 = vmatpush1.msra.mxu0 0.0
      %1224 = vmatprep.subr.mxu0 0.0
      %1225 = vmatpush1.msra.mxu0 0.0
      %1226 = vmatprep.subr.mxu0 0.0
      %1227 = vmatpush1.msra.mxu0 0.0
      %1228 = vmatprep.subr.mxu0 0.0
      %1229 = vmatpush1.msra.mxu0 0.0
      %1230 = vmatprep.subr.mxu0 0.0
      %1231 = vmatpush1.msra.mxu0 0.0
      %1232 = vmatprep.subr.mxu0 0.0
      %1233 = vmatpush1.msra.mxu0 0.0
      %1234 = vmatprep.subr.mxu0 0.0
      %1235 = vmatpush1.msra.mxu0 0.0
      %1236 = vmatprep.subr.mxu0 0.0
      %1237 = vmatpush1.msra.mxu0 0.0
      %1238 = vmatprep.subr.mxu0 0.0
      %1239 = vmatpush1.msra.mxu0 0.0
      %1240 = vmatprep.subr.mxu0 0.0
      %1241 = vmatpush1.msra.mxu0 0.0
      %1242 = vmatprep.subr.mxu0 0.0
      %1243 = vmatpush1.msra.mxu0 0.0
      %1244 = vmatprep.subr.mxu0 0.0
      %1245 = vmatpush1.msra.mxu0 0.0
      %1246 = vmatprep.subr.mxu0 0.0
      %1247 = vmatpush1.msra.mxu0 0.0
      %1248 = vmatprep.subr.mxu0 0.0
      %1249 = vmatpush1.msra.mxu0 0.0
      %1250 = vmatprep.subr.mxu0 0.0
      %1251 = vmatpush1.msra.mxu0 0.0
      %1252 = vmatprep.subr.mxu0 0.0
      %1253 = vmatpush1.msra.mxu0 0.0
      %1254 = vmatprep.subr.mxu0 0.0
      %1255 = vmatpush1.msra.mxu0 0.0
      %1256 = vmatprep.subr.mxu0 0.0
      %1257 = vmatpush1.msra.mxu0 0.0
      %1258 = vmatprep.subr.mxu0 0.0
      %1259 = vmatpush1.msra.mxu0 0.0
      %1260 = vmatprep.subr.mxu0 0.0
      %1261 = vmatpush1.msra.mxu0 0.0
      %1262 = vmatprep.mubr.f32.mxu0 0.0
      %1263 = vmatmul.mubr.f32.gmra.mrb[0].mxu0 %v1193
      %v1264 = vpop.f32.mrb[0].mxu0
      %v1265 = vadd.f32 0.0, %v1264
      %v1266 = vpop.f32.mrb[0].mxu0
      %1267 = vdwg.mxu0
      %v1268 = vadd.f32 %v1116, %v1265
      %s1269 = scalar_lea.vmem %s1, 112
      %v1270 = vld [vmem:[%s1269] sm:$0xff]
      %v1271 = vld [vmem:[%s1269 + $0x8] sm:$0xff]
      %1272 = vmatprep.subr.mxu0 0.0
      %1273 = vmatpush1.msra.mxu0 %v1270
      %1274 = vmatprep.subr.mxu0 0.0
      %1275 = vmatpush1.msra.mxu0 %v1271
      %1276 = vmatprep.subr.mxu0 0.0
      %1277 = vmatpush1.msra.mxu0 0.0
      %1278 = vmatprep.subr.mxu0 0.0
      %1279 = vmatpush1.msra.mxu0 0.0
      %1280 = vmatprep.subr.mxu0 0.0
      %1281 = vmatpush1.msra.mxu0 0.0
      %1282 = vmatprep.subr.mxu0 0.0
      %1283 = vmatpush1.msra.mxu0 0.0
      %1284 = vmatprep.subr.mxu0 0.0
      %1285 = vmatpush1.msra.mxu0 0.0
      %1286 = vmatprep.subr.mxu0 0.0
      %1287 = vmatpush1.msra.mxu0 0.0
      %1288 = vmatprep.subr.mxu0 0.0
      %1289 = vmatpush1.msra.mxu0 0.0
      %1290 = vmatprep.subr.mxu0 0.0
      %1291 = vmatpush1.msra.mxu0 0.0
      %1292 = vmatprep.subr.mxu0 0.0
      %1293 = vmatpush1.msra.mxu0 0.0
      %1294 = vmatprep.subr.mxu0 0.0
      %1295 = vmatpush1.msra.mxu0 0.0
      %1296 = vmatprep.subr.mxu0 0.0
      %1297 = vmatpush1.msra.mxu0 0.0
      %1298 = vmatprep.subr.mxu0 0.0
      %1299 = vmatpush1.msra.mxu0 0.0
      %1300 = vmatprep.subr.mxu0 0.0
      %1301 = vmatpush1.msra.mxu0 0.0
      %1302 = vmatprep.subr.mxu0 0.0
      %1303 = vmatpush1.msra.mxu0 0.0
      %1304 = vmatprep.subr.mxu0 0.0
      %1305 = vmatpush1.msra.mxu0 0.0
      %1306 = vmatprep.subr.mxu0 0.0
      %1307 = vmatpush1.msra.mxu0 0.0
      %1308 = vmatprep.subr.mxu0 0.0
      %1309 = vmatpush1.msra.mxu0 0.0
      %1310 = vmatprep.subr.mxu0 0.0
      %1311 = vmatpush1.msra.mxu0 0.0
      %1312 = vmatprep.subr.mxu0 0.0
      %1313 = vmatpush1.msra.mxu0 0.0
      %1314 = vmatprep.subr.mxu0 0.0
      %1315 = vmatpush1.msra.mxu0 0.0
      %1316 = vmatprep.subr.mxu0 0.0
      %1317 = vmatpush1.msra.mxu0 0.0
      %1318 = vmatprep.subr.mxu0 0.0
      %1319 = vmatpush1.msra.mxu0 0.0
      %1320 = vmatprep.subr.mxu0 0.0
      %1321 = vmatpush1.msra.mxu0 0.0
      %1322 = vmatprep.subr.mxu0 0.0
      %1323 = vmatpush1.msra.mxu0 0.0
      %1324 = vmatprep.subr.mxu0 0.0
      %1325 = vmatpush1.msra.mxu0 0.0
      %1326 = vmatprep.subr.mxu0 0.0
      %1327 = vmatpush1.msra.mxu0 0.0
      %1328 = vmatprep.subr.mxu0 0.0
      %1329 = vmatpush1.msra.mxu0 0.0
      %1330 = vmatprep.subr.mxu0 0.0
      %1331 = vmatpush1.msra.mxu0 0.0
      %1332 = vmatprep.subr.mxu0 0.0
      %1333 = vmatpush1.msra.mxu0 0.0
      %1334 = vmatprep.subr.mxu0 0.0
      %1335 = vmatpush1.msra.mxu0 0.0
      %1336 = vmatprep.mubr.f32.mxu0 0.0
      %1337 = vmatmul.mubr.f32.gmra.mrb[0].mxu0 %v205
      %v1338 = vpop.f32.mrb[0].mxu0
      %v1339 = vadd.f32 0.0, %v1338
      %v1340 = vpop.f32.mrb[0].mxu0
      %1341 = vdwg.mxu0
      %s1342 = scalar_lea.vmem %s2, 28
      %v1343 = vld [vmem:[%s1342] sm:$0xf]
      %v1345 = vsel %vm278, %v1343, 0
      %v1348 = vsel %vm282, %v1339, 0
      %1350 = vmatprep.subr.mxu0 0.0
      %1351 = vmatpush1.msra.mxu0 %v1348
      %1352 = vmatprep.subr.mxu0 0.0
      %1353 = vmatpush1.msra.mxu0 0.0
      %1354 = vmatprep.subr.mxu0 0.0
      %1355 = vmatpush1.msra.mxu0 0.0
      %1356 = vmatprep.subr.mxu0 0.0
      %1357 = vmatpush1.msra.mxu0 0.0
      %1358 = vmatprep.subr.mxu0 0.0
      %1359 = vmatpush1.msra.mxu0 0.0
      %1360 = vmatprep.subr.mxu0 0.0
      %1361 = vmatpush1.msra.mxu0 0.0
      %1362 = vmatprep.subr.mxu0 0.0
      %1363 = vmatpush1.msra.mxu0 0.0
      %1364 = vmatprep.subr.mxu0 0.0
      %1365 = vmatpush1.msra.mxu0 0.0
      %1366 = vmatprep.subr.mxu0 0.0
      %1367 = vmatpush1.msra.mxu0 0.0
      %1368 = vmatprep.subr.mxu0 0.0
      %1369 = vmatpush1.msra.mxu0 0.0
      %1370 = vmatprep.subr.mxu0 0.0
      %1371 = vmatpush1.msra.mxu0 0.0
      %1372 = vmatprep.subr.mxu0 0.0
      %1373 = vmatpush1.msra.mxu0 0.0
      %1374 = vmatprep.subr.mxu0 0.0
      %1375 = vmatpush1.msra.mxu0 0.0
      %1376 = vmatprep.subr.mxu0 0.0
      %1377 = vmatpush1.msra.mxu0 0.0
      %1378 = vmatprep.subr.mxu0 0.0
      %1379 = vmatpush1.msra.mxu0 0.0
      %1380 = vmatprep.subr.mxu0 0.0
      %1381 = vmatpush1.msra.mxu0 0.0
      %1382 = vmatprep.subr.mxu0 0.0
      %1383 = vmatpush1.msra.mxu0 0.0
      %1384 = vmatprep.subr.mxu0 0.0
      %1385 = vmatpush1.msra.mxu0 0.0
      %1386 = vmatprep.subr.mxu0 0.0
      %1387 = vmatpush1.msra.mxu0 0.0
      %1388 = vmatprep.subr.mxu0 0.0
      %1389 = vmatpush1.msra.mxu0 0.0
      %1390 = vmatprep.subr.mxu0 0.0
      %1391 = vmatpush1.msra.mxu0 0.0
      %1392 = vmatprep.subr.mxu0 0.0
      %1393 = vmatpush1.msra.mxu0 0.0
      %1394 = vmatprep.subr.mxu0 0.0
      %1395 = vmatpush1.msra.mxu0 0.0
      %1396 = vmatprep.subr.mxu0 0.0
      %1397 = vmatpush1.msra.mxu0 0.0
      %1398 = vmatprep.subr.mxu0 0.0
      %1399 = vmatpush1.msra.mxu0 0.0
      %1400 = vmatprep.subr.mxu0 0.0
      %1401 = vmatpush1.msra.mxu0 0.0
      %1402 = vmatprep.subr.mxu0 0.0
      %1403 = vmatpush1.msra.mxu0 0.0
      %1404 = vmatprep.subr.mxu0 0.0
      %1405 = vmatpush1.msra.mxu0 0.0
      %1406 = vmatprep.subr.mxu0 0.0
      %1407 = vmatpush1.msra.mxu0 0.0
      %1408 = vmatprep.subr.mxu0 0.0
      %1409 = vmatpush1.msra.mxu0 0.0
      %1410 = vmatprep.subr.mxu0 0.0
      %1411 = vmatpush1.msra.mxu0 0.0
      %1412 = vmatprep.subr.mxu0 0.0
      %1413 = vmatpush1.msra.mxu0 0.0
      %1414 = vmatprep.mubr.f32.mxu0 0.0
      %1415 = vmatmul.mubr.f32.gmra.mrb[0].mxu0 %v1345
      %v1416 = vpop.f32.mrb[0].mxu0
      %v1417 = vadd.f32 0.0, %v1416
      %v1418 = vpop.f32.mrb[0].mxu0
      %1419 = vdwg.mxu0
      %v1420 = vadd.f32 %v1268, %v1417
      %s1421 = scalar_lea.vmem %s1, 128
      %v1422 = vld [vmem:[%s1421] sm:$0xff]
      %v1423 = vld [vmem:[%s1421 + $0x8] sm:$0xff]
      %1424 = vmatprep.subr.mxu0 0.0
      %1425 = vmatpush1.msra.mxu0 %v1422
      %1426 = vmatprep.subr.mxu0 0.0
      %1427 = vmatpush1.msra.mxu0 %v1423
      %1428 = vmatprep.subr.mxu0 0.0
      %1429 = vmatpush1.msra.mxu0 0.0
      %1430 = vmatprep.subr.mxu0 0.0
      %1431 = vmatpush1.msra.mxu0 0.0
      %1432 = vmatprep.subr.mxu0 0.0
      %1433 = vmatpush1.msra.mxu0 0.0
      %1434 = vmatprep.subr.mxu0 0.0
      %1435 = vmatpush1.msra.mxu0 0.0
      %1436 = vmatprep.subr.mxu0 0.0
      %1437 = vmatpush1.msra.mxu0 0.0
      %1438 = vmatprep.subr.mxu0 0.0
      %1439 = vmatpush1.msra.mxu0 0.0
      %1440 = vmatprep.subr.mxu0 0.0
      %1441 = vmatpush1.msra.mxu0 0.0
      %1442 = vmatprep.subr.mxu0 0.0
      %1443 = vmatpush1.msra.mxu0 0.0
      %1444 = vmatprep.subr.mxu0 0.0
      %1445 = vmatpush1.msra.mxu0 0.0
      %1446 = vmatprep.subr.mxu0 0.0
      %1447 = vmatpush1.msra.mxu0 0.0
      %1448 = vmatprep.subr.mxu0 0.0
      %1449 = vmatpush1.msra.mxu0 0.0
      %1450 = vmatprep.subr.mxu0 0.0
      %1451 = vmatpush1.msra.mxu0 0.0
      %1452 = vmatprep.subr.mxu0 0.0
      %1453 = vmatpush1.msra.mxu0 0.0
      %1454 = vmatprep.subr.mxu0 0.0
      %1455 = vmatpush1.msra.mxu0 0.0
      %1456 = vmatprep.subr.mxu0 0.0
      %1457 = vmatpush1.msra.mxu0 0.0
      %1458 = vmatprep.subr.mxu0 0.0
      %1459 = vmatpush1.msra.mxu0 0.0
      %1460 = vmatprep.subr.mxu0 0.0
      %1461 = vmatpush1.msra.mxu0 0.0
      %1462 = vmatprep.subr.mxu0 0.0
      %1463 = vmatpush1.msra.mxu0 0.0
      %1464 = vmatprep.subr.mxu0 0.0
      %1465 = vmatpush1.msra.mxu0 0.0
      %1466 = vmatprep.subr.mxu0 0.0
      %1467 = vmatpush1.msra.mxu0 0.0
      %1468 = vmatprep.subr.mxu0 0.0
      %1469 = vmatpush1.msra.mxu0 0.0
      %1470 = vmatprep.subr.mxu0 0.0
      %1471 = vmatpush1.msra.mxu0 0.0
      %1472 = vmatprep.subr.mxu0 0.0
      %1473 = vmatpush1.msra.mxu0 0.0
      %1474 = vmatprep.subr.mxu0 0.0
      %1475 = vmatpush1.msra.mxu0 0.0
      %1476 = vmatprep.subr.mxu0 0.0
      %1477 = vmatpush1.msra.mxu0 0.0
      %1478 = vmatprep.subr.mxu0 0.0
      %1479 = vmatpush1.msra.mxu0 0.0
      %1480 = vmatprep.subr.mxu0 0.0
      %1481 = vmatpush1.msra.mxu0 0.0
      %1482 = vmatprep.subr.mxu0 0.0
      %1483 = vmatpush1.msra.mxu0 0.0
      %1484 = vmatprep.subr.mxu0 0.0
      %1485 = vmatpush1.msra.mxu0 0.0
      %1486 = vmatprep.subr.mxu0 0.0
      %1487 = vmatpush1.msra.mxu0 0.0
      %1488 = vmatprep.mubr.f32.mxu0 0.0
      %1489 = vmatmul.mubr.f32.gmra.mrb[0].mxu0 %v205
      %v1490 = vpop.f32.mrb[0].mxu0
      %v1491 = vadd.f32 0.0, %v1490
      %v1492 = vpop.f32.mrb[0].mxu0
      %1493 = vdwg.mxu0
      %s1494 = scalar_lea.vmem %s2, 32
      %v1495 = vld [vmem:[%s1494] sm:$0xf]
      %v1497 = vsel %vm278, %v1495, 0
      %v1500 = vsel %vm282, %v1491, 0
      %1502 = vmatprep.subr.mxu0 0.0
      %1503 = vmatpush1.msra.mxu0 %v1500
      %1504 = vmatprep.subr.mxu0 0.0
      %1505 = vmatpush1.msra.mxu0 0.0
      %1506 = vmatprep.subr.mxu0 0.0
      %1507 = vmatpush1.msra.mxu0 0.0
      %1508 = vmatprep.subr.mxu0 0.0
      %1509 = vmatpush1.msra.mxu0 0.0
      %1510 = vmatprep.subr.mxu0 0.0
      %1511 = vmatpush1.msra.mxu0 0.0
      %1512 = vmatprep.subr.mxu0 0.0
      %1513 = vmatpush1.msra.mxu0 0.0
      %1514 = vmatprep.subr.mxu0 0.0
      %1515 = vmatpush1.msra.mxu0 0.0
      %1516 = vmatprep.subr.mxu0 0.0
      %1517 = vmatpush1.msra.mxu0 0.0
      %1518 = vmatprep.subr.mxu0 0.0
      %1519 = vmatpush1.msra.mxu0 0.0
      %1520 = vmatprep.subr.mxu0 0.0
      %1521 = vmatpush1.msra.mxu0 0.0
      %1522 = vmatprep.subr.mxu0 0.0
      %1523 = vmatpush1.msra.mxu0 0.0
      %1524 = vmatprep.subr.mxu0 0.0
      %1525 = vmatpush1.msra.mxu0 0.0
      %1526 = vmatprep.subr.mxu0 0.0
      %1527 = vmatpush1.msra.mxu0 0.0
      %1528 = vmatprep.subr.mxu0 0.0
      %1529 = vmatpush1.msra.mxu0 0.0
      %1530 = vmatprep.subr.mxu0 0.0
      %1531 = vmatpush1.msra.mxu0 0.0
      %1532 = vmatprep.subr.mxu0 0.0
      %1533 = vmatpush1.msra.mxu0 0.0
      %1534 = vmatprep.subr.mxu0 0.0
      %1535 = vmatpush1.msra.mxu0 0.0
      %1536 = vmatprep.subr.mxu0 0.0
      %1537 = vmatpush1.msra.mxu0 0.0
      %1538 = vmatprep.subr.mxu0 0.0
      %1539 = vmatpush1.msra.mxu0 0.0
      %1540 = vmatprep.subr.mxu0 0.0
      %1541 = vmatpush1.msra.mxu0 0.0
      %1542 = vmatprep.subr.mxu0 0.0
      %1543 = vmatpush1.msra.mxu0 0.0
      %1544 = vmatprep.subr.mxu0 0.0
      %1545 = vmatpush1.msra.mxu0 0.0
      %1546 = vmatprep.subr.mxu0 0.0
      %1547 = vmatpush1.msra.mxu0 0.0
      %1548 = vmatprep.subr.mxu0 0.0
      %1549 = vmatpush1.msra.mxu0 0.0
      %1550 = vmatprep.subr.mxu0 0.0
      %1551 = vmatpush1.msra.mxu0 0.0
      %1552 = vmatprep.subr.mxu0 0.0
      %1553 = vmatpush1.msra.mxu0 0.0
      %1554 = vmatprep.subr.mxu0 0.0
      %1555 = vmatpush1.msra.mxu0 0.0
      %1556 = vmatprep.subr.mxu0 0.0
      %1557 = vmatpush1.msra.mxu0 0.0
      %1558 = vmatprep.subr.mxu0 0.0
      %1559 = vmatpush1.msra.mxu0 0.0
      %1560 = vmatprep.subr.mxu0 0.0
      %1561 = vmatpush1.msra.mxu0 0.0
      %1562 = vmatprep.subr.mxu0 0.0
      %1563 = vmatpush1.msra.mxu0 0.0
      %1564 = vmatprep.subr.mxu0 0.0
      %1565 = vmatpush1.msra.mxu0 0.0
      %1566 = vmatprep.mubr.f32.mxu0 0.0
      %1567 = vmatmul.mubr.f32.gmra.mrb[0].mxu0 %v1497
      %v1568 = vpop.f32.mrb[0].mxu0
      %v1569 = vadd.f32 0.0, %v1568
      %v1570 = vpop.f32.mrb[0].mxu0
      %1571 = vdwg.mxu0
      %v1572 = vadd.f32 %v1420, %v1569
      %v1573 = vmax.f32 %v1572, 0.0
      %s1574 = scalar_lea.vmem %s3, 4
      %v1575 = vld [vmem:[%s1574] sm:$0xf]
      %1577 = vset.pattern.permute.xlu0 0
      %1578 = vperm.xlu0 %1577, %v1575
      %v1579 = vpop.permute.xlu0 %1578
      %v1581 = vadd.f32 %v1579, 0.0
      %v1583 = vsel %vm203, %v1573, 0
      %1585 = vmatprep.subr.mxu0 0.0
      %1586 = vmatpush1.msra.mxu0 %v201
      %1587 = vmatprep.subr.mxu0 0.0
      %1588 = vmatpush1.msra.mxu0 %v202
      %1589 = vmatprep.subr.mxu0 0.0
      %1590 = vmatpush1.msra.mxu0 0.0
      %1591 = vmatprep.subr.mxu0 0.0
      %1592 = vmatpush1.msra.mxu0 0.0
      %1593 = vmatprep.subr.mxu0 0.0
      %1594 = vmatpush1.msra.mxu0 0.0
      %1595 = vmatprep.subr.mxu0 0.0
      %1596 = vmatpush1.msra.mxu0 0.0
      %1597 = vmatprep.subr.mxu0 0.0
      %1598 = vmatpush1.msra.mxu0 0.0
      %1599 = vmatprep.subr.mxu0 0.0
      %1600 = vmatpush1.msra.mxu0 0.0
      %1601 = vmatprep.subr.mxu0 0.0
      %1602 = vmatpush1.msra.mxu0 0.0
      %1603 = vmatprep.subr.mxu0 0.0
      %1604 = vmatpush1.msra.mxu0 0.0
      %1605 = vmatprep.subr.mxu0 0.0
      %1606 = vmatpush1.msra.mxu0 0.0
      %1607 = vmatprep.subr.mxu0 0.0
      %1608 = vmatpush1.msra.mxu0 0.0
      %1609 = vmatprep.subr.mxu0 0.0
      %1610 = vmatpush1.msra.mxu0 0.0
      %1611 = vmatprep.subr.mxu0 0.0
      %1612 = vmatpush1.msra.mxu0 0.0
      %1613 = vmatprep.subr.mxu0 0.0
      %1614 = vmatpush1.msra.mxu0 0.0
      %1615 = vmatprep.subr.mxu0 0.0
      %1616 = vmatpush1.msra.mxu0 0.0
      %1617 = vmatprep.subr.mxu0 0.0
      %1618 = vmatpush1.msra.mxu0 0.0
      %1619 = vmatprep.subr.mxu0 0.0
      %1620 = vmatpush1.msra.mxu0 0.0
      %1621 = vmatprep.subr.mxu0 0.0
      %1622 = vmatpush1.msra.mxu0 0.0
      %1623 = vmatprep.subr.mxu0 0.0
      %1624 = vmatpush1.msra.mxu0 0.0
      %1625 = vmatprep.subr.mxu0 0.0
      %1626 = vmatpush1.msra.mxu0 0.0
      %1627 = vmatprep.subr.mxu0 0.0
      %1628 = vmatpush1.msra.mxu0 0.0
      %1629 = vmatprep.subr.mxu0 0.0
      %1630 = vmatpush1.msra.mxu0 0.0
      %1631 = vmatprep.subr.mxu0 0.0
      %1632 = vmatpush1.msra.mxu0 0.0
      %1633 = vmatprep.subr.mxu0 0.0
      %1634 = vmatpush1.msra.mxu0 0.0
      %1635 = vmatprep.subr.mxu0 0.0
      %1636 = vmatpush1.msra.mxu0 0.0
      %1637 = vmatprep.subr.mxu0 0.0
      %1638 = vmatpush1.msra.mxu0 0.0
      %1639 = vmatprep.subr.mxu0 0.0
      %1640 = vmatpush1.msra.mxu0 0.0
      %1641 = vmatprep.subr.mxu0 0.0
      %1642 = vmatpush1.msra.mxu0 0.0
      %1643 = vmatprep.subr.mxu0 0.0
      %1644 = vmatpush1.msra.mxu0 0.0
      %1645 = vmatprep.subr.mxu0 0.0
      %1646 = vmatpush1.msra.mxu0 0.0
      %1647 = vmatprep.subr.mxu0 0.0
      %1648 = vmatpush1.msra.mxu0 0.0
      %1649 = vmatprep.mubr.f32.mxu0 0.0
      %1650 = vmatmul.mubr.f32.gmra.mrb[0].mxu0 %v1583
      %v1651 = vpop.f32.mrb[0].mxu0
      %v1652 = vadd.f32 0.0, %v1651
      %v1653 = vpop.f32.mrb[0].mxu0
      %1654 = vdwg.mxu0
      %s1655 = scalar_lea.vmem %s2, 36
      %v1656 = vld [vmem:[%s1655] sm:$0xf]
      %v1658 = vsel %vm278, %v1656, 0
      %v1661 = vsel %vm282, %v1652, 0
      %1663 = vmatprep.subr.mxu0 0.0
      %1664 = vmatpush1.msra.mxu0 %v1661
      %1665 = vmatprep.subr.mxu0 0.0
      %1666 = vmatpush1.msra.mxu0 0.0
      %1667 = vmatprep.subr.mxu0 0.0
      %1668 = vmatpush1.msra.mxu0 0.0
      %1669 = vmatprep.subr.mxu0 0.0
      %1670 = vmatpush1.msra.mxu0 0.0
      %1671 = vmatprep.subr.mxu0 0.0
      %1672 = vmatpush1.msra.mxu0 0.0
      %1673 = vmatprep.subr.mxu0 0.0
      %1674 = vmatpush1.msra.mxu0 0.0
      %1675 = vmatprep.subr.mxu0 0.0
      %1676 = vmatpush1.msra.mxu0 0.0
      %1677 = vmatprep.subr.mxu0 0.0
      %1678 = vmatpush1.msra.mxu0 0.0
      %1679 = vmatprep.subr.mxu0 0.0
      %1680 = vmatpush1.msra.mxu0 0.0
      %1681 = vmatprep.subr.mxu0 0.0
      %1682 = vmatpush1.msra.mxu0 0.0
      %1683 = vmatprep.subr.mxu0 0.0
      %1684 = vmatpush1.msra.mxu0 0.0
      %1685 = vmatprep.subr.mxu0 0.0
      %1686 = vmatpush1.msra.mxu0 0.0
      %1687 = vmatprep.subr.mxu0 0.0
      %1688 = vmatpush1.msra.mxu0 0.0
      %1689 = vmatprep.subr.mxu0 0.0
      %1690 = vmatpush1.msra.mxu0 0.0
      %1691 = vmatprep.subr.mxu0 0.0
      %1692 = vmatpush1.msra.mxu0 0.0
      %1693 = vmatprep.subr.mxu0 0.0
      %1694 = vmatpush1.msra.mxu0 0.0
      %1695 = vmatprep.subr.mxu0 0.0
      %1696 = vmatpush1.msra.mxu0 0.0
      %1697 = vmatprep.subr.mxu0 0.0
      %1698 = vmatpush1.msra.mxu0 0.0
      %1699 = vmatprep.subr.mxu0 0.0
      %1700 = vmatpush1.msra.mxu0 0.0
      %1701 = vmatprep.subr.mxu0 0.0
      %1702 = vmatpush1.msra.mxu0 0.0
      %1703 = vmatprep.subr.mxu0 0.0
      %1704 = vmatpush1.msra.mxu0 0.0
      %1705 = vmatprep.subr.mxu0 0.0
      %1706 = vmatpush1.msra.mxu0 0.0
      %1707 = vmatprep.subr.mxu0 0.0
      %1708 = vmatpush1.msra.mxu0 0.0
      %1709 = vmatprep.subr.mxu0 0.0
      %1710 = vmatpush1.msra.mxu0 0.0
      %1711 = vmatprep.subr.mxu0 0.0
      %1712 = vmatpush1.msra.mxu0 0.0
      %1713 = vmatprep.subr.mxu0 0.0
      %1714 = vmatpush1.msra.mxu0 0.0
      %1715 = vmatprep.subr.mxu0 0.0
      %1716 = vmatpush1.msra.mxu0 0.0
      %1717 = vmatprep.subr.mxu0 0.0
      %1718 = vmatpush1.msra.mxu0 0.0
      %1719 = vmatprep.subr.mxu0 0.0
      %1720 = vmatpush1.msra.mxu0 0.0
      %1721 = vmatprep.subr.mxu0 0.0
      %1722 = vmatpush1.msra.mxu0 0.0
      %1723 = vmatprep.subr.mxu0 0.0
      %1724 = vmatpush1.msra.mxu0 0.0
      %1725 = vmatprep.subr.mxu0 0.0
      %1726 = vmatpush1.msra.mxu0 0.0
      %1727 = vmatprep.mubr.f32.mxu0 0.0
      %1728 = vmatmul.mubr.f32.gmra.mrb[0].mxu0 %v1658
      %v1729 = vpop.f32.mrb[0].mxu0
      %v1730 = vadd.f32 0.0, %v1729
      %v1731 = vpop.f32.mrb[0].mxu0
      %1732 = vdwg.mxu0
      %v1733 = vadd.f32 %v1581, %v1730
      %1734 = vmatprep.subr.mxu0 0.0
      %1735 = vmatpush1.msra.mxu0 %v358
      %1736 = vmatprep.subr.mxu0 0.0
      %1737 = vmatpush1.msra.mxu0 %v359
      %1738 = vmatprep.subr.mxu0 0.0
      %1739 = vmatpush1.msra.mxu0 0.0
      %1740 = vmatprep.subr.mxu0 0.0
      %1741 = vmatpush1.msra.mxu0 0.0
      %1742 = vmatprep.subr.mxu0 0.0
      %1743 = vmatpush1.msra.mxu0 0.0
      %1744 = vmatprep.subr.mxu0 0.0
      %1745 = vmatpush1.msra.mxu0 0.0
      %1746 = vmatprep.subr.mxu0 0.0
      %1747 = vmatpush1.msra.mxu0 0.0
      %1748 = vmatprep.subr.mxu0 0.0
      %1749 = vmatpush1.msra.mxu0 0.0
      %1750 = vmatprep.subr.mxu0 0.0
      %1751 = vmatpush1.msra.mxu0 0.0
      %1752 = vmatprep.subr.mxu0 0.0
      %1753 = vmatpush1.msra.mxu0 0.0
      %1754 = vmatprep.subr.mxu0 0.0
      %1755 = vmatpush1.msra.mxu0 0.0
      %1756 = vmatprep.subr.mxu0 0.0
      %1757 = vmatpush1.msra.mxu0 0.0
      %1758 = vmatprep.subr.mxu0 0.0
      %1759 = vmatpush1.msra.mxu0 0.0
      %1760 = vmatprep.subr.mxu0 0.0
      %1761 = vmatpush1.msra.mxu0 0.0
      %1762 = vmatprep.subr.mxu0 0.0
      %1763 = vmatpush1.msra.mxu0 0.0
      %1764 = vmatprep.subr.mxu0 0.0
      %1765 = vmatpush1.msra.mxu0 0.0
      %1766 = vmatprep.subr.mxu0 0.0
      %1767 = vmatpush1.msra.mxu0 0.0
      %1768 = vmatprep.subr.mxu0 0.0
      %1769 = vmatpush1.msra.mxu0 0.0
      %1770 = vmatprep.subr.mxu0 0.0
      %1771 = vmatpush1.msra.mxu0 0.0
      %1772 = vmatprep.subr.mxu0 0.0
      %1773 = vmatpush1.msra.mxu0 0.0
      %1774 = vmatprep.subr.mxu0 0.0
      %1775 = vmatpush1.msra.mxu0 0.0
      %1776 = vmatprep.subr.mxu0 0.0
      %1777 = vmatpush1.msra.mxu0 0.0
      %1778 = vmatprep.subr.mxu0 0.0
      %1779 = vmatpush1.msra.mxu0 0.0
      %1780 = vmatprep.subr.mxu0 0.0
      %1781 = vmatpush1.msra.mxu0 0.0
      %1782 = vmatprep.subr.mxu0 0.0
      %1783 = vmatpush1.msra.mxu0 0.0
      %1784 = vmatprep.subr.mxu0 0.0
      %1785 = vmatpush1.msra.mxu0 0.0
      %1786 = vmatprep.subr.mxu0 0.0
      %1787 = vmatpush1.msra.mxu0 0.0
      %1788 = vmatprep.subr.mxu0 0.0
      %1789 = vmatpush1.msra.mxu0 0.0
      %1790 = vmatprep.subr.mxu0 0.0
      %1791 = vmatpush1.msra.mxu0 0.0
      %1792 = vmatprep.subr.mxu0 0.0
      %1793 = vmatpush1.msra.mxu0 0.0
      %1794 = vmatprep.subr.mxu0 0.0
      %1795 = vmatpush1.msra.mxu0 0.0
      %1796 = vmatprep.subr.mxu0 0.0
      %1797 = vmatpush1.msra.mxu0 0.0
      %1798 = vmatprep.mubr.f32.mxu0 0.0
      %1799 = vmatmul.mubr.f32.gmra.mrb[0].mxu0 %v1583
      %v1800 = vpop.f32.mrb[0].mxu0
      %v1801 = vadd.f32 0.0, %v1800
      %v1802 = vpop.f32.mrb[0].mxu0
      %1803 = vdwg.mxu0
      %s1804 = scalar_lea.vmem %s2, 40
      %v1805 = vld [vmem:[%s1804] sm:$0xf]
      %v1807 = vsel %vm278, %v1805, 0
      %v1810 = vsel %vm282, %v1801, 0
      %1812 = vmatprep.subr.mxu0 0.0
      %1813 = vmatpush1.msra.mxu0 %v1810
      %1814 = vmatprep.subr.mxu0 0.0
      %1815 = vmatpush1.msra.mxu0 0.0
      %1816 = vmatprep.subr.mxu0 0.0
      %1817 = vmatpush1.msra.mxu0 0.0
      %1818 = vmatprep.subr.mxu0 0.0
      %1819 = vmatpush1.msra.mxu0 0.0
      %1820 = vmatprep.subr.mxu0 0.0
      %1821 = vmatpush1.msra.mxu0 0.0
      %1822 = vmatprep.subr.mxu0 0.0
      %1823 = vmatpush1.msra.mxu0 0.0
      %1824 = vmatprep.subr.mxu0 0.0
      %1825 = vmatpush1.msra.mxu0 0.0
      %1826 = vmatprep.subr.mxu0 0.0
      %1827 = vmatpush1.msra.mxu0 0.0
      %1828 = vmatprep.subr.mxu0 0.0
      %1829 = vmatpush1.msra.mxu0 0.0
      %1830 = vmatprep.subr.mxu0 0.0
      %1831 = vmatpush1.msra.mxu0 0.0
      %1832 = vmatprep.subr.mxu0 0.0
      %1833 = vmatpush1.msra.mxu0 0.0
      %1834 = vmatprep.subr.mxu0 0.0
      %1835 = vmatpush1.msra.mxu0 0.0
      %1836 = vmatprep.subr.mxu0 0.0
      %1837 = vmatpush1.msra.mxu0 0.0
      %1838 = vmatprep.subr.mxu0 0.0
      %1839 = vmatpush1.msra.mxu0 0.0
      %1840 = vmatprep.subr.mxu0 0.0
      %1841 = vmatpush1.msra.mxu0 0.0
      %1842 = vmatprep.subr.mxu0 0.0
      %1843 = vmatpush1.msra.mxu0 0.0
      %1844 = vmatprep.subr.mxu0 0.0
      %1845 = vmatpush1.msra.mxu0 0.0
      %1846 = vmatprep.subr.mxu0 0.0
      %1847 = vmatpush1.msra.mxu0 0.0
      %1848 = vmatprep.subr.mxu0 0.0
      %1849 = vmatpush1.msra.mxu0 0.0
      %1850 = vmatprep.subr.mxu0 0.0
      %1851 = vmatpush1.msra.mxu0 0.0
      %1852 = vmatprep.subr.mxu0 0.0
      %1853 = vmatpush1.msra.mxu0 0.0
      %1854 = vmatprep.subr.mxu0 0.0
      %1855 = vmatpush1.msra.mxu0 0.0
      %1856 = vmatprep.subr.mxu0 0.0
      %1857 = vmatpush1.msra.mxu0 0.0
      %1858 = vmatprep.subr.mxu0 0.0
      %1859 = vmatpush1.msra.mxu0 0.0
      %1860 = vmatprep.subr.mxu0 0.0
      %1861 = vmatpush1.msra.mxu0 0.0
      %1862 = vmatprep.subr.mxu0 0.0
      %1863 = vmatpush1.msra.mxu0 0.0
      %1864 = vmatprep.subr.mxu0 0.0
      %1865 = vmatpush1.msra.mxu0 0.0
      %1866 = vmatprep.subr.mxu0 0.0
      %1867 = vmatpush1.msra.mxu0 0.0
      %1868 = vmatprep.subr.mxu0 0.0
      %1869 = vmatpush1.msra.mxu0 0.0
      %1870 = vmatprep.subr.mxu0 0.0
      %1871 = vmatpush1.msra.mxu0 0.0
      %1872 = vmatprep.subr.mxu0 0.0
      %1873 = vmatpush1.msra.mxu0 0.0
      %1874 = vmatprep.subr.mxu0 0.0
      %1875 = vmatpush1.msra.mxu0 0.0
      %1876 = vmatprep.mubr.f32.mxu0 0.0
      %1877 = vmatmul.mubr.f32.gmra.mrb[0].mxu0 %v1807
      %v1878 = vpop.f32.mrb[0].mxu0
      %v1879 = vadd.f32 0.0, %v1878
      %v1880 = vpop.f32.mrb[0].mxu0
      %1881 = vdwg.mxu0
      %v1882 = vadd.f32 %v1733, %v1879
      %1883 = vmatprep.subr.mxu0 0.0
      %1884 = vmatpush1.msra.mxu0 %v510
      %1885 = vmatprep.subr.mxu0 0.0
      %1886 = vmatpush1.msra.mxu0 %v511
      %1887 = vmatprep.subr.mxu0 0.0
      %1888 = vmatpush1.msra.mxu0 0.0
      %1889 = vmatprep.subr.mxu0 0.0
      %1890 = vmatpush1.msra.mxu0 0.0
      %1891 = vmatprep.subr.mxu0 0.0
      %1892 = vmatpush1.msra.mxu0 0.0
      %1893 = vmatprep.subr.mxu0 0.0
      %1894 = vmatpush1.msra.mxu0 0.0
      %1895 = vmatprep.subr.mxu0 0.0
      %1896 = vmatpush1.msra.mxu0 0.0
      %1897 = vmatprep.subr.mxu0 0.0
      %1898 = vmatpush1.msra.mxu0 0.0
      %1899 = vmatprep.subr.mxu0 0.0
      %1900 = vmatpush1.msra.mxu0 0.0
      %1901 = vmatprep.subr.mxu0 0.0
      %1902 = vmatpush1.msra.mxu0 0.0
      %1903 = vmatprep.subr.mxu0 0.0
      %1904 = vmatpush1.msra.mxu0 0.0
      %1905 = vmatprep.subr.mxu0 0.0
      %1906 = vmatpush1.msra.mxu0 0.0
      %1907 = vmatprep.subr.mxu0 0.0
      %1908 = vmatpush1.msra.mxu0 0.0
      %1909 = vmatprep.subr.mxu0 0.0
      %1910 = vmatpush1.msra.mxu0 0.0
      %1911 = vmatprep.subr.mxu0 0.0
      %1912 = vmatpush1.msra.mxu0 0.0
      %1913 = vmatprep.subr.mxu0 0.0
      %1914 = vmatpush1.msra.mxu0 0.0
      %1915 = vmatprep.subr.mxu0 0.0
      %1916 = vmatpush1.msra.mxu0 0.0
      %1917 = vmatprep.subr.mxu0 0.0
      %1918 = vmatpush1.msra.mxu0 0.0
      %1919 = vmatprep.subr.mxu0 0.0
      %1920 = vmatpush1.msra.mxu0 0.0
      %1921 = vmatprep.subr.mxu0 0.0
      %1922 = vmatpush1.msra.mxu0 0.0
      %1923 = vmatprep.subr.mxu0 0.0
      %1924 = vmatpush1.msra.mxu0 0.0
      %1925 = vmatprep.subr.mxu0 0.0
      %1926 = vmatpush1.msra.mxu0 0.0
      %1927 = vmatprep.subr.mxu0 0.0
      %1928 = vmatpush1.msra.mxu0 0.0
      %1929 = vmatprep.subr.mxu0 0.0
      %1930 = vmatpush1.msra.mxu0 0.0
      %1931 = vmatprep.subr.mxu0 0.0
      %1932 = vmatpush1.msra.mxu0 0.0
      %1933 = vmatprep.subr.mxu0 0.0
      %1934 = vmatpush1.msra.mxu0 0.0
      %1935 = vmatprep.subr.mxu0 0.0
      %1936 = vmatpush1.msra.mxu0 0.0
      %1937 = vmatprep.subr.mxu0 0.0
      %1938 = vmatpush1.msra.mxu0 0.0
      %1939 = vmatprep.subr.mxu0 0.0
      %1940 = vmatpush1.msra.mxu0 0.0
      %1941 = vmatprep.subr.mxu0 0.0
      %1942 = vmatpush1.msra.mxu0 0.0
      %1943 = vmatprep.subr.mxu0 0.0
      %1944 = vmatpush1.msra.mxu0 0.0
      %1945 = vmatprep.subr.mxu0 0.0
      %1946 = vmatpush1.msra.mxu0 0.0
      %1947 = vmatprep.mubr.f32.mxu0 0.0
      %1948 = vmatmul.mubr.f32.gmra.mrb[0].mxu0 %v1583
      %v1949 = vpop.f32.mrb[0].mxu0
      %v1950 = vadd.f32 0.0, %v1949
      %v1951 = vpop.f32.mrb[0].mxu0
      %1952 = vdwg.mxu0
      %s1953 = scalar_lea.vmem %s2, 44
      %v1954 = vld [vmem:[%s1953] sm:$0xf]
      %v1956 = vsel %vm278, %v1954, 0
      %v1959 = vsel %vm282, %v1950, 0
      %1961 = vmatprep.subr.mxu0 0.0
      %1962 = vmatpush1.msra.mxu0 %v1959
      %1963 = vmatprep.subr.mxu0 0.0
      %1964 = vmatpush1.msra.mxu0 0.0
      %1965 = vmatprep.subr.mxu0 0.0
      %1966 = vmatpush1.msra.mxu0 0.0
      %1967 = vmatprep.subr.mxu0 0.0
      %1968 = vmatpush1.msra.mxu0 0.0
      %1969 = vmatprep.subr.mxu0 0.0
      %1970 = vmatpush1.msra.mxu0 0.0
      %1971 = vmatprep.subr.mxu0 0.0
      %1972 = vmatpush1.msra.mxu0 0.0
      %1973 = vmatprep.subr.mxu0 0.0
      %1974 = vmatpush1.msra.mxu0 0.0
      %1975 = vmatprep.subr.mxu0 0.0
      %1976 = vmatpush1.msra.mxu0 0.0
      %1977 = vmatprep.subr.mxu0 0.0
      %1978 = vmatpush1.msra.mxu0 0.0
      %1979 = vmatprep.subr.mxu0 0.0
      %1980 = vmatpush1.msra.mxu0 0.0
      %1981 = vmatprep.subr.mxu0 0.0
      %1982 = vmatpush1.msra.mxu0 0.0
      %1983 = vmatprep.subr.mxu0 0.0
      %1984 = vmatpush1.msra.mxu0 0.0
      %1985 = vmatprep.subr.mxu0 0.0
      %1986 = vmatpush1.msra.mxu0 0.0
      %1987 = vmatprep.subr.mxu0 0.0
      %1988 = vmatpush1.msra.mxu0 0.0
      %1989 = vmatprep.subr.mxu0 0.0
      %1990 = vmatpush1.msra.mxu0 0.0
      %1991 = vmatprep.subr.mxu0 0.0
      %1992 = vmatpush1.msra.mxu0 0.0
      %1993 = vmatprep.subr.mxu0 0.0
      %1994 = vmatpush1.msra.mxu0 0.0
      %1995 = vmatprep.subr.mxu0 0.0
      %1996 = vmatpush1.msra.mxu0 0.0
      %1997 = vmatprep.subr.mxu0 0.0
      %1998 = vmatpush1.msra.mxu0 0.0
      %1999 = vmatprep.subr.mxu0 0.0
      %2000 = vmatpush1.msra.mxu0 0.0
      %2001 = vmatprep.subr.mxu0 0.0
      %2002 = vmatpush1.msra.mxu0 0.0
      %2003 = vmatprep.subr.mxu0 0.0
      %2004 = vmatpush1.msra.mxu0 0.0
      %2005 = vmatprep.subr.mxu0 0.0
      %2006 = vmatpush1.msra.mxu0 0.0
      %2007 = vmatprep.subr.mxu0 0.0
      %2008 = vmatpush1.msra.mxu0 0.0
      %2009 = vmatprep.subr.mxu0 0.0
      %2010 = vmatpush1.msra.mxu0 0.0
      %2011 = vmatprep.subr.mxu0 0.0
      %2012 = vmatpush1.msra.mxu0 0.0
      %2013 = vmatprep.subr.mxu0 0.0
      %2014 = vmatpush1.msra.mxu0 0.0
      %2015 = vmatprep.subr.mxu0 0.0
      %2016 = vmatpush1.msra.mxu0 0.0
      %2017 = vmatprep.subr.mxu0 0.0
      %2018 = vmatpush1.msra.mxu0 0.0
      %2019 = vmatprep.subr.mxu0 0.0
      %2020 = vmatpush1.msra.mxu0 0.0
      %2021 = vmatprep.subr.mxu0 0.0
      %2022 = vmatpush1.msra.mxu0 0.0
      %2023 = vmatprep.subr.mxu0 0.0
      %2024 = vmatpush1.msra.mxu0 0.0
      %2025 = vmatprep.mubr.f32.mxu0 0.0
      %2026 = vmatmul.mubr.f32.gmra.mrb[0].mxu0 %v1956
      %v2027 = vpop.f32.mrb[0].mxu0
      %v2028 = vadd.f32 0.0, %v2027
      %v2029 = vpop.f32.mrb[0].mxu0
      %2030 = vdwg.mxu0
      %v2031 = vadd.f32 %v1882, %v2028
      %2032 = vmatprep.subr.mxu0 0.0
      %2033 = vmatpush1.msra.mxu0 %v662
      %2034 = vmatprep.subr.mxu0 0.0
      %2035 = vmatpush1.msra.mxu0 %v663
      %2036 = vmatprep.subr.mxu0 0.0
      %2037 = vmatpush1.msra.mxu0 0.0
      %2038 = vmatprep.subr.mxu0 0.0
      %2039 = vmatpush1.msra.mxu0 0.0
      %2040 = vmatprep.subr.mxu0 0.0
      %2041 = vmatpush1.msra.mxu0 0.0
      %2042 = vmatprep.subr.mxu0 0.0
      %2043 = vmatpush1.msra.mxu0 0.0
      %2044 = vmatprep.subr.mxu0 0.0
      %2045 = vmatpush1.msra.mxu0 0.0
      %2046 = vmatprep.subr.mxu0 0.0
      %2047 = vmatpush1.msra.mxu0 0.0
      %2048 = vmatprep.subr.mxu0 0.0
      %2049 = vmatpush1.msra.mxu0 0.0
      %2050 = vmatprep.subr.mxu0 0.0
      %2051 = vmatpush1.msra.mxu0 0.0
      %2052 = vmatprep.subr.mxu0 0.0
      %2053 = vmatpush1.msra.mxu0 0.0
      %2054 = vmatprep.subr.mxu0 0.0
      %2055 = vmatpush1.msra.mxu0 0.0
      %2056 = vmatprep.subr.mxu0 0.0
      %2057 = vmatpush1.msra.mxu0 0.0
      %2058 = vmatprep.subr.mxu0 0.0
      %2059 = vmatpush1.msra.mxu0 0.0
      %2060 = vmatprep.subr.mxu0 0.0
      %2061 = vmatpush1.msra.mxu0 0.0
      %2062 = vmatprep.subr.mxu0 0.0
      %2063 = vmatpush1.msra.mxu0 0.0
      %2064 = vmatprep.subr.mxu0 0.0
      %2065 = vmatpush1.msra.mxu0 0.0
      %2066 = vmatprep.subr.mxu0 0.0
      %2067 = vmatpush1.msra.mxu0 0.0
      %2068 = vmatprep.subr.mxu0 0.0
      %2069 = vmatpush1.msra.mxu0 0.0
      %2070 = vmatprep.subr.mxu0 0.0
      %2071 = vmatpush1.msra.mxu0 0.0
      %2072 = vmatprep.subr.mxu0 0.0
      %2073 = vmatpush1.msra.mxu0 0.0
      %2074 = vmatprep.subr.mxu0 0.0
      %2075 = vmatpush1.msra.mxu0 0.0
      %2076 = vmatprep.subr.mxu0 0.0
      %2077 = vmatpush1.msra.mxu0 0.0
      %2078 = vmatprep.subr.mxu0 0.0
      %2079 = vmatpush1.msra.mxu0 0.0
      %2080 = vmatprep.subr.mxu0 0.0
      %2081 = vmatpush1.msra.mxu0 0.0
      %2082 = vmatprep.subr.mxu0 0.0
      %2083 = vmatpush1.msra.mxu0 0.0
      %2084 = vmatprep.subr.mxu0 0.0
      %2085 = vmatpush1.msra.mxu0 0.0
      %2086 = vmatprep.subr.mxu0 0.0
      %2087 = vmatpush1.msra.mxu0 0.0
      %2088 = vmatprep.subr.mxu0 0.0
      %2089 = vmatpush1.msra.mxu0 0.0
      %2090 = vmatprep.subr.mxu0 0.0
      %2091 = vmatpush1.msra.mxu0 0.0
      %2092 = vmatprep.subr.mxu0 0.0
      %2093 = vmatpush1.msra.mxu0 0.0
      %2094 = vmatprep.subr.mxu0 0.0
      %2095 = vmatpush1.msra.mxu0 0.0
      %2096 = vmatprep.mubr.f32.mxu0 0.0
      %2097 = vmatmul.mubr.f32.gmra.mrb[0].mxu0 %v1583
      %v2098 = vpop.f32.mrb[0].mxu0
      %v2099 = vadd.f32 0.0, %v2098
      %v2100 = vpop.f32.mrb[0].mxu0
      %2101 = vdwg.mxu0
      %s2102 = scalar_lea.vmem %s2, 48
      %v2103 = vld [vmem:[%s2102] sm:$0xf]
      %v2105 = vsel %vm278, %v2103, 0
      %v2108 = vsel %vm282, %v2099, 0
      %2110 = vmatprep.subr.mxu0 0.0
      %2111 = vmatpush1.msra.mxu0 %v2108
      %2112 = vmatprep.subr.mxu0 0.0
      %2113 = vmatpush1.msra.mxu0 0.0
      %2114 = vmatprep.subr.mxu0 0.0
      %2115 = vmatpush1.msra.mxu0 0.0
      %2116 = vmatprep.subr.mxu0 0.0
      %2117 = vmatpush1.msra.mxu0 0.0
      %2118 = vmatprep.subr.mxu0 0.0
      %2119 = vmatpush1.msra.mxu0 0.0
      %2120 = vmatprep.subr.mxu0 0.0
      %2121 = vmatpush1.msra.mxu0 0.0
      %2122 = vmatprep.subr.mxu0 0.0
      %2123 = vmatpush1.msra.mxu0 0.0
      %2124 = vmatprep.subr.mxu0 0.0
      %2125 = vmatpush1.msra.mxu0 0.0
      %2126 = vmatprep.subr.mxu0 0.0
      %2127 = vmatpush1.msra.mxu0 0.0
      %2128 = vmatprep.subr.mxu0 0.0
      %2129 = vmatpush1.msra.mxu0 0.0
      %2130 = vmatprep.subr.mxu0 0.0
      %2131 = vmatpush1.msra.mxu0 0.0
      %2132 = vmatprep.subr.mxu0 0.0
      %2133 = vmatpush1.msra.mxu0 0.0
      %2134 = vmatprep.subr.mxu0 0.0
      %2135 = vmatpush1.msra.mxu0 0.0
      %2136 = vmatprep.subr.mxu0 0.0
      %2137 = vmatpush1.msra.mxu0 0.0
      %2138 = vmatprep.subr.mxu0 0.0
      %2139 = vmatpush1.msra.mxu0 0.0
      %2140 = vmatprep.subr.mxu0 0.0
      %2141 = vmatpush1.msra.mxu0 0.0
      %2142 = vmatprep.subr.mxu0 0.0
      %2143 = vmatpush1.msra.mxu0 0.0
      %2144 = vmatprep.subr.mxu0 0.0
      %2145 = vmatpush1.msra.mxu0 0.0
      %2146 = vmatprep.subr.mxu0 0.0
      %2147 = vmatpush1.msra.mxu0 0.0
      %2148 = vmatprep.subr.mxu0 0.0
      %2149 = vmatpush1.msra.mxu0 0.0
      %2150 = vmatprep.subr.mxu0 0.0
      %2151 = vmatpush1.msra.mxu0 0.0
      %2152 = vmatprep.subr.mxu0 0.0
      %2153 = vmatpush1.msra.mxu0 0.0
      %2154 = vmatprep.subr.mxu0 0.0
      %2155 = vmatpush1.msra.mxu0 0.0
      %2156 = vmatprep.subr.mxu0 0.0
      %2157 = vmatpush1.msra.mxu0 0.0
      %2158 = vmatprep.subr.mxu0 0.0
      %2159 = vmatpush1.msra.mxu0 0.0
      %2160 = vmatprep.subr.mxu0 0.0
      %2161 = vmatpush1.msra.mxu0 0.0
      %2162 = vmatprep.subr.mxu0 0.0
      %2163 = vmatpush1.msra.mxu0 0.0
      %2164 = vmatprep.subr.mxu0 0.0
      %2165 = vmatpush1.msra.mxu0 0.0
      %2166 = vmatprep.subr.mxu0 0.0
      %2167 = vmatpush1.msra.mxu0 0.0
      %2168 = vmatprep.subr.mxu0 0.0
      %2169 = vmatpush1.msra.mxu0 0.0
      %2170 = vmatprep.subr.mxu0 0.0
      %2171 = vmatpush1.msra.mxu0 0.0
      %2172 = vmatprep.subr.mxu0 0.0
      %2173 = vmatpush1.msra.mxu0 0.0
      %2174 = vmatprep.mubr.f32.mxu0 0.0
      %2175 = vmatmul.mubr.f32.gmra.mrb[0].mxu0 %v2105
      %v2176 = vpop.f32.mrb[0].mxu0
      %v2177 = vadd.f32 0.0, %v2176
      %v2178 = vpop.f32.mrb[0].mxu0
      %2179 = vdwg.mxu0
      %v2180 = vadd.f32 %v2031, %v2177
      %2181 = vmatprep.subr.mxu0 0.0
      %2182 = vmatpush1.msra.mxu0 %v814
      %2183 = vmatprep.subr.mxu0 0.0
      %2184 = vmatpush1.msra.mxu0 %v815
      %2185 = vmatprep.subr.mxu0 0.0
      %2186 = vmatpush1.msra.mxu0 0.0
      %2187 = vmatprep.subr.mxu0 0.0
      %2188 = vmatpush1.msra.mxu0 0.0
      %2189 = vmatprep.subr.mxu0 0.0
      %2190 = vmatpush1.msra.mxu0 0.0
      %2191 = vmatprep.subr.mxu0 0.0
      %2192 = vmatpush1.msra.mxu0 0.0
      %2193 = vmatprep.subr.mxu0 0.0
      %2194 = vmatpush1.msra.mxu0 0.0
      %2195 = vmatprep.subr.mxu0 0.0
      %2196 = vmatpush1.msra.mxu0 0.0
      %2197 = vmatprep.subr.mxu0 0.0
      %2198 = vmatpush1.msra.mxu0 0.0
      %2199 = vmatprep.subr.mxu0 0.0
      %2200 = vmatpush1.msra.mxu0 0.0
      %2201 = vmatprep.subr.mxu0 0.0
      %2202 = vmatpush1.msra.mxu0 0.0
      %2203 = vmatprep.subr.mxu0 0.0
      %2204 = vmatpush1.msra.mxu0 0.0
      %2205 = vmatprep.subr.mxu0 0.0
      %2206 = vmatpush1.msra.mxu0 0.0
      %2207 = vmatprep.subr.mxu0 0.0
      %2208 = vmatpush1.msra.mxu0 0.0
      %2209 = vmatprep.subr.mxu0 0.0
      %2210 = vmatpush1.msra.mxu0 0.0
      %2211 = vmatprep.subr.mxu0 0.0
      %2212 = vmatpush1.msra.mxu0 0.0
      %2213 = vmatprep.subr.mxu0 0.0
      %2214 = vmatpush1.msra.mxu0 0.0
      %2215 = vmatprep.subr.mxu0 0.0
      %2216 = vmatpush1.msra.mxu0 0.0
      %2217 = vmatprep.subr.mxu0 0.0
      %2218 = vmatpush1.msra.mxu0 0.0
      %2219 = vmatprep.subr.mxu0 0.0
      %2220 = vmatpush1.msra.mxu0 0.0
      %2221 = vmatprep.subr.mxu0 0.0
      %2222 = vmatpush1.msra.mxu0 0.0
      %2223 = vmatprep.subr.mxu0 0.0
      %2224 = vmatpush1.msra.mxu0 0.0
      %2225 = vmatprep.subr.mxu0 0.0
      %2226 = vmatpush1.msra.mxu0 0.0
      %2227 = vmatprep.subr.mxu0 0.0
      %2228 = vmatpush1.msra.mxu0 0.0
      %2229 = vmatprep.subr.mxu0 0.0
      %2230 = vmatpush1.msra.mxu0 0.0
      %2231 = vmatprep.subr.mxu0 0.0
      %2232 = vmatpush1.msra.mxu0 0.0
      %2233 = vmatprep.subr.mxu0 0.0
      %2234 = vmatpush1.msra.mxu0 0.0
      %2235 = vmatprep.subr.mxu0 0.0
      %2236 = vmatpush1.msra.mxu0 0.0
      %2237 = vmatprep.subr.mxu0 0.0
      %2238 = vmatpush1.msra.mxu0 0.0
      %2239 = vmatprep.subr.mxu0 0.0
      %2240 = vmatpush1.msra.mxu0 0.0
      %2241 = vmatprep.subr.mxu0 0.0
      %2242 = vmatpush1.msra.mxu0 0.0
      %2243 = vmatprep.subr.mxu0 0.0
      %2244 = vmatpush1.msra.mxu0 0.0
      %2245 = vmatprep.mubr.f32.mxu0 0.0
      %2246 = vmatmul.mubr.f32.gmra.mrb[0].mxu0 %v1583
      %v2247 = vpop.f32.mrb[0].mxu0
      %v2248 = vadd.f32 0.0, %v2247
      %v2249 = vpop.f32.mrb[0].mxu0
      %2250 = vdwg.mxu0
      %s2251 = scalar_lea.vmem %s2, 52
      %v2252 = vld [vmem:[%s2251] sm:$0xf]
      %v2254 = vsel %vm278, %v2252, 0
      %v2257 = vsel %vm282, %v2248, 0
      %2259 = vmatprep.subr.mxu0 0.0
      %2260 = vmatpush1.msra.mxu0 %v2257
      %2261 = vmatprep.subr.mxu0 0.0
      %2262 = vmatpush1.msra.mxu0 0.0
      %2263 = vmatprep.subr.mxu0 0.0
      %2264 = vmatpush1.msra.mxu0 0.0
      %2265 = vmatprep.subr.mxu0 0.0
      %2266 = vmatpush1.msra.mxu0 0.0
      %2267 = vmatprep.subr.mxu0 0.0
      %2268 = vmatpush1.msra.mxu0 0.0
      %2269 = vmatprep.subr.mxu0 0.0
      %2270 = vmatpush1.msra.mxu0 0.0
      %2271 = vmatprep.subr.mxu0 0.0
      %2272 = vmatpush1.msra.mxu0 0.0
      %2273 = vmatprep.subr.mxu0 0.0
      %2274 = vmatpush1.msra.mxu0 0.0
      %2275 = vmatprep.subr.mxu0 0.0
      %2276 = vmatpush1.msra.mxu0 0.0
      %2277 = vmatprep.subr.mxu0 0.0
      %2278 = vmatpush1.msra.mxu0 0.0
      %2279 = vmatprep.subr.mxu0 0.0
      %2280 = vmatpush1.msra.mxu0 0.0
      %2281 = vmatprep.subr.mxu0 0.0
      %2282 = vmatpush1.msra.mxu0 0.0
      %2283 = vmatprep.subr.mxu0 0.0
      %2284 = vmatpush1.msra.mxu0 0.0
      %2285 = vmatprep.subr.mxu0 0.0
      %2286 = vmatpush1.msra.mxu0 0.0
      %2287 = vmatprep.subr.mxu0 0.0
      %2288 = vmatpush1.msra.mxu0 0.0
      %2289 = vmatprep.subr.mxu0 0.0
      %2290 = vmatpush1.msra.mxu0 0.0
      %2291 = vmatprep.subr.mxu0 0.0
      %2292 = vmatpush1.msra.mxu0 0.0
      %2293 = vmatprep.subr.mxu0 0.0
      %2294 = vmatpush1.msra.mxu0 0.0
      %2295 = vmatprep.subr.mxu0 0.0
      %2296 = vmatpush1.msra.mxu0 0.0
      %2297 = vmatprep.subr.mxu0 0.0
      %2298 = vmatpush1.msra.mxu0 0.0
      %2299 = vmatprep.subr.mxu0 0.0
      %2300 = vmatpush1.msra.mxu0 0.0
      %2301 = vmatprep.subr.mxu0 0.0
      %2302 = vmatpush1.msra.mxu0 0.0
      %2303 = vmatprep.subr.mxu0 0.0
      %2304 = vmatpush1.msra.mxu0 0.0
      %2305 = vmatprep.subr.mxu0 0.0
      %2306 = vmatpush1.msra.mxu0 0.0
      %2307 = vmatprep.subr.mxu0 0.0
      %2308 = vmatpush1.msra.mxu0 0.0
      %2309 = vmatprep.subr.mxu0 0.0
      %2310 = vmatpush1.msra.mxu0 0.0
      %2311 = vmatprep.subr.mxu0 0.0
      %2312 = vmatpush1.msra.mxu0 0.0
      %2313 = vmatprep.subr.mxu0 0.0
      %2314 = vmatpush1.msra.mxu0 0.0
      %2315 = vmatprep.subr.mxu0 0.0
      %2316 = vmatpush1.msra.mxu0 0.0
      %2317 = vmatprep.subr.mxu0 0.0
      %2318 = vmatpush1.msra.mxu0 0.0
      %2319 = vmatprep.subr.mxu0 0.0
      %2320 = vmatpush1.msra.mxu0 0.0
      %2321 = vmatprep.subr.mxu0 0.0
      %2322 = vmatpush1.msra.mxu0 0.0
      %2323 = vmatprep.mubr.f32.mxu0 0.0
      %2324 = vmatmul.mubr.f32.gmra.mrb[0].mxu0 %v2254
      %v2325 = vpop.f32.mrb[0].mxu0
      %v2326 = vadd.f32 0.0, %v2325
      %v2327 = vpop.f32.mrb[0].mxu0
      %2328 = vdwg.mxu0
      %v2329 = vadd.f32 %v2180, %v2326
      %2330 = vmatprep.subr.mxu0 0.0
      %2331 = vmatpush1.msra.mxu0 %v966
      %2332 = vmatprep.subr.mxu0 0.0
      %2333 = vmatpush1.msra.mxu0 %v967
      %2334 = vmatprep.subr.mxu0 0.0
      %2335 = vmatpush1.msra.mxu0 0.0
      %2336 = vmatprep.subr.mxu0 0.0
      %2337 = vmatpush1.msra.mxu0 0.0
      %2338 = vmatprep.subr.mxu0 0.0
      %2339 = vmatpush1.msra.mxu0 0.0
      %2340 = vmatprep.subr.mxu0 0.0
      %2341 = vmatpush1.msra.mxu0 0.0
      %2342 = vmatprep.subr.mxu0 0.0
      %2343 = vmatpush1.msra.mxu0 0.0
      %2344 = vmatprep.subr.mxu0 0.0
      %2345 = vmatpush1.msra.mxu0 0.0
      %2346 = vmatprep.subr.mxu0 0.0
      %2347 = vmatpush1.msra.mxu0 0.0
      %2348 = vmatprep.subr.mxu0 0.0
      %2349 = vmatpush1.msra.mxu0 0.0
      %2350 = vmatprep.subr.mxu0 0.0
      %2351 = vmatpush1.msra.mxu0 0.0
      %2352 = vmatprep.subr.mxu0 0.0
      %2353 = vmatpush1.msra.mxu0 0.0
      %2354 = vmatprep.subr.mxu0 0.0
      %2355 = vmatpush1.msra.mxu0 0.0
      %2356 = vmatprep.subr.mxu0 0.0
      %2357 = vmatpush1.msra.mxu0 0.0
      %2358 = vmatprep.subr.mxu0 0.0
      %2359 = vmatpush1.msra.mxu0 0.0
      %2360 = vmatprep.subr.mxu0 0.0
      %2361 = vmatpush1.msra.mxu0 0.0
      %2362 = vmatprep.subr.mxu0 0.0
      %2363 = vmatpush1.msra.mxu0 0.0
      %2364 = vmatprep.subr.mxu0 0.0
      %2365 = vmatpush1.msra.mxu0 0.0
      %2366 = vmatprep.subr.mxu0 0.0
      %2367 = vmatpush1.msra.mxu0 0.0
      %2368 = vmatprep.subr.mxu0 0.0
      %2369 = vmatpush1.msra.mxu0 0.0
      %2370 = vmatprep.subr.mxu0 0.0
      %2371 = vmatpush1.msra.mxu0 0.0
      %2372 = vmatprep.subr.mxu0 0.0
      %2373 = vmatpush1.msra.mxu0 0.0
      %2374 = vmatprep.subr.mxu0 0.0
      %2375 = vmatpush1.msra.mxu0 0.0
      %2376 = vmatprep.subr.mxu0 0.0
      %2377 = vmatpush1.msra.mxu0 0.0
      %2378 = vmatprep.subr.mxu0 0.0
      %2379 = vmatpush1.msra.mxu0 0.0
      %2380 = vmatprep.subr.mxu0 0.0
      %2381 = vmatpush1.msra.mxu0 0.0
      %2382 = vmatprep.subr.mxu0 0.0
      %2383 = vmatpush1.msra.mxu0 0.0
      %2384 = vmatprep.subr.mxu0 0.0
      %2385 = vmatpush1.msra.mxu0 0.0
      %2386 = vmatprep.subr.mxu0 0.0
      %2387 = vmatpush1.msra.mxu0 0.0
      %2388 = vmatprep.subr.mxu0 0.0
      %2389 = vmatpush1.msra.mxu0 0.0
      %2390 = vmatprep.subr.mxu0 0.0
      %2391 = vmatpush1.msra.mxu0 0.0
      %2392 = vmatprep.subr.mxu0 0.0
      %2393 = vmatpush1.msra.mxu0 0.0
      %2394 = vmatprep.mubr.f32.mxu0 0.0
      %2395 = vmatmul.mubr.f32.gmra.mrb[0].mxu0 %v1583
      %v2396 = vpop.f32.mrb[0].mxu0
      %v2397 = vadd.f32 0.0, %v2396
      %v2398 = vpop.f32.mrb[0].mxu0
      %2399 = vdwg.mxu0
      %s2400 = scalar_lea.vmem %s2, 56
      %v2401 = vld [vmem:[%s2400] sm:$0xf]
      %v2403 = vsel %vm278, %v2401, 0
      %v2406 = vsel %vm282, %v2397, 0
      %2408 = vmatprep.subr.mxu0 0.0
      %2409 = vmatpush1.msra.mxu0 %v2406
      %2410 = vmatprep.subr.mxu0 0.0
      %2411 = vmatpush1.msra.mxu0 0.0
      %2412 = vmatprep.subr.mxu0 0.0
      %2413 = vmatpush1.msra.mxu0 0.0
      %2414 = vmatprep.subr.mxu0 0.0
      %2415 = vmatpush1.msra.mxu0 0.0
      %2416 = vmatprep.subr.mxu0 0.0
      %2417 = vmatpush1.msra.mxu0 0.0
      %2418 = vmatprep.subr.mxu0 0.0
      %2419 = vmatpush1.msra.mxu0 0.0
      %2420 = vmatprep.subr.mxu0 0.0
      %2421 = vmatpush1.msra.mxu0 0.0
      %2422 = vmatprep.subr.mxu0 0.0
      %2423 = vmatpush1.msra.mxu0 0.0
      %2424 = vmatprep.subr.mxu0 0.0
      %2425 = vmatpush1.msra.mxu0 0.0
      %2426 = vmatprep.subr.mxu0 0.0
      %2427 = vmatpush1.msra.mxu0 0.0
      %2428 = vmatprep.subr.mxu0 0.0
      %2429 = vmatpush1.msra.mxu0 0.0
      %2430 = vmatprep.subr.mxu0 0.0
      %2431 = vmatpush1.msra.mxu0 0.0
      %2432 = vmatprep.subr.mxu0 0.0
      %2433 = vmatpush1.msra.mxu0 0.0
      %2434 = vmatprep.subr.mxu0 0.0
      %2435 = vmatpush1.msra.mxu0 0.0
      %2436 = vmatprep.subr.mxu0 0.0
      %2437 = vmatpush1.msra.mxu0 0.0
      %2438 = vmatprep.subr.mxu0 0.0
      %2439 = vmatpush1.msra.mxu0 0.0
      %2440 = vmatprep.subr.mxu0 0.0
      %2441 = vmatpush1.msra.mxu0 0.0
      %2442 = vmatprep.subr.mxu0 0.0
      %2443 = vmatpush1.msra.mxu0 0.0
      %2444 = vmatprep.subr.mxu0 0.0
      %2445 = vmatpush1.msra.mxu0 0.0
      %2446 = vmatprep.subr.mxu0 0.0
      %2447 = vmatpush1.msra.mxu0 0.0
      %2448 = vmatprep.subr.mxu0 0.0
      %2449 = vmatpush1.msra.mxu0 0.0
      %2450 = vmatprep.subr.mxu0 0.0
      %2451 = vmatpush1.msra.mxu0 0.0
      %2452 = vmatprep.subr.mxu0 0.0
      %2453 = vmatpush1.msra.mxu0 0.0
      %2454 = vmatprep.subr.mxu0 0.0
      %2455 = vmatpush1.msra.mxu0 0.0
      %2456 = vmatprep.subr.mxu0 0.0
      %2457 = vmatpush1.msra.mxu0 0.0
      %2458 = vmatprep.subr.mxu0 0.0
      %2459 = vmatpush1.msra.mxu0 0.0
      %2460 = vmatprep.subr.mxu0 0.0
      %2461 = vmatpush1.msra.mxu0 0.0
      %2462 = vmatprep.subr.mxu0 0.0
      %2463 = vmatpush1.msra.mxu0 0.0
      %2464 = vmatprep.subr.mxu0 0.0
      %2465 = vmatpush1.msra.mxu0 0.0
      %2466 = vmatprep.subr.mxu0 0.0
      %2467 = vmatpush1.msra.mxu0 0.0
      %2468 = vmatprep.subr.mxu0 0.0
      %2469 = vmatpush1.msra.mxu0 0.0
      %2470 = vmatprep.subr.mxu0 0.0
      %2471 = vmatpush1.msra.mxu0 0.0
      %2472 = vmatprep.mubr.f32.mxu0 0.0
      %2473 = vmatmul.mubr.f32.gmra.mrb[0].mxu0 %v2403
      %v2474 = vpop.f32.mrb[0].mxu0
      %v2475 = vadd.f32 0.0, %v2474
      %v2476 = vpop.f32.mrb[0].mxu0
      %2477 = vdwg.mxu0
      %v2478 = vadd.f32 %v2329, %v2475
      %2479 = vmatprep.subr.mxu0 0.0
      %2480 = vmatpush1.msra.mxu0 %v1118
      %2481 = vmatprep.subr.mxu0 0.0
      %2482 = vmatpush1.msra.mxu0 %v1119
      %2483 = vmatprep.subr.mxu0 0.0
      %2484 = vmatpush1.msra.mxu0 0.0
      %2485 = vmatprep.subr.mxu0 0.0
      %2486 = vmatpush1.msra.mxu0 0.0
      %2487 = vmatprep.subr.mxu0 0.0
      %2488 = vmatpush1.msra.mxu0 0.0
      %2489 = vmatprep.subr.mxu0 0.0
      %2490 = vmatpush1.msra.mxu0 0.0
      %2491 = vmatprep.subr.mxu0 0.0
      %2492 = vmatpush1.msra.mxu0 0.0
      %2493 = vmatprep.subr.mxu0 0.0
      %2494 = vmatpush1.msra.mxu0 0.0
      %2495 = vmatprep.subr.mxu0 0.0
      %2496 = vmatpush1.msra.mxu0 0.0
      %2497 = vmatprep.subr.mxu0 0.0
      %2498 = vmatpush1.msra.mxu0 0.0
      %2499 = vmatprep.subr.mxu0 0.0
      %2500 = vmatpush1.msra.mxu0 0.0
      %2501 = vmatprep.subr.mxu0 0.0
      %2502 = vmatpush1.msra.mxu0 0.0
      %2503 = vmatprep.subr.mxu0 0.0
      %2504 = vmatpush1.msra.mxu0 0.0
      %2505 = vmatprep.subr.mxu0 0.0
      %2506 = vmatpush1.msra.mxu0 0.0
      %2507 = vmatprep.subr.mxu0 0.0
      %2508 = vmatpush1.msra.mxu0 0.0
      %2509 = vmatprep.subr.mxu0 0.0
      %2510 = vmatpush1.msra.mxu0 0.0
      %2511 = vmatprep.subr.mxu0 0.0
      %2512 = vmatpush1.msra.mxu0 0.0
      %2513 = vmatprep.subr.mxu0 0.0
      %2514 = vmatpush1.msra.mxu0 0.0
      %2515 = vmatprep.subr.mxu0 0.0
      %2516 = vmatpush1.msra.mxu0 0.0
      %2517 = vmatprep.subr.mxu0 0.0
      %2518 = vmatpush1.msra.mxu0 0.0
      %2519 = vmatprep.subr.mxu0 0.0
      %2520 = vmatpush1.msra.mxu0 0.0
      %2521 = vmatprep.subr.mxu0 0.0
      %2522 = vmatpush1.msra.mxu0 0.0
      %2523 = vmatprep.subr.mxu0 0.0
      %2524 = vmatpush1.msra.mxu0 0.0
      %2525 = vmatprep.subr.mxu0 0.0
      %2526 = vmatpush1.msra.mxu0 0.0
      %2527 = vmatprep.subr.mxu0 0.0
      %2528 = vmatpush1.msra.mxu0 0.0
      %2529 = vmatprep.subr.mxu0 0.0
      %2530 = vmatpush1.msra.mxu0 0.0
      %2531 = vmatprep.subr.mxu0 0.0
      %2532 = vmatpush1.msra.mxu0 0.0
      %2533 = vmatprep.subr.mxu0 0.0
      %2534 = vmatpush1.msra.mxu0 0.0
      %2535 = vmatprep.subr.mxu0 0.0
      %2536 = vmatpush1.msra.mxu0 0.0
      %2537 = vmatprep.subr.mxu0 0.0
      %2538 = vmatpush1.msra.mxu0 0.0
      %2539 = vmatprep.subr.mxu0 0.0
      %2540 = vmatpush1.msra.mxu0 0.0
      %2541 = vmatprep.subr.mxu0 0.0
      %2542 = vmatpush1.msra.mxu0 0.0
      %2543 = vmatprep.mubr.f32.mxu0 0.0
      %2544 = vmatmul.mubr.f32.gmra.mrb[0].mxu0 %v1583
      %v2545 = vpop.f32.mrb[0].mxu0
      %v2546 = vadd.f32 0.0, %v2545
      %v2547 = vpop.f32.mrb[0].mxu0
      %2548 = vdwg.mxu0
      %s2549 = scalar_lea.vmem %s2, 60
      %v2550 = vld [vmem:[%s2549] sm:$0xf]
      %v2552 = vsel %vm278, %v2550, 0
      %v2555 = vsel %vm282, %v2546, 0
      %2557 = vmatprep.subr.mxu0 0.0
      %2558 = vmatpush1.msra.mxu0 %v2555
      %2559 = vmatprep.subr.mxu0 0.0
      %2560 = vmatpush1.msra.mxu0 0.0
      %2561 = vmatprep.subr.mxu0 0.0
      %2562 = vmatpush1.msra.mxu0 0.0
      %2563 = vmatprep.subr.mxu0 0.0
      %2564 = vmatpush1.msra.mxu0 0.0
      %2565 = vmatprep.subr.mxu0 0.0
      %2566 = vmatpush1.msra.mxu0 0.0
      %2567 = vmatprep.subr.mxu0 0.0
      %2568 = vmatpush1.msra.mxu0 0.0
      %2569 = vmatprep.subr.mxu0 0.0
      %2570 = vmatpush1.msra.mxu0 0.0
      %2571 = vmatprep.subr.mxu0 0.0
      %2572 = vmatpush1.msra.mxu0 0.0
      %2573 = vmatprep.subr.mxu0 0.0
      %2574 = vmatpush1.msra.mxu0 0.0
      %2575 = vmatprep.subr.mxu0 0.0
      %2576 = vmatpush1.msra.mxu0 0.0
      %2577 = vmatprep.subr.mxu0 0.0
      %2578 = vmatpush1.msra.mxu0 0.0
      %2579 = vmatprep.subr.mxu0 0.0
      %2580 = vmatpush1.msra.mxu0 0.0
      %2581 = vmatprep.subr.mxu0 0.0
      %2582 = vmatpush1.msra.mxu0 0.0
      %2583 = vmatprep.subr.mxu0 0.0
      %2584 = vmatpush1.msra.mxu0 0.0
      %2585 = vmatprep.subr.mxu0 0.0
      %2586 = vmatpush1.msra.mxu0 0.0
      %2587 = vmatprep.subr.mxu0 0.0
      %2588 = vmatpush1.msra.mxu0 0.0
      %2589 = vmatprep.subr.mxu0 0.0
      %2590 = vmatpush1.msra.mxu0 0.0
      %2591 = vmatprep.subr.mxu0 0.0
      %2592 = vmatpush1.msra.mxu0 0.0
      %2593 = vmatprep.subr.mxu0 0.0
      %2594 = vmatpush1.msra.mxu0 0.0
      %2595 = vmatprep.subr.mxu0 0.0
      %2596 = vmatpush1.msra.mxu0 0.0
      %2597 = vmatprep.subr.mxu0 0.0
      %2598 = vmatpush1.msra.mxu0 0.0
      %2599 = vmatprep.subr.mxu0 0.0
      %2600 = vmatpush1.msra.mxu0 0.0
      %2601 = vmatprep.subr.mxu0 0.0
      %2602 = vmatpush1.msra.mxu0 0.0
      %2603 = vmatprep.subr.mxu0 0.0
      %2604 = vmatpush1.msra.mxu0 0.0
      %2605 = vmatprep.subr.mxu0 0.0
      %2606 = vmatpush1.msra.mxu0 0.0
      %2607 = vmatprep.subr.mxu0 0.0
      %2608 = vmatpush1.msra.mxu0 0.0
      %2609 = vmatprep.subr.mxu0 0.0
      %2610 = vmatpush1.msra.mxu0 0.0
      %2611 = vmatprep.subr.mxu0 0.0
      %2612 = vmatpush1.msra.mxu0 0.0
      %2613 = vmatprep.subr.mxu0 0.0
      %2614 = vmatpush1.msra.mxu0 0.0
      %2615 = vmatprep.subr.mxu0 0.0
      %2616 = vmatpush1.msra.mxu0 0.0
      %2617 = vmatprep.subr.mxu0 0.0
      %2618 = vmatpush1.msra.mxu0 0.0
      %2619 = vmatprep.subr.mxu0 0.0
      %2620 = vmatpush1.msra.mxu0 0.0
      %2621 = vmatprep.mubr.f32.mxu0 0.0
      %2622 = vmatmul.mubr.f32.gmra.mrb[0].mxu0 %v2552
      %v2623 = vpop.f32.mrb[0].mxu0
      %v2624 = vadd.f32 0.0, %v2623
      %v2625 = vpop.f32.mrb[0].mxu0
      %2626 = vdwg.mxu0
      %v2627 = vadd.f32 %v2478, %v2624
      %2628 = vmatprep.subr.mxu0 0.0
      %2629 = vmatpush1.msra.mxu0 %v1270
      %2630 = vmatprep.subr.mxu0 0.0
      %2631 = vmatpush1.msra.mxu0 %v1271
      %2632 = vmatprep.subr.mxu0 0.0
      %2633 = vmatpush1.msra.mxu0 0.0
      %2634 = vmatprep.subr.mxu0 0.0
      %2635 = vmatpush1.msra.mxu0 0.0
      %2636 = vmatprep.subr.mxu0 0.0
      %2637 = vmatpush1.msra.mxu0 0.0
      %2638 = vmatprep.subr.mxu0 0.0
      %2639 = vmatpush1.msra.mxu0 0.0
      %2640 = vmatprep.subr.mxu0 0.0
      %2641 = vmatpush1.msra.mxu0 0.0
      %2642 = vmatprep.subr.mxu0 0.0
      %2643 = vmatpush1.msra.mxu0 0.0
      %2644 = vmatprep.subr.mxu0 0.0
      %2645 = vmatpush1.msra.mxu0 0.0
      %2646 = vmatprep.subr.mxu0 0.0
      %2647 = vmatpush1.msra.mxu0 0.0
      %2648 = vmatprep.subr.mxu0 0.0
      %2649 = vmatpush1.msra.mxu0 0.0
      %2650 = vmatprep.subr.mxu0 0.0
      %2651 = vmatpush1.msra.mxu0 0.0
      %2652 = vmatprep.subr.mxu0 0.0
      %2653 = vmatpush1.msra.mxu0 0.0
      %2654 = vmatprep.subr.mxu0 0.0
      %2655 = vmatpush1.msra.mxu0 0.0
      %2656 = vmatprep.subr.mxu0 0.0
      %2657 = vmatpush1.msra.mxu0 0.0
      %2658 = vmatprep.subr.mxu0 0.0
      %2659 = vmatpush1.msra.mxu0 0.0
      %2660 = vmatprep.subr.mxu0 0.0
      %2661 = vmatpush1.msra.mxu0 0.0
      %2662 = vmatprep.subr.mxu0 0.0
      %2663 = vmatpush1.msra.mxu0 0.0
      %2664 = vmatprep.subr.mxu0 0.0
      %2665 = vmatpush1.msra.mxu0 0.0
      %2666 = vmatprep.subr.mxu0 0.0
      %2667 = vmatpush1.msra.mxu0 0.0
      %2668 = vmatprep.subr.mxu0 0.0
      %2669 = vmatpush1.msra.mxu0 0.0
      %2670 = vmatprep.subr.mxu0 0.0
      %2671 = vmatpush1.msra.mxu0 0.0
      %2672 = vmatprep.subr.mxu0 0.0
      %2673 = vmatpush1.msra.mxu0 0.0
      %2674 = vmatprep.subr.mxu0 0.0
      %2675 = vmatpush1.msra.mxu0 0.0
      %2676 = vmatprep.subr.mxu0 0.0
      %2677 = vmatpush1.msra.mxu0 0.0
      %2678 = vmatprep.subr.mxu0 0.0
      %2679 = vmatpush1.msra.mxu0 0.0
      %2680 = vmatprep.subr.mxu0 0.0
      %2681 = vmatpush1.msra.mxu0 0.0
      %2682 = vmatprep.subr.mxu0 0.0
      %2683 = vmatpush1.msra.mxu0 0.0
      %2684 = vmatprep.subr.mxu0 0.0
      %2685 = vmatpush1.msra.mxu0 0.0
      %2686 = vmatprep.subr.mxu0 0.0
      %2687 = vmatpush1.msra.mxu0 0.0
      %2688 = vmatprep.subr.mxu0 0.0
      %2689 = vmatpush1.msra.mxu0 0.0
      %2690 = vmatprep.subr.mxu0 0.0
      %2691 = vmatpush1.msra.mxu0 0.0
      %2692 = vmatprep.mubr.f32.mxu0 0.0
      %2693 = vmatmul.mubr.f32.gmra.mrb[0].mxu0 %v1583
      %v2694 = vpop.f32.mrb[0].mxu0
      %v2695 = vadd.f32 0.0, %v2694
      %v2696 = vpop.f32.mrb[0].mxu0
      %2697 = vdwg.mxu0
      %s2698 = scalar_lea.vmem %s2, 64
      %v2699 = vld [vmem:[%s2698] sm:$0xf]
      %v2701 = vsel %vm278, %v2699, 0
      %v2704 = vsel %vm282, %v2695, 0
      %2706 = vmatprep.subr.mxu0 0.0
      %2707 = vmatpush1.msra.mxu0 %v2704
      %2708 = vmatprep.subr.mxu0 0.0
      %2709 = vmatpush1.msra.mxu0 0.0
      %2710 = vmatprep.subr.mxu0 0.0
      %2711 = vmatpush1.msra.mxu0 0.0
      %2712 = vmatprep.subr.mxu0 0.0
      %2713 = vmatpush1.msra.mxu0 0.0
      %2714 = vmatprep.subr.mxu0 0.0
      %2715 = vmatpush1.msra.mxu0 0.0
      %2716 = vmatprep.subr.mxu0 0.0
      %2717 = vmatpush1.msra.mxu0 0.0
      %2718 = vmatprep.subr.mxu0 0.0
      %2719 = vmatpush1.msra.mxu0 0.0
      %2720 = vmatprep.subr.mxu0 0.0
      %2721 = vmatpush1.msra.mxu0 0.0
      %2722 = vmatprep.subr.mxu0 0.0
      %2723 = vmatpush1.msra.mxu0 0.0
      %2724 = vmatprep.subr.mxu0 0.0
      %2725 = vmatpush1.msra.mxu0 0.0
      %2726 = vmatprep.subr.mxu0 0.0
      %2727 = vmatpush1.msra.mxu0 0.0
      %2728 = vmatprep.subr.mxu0 0.0
      %2729 = vmatpush1.msra.mxu0 0.0
      %2730 = vmatprep.subr.mxu0 0.0
      %2731 = vmatpush1.msra.mxu0 0.0
      %2732 = vmatprep.subr.mxu0 0.0
      %2733 = vmatpush1.msra.mxu0 0.0
      %2734 = vmatprep.subr.mxu0 0.0
      %2735 = vmatpush1.msra.mxu0 0.0
      %2736 = vmatprep.subr.mxu0 0.0
      %2737 = vmatpush1.msra.mxu0 0.0
      %2738 = vmatprep.subr.mxu0 0.0
      %2739 = vmatpush1.msra.mxu0 0.0
      %2740 = vmatprep.subr.mxu0 0.0
      %2741 = vmatpush1.msra.mxu0 0.0
      %2742 = vmatprep.subr.mxu0 0.0
      %2743 = vmatpush1.msra.mxu0 0.0
      %2744 = vmatprep.subr.mxu0 0.0
      %2745 = vmatpush1.msra.mxu0 0.0
      %2746 = vmatprep.subr.mxu0 0.0
      %2747 = vmatpush1.msra.mxu0 0.0
      %2748 = vmatprep.subr.mxu0 0.0
      %2749 = vmatpush1.msra.mxu0 0.0
      %2750 = vmatprep.subr.mxu0 0.0
      %2751 = vmatpush1.msra.mxu0 0.0
      %2752 = vmatprep.subr.mxu0 0.0
      %2753 = vmatpush1.msra.mxu0 0.0
      %2754 = vmatprep.subr.mxu0 0.0
      %2755 = vmatpush1.msra.mxu0 0.0
      %2756 = vmatprep.subr.mxu0 0.0
      %2757 = vmatpush1.msra.mxu0 0.0
      %2758 = vmatprep.subr.mxu0 0.0
      %2759 = vmatpush1.msra.mxu0 0.0
      %2760 = vmatprep.subr.mxu0 0.0
      %2761 = vmatpush1.msra.mxu0 0.0
      %2762 = vmatprep.subr.mxu0 0.0
      %2763 = vmatpush1.msra.mxu0 0.0
      %2764 = vmatprep.subr.mxu0 0.0
      %2765 = vmatpush1.msra.mxu0 0.0
      %2766 = vmatprep.subr.mxu0 0.0
      %2767 = vmatpush1.msra.mxu0 0.0
      %2768 = vmatprep.subr.mxu0 0.0
      %2769 = vmatpush1.msra.mxu0 0.0
      %2770 = vmatprep.mubr.f32.mxu0 0.0
      %2771 = vmatmul.mubr.f32.gmra.mrb[0].mxu0 %v2701
      %v2772 = vpop.f32.mrb[0].mxu0
      %v2773 = vadd.f32 0.0, %v2772
      %v2774 = vpop.f32.mrb[0].mxu0
      %2775 = vdwg.mxu0
      %v2776 = vadd.f32 %v2627, %v2773
      %2777 = vmatprep.subr.mxu0 0.0
      %2778 = vmatpush1.msra.mxu0 %v1422
      %2779 = vmatprep.subr.mxu0 0.0
      %2780 = vmatpush1.msra.mxu0 %v1423
      %2781 = vmatprep.subr.mxu0 0.0
      %2782 = vmatpush1.msra.mxu0 0.0
      %2783 = vmatprep.subr.mxu0 0.0
      %2784 = vmatpush1.msra.mxu0 0.0
      %2785 = vmatprep.subr.mxu0 0.0
      %2786 = vmatpush1.msra.mxu0 0.0
      %2787 = vmatprep.subr.mxu0 0.0
      %2788 = vmatpush1.msra.mxu0 0.0
      %2789 = vmatprep.subr.mxu0 0.0
      %2790 = vmatpush1.msra.mxu0 0.0
      %2791 = vmatprep.subr.mxu0 0.0
      %2792 = vmatpush1.msra.mxu0 0.0
      %2793 = vmatprep.subr.mxu0 0.0
      %2794 = vmatpush1.msra.mxu0 0.0
      %2795 = vmatprep.subr.mxu0 0.0
      %2796 = vmatpush1.msra.mxu0 0.0
      %2797 = vmatprep.subr.mxu0 0.0
      %2798 = vmatpush1.msra.mxu0 0.0
      %2799 = vmatprep.subr.mxu0 0.0
      %2800 = vmatpush1.msra.mxu0 0.0
      %2801 = vmatprep.subr.mxu0 0.0
      %2802 = vmatpush1.msra.mxu0 0.0
      %2803 = vmatprep.subr.mxu0 0.0
      %2804 = vmatpush1.msra.mxu0 0.0
      %2805 = vmatprep.subr.mxu0 0.0
      %2806 = vmatpush1.msra.mxu0 0.0
      %2807 = vmatprep.subr.mxu0 0.0
      %2808 = vmatpush1.msra.mxu0 0.0
      %2809 = vmatprep.subr.mxu0 0.0
      %2810 = vmatpush1.msra.mxu0 0.0
      %2811 = vmatprep.subr.mxu0 0.0
      %2812 = vmatpush1.msra.mxu0 0.0
      %2813 = vmatprep.subr.mxu0 0.0
      %2814 = vmatpush1.msra.mxu0 0.0
      %2815 = vmatprep.subr.mxu0 0.0
      %2816 = vmatpush1.msra.mxu0 0.0
      %2817 = vmatprep.subr.mxu0 0.0
      %2818 = vmatpush1.msra.mxu0 0.0
      %2819 = vmatprep.subr.mxu0 0.0
      %2820 = vmatpush1.msra.mxu0 0.0
      %2821 = vmatprep.subr.mxu0 0.0
      %2822 = vmatpush1.msra.mxu0 0.0
      %2823 = vmatprep.subr.mxu0 0.0
      %2824 = vmatpush1.msra.mxu0 0.0
      %2825 = vmatprep.subr.mxu0 0.0
      %2826 = vmatpush1.msra.mxu0 0.0
      %2827 = vmatprep.subr.mxu0 0.0
      %2828 = vmatpush1.msra.mxu0 0.0
      %2829 = vmatprep.subr.mxu0 0.0
      %2830 = vmatpush1.msra.mxu0 0.0
      %2831 = vmatprep.subr.mxu0 0.0
      %2832 = vmatpush1.msra.mxu0 0.0
      %2833 = vmatprep.subr.mxu0 0.0
      %2834 = vmatpush1.msra.mxu0 0.0
      %2835 = vmatprep.subr.mxu0 0.0
      %2836 = vmatpush1.msra.mxu0 0.0
      %2837 = vmatprep.subr.mxu0 0.0
      %2838 = vmatpush1.msra.mxu0 0.0
      %2839 = vmatprep.subr.mxu0 0.0
      %2840 = vmatpush1.msra.mxu0 0.0
      %2841 = vmatprep.mubr.f32.mxu0 0.0
      %2842 = vmatmul.mubr.f32.gmra.mrb[0].mxu0 %v1583
      %v2843 = vpop.f32.mrb[0].mxu0
      %v2844 = vadd.f32 0.0, %v2843
      %v2845 = vpop.f32.mrb[0].mxu0
      %2846 = vdwg.mxu0
      %s2847 = scalar_lea.vmem %s2, 68
      %v2848 = vld [vmem:[%s2847] sm:$0xf]
      %v2850 = vsel %vm278, %v2848, 0
      %v2853 = vsel %vm282, %v2844, 0
      %2855 = vmatprep.subr.mxu0 0.0
      %2856 = vmatpush1.msra.mxu0 %v2853
      %2857 = vmatprep.subr.mxu0 0.0
      %2858 = vmatpush1.msra.mxu0 0.0
      %2859 = vmatprep.subr.mxu0 0.0
      %2860 = vmatpush1.msra.mxu0 0.0
      %2861 = vmatprep.subr.mxu0 0.0
      %2862 = vmatpush1.msra.mxu0 0.0
      %2863 = vmatprep.subr.mxu0 0.0
      %2864 = vmatpush1.msra.mxu0 0.0
      %2865 = vmatprep.subr.mxu0 0.0
      %2866 = vmatpush1.msra.mxu0 0.0
      %2867 = vmatprep.subr.mxu0 0.0
      %2868 = vmatpush1.msra.mxu0 0.0
      %2869 = vmatprep.subr.mxu0 0.0
      %2870 = vmatpush1.msra.mxu0 0.0
      %2871 = vmatprep.subr.mxu0 0.0
      %2872 = vmatpush1.msra.mxu0 0.0
      %2873 = vmatprep.subr.mxu0 0.0
      %2874 = vmatpush1.msra.mxu0 0.0
      %2875 = vmatprep.subr.mxu0 0.0
      %2876 = vmatpush1.msra.mxu0 0.0
      %2877 = vmatprep.subr.mxu0 0.0
      %2878 = vmatpush1.msra.mxu0 0.0
      %2879 = vmatprep.subr.mxu0 0.0
      %2880 = vmatpush1.msra.mxu0 0.0
      %2881 = vmatprep.subr.mxu0 0.0
      %2882 = vmatpush1.msra.mxu0 0.0
      %2883 = vmatprep.subr.mxu0 0.0
      %2884 = vmatpush1.msra.mxu0 0.0
      %2885 = vmatprep.subr.mxu0 0.0
      %2886 = vmatpush1.msra.mxu0 0.0
      %2887 = vmatprep.subr.mxu0 0.0
      %2888 = vmatpush1.msra.mxu0 0.0
      %2889 = vmatprep.subr.mxu0 0.0
      %2890 = vmatpush1.msra.mxu0 0.0
      %2891 = vmatprep.subr.mxu0 0.0
      %2892 = vmatpush1.msra.mxu0 0.0
      %2893 = vmatprep.subr.mxu0 0.0
      %2894 = vmatpush1.msra.mxu0 0.0
      %2895 = vmatprep.subr.mxu0 0.0
      %2896 = vmatpush1.msra.mxu0 0.0
      %2897 = vmatprep.subr.mxu0 0.0
      %2898 = vmatpush1.msra.mxu0 0.0
      %2899 = vmatprep.subr.mxu0 0.0
      %2900 = vmatpush1.msra.mxu0 0.0
      %2901 = vmatprep.subr.mxu0 0.0
      %2902 = vmatpush1.msra.mxu0 0.0
      %2903 = vmatprep.subr.mxu0 0.0
      %2904 = vmatpush1.msra.mxu0 0.0
      %2905 = vmatprep.subr.mxu0 0.0
      %2906 = vmatpush1.msra.mxu0 0.0
      %2907 = vmatprep.subr.mxu0 0.0
      %2908 = vmatpush1.msra.mxu0 0.0
      %2909 = vmatprep.subr.mxu0 0.0
      %2910 = vmatpush1.msra.mxu0 0.0
      %2911 = vmatprep.subr.mxu0 0.0
      %2912 = vmatpush1.msra.mxu0 0.0
      %2913 = vmatprep.subr.mxu0 0.0
      %2914 = vmatpush1.msra.mxu0 0.0
      %2915 = vmatprep.subr.mxu0 0.0
      %2916 = vmatpush1.msra.mxu0 0.0
      %2917 = vmatprep.subr.mxu0 0.0
      %2918 = vmatpush1.msra.mxu0 0.0
      %2919 = vmatprep.mubr.f32.mxu0 0.0
      %2920 = vmatmul.mubr.f32.gmra.mrb[0].mxu0 %v2850
      %v2921 = vpop.f32.mrb[0].mxu0
      %v2922 = vadd.f32 0.0, %v2921
      %v2923 = vpop.f32.mrb[0].mxu0
      %2924 = vdwg.mxu0
      %v2925 = vadd.f32 %v2776, %v2922
      %v2926 = vmax.f32 %v2925, 0.0
      %s2927 = scalar_lea.vmem %s3, 8
      %v2928 = vld [vmem:[%s2927] sm:$0xf]
      %2930 = vset.pattern.permute.xlu0 0
      %2931 = vperm.xlu0 %2930, %v2928
      %v2932 = vpop.permute.xlu0 %2931
      %v2934 = vadd.f32 %v2932, 0.0
      %v2936 = vsel %vm203, %v2926, 0
      %2938 = vmatprep.subr.mxu0 0.0
      %2939 = vmatpush1.msra.mxu0 %v201
      %2940 = vmatprep.subr.mxu0 0.0
      %2941 = vmatpush1.msra.mxu0 %v202
      %2942 = vmatprep.subr.mxu0 0.0
      %2943 = vmatpush1.msra.mxu0 0.0
      %2944 = vmatprep.subr.mxu0 0.0
      %2945 = vmatpush1.msra.mxu0 0.0
      %2946 = vmatprep.subr.mxu0 0.0
      %2947 = vmatpush1.msra.mxu0 0.0
      %2948 = vmatprep.subr.mxu0 0.0
      %2949 = vmatpush1.msra.mxu0 0.0
      %2950 = vmatprep.subr.mxu0 0.0
      %2951 = vmatpush1.msra.mxu0 0.0
      %2952 = vmatprep.subr.mxu0 0.0
      %2953 = vmatpush1.msra.mxu0 0.0
      %2954 = vmatprep.subr.mxu0 0.0
      %2955 = vmatpush1.msra.mxu0 0.0
      %2956 = vmatprep.subr.mxu0 0.0
      %2957 = vmatpush1.msra.mxu0 0.0
      %2958 = vmatprep.subr.mxu0 0.0
      %2959 = vmatpush1.msra.mxu0 0.0
      %2960 = vmatprep.subr.mxu0 0.0
      %2961 = vmatpush1.msra.mxu0 0.0
      %2962 = vmatprep.subr.mxu0 0.0
      %2963 = vmatpush1.msra.mxu0 0.0
      %2964 = vmatprep.subr.mxu0 0.0
      %2965 = vmatpush1.msra.mxu0 0.0
      %2966 = vmatprep.subr.mxu0 0.0
      %2967 = vmatpush1.msra.mxu0 0.0
      %2968 = vmatprep.subr.mxu0 0.0
      %2969 = vmatpush1.msra.mxu0 0.0
      %2970 = vmatprep.subr.mxu0 0.0
      %2971 = vmatpush1.msra.mxu0 0.0
      %2972 = vmatprep.subr.mxu0 0.0
      %2973 = vmatpush1.msra.mxu0 0.0
      %2974 = vmatprep.subr.mxu0 0.0
      %2975 = vmatpush1.msra.mxu0 0.0
      %2976 = vmatprep.subr.mxu0 0.0
      %2977 = vmatpush1.msra.mxu0 0.0
      %2978 = vmatprep.subr.mxu0 0.0
      %2979 = vmatpush1.msra.mxu0 0.0
      %2980 = vmatprep.subr.mxu0 0.0
      %2981 = vmatpush1.msra.mxu0 0.0
      %2982 = vmatprep.subr.mxu0 0.0
      %2983 = vmatpush1.msra.mxu0 0.0
      %2984 = vmatprep.subr.mxu0 0.0
      %2985 = vmatpush1.msra.mxu0 0.0
      %2986 = vmatprep.subr.mxu0 0.0
      %2987 = vmatpush1.msra.mxu0 0.0
      %2988 = vmatprep.subr.mxu0 0.0
      %2989 = vmatpush1.msra.mxu0 0.0
      %2990 = vmatprep.subr.mxu0 0.0
      %2991 = vmatpush1.msra.mxu0 0.0
      %2992 = vmatprep.subr.mxu0 0.0
      %2993 = vmatpush1.msra.mxu0 0.0
      %2994 = vmatprep.subr.mxu0 0.0
      %2995 = vmatpush1.msra.mxu0 0.0
      %2996 = vmatprep.subr.mxu0 0.0
      %2997 = vmatpush1.msra.mxu0 0.0
      %2998 = vmatprep.subr.mxu0 0.0
      %2999 = vmatpush1.msra.mxu0 0.0
      %3000 = vmatprep.subr.mxu0 0.0
      %3001 = vmatpush1.msra.mxu0 0.0
      %3002 = vmatprep.mubr.f32.mxu0 0.0
      %3003 = vmatmul.mubr.f32.gmra.mrb[0].mxu0 %v2936
      %v3004 = vpop.f32.mrb[0].mxu0
      %v3005 = vadd.f32 0.0, %v3004
      %v3006 = vpop.f32.mrb[0].mxu0
      %3007 = vdwg.mxu0
      %s3008 = scalar_lea.vmem %s2, 72
      %v3009 = vld [vmem:[%s3008] sm:$0xf]
      %v3011 = vsel %vm278, %v3009, 0
      %v3014 = vsel %vm282, %v3005, 0
      %3016 = vmatprep.subr.mxu0 0.0
      %3017 = vmatpush1.msra.mxu0 %v3014
      %3018 = vmatprep.subr.mxu0 0.0
      %3019 = vmatpush1.msra.mxu0 0.0
      %3020 = vmatprep.subr.mxu0 0.0
      %3021 = vmatpush1.msra.mxu0 0.0
      %3022 = vmatprep.subr.mxu0 0.0
      %3023 = vmatpush1.msra.mxu0 0.0
      %3024 = vmatprep.subr.mxu0 0.0
      %3025 = vmatpush1.msra.mxu0 0.0
      %3026 = vmatprep.subr.mxu0 0.0
      %3027 = vmatpush1.msra.mxu0 0.0
      %3028 = vmatprep.subr.mxu0 0.0
      %3029 = vmatpush1.msra.mxu0 0.0
      %3030 = vmatprep.subr.mxu0 0.0
      %3031 = vmatpush1.msra.mxu0 0.0
      %3032 = vmatprep.subr.mxu0 0.0
      %3033 = vmatpush1.msra.mxu0 0.0
      %3034 = vmatprep.subr.mxu0 0.0
      %3035 = vmatpush1.msra.mxu0 0.0
      %3036 = vmatprep.subr.mxu0 0.0
      %3037 = vmatpush1.msra.mxu0 0.0
      %3038 = vmatprep.subr.mxu0 0.0
      %3039 = vmatpush1.msra.mxu0 0.0
      %3040 = vmatprep.subr.mxu0 0.0
      %3041 = vmatpush1.msra.mxu0 0.0
      %3042 = vmatprep.subr.mxu0 0.0
      %3043 = vmatpush1.msra.mxu0 0.0
      %3044 = vmatprep.subr.mxu0 0.0
      %3045 = vmatpush1.msra.mxu0 0.0
      %3046 = vmatprep.subr.mxu0 0.0
      %3047 = vmatpush1.msra.mxu0 0.0
      %3048 = vmatprep.subr.mxu0 0.0
      %3049 = vmatpush1.msra.mxu0 0.0
      %3050 = vmatprep.subr.mxu0 0.0
      %3051 = vmatpush1.msra.mxu0 0.0
      %3052 = vmatprep.subr.mxu0 0.0
      %3053 = vmatpush1.msra.mxu0 0.0
      %3054 = vmatprep.subr.mxu0 0.0
      %3055 = vmatpush1.msra.mxu0 0.0
      %3056 = vmatprep.subr.mxu0 0.0
      %3057 = vmatpush1.msra.mxu0 0.0
      %3058 = vmatprep.subr.mxu0 0.0
      %3059 = vmatpush1.msra.mxu0 0.0
      %3060 = vmatprep.subr.mxu0 0.0
      %3061 = vmatpush1.msra.mxu0 0.0
      %3062 = vmatprep.subr.mxu0 0.0
      %3063 = vmatpush1.msra.mxu0 0.0
      %3064 = vmatprep.subr.mxu0 0.0
      %3065 = vmatpush1.msra.mxu0 0.0
      %3066 = vmatprep.subr.mxu0 0.0
      %3067 = vmatpush1.msra.mxu0 0.0
      %3068 = vmatprep.subr.mxu0 0.0
      %3069 = vmatpush1.msra.mxu0 0.0
      %3070 = vmatprep.subr.mxu0 0.0
      %3071 = vmatpush1.msra.mxu0 0.0
      %3072 = vmatprep.subr.mxu0 0.0
      %3073 = vmatpush1.msra.mxu0 0.0
      %3074 = vmatprep.subr.mxu0 0.0
      %3075 = vmatpush1.msra.mxu0 0.0
      %3076 = vmatprep.subr.mxu0 0.0
      %3077 = vmatpush1.msra.mxu0 0.0
      %3078 = vmatprep.subr.mxu0 0.0
      %3079 = vmatpush1.msra.mxu0 0.0
      %3080 = vmatprep.mubr.f32.mxu0 0.0
      %3081 = vmatmul.mubr.f32.gmra.mrb[0].mxu0 %v3011
      %v3082 = vpop.f32.mrb[0].mxu0
      %v3083 = vadd.f32 0.0, %v3082
      %v3084 = vpop.f32.mrb[0].mxu0
      %3085 = vdwg.mxu0
      %v3086 = vadd.f32 %v2934, %v3083
      %3087 = vmatprep.subr.mxu0 0.0
      %3088 = vmatpush1.msra.mxu0 %v358
      %3089 = vmatprep.subr.mxu0 0.0
      %3090 = vmatpush1.msra.mxu0 %v359
      %3091 = vmatprep.subr.mxu0 0.0
      %3092 = vmatpush1.msra.mxu0 0.0
      %3093 = vmatprep.subr.mxu0 0.0
      %3094 = vmatpush1.msra.mxu0 0.0
      %3095 = vmatprep.subr.mxu0 0.0
      %3096 = vmatpush1.msra.mxu0 0.0
      %3097 = vmatprep.subr.mxu0 0.0
      %3098 = vmatpush1.msra.mxu0 0.0
      %3099 = vmatprep.subr.mxu0 0.0
      %3100 = vmatpush1.msra.mxu0 0.0
      %3101 = vmatprep.subr.mxu0 0.0
      %3102 = vmatpush1.msra.mxu0 0.0
      %3103 = vmatprep.subr.mxu0 0.0
      %3104 = vmatpush1.msra.mxu0 0.0
      %3105 = vmatprep.subr.mxu0 0.0
      %3106 = vmatpush1.msra.mxu0 0.0
      %3107 = vmatprep.subr.mxu0 0.0
      %3108 = vmatpush1.msra.mxu0 0.0
      %3109 = vmatprep.subr.mxu0 0.0
      %3110 = vmatpush1.msra.mxu0 0.0
      %3111 = vmatprep.subr.mxu0 0.0
      %3112 = vmatpush1.msra.mxu0 0.0
      %3113 = vmatprep.subr.mxu0 0.0
      %3114 = vmatpush1.msra.mxu0 0.0
      %3115 = vmatprep.subr.mxu0 0.0
      %3116 = vmatpush1.msra.mxu0 0.0
      %3117 = vmatprep.subr.mxu0 0.0
      %3118 = vmatpush1.msra.mxu0 0.0
      %3119 = vmatprep.subr.mxu0 0.0
      %3120 = vmatpush1.msra.mxu0 0.0
      %3121 = vmatprep.subr.mxu0 0.0
      %3122 = vmatpush1.msra.mxu0 0.0
      %3123 = vmatprep.subr.mxu0 0.0
      %3124 = vmatpush1.msra.mxu0 0.0
      %3125 = vmatprep.subr.mxu0 0.0
      %3126 = vmatpush1.msra.mxu0 0.0
      %3127 = vmatprep.subr.mxu0 0.0
      %3128 = vmatpush1.msra.mxu0 0.0
      %3129 = vmatprep.subr.mxu0 0.0
      %3130 = vmatpush1.msra.mxu0 0.0
      %3131 = vmatprep.subr.mxu0 0.0
      %3132 = vmatpush1.msra.mxu0 0.0
      %3133 = vmatprep.subr.mxu0 0.0
      %3134 = vmatpush1.msra.mxu0 0.0
      %3135 = vmatprep.subr.mxu0 0.0
      %3136 = vmatpush1.msra.mxu0 0.0
      %3137 = vmatprep.subr.mxu0 0.0
      %3138 = vmatpush1.msra.mxu0 0.0
      %3139 = vmatprep.subr.mxu0 0.0
      %3140 = vmatpush1.msra.mxu0 0.0
      %3141 = vmatprep.subr.mxu0 0.0
      %3142 = vmatpush1.msra.mxu0 0.0
      %3143 = vmatprep.subr.mxu0 0.0
      %3144 = vmatpush1.msra.mxu0 0.0
      %3145 = vmatprep.subr.mxu0 0.0
      %3146 = vmatpush1.msra.mxu0 0.0
      %3147 = vmatprep.subr.mxu0 0.0
      %3148 = vmatpush1.msra.mxu0 0.0
      %3149 = vmatprep.subr.mxu0 0.0
      %3150 = vmatpush1.msra.mxu0 0.0
      %3151 = vmatprep.mubr.f32.mxu0 0.0
      %3152 = vmatmul.mubr.f32.gmra.mrb[0].mxu0 %v2936
      %v3153 = vpop.f32.mrb[0].mxu0
      %v3154 = vadd.f32 0.0, %v3153
      %v3155 = vpop.f32.mrb[0].mxu0
      %3156 = vdwg.mxu0
      %s3157 = scalar_lea.vmem %s2, 76
      %v3158 = vld [vmem:[%s3157] sm:$0xf]
      %v3160 = vsel %vm278, %v3158, 0
      %v3163 = vsel %vm282, %v3154, 0
      %3165 = vmatprep.subr.mxu0 0.0
      %3166 = vmatpush1.msra.mxu0 %v3163
      %3167 = vmatprep.subr.mxu0 0.0
      %3168 = vmatpush1.msra.mxu0 0.0
      %3169 = vmatprep.subr.mxu0 0.0
      %3170 = vmatpush1.msra.mxu0 0.0
      %3171 = vmatprep.subr.mxu0 0.0
      %3172 = vmatpush1.msra.mxu0 0.0
      %3173 = vmatprep.subr.mxu0 0.0
      %3174 = vmatpush1.msra.mxu0 0.0
      %3175 = vmatprep.subr.mxu0 0.0
      %3176 = vmatpush1.msra.mxu0 0.0
      %3177 = vmatprep.subr.mxu0 0.0
      %3178 = vmatpush1.msra.mxu0 0.0
      %3179 = vmatprep.subr.mxu0 0.0
      %3180 = vmatpush1.msra.mxu0 0.0
      %3181 = vmatprep.subr.mxu0 0.0
      %3182 = vmatpush1.msra.mxu0 0.0
      %3183 = vmatprep.subr.mxu0 0.0
      %3184 = vmatpush1.msra.mxu0 0.0
      %3185 = vmatprep.subr.mxu0 0.0
      %3186 = vmatpush1.msra.mxu0 0.0
      %3187 = vmatprep.subr.mxu0 0.0
      %3188 = vmatpush1.msra.mxu0 0.0
      %3189 = vmatprep.subr.mxu0 0.0
      %3190 = vmatpush1.msra.mxu0 0.0
      %3191 = vmatprep.subr.mxu0 0.0
      %3192 = vmatpush1.msra.mxu0 0.0
      %3193 = vmatprep.subr.mxu0 0.0
      %3194 = vmatpush1.msra.mxu0 0.0
      %3195 = vmatprep.subr.mxu0 0.0
      %3196 = vmatpush1.msra.mxu0 0.0
      %3197 = vmatprep.subr.mxu0 0.0
      %3198 = vmatpush1.msra.mxu0 0.0
      %3199 = vmatprep.subr.mxu0 0.0
      %3200 = vmatpush1.msra.mxu0 0.0
      %3201 = vmatprep.subr.mxu0 0.0
      %3202 = vmatpush1.msra.mxu0 0.0
      %3203 = vmatprep.subr.mxu0 0.0
      %3204 = vmatpush1.msra.mxu0 0.0
      %3205 = vmatprep.subr.mxu0 0.0
      %3206 = vmatpush1.msra.mxu0 0.0
      %3207 = vmatprep.subr.mxu0 0.0
      %3208 = vmatpush1.msra.mxu0 0.0
      %3209 = vmatprep.subr.mxu0 0.0
      %3210 = vmatpush1.msra.mxu0 0.0
      %3211 = vmatprep.subr.mxu0 0.0
      %3212 = vmatpush1.msra.mxu0 0.0
      %3213 = vmatprep.subr.mxu0 0.0
      %3214 = vmatpush1.msra.mxu0 0.0
      %3215 = vmatprep.subr.mxu0 0.0
      %3216 = vmatpush1.msra.mxu0 0.0
      %3217 = vmatprep.subr.mxu0 0.0
      %3218 = vmatpush1.msra.mxu0 0.0
      %3219 = vmatprep.subr.mxu0 0.0
      %3220 = vmatpush1.msra.mxu0 0.0
      %3221 = vmatprep.subr.mxu0 0.0
      %3222 = vmatpush1.msra.mxu0 0.0
      %3223 = vmatprep.subr.mxu0 0.0
      %3224 = vmatpush1.msra.mxu0 0.0
      %3225 = vmatprep.subr.mxu0 0.0
      %3226 = vmatpush1.msra.mxu0 0.0
      %3227 = vmatprep.subr.mxu0 0.0
      %3228 = vmatpush1.msra.mxu0 0.0
      %3229 = vmatprep.mubr.f32.mxu0 0.0
      %3230 = vmatmul.mubr.f32.gmra.mrb[0].mxu0 %v3160
      %v3231 = vpop.f32.mrb[0].mxu0
      %v3232 = vadd.f32 0.0, %v3231
      %v3233 = vpop.f32.mrb[0].mxu0
      %3234 = vdwg.mxu0
      %v3235 = vadd.f32 %v3086, %v3232
      %3236 = vmatprep.subr.mxu0 0.0
      %3237 = vmatpush1.msra.mxu0 %v510
      %3238 = vmatprep.subr.mxu0 0.0
      %3239 = vmatpush1.msra.mxu0 %v511
      %3240 = vmatprep.subr.mxu0 0.0
      %3241 = vmatpush1.msra.mxu0 0.0
      %3242 = vmatprep.subr.mxu0 0.0
      %3243 = vmatpush1.msra.mxu0 0.0
      %3244 = vmatprep.subr.mxu0 0.0
      %3245 = vmatpush1.msra.mxu0 0.0
      %3246 = vmatprep.subr.mxu0 0.0
      %3247 = vmatpush1.msra.mxu0 0.0
      %3248 = vmatprep.subr.mxu0 0.0
      %3249 = vmatpush1.msra.mxu0 0.0
      %3250 = vmatprep.subr.mxu0 0.0
      %3251 = vmatpush1.msra.mxu0 0.0
      %3252 = vmatprep.subr.mxu0 0.0
      %3253 = vmatpush1.msra.mxu0 0.0
      %3254 = vmatprep.subr.mxu0 0.0
      %3255 = vmatpush1.msra.mxu0 0.0
      %3256 = vmatprep.subr.mxu0 0.0
      %3257 = vmatpush1.msra.mxu0 0.0
      %3258 = vmatprep.subr.mxu0 0.0
      %3259 = vmatpush1.msra.mxu0 0.0
      %3260 = vmatprep.subr.mxu0 0.0
      %3261 = vmatpush1.msra.mxu0 0.0
      %3262 = vmatprep.subr.mxu0 0.0
      %3263 = vmatpush1.msra.mxu0 0.0
      %3264 = vmatprep.subr.mxu0 0.0
      %3265 = vmatpush1.msra.mxu0 0.0
      %3266 = vmatprep.subr.mxu0 0.0
      %3267 = vmatpush1.msra.mxu0 0.0
      %3268 = vmatprep.subr.mxu0 0.0
      %3269 = vmatpush1.msra.mxu0 0.0
      %3270 = vmatprep.subr.mxu0 0.0
      %3271 = vmatpush1.msra.mxu0 0.0
      %3272 = vmatprep.subr.mxu0 0.0
      %3273 = vmatpush1.msra.mxu0 0.0
      %3274 = vmatprep.subr.mxu0 0.0
      %3275 = vmatpush1.msra.mxu0 0.0
      %3276 = vmatprep.subr.mxu0 0.0
      %3277 = vmatpush1.msra.mxu0 0.0
      %3278 = vmatprep.subr.mxu0 0.0
      %3279 = vmatpush1.msra.mxu0 0.0
      %3280 = vmatprep.subr.mxu0 0.0
      %3281 = vmatpush1.msra.mxu0 0.0
      %3282 = vmatprep.subr.mxu0 0.0
      %3283 = vmatpush1.msra.mxu0 0.0
      %3284 = vmatprep.subr.mxu0 0.0
      %3285 = vmatpush1.msra.mxu0 0.0
      %3286 = vmatprep.subr.mxu0 0.0
      %3287 = vmatpush1.msra.mxu0 0.0
      %3288 = vmatprep.subr.mxu0 0.0
      %3289 = vmatpush1.msra.mxu0 0.0
      %3290 = vmatprep.subr.mxu0 0.0
      %3291 = vmatpush1.msra.mxu0 0.0
      %3292 = vmatprep.subr.mxu0 0.0
      %3293 = vmatpush1.msra.mxu0 0.0
      %3294 = vmatprep.subr.mxu0 0.0
      %3295 = vmatpush1.msra.mxu0 0.0
      %3296 = vmatprep.subr.mxu0 0.0
      %3297 = vmatpush1.msra.mxu0 0.0
      %3298 = vmatprep.subr.mxu0 0.0
      %3299 = vmatpush1.msra.mxu0 0.0
      %3300 = vmatprep.mubr.f32.mxu0 0.0
      %3301 = vmatmul.mubr.f32.gmra.mrb[0].mxu0 %v2936
      %v3302 = vpop.f32.mrb[0].mxu0
      %v3303 = vadd.f32 0.0, %v3302
      %v3304 = vpop.f32.mrb[0].mxu0
      %3305 = vdwg.mxu0
      %s3306 = scalar_lea.vmem %s2, 80
      %v3307 = vld [vmem:[%s3306] sm:$0xf]
      %v3309 = vsel %vm278, %v3307, 0
      %v3312 = vsel %vm282, %v3303, 0
      %3314 = vmatprep.subr.mxu0 0.0
      %3315 = vmatpush1.msra.mxu0 %v3312
      %3316 = vmatprep.subr.mxu0 0.0
      %3317 = vmatpush1.msra.mxu0 0.0
      %3318 = vmatprep.subr.mxu0 0.0
      %3319 = vmatpush1.msra.mxu0 0.0
      %3320 = vmatprep.subr.mxu0 0.0
      %3321 = vmatpush1.msra.mxu0 0.0
      %3322 = vmatprep.subr.mxu0 0.0
      %3323 = vmatpush1.msra.mxu0 0.0
      %3324 = vmatprep.subr.mxu0 0.0
      %3325 = vmatpush1.msra.mxu0 0.0
      %3326 = vmatprep.subr.mxu0 0.0
      %3327 = vmatpush1.msra.mxu0 0.0
      %3328 = vmatprep.subr.mxu0 0.0
      %3329 = vmatpush1.msra.mxu0 0.0
      %3330 = vmatprep.subr.mxu0 0.0
      %3331 = vmatpush1.msra.mxu0 0.0
      %3332 = vmatprep.subr.mxu0 0.0
      %3333 = vmatpush1.msra.mxu0 0.0
      %3334 = vmatprep.subr.mxu0 0.0
      %3335 = vmatpush1.msra.mxu0 0.0
      %3336 = vmatprep.subr.mxu0 0.0
      %3337 = vmatpush1.msra.mxu0 0.0
      %3338 = vmatprep.subr.mxu0 0.0
      %3339 = vmatpush1.msra.mxu0 0.0
      %3340 = vmatprep.subr.mxu0 0.0
      %3341 = vmatpush1.msra.mxu0 0.0
      %3342 = vmatprep.subr.mxu0 0.0
      %3343 = vmatpush1.msra.mxu0 0.0
      %3344 = vmatprep.subr.mxu0 0.0
      %3345 = vmatpush1.msra.mxu0 0.0
      %3346 = vmatprep.subr.mxu0 0.0
      %3347 = vmatpush1.msra.mxu0 0.0
      %3348 = vmatprep.subr.mxu0 0.0
      %3349 = vmatpush1.msra.mxu0 0.0
      %3350 = vmatprep.subr.mxu0 0.0
      %3351 = vmatpush1.msra.mxu0 0.0
      %3352 = vmatprep.subr.mxu0 0.0
      %3353 = vmatpush1.msra.mxu0 0.0
      %3354 = vmatprep.subr.mxu0 0.0
      %3355 = vmatpush1.msra.mxu0 0.0
      %3356 = vmatprep.subr.mxu0 0.0
      %3357 = vmatpush1.msra.mxu0 0.0
      %3358 = vmatprep.subr.mxu0 0.0
      %3359 = vmatpush1.msra.mxu0 0.0
      %3360 = vmatprep.subr.mxu0 0.0
      %3361 = vmatpush1.msra.mxu0 0.0
      %3362 = vmatprep.subr.mxu0 0.0
      %3363 = vmatpush1.msra.mxu0 0.0
      %3364 = vmatprep.subr.mxu0 0.0
      %3365 = vmatpush1.msra.mxu0 0.0
      %3366 = vmatprep.subr.mxu0 0.0
      %3367 = vmatpush1.msra.mxu0 0.0
      %3368 = vmatprep.subr.mxu0 0.0
      %3369 = vmatpush1.msra.mxu0 0.0
      %3370 = vmatprep.subr.mxu0 0.0
      %3371 = vmatpush1.msra.mxu0 0.0
      %3372 = vmatprep.subr.mxu0 0.0
      %3373 = vmatpush1.msra.mxu0 0.0
      %3374 = vmatprep.subr.mxu0 0.0
      %3375 = vmatpush1.msra.mxu0 0.0
      %3376 = vmatprep.subr.mxu0 0.0
      %3377 = vmatpush1.msra.mxu0 0.0
      %3378 = vmatprep.mubr.f32.mxu0 0.0
      %3379 = vmatmul.mubr.f32.gmra.mrb[0].mxu0 %v3309
      %v3380 = vpop.f32.mrb[0].mxu0
      %v3381 = vadd.f32 0.0, %v3380
      %v3382 = vpop.f32.mrb[0].mxu0
      %3383 = vdwg.mxu0
      %v3384 = vadd.f32 %v3235, %v3381
      %3385 = vmatprep.subr.mxu0 0.0
      %3386 = vmatpush1.msra.mxu0 %v662
      %3387 = vmatprep.subr.mxu0 0.0
      %3388 = vmatpush1.msra.mxu0 %v663
      %3389 = vmatprep.subr.mxu0 0.0
      %3390 = vmatpush1.msra.mxu0 0.0
      %3391 = vmatprep.subr.mxu0 0.0
      %3392 = vmatpush1.msra.mxu0 0.0
      %3393 = vmatprep.subr.mxu0 0.0
      %3394 = vmatpush1.msra.mxu0 0.0
      %3395 = vmatprep.subr.mxu0 0.0
      %3396 = vmatpush1.msra.mxu0 0.0
      %3397 = vmatprep.subr.mxu0 0.0
      %3398 = vmatpush1.msra.mxu0 0.0
      %3399 = vmatprep.subr.mxu0 0.0
      %3400 = vmatpush1.msra.mxu0 0.0
      %3401 = vmatprep.subr.mxu0 0.0
      %3402 = vmatpush1.msra.mxu0 0.0
      %3403 = vmatprep.subr.mxu0 0.0
      %3404 = vmatpush1.msra.mxu0 0.0
      %3405 = vmatprep.subr.mxu0 0.0
      %3406 = vmatpush1.msra.mxu0 0.0
      %3407 = vmatprep.subr.mxu0 0.0
      %3408 = vmatpush1.msra.mxu0 0.0
      %3409 = vmatprep.subr.mxu0 0.0
      %3410 = vmatpush1.msra.mxu0 0.0
      %3411 = vmatprep.subr.mxu0 0.0
      %3412 = vmatpush1.msra.mxu0 0.0
      %3413 = vmatprep.subr.mxu0 0.0
      %3414 = vmatpush1.msra.mxu0 0.0
      %3415 = vmatprep.subr.mxu0 0.0
      %3416 = vmatpush1.msra.mxu0 0.0
      %3417 = vmatprep.subr.mxu0 0.0
      %3418 = vmatpush1.msra.mxu0 0.0
      %3419 = vmatprep.subr.mxu0 0.0
      %3420 = vmatpush1.msra.mxu0 0.0
      %3421 = vmatprep.subr.mxu0 0.0
      %3422 = vmatpush1.msra.mxu0 0.0
      %3423 = vmatprep.subr.mxu0 0.0
      %3424 = vmatpush1.msra.mxu0 0.0
      %3425 = vmatprep.subr.mxu0 0.0
      %3426 = vmatpush1.msra.mxu0 0.0
      %3427 = vmatprep.subr.mxu0 0.0
      %3428 = vmatpush1.msra.mxu0 0.0
      %3429 = vmatprep.subr.mxu0 0.0
      %3430 = vmatpush1.msra.mxu0 0.0
      %3431 = vmatprep.subr.mxu0 0.0
      %3432 = vmatpush1.msra.mxu0 0.0
      %3433 = vmatprep.subr.mxu0 0.0
      %3434 = vmatpush1.msra.mxu0 0.0
      %3435 = vmatprep.subr.mxu0 0.0
      %3436 = vmatpush1.msra.mxu0 0.0
      %3437 = vmatprep.subr.mxu0 0.0
      %3438 = vmatpush1.msra.mxu0 0.0
      %3439 = vmatprep.subr.mxu0 0.0
      %3440 = vmatpush1.msra.mxu0 0.0
      %3441 = vmatprep.subr.mxu0 0.0
      %3442 = vmatpush1.msra.mxu0 0.0
      %3443 = vmatprep.subr.mxu0 0.0
      %3444 = vmatpush1.msra.mxu0 0.0
      %3445 = vmatprep.subr.mxu0 0.0
      %3446 = vmatpush1.msra.mxu0 0.0
      %3447 = vmatprep.subr.mxu0 0.0
      %3448 = vmatpush1.msra.mxu0 0.0
      %3449 = vmatprep.mubr.f32.mxu0 0.0
      %3450 = vmatmul.mubr.f32.gmra.mrb[0].mxu0 %v2936
      %v3451 = vpop.f32.mrb[0].mxu0
      %v3452 = vadd.f32 0.0, %v3451
      %v3453 = vpop.f32.mrb[0].mxu0
      %3454 = vdwg.mxu0
      %s3455 = scalar_lea.vmem %s2, 84
      %v3456 = vld [vmem:[%s3455] sm:$0xf]
      %v3458 = vsel %vm278, %v3456, 0
      %v3461 = vsel %vm282, %v3452, 0
      %3463 = vmatprep.subr.mxu0 0.0
      %3464 = vmatpush1.msra.mxu0 %v3461
      %3465 = vmatprep.subr.mxu0 0.0
      %3466 = vmatpush1.msra.mxu0 0.0
      %3467 = vmatprep.subr.mxu0 0.0
      %3468 = vmatpush1.msra.mxu0 0.0
      %3469 = vmatprep.subr.mxu0 0.0
      %3470 = vmatpush1.msra.mxu0 0.0
      %3471 = vmatprep.subr.mxu0 0.0
      %3472 = vmatpush1.msra.mxu0 0.0
      %3473 = vmatprep.subr.mxu0 0.0
      %3474 = vmatpush1.msra.mxu0 0.0
      %3475 = vmatprep.subr.mxu0 0.0
      %3476 = vmatpush1.msra.mxu0 0.0
      %3477 = vmatprep.subr.mxu0 0.0
      %3478 = vmatpush1.msra.mxu0 0.0
      %3479 = vmatprep.subr.mxu0 0.0
      %3480 = vmatpush1.msra.mxu0 0.0
      %3481 = vmatprep.subr.mxu0 0.0
      %3482 = vmatpush1.msra.mxu0 0.0
      %3483 = vmatprep.subr.mxu0 0.0
      %3484 = vmatpush1.msra.mxu0 0.0
      %3485 = vmatprep.subr.mxu0 0.0
      %3486 = vmatpush1.msra.mxu0 0.0
      %3487 = vmatprep.subr.mxu0 0.0
      %3488 = vmatpush1.msra.mxu0 0.0
      %3489 = vmatprep.subr.mxu0 0.0
      %3490 = vmatpush1.msra.mxu0 0.0
      %3491 = vmatprep.subr.mxu0 0.0
      %3492 = vmatpush1.msra.mxu0 0.0
      %3493 = vmatprep.subr.mxu0 0.0
      %3494 = vmatpush1.msra.mxu0 0.0
      %3495 = vmatprep.subr.mxu0 0.0
      %3496 = vmatpush1.msra.mxu0 0.0
      %3497 = vmatprep.subr.mxu0 0.0
      %3498 = vmatpush1.msra.mxu0 0.0
      %3499 = vmatprep.subr.mxu0 0.0
      %3500 = vmatpush1.msra.mxu0 0.0
      %3501 = vmatprep.subr.mxu0 0.0
      %3502 = vmatpush1.msra.mxu0 0.0
      %3503 = vmatprep.subr.mxu0 0.0
      %3504 = vmatpush1.msra.mxu0 0.0
      %3505 = vmatprep.subr.mxu0 0.0
      %3506 = vmatpush1.msra.mxu0 0.0
      %3507 = vmatprep.subr.mxu0 0.0
      %3508 = vmatpush1.msra.mxu0 0.0
      %3509 = vmatprep.subr.mxu0 0.0
      %3510 = vmatpush1.msra.mxu0 0.0
      %3511 = vmatprep.subr.mxu0 0.0
      %3512 = vmatpush1.msra.mxu0 0.0
      %3513 = vmatprep.subr.mxu0 0.0
      %3514 = vmatpush1.msra.mxu0 0.0
      %3515 = vmatprep.subr.mxu0 0.0
      %3516 = vmatpush1.msra.mxu0 0.0
      %3517 = vmatprep.subr.mxu0 0.0
      %3518 = vmatpush1.msra.mxu0 0.0
      %3519 = vmatprep.subr.mxu0 0.0
      %3520 = vmatpush1.msra.mxu0 0.0
      %3521 = vmatprep.subr.mxu0 0.0
      %3522 = vmatpush1.msra.mxu0 0.0
      %3523 = vmatprep.subr.mxu0 0.0
      %3524 = vmatpush1.msra.mxu0 0.0
      %3525 = vmatprep.subr.mxu0 0.0
      %3526 = vmatpush1.msra.mxu0 0.0
      %3527 = vmatprep.mubr.f32.mxu0 0.0
      %3528 = vmatmul.mubr.f32.gmra.mrb[0].mxu0 %v3458
      %v3529 = vpop.f32.mrb[0].mxu0
      %v3530 = vadd.f32 0.0, %v3529
      %v3531 = vpop.f32.mrb[0].mxu0
      %3532 = vdwg.mxu0
      %v3533 = vadd.f32 %v3384, %v3530
      %3534 = vmatprep.subr.mxu0 0.0
      %3535 = vmatpush1.msra.mxu0 %v814
      %3536 = vmatprep.subr.mxu0 0.0
      %3537 = vmatpush1.msra.mxu0 %v815
      %3538 = vmatprep.subr.mxu0 0.0
      %3539 = vmatpush1.msra.mxu0 0.0
      %3540 = vmatprep.subr.mxu0 0.0
      %3541 = vmatpush1.msra.mxu0 0.0
      %3542 = vmatprep.subr.mxu0 0.0
      %3543 = vmatpush1.msra.mxu0 0.0
      %3544 = vmatprep.subr.mxu0 0.0
      %3545 = vmatpush1.msra.mxu0 0.0
      %3546 = vmatprep.subr.mxu0 0.0
      %3547 = vmatpush1.msra.mxu0 0.0
      %3548 = vmatprep.subr.mxu0 0.0
      %3549 = vmatpush1.msra.mxu0 0.0
      %3550 = vmatprep.subr.mxu0 0.0
      %3551 = vmatpush1.msra.mxu0 0.0
      %3552 = vmatprep.subr.mxu0 0.0
      %3553 = vmatpush1.msra.mxu0 0.0
      %3554 = vmatprep.subr.mxu0 0.0
      %3555 = vmatpush1.msra.mxu0 0.0
      %3556 = vmatprep.subr.mxu0 0.0
      %3557 = vmatpush1.msra.mxu0 0.0
      %3558 = vmatprep.subr.mxu0 0.0
      %3559 = vmatpush1.msra.mxu0 0.0
      %3560 = vmatprep.subr.mxu0 0.0
      %3561 = vmatpush1.msra.mxu0 0.0
      %3562 = vmatprep.subr.mxu0 0.0
      %3563 = vmatpush1.msra.mxu0 0.0
      %3564 = vmatprep.subr.mxu0 0.0
      %3565 = vmatpush1.msra.mxu0 0.0
      %3566 = vmatprep.subr.mxu0 0.0
      %3567 = vmatpush1.msra.mxu0 0.0
      %3568 = vmatprep.subr.mxu0 0.0
      %3569 = vmatpush1.msra.mxu0 0.0
      %3570 = vmatprep.subr.mxu0 0.0
      %3571 = vmatpush1.msra.mxu0 0.0
      %3572 = vmatprep.subr.mxu0 0.0
      %3573 = vmatpush1.msra.mxu0 0.0
      %3574 = vmatprep.subr.mxu0 0.0
      %3575 = vmatpush1.msra.mxu0 0.0
      %3576 = vmatprep.subr.mxu0 0.0
      %3577 = vmatpush1.msra.mxu0 0.0
      %3578 = vmatprep.subr.mxu0 0.0
      %3579 = vmatpush1.msra.mxu0 0.0
      %3580 = vmatprep.subr.mxu0 0.0
      %3581 = vmatpush1.msra.mxu0 0.0
      %3582 = vmatprep.subr.mxu0 0.0
      %3583 = vmatpush1.msra.mxu0 0.0
      %3584 = vmatprep.subr.mxu0 0.0
      %3585 = vmatpush1.msra.mxu0 0.0
      %3586 = vmatprep.subr.mxu0 0.0
      %3587 = vmatpush1.msra.mxu0 0.0
      %3588 = vmatprep.subr.mxu0 0.0
      %3589 = vmatpush1.msra.mxu0 0.0
      %3590 = vmatprep.subr.mxu0 0.0
      %3591 = vmatpush1.msra.mxu0 0.0
      %3592 = vmatprep.subr.mxu0 0.0
      %3593 = vmatpush1.msra.mxu0 0.0
      %3594 = vmatprep.subr.mxu0 0.0
      %3595 = vmatpush1.msra.mxu0 0.0
      %3596 = vmatprep.subr.mxu0 0.0
      %3597 = vmatpush1.msra.mxu0 0.0
      %3598 = vmatprep.mubr.f32.mxu0 0.0
      %3599 = vmatmul.mubr.f32.gmra.mrb[0].mxu0 %v2936
      %v3600 = vpop.f32.mrb[0].mxu0
      %v3601 = vadd.f32 0.0, %v3600
      %v3602 = vpop.f32.mrb[0].mxu0
      %3603 = vdwg.mxu0
      %s3604 = scalar_lea.vmem %s2, 88
      %v3605 = vld [vmem:[%s3604] sm:$0xf]
      %v3607 = vsel %vm278, %v3605, 0
      %v3610 = vsel %vm282, %v3601, 0
      %3612 = vmatprep.subr.mxu0 0.0
      %3613 = vmatpush1.msra.mxu0 %v3610
      %3614 = vmatprep.subr.mxu0 0.0
      %3615 = vmatpush1.msra.mxu0 0.0
      %3616 = vmatprep.subr.mxu0 0.0
      %3617 = vmatpush1.msra.mxu0 0.0
      %3618 = vmatprep.subr.mxu0 0.0
      %3619 = vmatpush1.msra.mxu0 0.0
      %3620 = vmatprep.subr.mxu0 0.0
      %3621 = vmatpush1.msra.mxu0 0.0
      %3622 = vmatprep.subr.mxu0 0.0
      %3623 = vmatpush1.msra.mxu0 0.0
      %3624 = vmatprep.subr.mxu0 0.0
      %3625 = vmatpush1.msra.mxu0 0.0
      %3626 = vmatprep.subr.mxu0 0.0
      %3627 = vmatpush1.msra.mxu0 0.0
      %3628 = vmatprep.subr.mxu0 0.0
      %3629 = vmatpush1.msra.mxu0 0.0
      %3630 = vmatprep.subr.mxu0 0.0
      %3631 = vmatpush1.msra.mxu0 0.0
      %3632 = vmatprep.subr.mxu0 0.0
      %3633 = vmatpush1.msra.mxu0 0.0
      %3634 = vmatprep.subr.mxu0 0.0
      %3635 = vmatpush1.msra.mxu0 0.0
      %3636 = vmatprep.subr.mxu0 0.0
      %3637 = vmatpush1.msra.mxu0 0.0
      %3638 = vmatprep.subr.mxu0 0.0
      %3639 = vmatpush1.msra.mxu0 0.0
      %3640 = vmatprep.subr.mxu0 0.0
      %3641 = vmatpush1.msra.mxu0 0.0
      %3642 = vmatprep.subr.mxu0 0.0
      %3643 = vmatpush1.msra.mxu0 0.0
      %3644 = vmatprep.subr.mxu0 0.0
      %3645 = vmatpush1.msra.mxu0 0.0
      %3646 = vmatprep.subr.mxu0 0.0
      %3647 = vmatpush1.msra.mxu0 0.0
      %3648 = vmatprep.subr.mxu0 0.0
      %3649 = vmatpush1.msra.mxu0 0.0
      %3650 = vmatprep.subr.mxu0 0.0
      %3651 = vmatpush1.msra.mxu0 0.0
      %3652 = vmatprep.subr.mxu0 0.0
      %3653 = vmatpush1.msra.mxu0 0.0
      %3654 = vmatprep.subr.mxu0 0.0
      %3655 = vmatpush1.msra.mxu0 0.0
      %3656 = vmatprep.subr.mxu0 0.0
      %3657 = vmatpush1.msra.mxu0 0.0
      %3658 = vmatprep.subr.mxu0 0.0
      %3659 = vmatpush1.msra.mxu0 0.0
      %3660 = vmatprep.subr.mxu0 0.0
      %3661 = vmatpush1.msra.mxu0 0.0
      %3662 = vmatprep.subr.mxu0 0.0
      %3663 = vmatpush1.msra.mxu0 0.0
      %3664 = vmatprep.subr.mxu0 0.0
      %3665 = vmatpush1.msra.mxu0 0.0
      %3666 = vmatprep.subr.mxu0 0.0
      %3667 = vmatpush1.msra.mxu0 0.0
      %3668 = vmatprep.subr.mxu0 0.0
      %3669 = vmatpush1.msra.mxu0 0.0
      %3670 = vmatprep.subr.mxu0 0.0
      %3671 = vmatpush1.msra.mxu0 0.0
      %3672 = vmatprep.subr.mxu0 0.0
      %3673 = vmatpush1.msra.mxu0 0.0
      %3674 = vmatprep.subr.mxu0 0.0
      %3675 = vmatpush1.msra.mxu0 0.0
      %3676 = vmatprep.mubr.f32.mxu0 0.0
      %3677 = vmatmul.mubr.f32.gmra.mrb[0].mxu0 %v3607
      %v3678 = vpop.f32.mrb[0].mxu0
      %v3679 = vadd.f32 0.0, %v3678
      %v3680 = vpop.f32.mrb[0].mxu0
      %3681 = vdwg.mxu0
      %v3682 = vadd.f32 %v3533, %v3679
      %3683 = vmatprep.subr.mxu0 0.0
      %3684 = vmatpush1.msra.mxu0 %v966
      %3685 = vmatprep.subr.mxu0 0.0
      %3686 = vmatpush1.msra.mxu0 %v967
      %3687 = vmatprep.subr.mxu0 0.0
      %3688 = vmatpush1.msra.mxu0 0.0
      %3689 = vmatprep.subr.mxu0 0.0
      %3690 = vmatpush1.msra.mxu0 0.0
      %3691 = vmatprep.subr.mxu0 0.0
      %3692 = vmatpush1.msra.mxu0 0.0
      %3693 = vmatprep.subr.mxu0 0.0
      %3694 = vmatpush1.msra.mxu0 0.0
      %3695 = vmatprep.subr.mxu0 0.0
      %3696 = vmatpush1.msra.mxu0 0.0
      %3697 = vmatprep.subr.mxu0 0.0
      %3698 = vmatpush1.msra.mxu0 0.0
      %3699 = vmatprep.subr.mxu0 0.0
      %3700 = vmatpush1.msra.mxu0 0.0
      %3701 = vmatprep.subr.mxu0 0.0
      %3702 = vmatpush1.msra.mxu0 0.0
      %3703 = vmatprep.subr.mxu0 0.0
      %3704 = vmatpush1.msra.mxu0 0.0
      %3705 = vmatprep.subr.mxu0 0.0
      %3706 = vmatpush1.msra.mxu0 0.0
      %3707 = vmatprep.subr.mxu0 0.0
      %3708 = vmatpush1.msra.mxu0 0.0
      %3709 = vmatprep.subr.mxu0 0.0
      %3710 = vmatpush1.msra.mxu0 0.0
      %3711 = vmatprep.subr.mxu0 0.0
      %3712 = vmatpush1.msra.mxu0 0.0
      %3713 = vmatprep.subr.mxu0 0.0
      %3714 = vmatpush1.msra.mxu0 0.0
      %3715 = vmatprep.subr.mxu0 0.0
      %3716 = vmatpush1.msra.mxu0 0.0
      %3717 = vmatprep.subr.mxu0 0.0
      %3718 = vmatpush1.msra.mxu0 0.0
      %3719 = vmatprep.subr.mxu0 0.0
      %3720 = vmatpush1.msra.mxu0 0.0
      %3721 = vmatprep.subr.mxu0 0.0
      %3722 = vmatpush1.msra.mxu0 0.0
      %3723 = vmatprep.subr.mxu0 0.0
      %3724 = vmatpush1.msra.mxu0 0.0
      %3725 = vmatprep.subr.mxu0 0.0
      %3726 = vmatpush1.msra.mxu0 0.0
      %3727 = vmatprep.subr.mxu0 0.0
      %3728 = vmatpush1.msra.mxu0 0.0
      %3729 = vmatprep.subr.mxu0 0.0
      %3730 = vmatpush1.msra.mxu0 0.0
      %3731 = vmatprep.subr.mxu0 0.0
      %3732 = vmatpush1.msra.mxu0 0.0
      %3733 = vmatprep.subr.mxu0 0.0
      %3734 = vmatpush1.msra.mxu0 0.0
      %3735 = vmatprep.subr.mxu0 0.0
      %3736 = vmatpush1.msra.mxu0 0.0
      %3737 = vmatprep.subr.mxu0 0.0
      %3738 = vmatpush1.msra.mxu0 0.0
      %3739 = vmatprep.subr.mxu0 0.0
      %3740 = vmatpush1.msra.mxu0 0.0
      %3741 = vmatprep.subr.mxu0 0.0
      %3742 = vmatpush1.msra.mxu0 0.0
      %3743 = vmatprep.subr.mxu0 0.0
      %3744 = vmatpush1.msra.mxu0 0.0
      %3745 = vmatprep.subr.mxu0 0.0
      %3746 = vmatpush1.msra.mxu0 0.0
      %3747 = vmatprep.mubr.f32.mxu0 0.0
      %3748 = vmatmul.mubr.f32.gmra.mrb[0].mxu0 %v2936
      %v3749 = vpop.f32.mrb[0].mxu0
      %v3750 = vadd.f32 0.0, %v3749
      %v3751 = vpop.f32.mrb[0].mxu0
      %3752 = vdwg.mxu0
      %s3753 = scalar_lea.vmem %s2, 92
      %v3754 = vld [vmem:[%s3753] sm:$0xf]
      %v3756 = vsel %vm278, %v3754, 0
      %v3759 = vsel %vm282, %v3750, 0
      %3761 = vmatprep.subr.mxu0 0.0
      %3762 = vmatpush1.msra.mxu0 %v3759
      %3763 = vmatprep.subr.mxu0 0.0
      %3764 = vmatpush1.msra.mxu0 0.0
      %3765 = vmatprep.subr.mxu0 0.0
      %3766 = vmatpush1.msra.mxu0 0.0
      %3767 = vmatprep.subr.mxu0 0.0
      %3768 = vmatpush1.msra.mxu0 0.0
      %3769 = vmatprep.subr.mxu0 0.0
      %3770 = vmatpush1.msra.mxu0 0.0
      %3771 = vmatprep.subr.mxu0 0.0
      %3772 = vmatpush1.msra.mxu0 0.0
      %3773 = vmatprep.subr.mxu0 0.0
      %3774 = vmatpush1.msra.mxu0 0.0
      %3775 = vmatprep.subr.mxu0 0.0
      %3776 = vmatpush1.msra.mxu0 0.0
      %3777 = vmatprep.subr.mxu0 0.0
      %3778 = vmatpush1.msra.mxu0 0.0
      %3779 = vmatprep.subr.mxu0 0.0
      %3780 = vmatpush1.msra.mxu0 0.0
      %3781 = vmatprep.subr.mxu0 0.0
      %3782 = vmatpush1.msra.mxu0 0.0
      %3783 = vmatprep.subr.mxu0 0.0
      %3784 = vmatpush1.msra.mxu0 0.0
      %3785 = vmatprep.subr.mxu0 0.0
      %3786 = vmatpush1.msra.mxu0 0.0
      %3787 = vmatprep.subr.mxu0 0.0
      %3788 = vmatpush1.msra.mxu0 0.0
      %3789 = vmatprep.subr.mxu0 0.0
      %3790 = vmatpush1.msra.mxu0 0.0
      %3791 = vmatprep.subr.mxu0 0.0
      %3792 = vmatpush1.msra.mxu0 0.0
      %3793 = vmatprep.subr.mxu0 0.0
      %3794 = vmatpush1.msra.mxu0 0.0
      %3795 = vmatprep.subr.mxu0 0.0
      %3796 = vmatpush1.msra.mxu0 0.0
      %3797 = vmatprep.subr.mxu0 0.0
      %3798 = vmatpush1.msra.mxu0 0.0
      %3799 = vmatprep.subr.mxu0 0.0
      %3800 = vmatpush1.msra.mxu0 0.0
      %3801 = vmatprep.subr.mxu0 0.0
      %3802 = vmatpush1.msra.mxu0 0.0
      %3803 = vmatprep.subr.mxu0 0.0
      %3804 = vmatpush1.msra.mxu0 0.0
      %3805 = vmatprep.subr.mxu0 0.0
      %3806 = vmatpush1.msra.mxu0 0.0
      %3807 = vmatprep.subr.mxu0 0.0
      %3808 = vmatpush1.msra.mxu0 0.0
      %3809 = vmatprep.subr.mxu0 0.0
      %3810 = vmatpush1.msra.mxu0 0.0
      %3811 = vmatprep.subr.mxu0 0.0
      %3812 = vmatpush1.msra.mxu0 0.0
      %3813 = vmatprep.subr.mxu0 0.0
      %3814 = vmatpush1.msra.mxu0 0.0
      %3815 = vmatprep.subr.mxu0 0.0
      %3816 = vmatpush1.msra.mxu0 0.0
      %3817 = vmatprep.subr.mxu0 0.0
      %3818 = vmatpush1.msra.mxu0 0.0
      %3819 = vmatprep.subr.mxu0 0.0
      %3820 = vmatpush1.msra.mxu0 0.0
      %3821 = vmatprep.subr.mxu0 0.0
      %3822 = vmatpush1.msra.mxu0 0.0
      %3823 = vmatprep.subr.mxu0 0.0
      %3824 = vmatpush1.msra.mxu0 0.0
      %3825 = vmatprep.mubr.f32.mxu0 0.0
      %3826 = vmatmul.mubr.f32.gmra.mrb[0].mxu0 %v3756
      %v3827 = vpop.f32.mrb[0].mxu0
      %v3828 = vadd.f32 0.0, %v3827
      %v3829 = vpop.f32.mrb[0].mxu0
      %3830 = vdwg.mxu0
      %v3831 = vadd.f32 %v3682, %v3828
      %3832 = vmatprep.subr.mxu0 0.0
      %3833 = vmatpush1.msra.mxu0 %v1118
      %3834 = vmatprep.subr.mxu0 0.0
      %3835 = vmatpush1.msra.mxu0 %v1119
      %3836 = vmatprep.subr.mxu0 0.0
      %3837 = vmatpush1.msra.mxu0 0.0
      %3838 = vmatprep.subr.mxu0 0.0
      %3839 = vmatpush1.msra.mxu0 0.0
      %3840 = vmatprep.subr.mxu0 0.0
      %3841 = vmatpush1.msra.mxu0 0.0
      %3842 = vmatprep.subr.mxu0 0.0
      %3843 = vmatpush1.msra.mxu0 0.0
      %3844 = vmatprep.subr.mxu0 0.0
      %3845 = vmatpush1.msra.mxu0 0.0
      %3846 = vmatprep.subr.mxu0 0.0
      %3847 = vmatpush1.msra.mxu0 0.0
      %3848 = vmatprep.subr.mxu0 0.0
      %3849 = vmatpush1.msra.mxu0 0.0
      %3850 = vmatprep.subr.mxu0 0.0
      %3851 = vmatpush1.msra.mxu0 0.0
      %3852 = vmatprep.subr.mxu0 0.0
      %3853 = vmatpush1.msra.mxu0 0.0
      %3854 = vmatprep.subr.mxu0 0.0
      %3855 = vmatpush1.msra.mxu0 0.0
      %3856 = vmatprep.subr.mxu0 0.0
      %3857 = vmatpush1.msra.mxu0 0.0
      %3858 = vmatprep.subr.mxu0 0.0
      %3859 = vmatpush1.msra.mxu0 0.0
      %3860 = vmatprep.subr.mxu0 0.0
      %3861 = vmatpush1.msra.mxu0 0.0
      %3862 = vmatprep.subr.mxu0 0.0
      %3863 = vmatpush1.msra.mxu0 0.0
      %3864 = vmatprep.subr.mxu0 0.0
      %3865 = vmatpush1.msra.mxu0 0.0
      %3866 = vmatprep.subr.mxu0 0.0
      %3867 = vmatpush1.msra.mxu0 0.0
      %3868 = vmatprep.subr.mxu0 0.0
      %3869 = vmatpush1.msra.mxu0 0.0
      %3870 = vmatprep.subr.mxu0 0.0
      %3871 = vmatpush1.msra.mxu0 0.0
      %3872 = vmatprep.subr.mxu0 0.0
      %3873 = vmatpush1.msra.mxu0 0.0
      %3874 = vmatprep.subr.mxu0 0.0
      %3875 = vmatpush1.msra.mxu0 0.0
      %3876 = vmatprep.subr.mxu0 0.0
      %3877 = vmatpush1.msra.mxu0 0.0
      %3878 = vmatprep.subr.mxu0 0.0
      %3879 = vmatpush1.msra.mxu0 0.0
      %3880 = vmatprep.subr.mxu0 0.0
      %3881 = vmatpush1.msra.mxu0 0.0
      %3882 = vmatprep.subr.mxu0 0.0
      %3883 = vmatpush1.msra.mxu0 0.0
      %3884 = vmatprep.subr.mxu0 0.0
      %3885 = vmatpush1.msra.mxu0 0.0
      %3886 = vmatprep.subr.mxu0 0.0
      %3887 = vmatpush1.msra.mxu0 0.0
      %3888 = vmatprep.subr.mxu0 0.0
      %3889 = vmatpush1.msra.mxu0 0.0
      %3890 = vmatprep.subr.mxu0 0.0
      %3891 = vmatpush1.msra.mxu0 0.0
      %3892 = vmatprep.subr.mxu0 0.0
      %3893 = vmatpush1.msra.mxu0 0.0
      %3894 = vmatprep.subr.mxu0 0.0
      %3895 = vmatpush1.msra.mxu0 0.0
      %3896 = vmatprep.mubr.f32.mxu0 0.0
      %3897 = vmatmul.mubr.f32.gmra.mrb[0].mxu0 %v2936
      %v3898 = vpop.f32.mrb[0].mxu0
      %v3899 = vadd.f32 0.0, %v3898
      %v3900 = vpop.f32.mrb[0].mxu0
      %3901 = vdwg.mxu0
      %s3902 = scalar_lea.vmem %s2, 96
      %v3903 = vld [vmem:[%s3902] sm:$0xf]
      %v3905 = vsel %vm278, %v3903, 0
      %v3908 = vsel %vm282, %v3899, 0
      %3910 = vmatprep.subr.mxu0 0.0
      %3911 = vmatpush1.msra.mxu0 %v3908
      %3912 = vmatprep.subr.mxu0 0.0
      %3913 = vmatpush1.msra.mxu0 0.0
      %3914 = vmatprep.subr.mxu0 0.0
      %3915 = vmatpush1.msra.mxu0 0.0
      %3916 = vmatprep.subr.mxu0 0.0
      %3917 = vmatpush1.msra.mxu0 0.0
      %3918 = vmatprep.subr.mxu0 0.0
      %3919 = vmatpush1.msra.mxu0 0.0
      %3920 = vmatprep.subr.mxu0 0.0
      %3921 = vmatpush1.msra.mxu0 0.0
      %3922 = vmatprep.subr.mxu0 0.0
      %3923 = vmatpush1.msra.mxu0 0.0
      %3924 = vmatprep.subr.mxu0 0.0
      %3925 = vmatpush1.msra.mxu0 0.0
      %3926 = vmatprep.subr.mxu0 0.0
      %3927 = vmatpush1.msra.mxu0 0.0
      %3928 = vmatprep.subr.mxu0 0.0
      %3929 = vmatpush1.msra.mxu0 0.0
      %3930 = vmatprep.subr.mxu0 0.0
      %3931 = vmatpush1.msra.mxu0 0.0
      %3932 = vmatprep.subr.mxu0 0.0
      %3933 = vmatpush1.msra.mxu0 0.0
      %3934 = vmatprep.subr.mxu0 0.0
      %3935 = vmatpush1.msra.mxu0 0.0
      %3936 = vmatprep.subr.mxu0 0.0
      %3937 = vmatpush1.msra.mxu0 0.0
      %3938 = vmatprep.subr.mxu0 0.0
      %3939 = vmatpush1.msra.mxu0 0.0
      %3940 = vmatprep.subr.mxu0 0.0
      %3941 = vmatpush1.msra.mxu0 0.0
      %3942 = vmatprep.subr.mxu0 0.0
      %3943 = vmatpush1.msra.mxu0 0.0
      %3944 = vmatprep.subr.mxu0 0.0
      %3945 = vmatpush1.msra.mxu0 0.0
      %3946 = vmatprep.subr.mxu0 0.0
      %3947 = vmatpush1.msra.mxu0 0.0
      %3948 = vmatprep.subr.mxu0 0.0
      %3949 = vmatpush1.msra.mxu0 0.0
      %3950 = vmatprep.subr.mxu0 0.0
      %3951 = vmatpush1.msra.mxu0 0.0
      %3952 = vmatprep.subr.mxu0 0.0
      %3953 = vmatpush1.msra.mxu0 0.0
      %3954 = vmatprep.subr.mxu0 0.0
      %3955 = vmatpush1.msra.mxu0 0.0
      %3956 = vmatprep.subr.mxu0 0.0
      %3957 = vmatpush1.msra.mxu0 0.0
      %3958 = vmatprep.subr.mxu0 0.0
      %3959 = vmatpush1.msra.mxu0 0.0
      %3960 = vmatprep.subr.mxu0 0.0
      %3961 = vmatpush1.msra.mxu0 0.0
      %3962 = vmatprep.subr.mxu0 0.0
      %3963 = vmatpush1.msra.mxu0 0.0
      %3964 = vmatprep.subr.mxu0 0.0
      %3965 = vmatpush1.msra.mxu0 0.0
      %3966 = vmatprep.subr.mxu0 0.0
      %3967 = vmatpush1.msra.mxu0 0.0
      %3968 = vmatprep.subr.mxu0 0.0
      %3969 = vmatpush1.msra.mxu0 0.0
      %3970 = vmatprep.subr.mxu0 0.0
      %3971 = vmatpush1.msra.mxu0 0.0
      %3972 = vmatprep.subr.mxu0 0.0
      %3973 = vmatpush1.msra.mxu0 0.0
      %3974 = vmatprep.mubr.f32.mxu0 0.0
      %3975 = vmatmul.mubr.f32.gmra.mrb[0].mxu0 %v3905
      %v3976 = vpop.f32.mrb[0].mxu0
      %v3977 = vadd.f32 0.0, %v3976
      %v3978 = vpop.f32.mrb[0].mxu0
      %3979 = vdwg.mxu0
      %v3980 = vadd.f32 %v3831, %v3977
      %3981 = vmatprep.subr.mxu0 0.0
      %3982 = vmatpush1.msra.mxu0 %v1270
      %3983 = vmatprep.subr.mxu0 0.0
      %3984 = vmatpush1.msra.mxu0 %v1271
      %3985 = vmatprep.subr.mxu0 0.0
      %3986 = vmatpush1.msra.mxu0 0.0
      %3987 = vmatprep.subr.mxu0 0.0
      %3988 = vmatpush1.msra.mxu0 0.0
      %3989 = vmatprep.subr.mxu0 0.0
      %3990 = vmatpush1.msra.mxu0 0.0
      %3991 = vmatprep.subr.mxu0 0.0
      %3992 = vmatpush1.msra.mxu0 0.0
      %3993 = vmatprep.subr.mxu0 0.0
      %3994 = vmatpush1.msra.mxu0 0.0
      %3995 = vmatprep.subr.mxu0 0.0
      %3996 = vmatpush1.msra.mxu0 0.0
      %3997 = vmatprep.subr.mxu0 0.0
      %3998 = vmatpush1.msra.mxu0 0.0
      %3999 = vmatprep.subr.mxu0 0.0
      %4000 = vmatpush1.msra.mxu0 0.0
      %4001 = vmatprep.subr.mxu0 0.0
      %4002 = vmatpush1.msra.mxu0 0.0
      %4003 = vmatprep.subr.mxu0 0.0
      %4004 = vmatpush1.msra.mxu0 0.0
      %4005 = vmatprep.subr.mxu0 0.0
      %4006 = vmatpush1.msra.mxu0 0.0
      %4007 = vmatprep.subr.mxu0 0.0
      %4008 = vmatpush1.msra.mxu0 0.0
      %4009 = vmatprep.subr.mxu0 0.0
      %4010 = vmatpush1.msra.mxu0 0.0
      %4011 = vmatprep.subr.mxu0 0.0
      %4012 = vmatpush1.msra.mxu0 0.0
      %4013 = vmatprep.subr.mxu0 0.0
      %4014 = vmatpush1.msra.mxu0 0.0
      %4015 = vmatprep.subr.mxu0 0.0
      %4016 = vmatpush1.msra.mxu0 0.0
      %4017 = vmatprep.subr.mxu0 0.0
      %4018 = vmatpush1.msra.mxu0 0.0
      %4019 = vmatprep.subr.mxu0 0.0
      %4020 = vmatpush1.msra.mxu0 0.0
      %4021 = vmatprep.subr.mxu0 0.0
      %4022 = vmatpush1.msra.mxu0 0.0
      %4023 = vmatprep.subr.mxu0 0.0
      %4024 = vmatpush1.msra.mxu0 0.0
      %4025 = vmatprep.subr.mxu0 0.0
      %4026 = vmatpush1.msra.mxu0 0.0
      %4027 = vmatprep.subr.mxu0 0.0
      %4028 = vmatpush1.msra.mxu0 0.0
      %4029 = vmatprep.subr.mxu0 0.0
      %4030 = vmatpush1.msra.mxu0 0.0
      %4031 = vmatprep.subr.mxu0 0.0
      %4032 = vmatpush1.msra.mxu0 0.0
      %4033 = vmatprep.subr.mxu0 0.0
      %4034 = vmatpush1.msra.mxu0 0.0
      %4035 = vmatprep.subr.mxu0 0.0
      %4036 = vmatpush1.msra.mxu0 0.0
      %4037 = vmatprep.subr.mxu0 0.0
      %4038 = vmatpush1.msra.mxu0 0.0
      %4039 = vmatprep.subr.mxu0 0.0
      %4040 = vmatpush1.msra.mxu0 0.0
      %4041 = vmatprep.subr.mxu0 0.0
      %4042 = vmatpush1.msra.mxu0 0.0
      %4043 = vmatprep.subr.mxu0 0.0
      %4044 = vmatpush1.msra.mxu0 0.0
      %4045 = vmatprep.mubr.f32.mxu0 0.0
      %4046 = vmatmul.mubr.f32.gmra.mrb[0].mxu0 %v2936
      %v4047 = vpop.f32.mrb[0].mxu0
      %v4048 = vadd.f32 0.0, %v4047
      %v4049 = vpop.f32.mrb[0].mxu0
      %4050 = vdwg.mxu0
      %s4051 = scalar_lea.vmem %s2, 100
      %v4052 = vld [vmem:[%s4051] sm:$0xf]
      %v4054 = vsel %vm278, %v4052, 0
      %v4057 = vsel %vm282, %v4048, 0
      %4059 = vmatprep.subr.mxu0 0.0
      %4060 = vmatpush1.msra.mxu0 %v4057
      %4061 = vmatprep.subr.mxu0 0.0
      %4062 = vmatpush1.msra.mxu0 0.0
      %4063 = vmatprep.subr.mxu0 0.0
      %4064 = vmatpush1.msra.mxu0 0.0
      %4065 = vmatprep.subr.mxu0 0.0
      %4066 = vmatpush1.msra.mxu0 0.0
      %4067 = vmatprep.subr.mxu0 0.0
      %4068 = vmatpush1.msra.mxu0 0.0
      %4069 = vmatprep.subr.mxu0 0.0
      %4070 = vmatpush1.msra.mxu0 0.0
      %4071 = vmatprep.subr.mxu0 0.0
      %4072 = vmatpush1.msra.mxu0 0.0
      %4073 = vmatprep.subr.mxu0 0.0
      %4074 = vmatpush1.msra.mxu0 0.0
      %4075 = vmatprep.subr.mxu0 0.0
      %4076 = vmatpush1.msra.mxu0 0.0
      %4077 = vmatprep.subr.mxu0 0.0
      %4078 = vmatpush1.msra.mxu0 0.0
      %4079 = vmatprep.subr.mxu0 0.0
      %4080 = vmatpush1.msra.mxu0 0.0
      %4081 = vmatprep.subr.mxu0 0.0
      %4082 = vmatpush1.msra.mxu0 0.0
      %4083 = vmatprep.subr.mxu0 0.0
      %4084 = vmatpush1.msra.mxu0 0.0
      %4085 = vmatprep.subr.mxu0 0.0
      %4086 = vmatpush1.msra.mxu0 0.0
      %4087 = vmatprep.subr.mxu0 0.0
      %4088 = vmatpush1.msra.mxu0 0.0
      %4089 = vmatprep.subr.mxu0 0.0
      %4090 = vmatpush1.msra.mxu0 0.0
      %4091 = vmatprep.subr.mxu0 0.0
      %4092 = vmatpush1.msra.mxu0 0.0
      %4093 = vmatprep.subr.mxu0 0.0
      %4094 = vmatpush1.msra.mxu0 0.0
      %4095 = vmatprep.subr.mxu0 0.0
      %4096 = vmatpush1.msra.mxu0 0.0
      %4097 = vmatprep.subr.mxu0 0.0
      %4098 = vmatpush1.msra.mxu0 0.0
      %4099 = vmatprep.subr.mxu0 0.0
      %4100 = vmatpush1.msra.mxu0 0.0
      %4101 = vmatprep.subr.mxu0 0.0
      %4102 = vmatpush1.msra.mxu0 0.0
      %4103 = vmatprep.subr.mxu0 0.0
      %4104 = vmatpush1.msra.mxu0 0.0
      %4105 = vmatprep.subr.mxu0 0.0
      %4106 = vmatpush1.msra.mxu0 0.0
      %4107 = vmatprep.subr.mxu0 0.0
      %4108 = vmatpush1.msra.mxu0 0.0
      %4109 = vmatprep.subr.mxu0 0.0
      %4110 = vmatpush1.msra.mxu0 0.0
      %4111 = vmatprep.subr.mxu0 0.0
      %4112 = vmatpush1.msra.mxu0 0.0
      %4113 = vmatprep.subr.mxu0 0.0
      %4114 = vmatpush1.msra.mxu0 0.0
      %4115 = vmatprep.subr.mxu0 0.0
      %4116 = vmatpush1.msra.mxu0 0.0
      %4117 = vmatprep.subr.mxu0 0.0
      %4118 = vmatpush1.msra.mxu0 0.0
      %4119 = vmatprep.subr.mxu0 0.0
      %4120 = vmatpush1.msra.mxu0 0.0
      %4121 = vmatprep.subr.mxu0 0.0
      %4122 = vmatpush1.msra.mxu0 0.0
      %4123 = vmatprep.mubr.f32.mxu0 0.0
      %4124 = vmatmul.mubr.f32.gmra.mrb[0].mxu0 %v4054
      %v4125 = vpop.f32.mrb[0].mxu0
      %v4126 = vadd.f32 0.0, %v4125
      %v4127 = vpop.f32.mrb[0].mxu0
      %4128 = vdwg.mxu0
      %v4129 = vadd.f32 %v3980, %v4126
      %4130 = vmatprep.subr.mxu0 0.0
      %4131 = vmatpush1.msra.mxu0 %v1422
      %4132 = vmatprep.subr.mxu0 0.0
      %4133 = vmatpush1.msra.mxu0 %v1423
      %4134 = vmatprep.subr.mxu0 0.0
      %4135 = vmatpush1.msra.mxu0 0.0
      %4136 = vmatprep.subr.mxu0 0.0
      %4137 = vmatpush1.msra.mxu0 0.0
      %4138 = vmatprep.subr.mxu0 0.0
      %4139 = vmatpush1.msra.mxu0 0.0
      %4140 = vmatprep.subr.mxu0 0.0
      %4141 = vmatpush1.msra.mxu0 0.0
      %4142 = vmatprep.subr.mxu0 0.0
      %4143 = vmatpush1.msra.mxu0 0.0
      %4144 = vmatprep.subr.mxu0 0.0
      %4145 = vmatpush1.msra.mxu0 0.0
      %4146 = vmatprep.subr.mxu0 0.0
      %4147 = vmatpush1.msra.mxu0 0.0
      %4148 = vmatprep.subr.mxu0 0.0
      %4149 = vmatpush1.msra.mxu0 0.0
      %4150 = vmatprep.subr.mxu0 0.0
      %4151 = vmatpush1.msra.mxu0 0.0
      %4152 = vmatprep.subr.mxu0 0.0
      %4153 = vmatpush1.msra.mxu0 0.0
      %4154 = vmatprep.subr.mxu0 0.0
      %4155 = vmatpush1.msra.mxu0 0.0
      %4156 = vmatprep.subr.mxu0 0.0
      %4157 = vmatpush1.msra.mxu0 0.0
      %4158 = vmatprep.subr.mxu0 0.0
      %4159 = vmatpush1.msra.mxu0 0.0
      %4160 = vmatprep.subr.mxu0 0.0
      %4161 = vmatpush1.msra.mxu0 0.0
      %4162 = vmatprep.subr.mxu0 0.0
      %4163 = vmatpush1.msra.mxu0 0.0
      %4164 = vmatprep.subr.mxu0 0.0
      %4165 = vmatpush1.msra.mxu0 0.0
      %4166 = vmatprep.subr.mxu0 0.0
      %4167 = vmatpush1.msra.mxu0 0.0
      %4168 = vmatprep.subr.mxu0 0.0
      %4169 = vmatpush1.msra.mxu0 0.0
      %4170 = vmatprep.subr.mxu0 0.0
      %4171 = vmatpush1.msra.mxu0 0.0
      %4172 = vmatprep.subr.mxu0 0.0
      %4173 = vmatpush1.msra.mxu0 0.0
      %4174 = vmatprep.subr.mxu0 0.0
      %4175 = vmatpush1.msra.mxu0 0.0
      %4176 = vmatprep.subr.mxu0 0.0
      %4177 = vmatpush1.msra.mxu0 0.0
      %4178 = vmatprep.subr.mxu0 0.0
      %4179 = vmatpush1.msra.mxu0 0.0
      %4180 = vmatprep.subr.mxu0 0.0
      %4181 = vmatpush1.msra.mxu0 0.0
      %4182 = vmatprep.subr.mxu0 0.0
      %4183 = vmatpush1.msra.mxu0 0.0
      %4184 = vmatprep.subr.mxu0 0.0
      %4185 = vmatpush1.msra.mxu0 0.0
      %4186 = vmatprep.subr.mxu0 0.0
      %4187 = vmatpush1.msra.mxu0 0.0
      %4188 = vmatprep.subr.mxu0 0.0
      %4189 = vmatpush1.msra.mxu0 0.0
      %4190 = vmatprep.subr.mxu0 0.0
      %4191 = vmatpush1.msra.mxu0 0.0
      %4192 = vmatprep.subr.mxu0 0.0
      %4193 = vmatpush1.msra.mxu0 0.0
      %4194 = vmatprep.mubr.f32.mxu0 0.0
      %4195 = vmatmul.mubr.f32.gmra.mrb[0].mxu0 %v2936
      %v4196 = vpop.f32.mrb[0].mxu0
      %v4197 = vadd.f32 0.0, %v4196
      %v4198 = vpop.f32.mrb[0].mxu0
      %4199 = vdwg.mxu0
      %s4200 = scalar_lea.vmem %s2, 104
      %v4201 = vld [vmem:[%s4200] sm:$0xf]
      %v4203 = vsel %vm278, %v4201, 0
      %v4206 = vsel %vm282, %v4197, 0
      %4208 = vmatprep.subr.mxu0 0.0
      %4209 = vmatpush1.msra.mxu0 %v4206
      %4210 = vmatprep.subr.mxu0 0.0
      %4211 = vmatpush1.msra.mxu0 0.0
      %4212 = vmatprep.subr.mxu0 0.0
      %4213 = vmatpush1.msra.mxu0 0.0
      %4214 = vmatprep.subr.mxu0 0.0
      %4215 = vmatpush1.msra.mxu0 0.0
      %4216 = vmatprep.subr.mxu0 0.0
      %4217 = vmatpush1.msra.mxu0 0.0
      %4218 = vmatprep.subr.mxu0 0.0
      %4219 = vmatpush1.msra.mxu0 0.0
      %4220 = vmatprep.subr.mxu0 0.0
      %4221 = vmatpush1.msra.mxu0 0.0
      %4222 = vmatprep.subr.mxu0 0.0
      %4223 = vmatpush1.msra.mxu0 0.0
      %4224 = vmatprep.subr.mxu0 0.0
      %4225 = vmatpush1.msra.mxu0 0.0
      %4226 = vmatprep.subr.mxu0 0.0
      %4227 = vmatpush1.msra.mxu0 0.0
      %4228 = vmatprep.subr.mxu0 0.0
      %4229 = vmatpush1.msra.mxu0 0.0
      %4230 = vmatprep.subr.mxu0 0.0
      %4231 = vmatpush1.msra.mxu0 0.0
      %4232 = vmatprep.subr.mxu0 0.0
      %4233 = vmatpush1.msra.mxu0 0.0
      %4234 = vmatprep.subr.mxu0 0.0
      %4235 = vmatpush1.msra.mxu0 0.0
      %4236 = vmatprep.subr.mxu0 0.0
      %4237 = vmatpush1.msra.mxu0 0.0
      %4238 = vmatprep.subr.mxu0 0.0
      %4239 = vmatpush1.msra.mxu0 0.0
      %4240 = vmatprep.subr.mxu0 0.0
      %4241 = vmatpush1.msra.mxu0 0.0
      %4242 = vmatprep.subr.mxu0 0.0
      %4243 = vmatpush1.msra.mxu0 0.0
      %4244 = vmatprep.subr.mxu0 0.0
      %4245 = vmatpush1.msra.mxu0 0.0
      %4246 = vmatprep.subr.mxu0 0.0
      %4247 = vmatpush1.msra.mxu0 0.0
      %4248 = vmatprep.subr.mxu0 0.0
      %4249 = vmatpush1.msra.mxu0 0.0
      %4250 = vmatprep.subr.mxu0 0.0
      %4251 = vmatpush1.msra.mxu0 0.0
      %4252 = vmatprep.subr.mxu0 0.0
      %4253 = vmatpush1.msra.mxu0 0.0
      %4254 = vmatprep.subr.mxu0 0.0
      %4255 = vmatpush1.msra.mxu0 0.0
      %4256 = vmatprep.subr.mxu0 0.0
      %4257 = vmatpush1.msra.mxu0 0.0
      %4258 = vmatprep.subr.mxu0 0.0
      %4259 = vmatpush1.msra.mxu0 0.0
      %4260 = vmatprep.subr.mxu0 0.0
      %4261 = vmatpush1.msra.mxu0 0.0
      %4262 = vmatprep.subr.mxu0 0.0
      %4263 = vmatpush1.msra.mxu0 0.0
      %4264 = vmatprep.subr.mxu0 0.0
      %4265 = vmatpush1.msra.mxu0 0.0
      %4266 = vmatprep.subr.mxu0 0.0
      %4267 = vmatpush1.msra.mxu0 0.0
      %4268 = vmatprep.subr.mxu0 0.0
      %4269 = vmatpush1.msra.mxu0 0.0
      %4270 = vmatprep.subr.mxu0 0.0
      %4271 = vmatpush1.msra.mxu0 0.0
      %4272 = vmatprep.mubr.f32.mxu0 0.0
      %4273 = vmatmul.mubr.f32.gmra.mrb[0].mxu0 %v4203
      %v4274 = vpop.f32.mrb[0].mxu0
      %v4275 = vadd.f32 0.0, %v4274
      %v4276 = vpop.f32.mrb[0].mxu0
      %4277 = vdwg.mxu0
      %v4278 = vadd.f32 %v4129, %v4275
      %vm4279 = vcmask 125952
      %4280 = vst.msk [vmem:[%s192] sm:$0xf] %vm4279, %v4278
      %p4281 = scmp.lt.s32.totalorder %s15, 1
      %s4282 = scalar_select %p4281, %s15, 1
      %s4283 = smul.addr %s4282, 4
      %s4284 = scalar_lea.vmem %s4, %s4283
      // Predicated region
      $region37: #{esa_forward.6} parent=35 // pred_check
        %p4285 = pneg %p122
      $region38: #{esa_forward.6} parent=35 // pred_check_branch
        %4287 = sbr.rel (%p4285) target = $region40
      $region39: #{esa_forward.6} parent=35 // pred_region
        _
      $region40: #{esa_forward.6} parent=35 // pred_fallthru
        _
    $region36: #{esa_forward.6} parent=5 // pred_fallthru
      _
    %p4288 = scmp.le.s32.totalorder 2, %s10
    // Predicated region
    $region41: #{esa_forward.6} parent=5 // pred_check
      %p4289 = pneg %p4288
    $region42: #{esa_forward.6} parent=5 // pred_check_branch
      %4291 = sbr.rel (%p4289) target = $region44
    $region43: #{esa_forward.6} parent=5 // pred_region
      %s4292 = ssub.s32 %s10, 2
      // Predicated region
      $region45: #{esa_forward.6} parent=43 // pred_check
        %p4293 = pneg %p128
      $region46: #{esa_forward.6} parent=43 // pred_check_branch
        %4295 = sbr.rel (%p4293) target = $region48
      $region47: #{esa_forward.6} parent=43 // pred_region
        %p4296 = scmp.lt.s32.totalorder %s16, 1
        %s4297 = scalar_select %p4296, %s16, 1
        %s4298 = smul.addr %s4297, 4
        %s4299 = scalar_lea.vmem %s4, %s4298
      $region48: #{esa_forward.6} parent=43 // pred_fallthru
        _
    $region44: #{esa_forward.6} parent=5 // pred_fallthru
      _
  $region6: #{esa_forward.6} parent=0 // loop_footer
    %s14 = sadd.s32 1, %s10
  $region7: #{esa_forward.6} parent=0 // loop_footer_branch
    %9 = sbr.rel target = $region3
  $region8: #{esa_forward.6} parent=0 // loop_exit
    _

</llo_original>
